<compile_context>
chip_gen: v7x
topology: tpu7x:2x2x1
jax: 0.10.0
libtpu: 0.0.40
codegen_flags: <defaults>
</compile_context>

<pallas_src>
import jax
import jax.numpy as jnp
from jax import lax
from jax.experimental import pallas as pl
from jax.experimental.pallas import tpu as pltpu


def _forward_kernel(x_ref, wm_ref, ws_ref, wfl_ref, beff_ref, pool_ref,
                    w3_ref, b3_ref, out_ref, xcol_ref):
    BBLK, E, T = x_ref.shape
    C = wfl_ref.shape[0]                 # net_1 output channels (10)
    KJ = wfl_ref.shape[1] // E           # fused net_1 kernel width (69)
    T2, NP = pool_ref.shape              # net_1 output width, pooled width
    OUT = w3_ref.shape[0]
    inv_tm1 = 1.0 / (T - 1)              # unbiased std normaliser

    def sample(s, carry):
        x = x_ref[s]                                            # (E, T) f32

        # ---- shift = mean_net(x.mean(time)); x_shifted = x - shift ----
        mean_x = jnp.mean(x, axis=1, keepdims=True)             # (E, 1)
        shift = jnp.dot(wm_ref[...], mean_x,
                        preferred_element_type=jnp.float32)     # (E, 1)
        x_sh = x - shift

        # ---- scale = std_net(std(x_shifted, unbiased)); x * scale ----
        mu = jnp.mean(x_sh, axis=1, keepdims=True)
        cen = x_sh - mu
        var = jnp.sum(cen * cen, axis=1, keepdims=True) * inv_tm1
        scale = jnp.dot(ws_ref[...], jnp.sqrt(var),
                        preferred_element_type=jnp.float32)     # (E, 1)
        # elementwise math stays f32 (v5e VPU has no bf16); only the MXU
        # operand below is cast to bf16.
        x_sc = (x_sh * scale).astype(jnp.bfloat16)              # (E, T)

        # ---- fused net_1 as ONE K = KJ*E matmul over an im2col slab ----
        # row j*E + e of xcol holds x_sc[e, j : j + T2]
        for j in range(KJ):
            xcol_ref[j * E:(j + 1) * E, :] = x_sc[:, j:j + T2]
        out2 = jnp.dot(wfl_ref[...], xcol_ref[...],
                       preferred_element_type=jnp.float32) + beff_ref[...]  # (C, T2)

        # ---- square -> AvgPool (pooling-matrix matmul) -> log(clamp) ----
        sq = out2 * out2
        pooled = jnp.dot(sq, pool_ref[...],
                         preferred_element_type=jnp.float32)    # (C, NP)
        lp = jnp.log(jnp.maximum(pooled, 1e-6))
        # TODO(synk): nn.Dropout is identity at inference (eval mode); the
        # batch_norm and full layers are defined but never used in forward.

        # ---- net_2: full contraction over (channel, pooled pos) per class ----
        cols = []
        for o in range(OUT):
            v = jnp.sum(lp * w3_ref[o], axis=1, keepdims=True)   # (C, 1)
            cols.append(jnp.sum(v, axis=0, keepdims=True))       # (1, 1)
        logits = jnp.concatenate(cols, axis=1) + b3_ref[...]     # (1, OUT)

        # ---- softmax / log_softmax over the class axis ----
        m = jnp.max(logits, axis=1, keepdims=True)
        z = logits - m
        e = jnp.exp(z)
        ssum = jnp.sum(e, axis=1, keepdims=True)
        prob = e * pl.reciprocal(ssum, approx=True)
        logp = z - jnp.log(ssum)
        out_ref[s] = jnp.concatenate([logp, prob], axis=0)       # (2, OUT)
        return carry

    lax.fori_loop(0, BBLK, sample, 0)


def shift_scale_eeg_classify(x, params):
    """ShiftScaleEEGClassify forward; returns (log_prob, prob), each (B, OUT)."""
    B, E, T = x.shape
    w1, b1 = params['w1'], params['b1']          # (C1,1,1,KW1), (C1,)
    w2, b2 = params['w2'], params['b2']          # (C,C1,E,KW2), (C,)
    w3, b3 = params['w3'], params['b3']          # (OUT,C,1,KW3), (OUT,)
    C1, _, KH1, KW1 = w1.shape
    C, C1b, KH2, KW2 = w2.shape
    OUT = b3.shape[0]
    assert KH1 == 1 and C1b == C1 and KH2 == E, \
        "conv2 height must equal n_electrodes (output height collapses to 1)"
    KJ = KW1 + KW2 - 1                           # fused net_1 kernel width (69)
    T2 = T - KJ + 1                              # net_1 output width
    POOL_K, POOL_S = 150, 30
    NP = (T2 - POOL_K) // POOL_S + 1             # pooled width
    KW3 = w3.shape[-1]
    assert NP == KW3, "pooled width must equal net_2 kernel width"

    # ---- fold net_1 = conv1 o conv2 (no nonlinearity between them -> exact) ----
    # Weff[c, e, j] = sum_ci (w2[c, ci, e, :] * w1[ci, :])_fullconv[j]
    w1m = w1.reshape(C1, KW1)
    w2t = jnp.transpose(w2, (0, 2, 1, 3))                        # (C, E, C1, KW2)
    conv_ci = jax.vmap(jnp.convolve)                             # over C1
    per_ce = lambda w2_ce: jnp.sum(conv_ci(w2_ce, w1m), axis=0)  # (KJ,)
    w_eff = jax.vmap(jax.vmap(per_ce))(w2t)                      # (C, E, KJ)
    # lane-dense (C, KJ*E); column j*E + e matches the in-kernel im2col rows
    wfl = jnp.transpose(w_eff, (0, 2, 1)).reshape(C, KJ * E).astype(jnp.bfloat16)
    beff = (b2 + jnp.einsum('oiek,i->o', w2, b1)).reshape(C, 1).astype(jnp.float32)

    # ---- AvgPool2d((1,150), stride (1,30)) as a (T2, NP) matrix of 1/150 ----
    t_idx = jnp.arange(T2)[:, None]
    p_idx = jnp.arange(NP)[None, :]
    pool_mat = jnp.where(
        (t_idx >= p_idx * POOL_S) & (t_idx < p_idx * POOL_S + POOL_K),
        1.0 / POOL_K, 0.0).astype(jnp.float32)

    w3r = w3[:, :, 0, :].astype(jnp.float32)                     # (OUT, C, NP)
    b3r = b3.reshape(1, OUT).astype(jnp.float32)
    wm = params['wm'].astype(jnp.float32)
    ws = params['ws'].astype(jnp.float32)

    # ---- batch blocking: a few samples per grid step, >= 2 steps when possible
    bblk = max(1, min(8, (B + 1) // 2))
    Bp = ((B + bblk - 1) // bblk) * bblk
    xp = x if Bp == B else jnp.pad(x, ((0, Bp - B), (0, 0), (0, 0)))

    out = pl.pallas_call(
        _forward_kernel,
        out_shape=jax.ShapeDtypeStruct((Bp, 2, OUT), jnp.float32),
        grid=(Bp // bblk,),
        in_specs=[
            pl.BlockSpec((bblk, E, T), lambda b: (b, 0, 0)),      # x
            pl.BlockSpec((E, E), lambda b: (0, 0)),               # mean_net W
            pl.BlockSpec((E, E), lambda b: (0, 0)),               # std_net W
            pl.BlockSpec((C, KJ * E), lambda b: (0, 0)),          # fused net_1 W (bf16)
            pl.BlockSpec((C, 1), lambda b: (0, 0)),               # fused net_1 bias
            pl.BlockSpec((T2, NP), lambda b: (0, 0)),             # pooling matrix
            pl.BlockSpec((OUT, C, NP), lambda b: (0, 0, 0)),      # net_2 W
            pl.BlockSpec((1, OUT), lambda b: (0, 0)),             # net_2 bias
        ],
        out_specs=pl.BlockSpec((bblk, 2, OUT), lambda b: (b, 0, 0)),
        scratch_shapes=[pltpu.VMEM((KJ * E, T2), jnp.bfloat16)],  # im2col slab
        compiler_params=pltpu.CompilerParams(
            dimension_semantics=("parallel",)),
    )(xp, wm, ws, wfl, beff, pool_mat, w3r, b3r)
    return out[:B, 0, :], out[:B, 1, :]


def reference_forward(x, params):
    """Pure-JAX mirror of the PyTorch forward (eval mode, two-conv path)."""
    x4 = x[:, None, :, :]                                      # (B,1,E,T)
    mean = x4.mean(axis=3)                                     # (B,1,E)
    shift = mean @ params['wm'].T
    x_shifted = x4 - shift[..., None]
    std = jnp.std(x_shifted, axis=3, ddof=1)
    scale = std @ params['ws'].T
    x_scaled = x_shifted * scale[..., None]
    dn = ('NCHW', 'OIHW', 'NCHW')
    out = lax.conv_general_dilated(x_scaled, params['w1'], (1, 1), 'VALID',
                                   dimension_numbers=dn)
    out = out + params['b1'][None, :, None, None]
    out = lax.conv_general_dilated(out, params['w2'], (1, 1), 'VALID',
                                   dimension_numbers=dn)
    out = out + params['b2'][None, :, None, None]
    out = out * out
    out = lax.reduce_window(out, 0.0, lax.add, (1, 1, 1, 150),
                            (1, 1, 1, 30), 'VALID') / 150.0
    out = jnp.log(jnp.clip(out, 1e-6))
    out = lax.conv_general_dilated(out, params['w3'], (1, 1), 'VALID',
                                   dimension_numbers=dn)
    out = out + params['b3'][None, :, None, None]
    prob = jax.nn.softmax(out, axis=1)
    log_prob = jax.nn.log_softmax(out, axis=1)
    return jnp.squeeze(log_prob), jnp.squeeze(prob)


if __name__ == "__main__":
    B, E, T, OUT = 2, 20, 488, 4   # T >= 488 so net_2's (1,10) conv fits exactly
    key = jax.random.PRNGKey(0)
    ks = jax.random.split(key, 10)

    def init(k, shape, fan_in):
        return jax.random.normal(k, shape, jnp.float32) / jnp.sqrt(float(fan_in))

    params = dict(
        wm=init(ks[0], (E, E), E),                      # mean_net (no bias)
        ws=init(ks[1], (E, E), E),                      # std_net (no bias)
        w1=init(ks[2], (10, 1, 1, 30), 30),             # Conv2d(1,10,(1,30))
        b1=init(ks[3], (10,), 30),
        w2=init(ks[4], (10, 10, 20, 40), 10 * 20 * 40), # Conv2d(10,10,(20,40))
        b2=init(ks[5], (10,), 10 * 20 * 40),
        w3=init(ks[6], (OUT, 10, 1, 10), 10 * 10),      # Conv2d(10,OUT,(1,10))
        b3=init(ks[7], (OUT,), 10 * 10),
    )

    x = jax.random.normal(ks[8], (B, E, T), jnp.float32)

    logp, prob = shift_scale_eeg_classify(x, params)
    jax.block_until_ready((logp, prob))

    ref_logp, ref_prob = reference_forward(x, params)
    assert logp.shape == (B, OUT) and prob.shape == (B, OUT)
    assert bool(jnp.allclose(prob, ref_prob, atol=1e-2, rtol=1e-2))
    # logp gets a little extra absolute headroom: the fused-conv MXU matmul uses
    # bf16 operands (f32 accumulate), per the per-generation perf guidance.
    assert bool(jnp.allclose(logp, ref_logp, atol=2e-2, rtol=2e-2))
    print("KERNEL_OK")
</pallas_src>

<mosaic_0001>
module attributes {stable_mosaic.version = 11 : i64} {
  func.func @_forward_kernel(%arg0: i32, %arg1: memref<1x20x488xf32, #tpu.memory_space<vmem>>, %arg2: memref<20x20xf32, #tpu.memory_space<vmem>>, %arg3: memref<20x20xf32, #tpu.memory_space<vmem>>, %arg4: memref<10x1380xbf16, #tpu.memory_space<vmem>>, %arg5: memref<10x1xf32, #tpu.memory_space<vmem>>, %arg6: memref<420x10xf32, #tpu.memory_space<vmem>>, %arg7: memref<4x10x10xf32, #tpu.memory_space<vmem>>, %arg8: memref<1x4xf32, #tpu.memory_space<vmem>>, %arg9: memref<1x2x4xf32, #tpu.memory_space<vmem>>, %arg10: memref<1380x420xbf16, #tpu.memory_space<vmem>>) attributes {dimension_semantics = [#tpu.dimension_semantics<parallel>], iteration_bounds = array<i64: 2>, scalar_prefetch = 0 : i64, scratch_operands = 1 : i64, tpu.core_type = #tpu.core_type<tc>, window_params = [{transform_indices = @transform_0, window_bounds = array<i64: 1, 20, 488>}, {pipeline_mode = #tpu.pipeline_mode<synchronous>, transform_indices = @transform_1, window_bounds = array<i64: 20, 20>}, {pipeline_mode = #tpu.pipeline_mode<synchronous>, transform_indices = @transform_2, window_bounds = array<i64: 20, 20>}, {pipeline_mode = #tpu.pipeline_mode<synchronous>, transform_indices = @transform_3, window_bounds = array<i64: 10, 1380>}, {pipeline_mode = #tpu.pipeline_mode<synchronous>, transform_indices = @transform_4, window_bounds = array<i64: 10, 1>}, {pipeline_mode = #tpu.pipeline_mode<synchronous>, transform_indices = @transform_5, window_bounds = array<i64: 420, 10>}, {pipeline_mode = #tpu.pipeline_mode<synchronous>, transform_indices = @transform_6, window_bounds = array<i64: 4, 10, 10>}, {pipeline_mode = #tpu.pipeline_mode<synchronous>, transform_indices = @transform_7, window_bounds = array<i64: 1, 4>}, {transform_indices = @transform_8, window_bounds = array<i64: 1, 2, 4>}]} {
    %c0_i32 = arith.constant 0 : i32
    %0 = arith.index_cast %c0_i32 : i32 to index
    %c0 = arith.constant 0 : index
    %c0_0 = arith.constant 0 : index
    %1 = vector.load %arg1[%0, %c0, %c0_0] : memref<1x20x488xf32, #tpu.memory_space<vmem>>, vector<1x20x488xf32>
    %2 = vector.shape_cast %1 : vector<1x20x488xf32> to vector<20x488xf32>
    %cst = arith.constant dense<0.000000e+00> : vector<20xf32>
    %3 = vector.multi_reduction <add>, %2, %cst [1] : vector<20x488xf32> to vector<20xf32>
    %4 = vector.shape_cast %3 : vector<20xf32> to vector<20x1xf32>
    %cst_1 = arith.constant 4.880000e+02 : f32
    %5 = vector.broadcast %cst_1 : f32 to vector<20x1xf32>
    %6 = arith.divf %4, %5 : vector<20x1xf32>
    %c0_2 = arith.constant 0 : index
    %c0_3 = arith.constant 0 : index
    %7 = vector.load %arg2[%c0_2, %c0_3] : memref<20x20xf32, #tpu.memory_space<vmem>>, vector<20x20xf32>
    %cst_4 = arith.constant dense<0.000000e+00> : vector<20x1xf32>
    %8 = tpu.matmul %7, %6, %cst_4 {dimension_numbers = #tpu.dot_dimension_numbers<[1], [0], [0], [1], [0, 0, 1, 1], [], []>} : vector<20x20xf32>, vector<20x1xf32>, vector<20x1xf32> -> vector<20x1xf32>
    %9 = vector.broadcast %8 : vector<20x1xf32> to vector<20x488xf32>
    %10 = arith.subf %2, %9 : vector<20x488xf32>
    %cst_5 = arith.constant dense<0.000000e+00> : vector<20xf32>
    %11 = vector.multi_reduction <add>, %10, %cst_5 [1] : vector<20x488xf32> to vector<20xf32>
    %12 = vector.shape_cast %11 : vector<20xf32> to vector<20x1xf32>
    %cst_6 = arith.constant 4.880000e+02 : f32
    %13 = vector.broadcast %cst_6 : f32 to vector<20x1xf32>
    %14 = arith.divf %12, %13 : vector<20x1xf32>
    %15 = vector.broadcast %14 : vector<20x1xf32> to vector<20x488xf32>
    %16 = arith.subf %10, %15 : vector<20x488xf32>
    %17 = arith.mulf %16, %16 : vector<20x488xf32>
    %cst_7 = arith.constant dense<0.000000e+00> : vector<20xf32>
    %18 = vector.multi_reduction <add>, %17, %cst_7 [1] : vector<20x488xf32> to vector<20xf32>
    %19 = vector.shape_cast %18 : vector<20xf32> to vector<20x1xf32>
    %cst_8 = arith.constant 0.00205338816 : f32
    %20 = vector.broadcast %cst_8 : f32 to vector<20x1xf32>
    %21 = arith.mulf %19, %20 : vector<20x1xf32>
    %c0_9 = arith.constant 0 : index
    %c0_10 = arith.constant 0 : index
    %22 = vector.load %arg3[%c0_9, %c0_10] : memref<20x20xf32, #tpu.memory_space<vmem>>, vector<20x20xf32>
    %23 = math.sqrt %21 : vector<20x1xf32>
    %cst_11 = arith.constant dense<0.000000e+00> : vector<20x1xf32>
    %24 = tpu.matmul %22, %23, %cst_11 {dimension_numbers = #tpu.dot_dimension_numbers<[1], [0], [0], [1], [0, 0, 1, 1], [], []>} : vector<20x20xf32>, vector<20x1xf32>, vector<20x1xf32> -> vector<20x1xf32>
    %25 = vector.broadcast %24 : vector<20x1xf32> to vector<20x488xf32>
    %26 = arith.mulf %10, %25 : vector<20x488xf32>
    %27 = arith.truncf %26 : vector<20x488xf32> to vector<20x488xbf16>
    %28 = vector.extract_strided_slice %27 {offsets = [0, 0], sizes = [20, 420], strides = [1, 1]} : vector<20x488xbf16> to vector<20x420xbf16>
    %c0_12 = arith.constant 0 : index
    %c0_13 = arith.constant 0 : index
    %29 = vector.load %arg10[%c0_12, %c0_13] : memref<1380x420xbf16, #tpu.memory_space<vmem>>, vector<20x420xbf16>
    tpu.vector_store %arg10[%c0_12, %c0_13], %28 {strides = array<i32>} : memref<1380x420xbf16, #tpu.memory_space<vmem>>, vector<20x420xbf16>,
    %30 = vector.extract_strided_slice %27 {offsets = [0, 1], sizes = [20, 420], strides = [1, 1]} : vector<20x488xbf16> to vector<20x420xbf16>
    %c20 = arith.constant 20 : index
    %c0_14 = arith.constant 0 : index
    %31 = vector.load %arg10[%c20, %c0_14] : memref<1380x420xbf16, #tpu.memory_space<vmem>>, vector<20x420xbf16>
    tpu.vector_store %arg10[%c20, %c0_14], %30 {strides = array<i32>} : memref<1380x420xbf16, #tpu.memory_space<vmem>>, vector<20x420xbf16>,
    %32 = vector.extract_strided_slice %27 {offsets = [0, 2], sizes = [20, 420], strides = [1, 1]} : vector<20x488xbf16> to vector<20x420xbf16>
    %c40 = arith.constant 40 : index
    %c0_15 = arith.constant 0 : index
    %33 = vector.load %arg10[%c40, %c0_15] : memref<1380x420xbf16, #tpu.memory_space<vmem>>, vector<20x420xbf16>
    tpu.vector_store %arg10[%c40, %c0_15], %32 {strides = array<i32>} : memref<1380x420xbf16, #tpu.memory_space<vmem>>, vector<20x420xbf16>,
    %34 = vector.extract_strided_slice %27 {offsets = [0, 3], sizes = [20, 420], strides = [1, 1]} : vector<20x488xbf16> to vector<20x420xbf16>
    %c60 = arith.constant 60 : index
    %c0_16 = arith.constant 0 : index
    %35 = vector.load %arg10[%c60, %c0_16] : memref<1380x420xbf16, #tpu.memory_space<vmem>>, vector<20x420xbf16>
    tpu.vector_store %arg10[%c60, %c0_16], %34 {strides = array<i32>} : memref<1380x420xbf16, #tpu.memory_space<vmem>>, vector<20x420xbf16>,
    %36 = vector.extract_strided_slice %27 {offsets = [0, 4], sizes = [20, 420], strides = [1, 1]} : vector<20x488xbf16> to vector<20x420xbf16>
    %c80 = arith.constant 80 : index
    %c0_17 = arith.constant 0 : index
    %37 = vector.load %arg10[%c80, %c0_17] : memref<1380x420xbf16, #tpu.memory_space<vmem>>, vector<20x420xbf16>
    tpu.vector_store %arg10[%c80, %c0_17], %36 {strides = array<i32>} : memref<1380x420xbf16, #tpu.memory_space<vmem>>, vector<20x420xbf16>,
    %38 = vector.extract_strided_slice %27 {offsets = [0, 5], sizes = [20, 420], strides = [1, 1]} : vector<20x488xbf16> to vector<20x420xbf16>
    %c100 = arith.constant 100 : index
    %c0_18 = arith.constant 0 : index
    %39 = vector.load %arg10[%c100, %c0_18] : memref<1380x420xbf16, #tpu.memory_space<vmem>>, vector<20x420xbf16>
    tpu.vector_store %arg10[%c100, %c0_18], %38 {strides = array<i32>} : memref<1380x420xbf16, #tpu.memory_space<vmem>>, vector<20x420xbf16>,
    %40 = vector.extract_strided_slice %27 {offsets = [0, 6], sizes = [20, 420], strides = [1, 1]} : vector<20x488xbf16> to vector<20x420xbf16>
    %c120 = arith.constant 120 : index
    %c0_19 = arith.constant 0 : index
    %41 = vector.load %arg10[%c120, %c0_19] : memref<1380x420xbf16, #tpu.memory_space<vmem>>, vector<20x420xbf16>
    tpu.vector_store %arg10[%c120, %c0_19], %40 {strides = array<i32>} : memref<1380x420xbf16, #tpu.memory_space<vmem>>, vector<20x420xbf16>,
    %42 = vector.extract_strided_slice %27 {offsets = [0, 7], sizes = [20, 420], strides = [1, 1]} : vector<20x488xbf16> to vector<20x420xbf16>
    %c140 = arith.constant 140 : index
    %c0_20 = arith.constant 0 : index
    %43 = vector.load %arg10[%c140, %c0_20] : memref<1380x420xbf16, #tpu.memory_space<vmem>>, vector<20x420xbf16>
    tpu.vector_store %arg10[%c140, %c0_20], %42 {strides = array<i32>} : memref<1380x420xbf16, #tpu.memory_space<vmem>>, vector<20x420xbf16>,
    %44 = vector.extract_strided_slice %27 {offsets = [0, 8], sizes = [20, 420], strides = [1, 1]} : vector<20x488xbf16> to vector<20x420xbf16>
    %c160 = arith.constant 160 : index
    %c0_21 = arith.constant 0 : index
    %45 = vector.load %arg10[%c160, %c0_21] : memref<1380x420xbf16, #tpu.memory_space<vmem>>, vector<20x420xbf16>
    tpu.vector_store %arg10[%c160, %c0_21], %44 {strides = array<i32>} : memref<1380x420xbf16, #tpu.memory_space<vmem>>, vector<20x420xbf16>,
    %46 = vector.extract_strided_slice %27 {offsets = [0, 9], sizes = [20, 420], strides = [1, 1]} : vector<20x488xbf16> to vector<20x420xbf16>
    %c180 = arith.constant 180 : index
    %c0_22 = arith.constant 0 : index
    %47 = vector.load %arg10[%c180, %c0_22] : memref<1380x420xbf16, #tpu.memory_space<vmem>>, vector<20x420xbf16>
    tpu.vector_store %arg10[%c180, %c0_22], %46 {strides = array<i32>} : memref<1380x420xbf16, #tpu.memory_space<vmem>>, vector<20x420xbf16>,
    %48 = vector.extract_strided_slice %27 {offsets = [0, 10], sizes = [20, 420], strides = [1, 1]} : vector<20x488xbf16> to vector<20x420xbf16>
    %c200 = arith.constant 200 : index
    %c0_23 = arith.constant 0 : index
    %49 = vector.load %arg10[%c200, %c0_23] : memref<1380x420xbf16, #tpu.memory_space<vmem>>, vector<20x420xbf16>
    tpu.vector_store %arg10[%c200, %c0_23], %48 {strides = array<i32>} : memref<1380x420xbf16, #tpu.memory_space<vmem>>, vector<20x420xbf16>,
    %50 = vector.extract_strided_slice %27 {offsets = [0, 11], sizes = [20, 420], strides = [1, 1]} : vector<20x488xbf16> to vector<20x420xbf16>
    %c220 = arith.constant 220 : index
    %c0_24 = arith.constant 0 : index
    %51 = vector.load %arg10[%c220, %c0_24] : memref<1380x420xbf16, #tpu.memory_space<vmem>>, vector<20x420xbf16>
    tpu.vector_store %arg10[%c220, %c0_24], %50 {strides = array<i32>} : memref<1380x420xbf16, #tpu.memory_space<vmem>>, vector<20x420xbf16>,
    %52 = vector.extract_strided_slice %27 {offsets = [0, 12], sizes = [20, 420], strides = [1, 1]} : vector<20x488xbf16> to vector<20x420xbf16>
    %c240 = arith.constant 240 : index
    %c0_25 = arith.constant 0 : index
    %53 = vector.load %arg10[%c240, %c0_25] : memref<1380x420xbf16, #tpu.memory_space<vmem>>, vector<20x420xbf16>
    tpu.vector_store %arg10[%c240, %c0_25], %52 {strides = array<i32>} : memref<1380x420xbf16, #tpu.memory_space<vmem>>, vector<20x420xbf16>,
    %54 = vector.extract_strided_slice %27 {offsets = [0, 13], sizes = [20, 420], strides = [1, 1]} : vector<20x488xbf16> to vector<20x420xbf16>
    %c260 = arith.constant 260 : index
    %c0_26 = arith.constant 0 : index
    %55 = vector.load %arg10[%c260, %c0_26] : memref<1380x420xbf16, #tpu.memory_space<vmem>>, vector<20x420xbf16>
    tpu.vector_store %arg10[%c260, %c0_26], %54 {strides = array<i32>} : memref<1380x420xbf16, #tpu.memory_space<vmem>>, vector<20x420xbf16>,
    %56 = vector.extract_strided_slice %27 {offsets = [0, 14], sizes = [20, 420], strides = [1, 1]} : vector<20x488xbf16> to vector<20x420xbf16>
    %c280 = arith.constant 280 : index
    %c0_27 = arith.constant 0 : index
    %57 = vector.load %arg10[%c280, %c0_27] : memref<1380x420xbf16, #tpu.memory_space<vmem>>, vector<20x420xbf16>
    tpu.vector_store %arg10[%c280, %c0_27], %56 {strides = array<i32>} : memref<1380x420xbf16, #tpu.memory_space<vmem>>, vector<20x420xbf16>,
    %58 = vector.extract_strided_slice %27 {offsets = [0, 15], sizes = [20, 420], strides = [1, 1]} : vector<20x488xbf16> to vector<20x420xbf16>
    %c300 = arith.constant 300 : index
    %c0_28 = arith.constant 0 : index
    %59 = vector.load %arg10[%c300, %c0_28] : memref<1380x420xbf16, #tpu.memory_space<vmem>>, vector<20x420xbf16>
    tpu.vector_store %arg10[%c300, %c0_28], %58 {strides = array<i32>} : memref<1380x420xbf16, #tpu.memory_space<vmem>>, vector<20x420xbf16>,
    %60 = vector.extract_strided_slice %27 {offsets = [0, 16], sizes = [20, 420], strides = [1, 1]} : vector<20x488xbf16> to vector<20x420xbf16>
    %c320 = arith.constant 320 : index
    %c0_29 = arith.constant 0 : index
    %61 = vector.load %arg10[%c320, %c0_29] : memref<1380x420xbf16, #tpu.memory_space<vmem>>, vector<20x420xbf16>
    tpu.vector_store %arg10[%c320, %c0_29], %60 {strides = array<i32>} : memref<1380x420xbf16, #tpu.memory_space<vmem>>, vector<20x420xbf16>,
    %62 = vector.extract_strided_slice %27 {offsets = [0, 17], sizes = [20, 420], strides = [1, 1]} : vector<20x488xbf16> to vector<20x420xbf16>
    %c340 = arith.constant 340 : index
    %c0_30 = arith.constant 0 : index
    %63 = vector.load %arg10[%c340, %c0_30] : memref<1380x420xbf16, #tpu.memory_space<vmem>>, vector<20x420xbf16>
    tpu.vector_store %arg10[%c340, %c0_30], %62 {strides = array<i32>} : memref<1380x420xbf16, #tpu.memory_space<vmem>>, vector<20x420xbf16>,
    %64 = vector.extract_strided_slice %27 {offsets = [0, 18], sizes = [20, 420], strides = [1, 1]} : vector<20x488xbf16> to vector<20x420xbf16>
    %c360 = arith.constant 360 : index
    %c0_31 = arith.constant 0 : index
    %65 = vector.load %arg10[%c360, %c0_31] : memref<1380x420xbf16, #tpu.memory_space<vmem>>, vector<20x420xbf16>
    tpu.vector_store %arg10[%c360, %c0_31], %64 {strides = array<i32>} : memref<1380x420xbf16, #tpu.memory_space<vmem>>, vector<20x420xbf16>,
    %66 = vector.extract_strided_slice %27 {offsets = [0, 19], sizes = [20, 420], strides = [1, 1]} : vector<20x488xbf16> to vector<20x420xbf16>
    %c380 = arith.constant 380 : index
    %c0_32 = arith.constant 0 : index
    %67 = vector.load %arg10[%c380, %c0_32] : memref<1380x420xbf16, #tpu.memory_space<vmem>>, vector<20x420xbf16>
    tpu.vector_store %arg10[%c380, %c0_32], %66 {strides = array<i32>} : memref<1380x420xbf16, #tpu.memory_space<vmem>>, vector<20x420xbf16>,
    %68 = vector.extract_strided_slice %27 {offsets = [0, 20], sizes = [20, 420], strides = [1, 1]} : vector<20x488xbf16> to vector<20x420xbf16>
    %c400 = arith.constant 400 : index
    %c0_33 = arith.constant 0 : index
    %69 = vector.load %arg10[%c400, %c0_33] : memref<1380x420xbf16, #tpu.memory_space<vmem>>, vector<20x420xbf16>
    tpu.vector_store %arg10[%c400, %c0_33], %68 {strides = array<i32>} : memref<1380x420xbf16, #tpu.memory_space<vmem>>, vector<20x420xbf16>,
    %70 = vector.extract_strided_slice %27 {offsets = [0, 21], sizes = [20, 420], strides = [1, 1]} : vector<20x488xbf16> to vector<20x420xbf16>
    %c420 = arith.constant 420 : index
    %c0_34 = arith.constant 0 : index
    %71 = vector.load %arg10[%c420, %c0_34] : memref<1380x420xbf16, #tpu.memory_space<vmem>>, vector<20x420xbf16>
    tpu.vector_store %arg10[%c420, %c0_34], %70 {strides = array<i32>} : memref<1380x420xbf16, #tpu.memory_space<vmem>>, vector<20x420xbf16>,
    %72 = vector.extract_strided_slice %27 {offsets = [0, 22], sizes = [20, 420], strides = [1, 1]} : vector<20x488xbf16> to vector<20x420xbf16>
    %c440 = arith.constant 440 : index
    %c0_35 = arith.constant 0 : index
    %73 = vector.load %arg10[%c440, %c0_35] : memref<1380x420xbf16, #tpu.memory_space<vmem>>, vector<20x420xbf16>
    tpu.vector_store %arg10[%c440, %c0_35], %72 {strides = array<i32>} : memref<1380x420xbf16, #tpu.memory_space<vmem>>, vector<20x420xbf16>,
    %74 = vector.extract_strided_slice %27 {offsets = [0, 23], sizes = [20, 420], strides = [1, 1]} : vector<20x488xbf16> to vector<20x420xbf16>
    %c460 = arith.constant 460 : index
    %c0_36 = arith.constant 0 : index
    %75 = vector.load %arg10[%c460, %c0_36] : memref<1380x420xbf16, #tpu.memory_space<vmem>>, vector<20x420xbf16>
    tpu.vector_store %arg10[%c460, %c0_36], %74 {strides = array<i32>} : memref<1380x420xbf16, #tpu.memory_space<vmem>>, vector<20x420xbf16>,
    %76 = vector.extract_strided_slice %27 {offsets = [0, 24], sizes = [20, 420], strides = [1, 1]} : vector<20x488xbf16> to vector<20x420xbf16>
    %c480 = arith.constant 480 : index
    %c0_37 = arith.constant 0 : index
    %77 = vector.load %arg10[%c480, %c0_37] : memref<1380x420xbf16, #tpu.memory_space<vmem>>, vector<20x420xbf16>
    tpu.vector_store %arg10[%c480, %c0_37], %76 {strides = array<i32>} : memref<1380x420xbf16, #tpu.memory_space<vmem>>, vector<20x420xbf16>,
    %78 = vector.extract_strided_slice %27 {offsets = [0, 25], sizes = [20, 420], strides = [1, 1]} : vector<20x488xbf16> to vector<20x420xbf16>
    %c500 = arith.constant 500 : index
    %c0_38 = arith.constant 0 : index
    %79 = vector.load %arg10[%c500, %c0_38] : memref<1380x420xbf16, #tpu.memory_space<vmem>>, vector<20x420xbf16>
    tpu.vector_store %arg10[%c500, %c0_38], %78 {strides = array<i32>} : memref<1380x420xbf16, #tpu.memory_space<vmem>>, vector<20x420xbf16>,
    %80 = vector.extract_strided_slice %27 {offsets = [0, 26], sizes = [20, 420], strides = [1, 1]} : vector<20x488xbf16> to vector<20x420xbf16>
    %c520 = arith.constant 520 : index
    %c0_39 = arith.constant 0 : index
    %81 = vector.load %arg10[%c520, %c0_39] : memref<1380x420xbf16, #tpu.memory_space<vmem>>, vector<20x420xbf16>
    tpu.vector_store %arg10[%c520, %c0_39], %80 {strides = array<i32>} : memref<1380x420xbf16, #tpu.memory_space<vmem>>, vector<20x420xbf16>,
    %82 = vector.extract_strided_slice %27 {offsets = [0, 27], sizes = [20, 420], strides = [1, 1]} : vector<20x488xbf16> to vector<20x420xbf16>
    %c540 = arith.constant 540 : index
    %c0_40 = arith.constant 0 : index
    %83 = vector.load %arg10[%c540, %c0_40] : memref<1380x420xbf16, #tpu.memory_space<vmem>>, vector<20x420xbf16>
    tpu.vector_store %arg10[%c540, %c0_40], %82 {strides = array<i32>} : memref<1380x420xbf16, #tpu.memory_space<vmem>>, vector<20x420xbf16>,
    %84 = vector.extract_strided_slice %27 {offsets = [0, 28], sizes = [20, 420], strides = [1, 1]} : vector<20x488xbf16> to vector<20x420xbf16>
    %c560 = arith.constant 560 : index
    %c0_41 = arith.constant 0 : index
    %85 = vector.load %arg10[%c560, %c0_41] : memref<1380x420xbf16, #tpu.memory_space<vmem>>, vector<20x420xbf16>
    tpu.vector_store %arg10[%c560, %c0_41], %84 {strides = array<i32>} : memref<1380x420xbf16, #tpu.memory_space<vmem>>, vector<20x420xbf16>,
    %86 = vector.extract_strided_slice %27 {offsets = [0, 29], sizes = [20, 420], strides = [1, 1]} : vector<20x488xbf16> to vector<20x420xbf16>
    %c580 = arith.constant 580 : index
    %c0_42 = arith.constant 0 : index
    %87 = vector.load %arg10[%c580, %c0_42] : memref<1380x420xbf16, #tpu.memory_space<vmem>>, vector<20x420xbf16>
    tpu.vector_store %arg10[%c580, %c0_42], %86 {strides = array<i32>} : memref<1380x420xbf16, #tpu.memory_space<vmem>>, vector<20x420xbf16>,
    %88 = vector.extract_strided_slice %27 {offsets = [0, 30], sizes = [20, 420], strides = [1, 1]} : vector<20x488xbf16> to vector<20x420xbf16>
    %c600 = arith.constant 600 : index
    %c0_43 = arith.constant 0 : index
    %89 = vector.load %arg10[%c600, %c0_43] : memref<1380x420xbf16, #tpu.memory_space<vmem>>, vector<20x420xbf16>
    tpu.vector_store %arg10[%c600, %c0_43], %88 {strides = array<i32>} : memref<1380x420xbf16, #tpu.memory_space<vmem>>, vector<20x420xbf16>,
    %90 = vector.extract_strided_slice %27 {offsets = [0, 31], sizes = [20, 420], strides = [1, 1]} : vector<20x488xbf16> to vector<20x420xbf16>
    %c620 = arith.constant 620 : index
    %c0_44 = arith.constant 0 : index
    %91 = vector.load %arg10[%c620, %c0_44] : memref<1380x420xbf16, #tpu.memory_space<vmem>>, vector<20x420xbf16>
    tpu.vector_store %arg10[%c620, %c0_44], %90 {strides = array<i32>} : memref<1380x420xbf16, #tpu.memory_space<vmem>>, vector<20x420xbf16>,
    %92 = vector.extract_strided_slice %27 {offsets = [0, 32], sizes = [20, 420], strides = [1, 1]} : vector<20x488xbf16> to vector<20x420xbf16>
    %c640 = arith.constant 640 : index
    %c0_45 = arith.constant 0 : index
    %93 = vector.load %arg10[%c640, %c0_45] : memref<1380x420xbf16, #tpu.memory_space<vmem>>, vector<20x420xbf16>
    tpu.vector_store %arg10[%c640, %c0_45], %92 {strides = array<i32>} : memref<1380x420xbf16, #tpu.memory_space<vmem>>, vector<20x420xbf16>,
    %94 = vector.extract_strided_slice %27 {offsets = [0, 33], sizes = [20, 420], strides = [1, 1]} : vector<20x488xbf16> to vector<20x420xbf16>
    %c660 = arith.constant 660 : index
    %c0_46 = arith.constant 0 : index
    %95 = vector.load %arg10[%c660, %c0_46] : memref<1380x420xbf16, #tpu.memory_space<vmem>>, vector<20x420xbf16>
    tpu.vector_store %arg10[%c660, %c0_46], %94 {strides = array<i32>} : memref<1380x420xbf16, #tpu.memory_space<vmem>>, vector<20x420xbf16>,
    %96 = vector.extract_strided_slice %27 {offsets = [0, 34], sizes = [20, 420], strides = [1, 1]} : vector<20x488xbf16> to vector<20x420xbf16>
    %c680 = arith.constant 680 : index
    %c0_47 = arith.constant 0 : index
    %97 = vector.load %arg10[%c680, %c0_47] : memref<1380x420xbf16, #tpu.memory_space<vmem>>, vector<20x420xbf16>
    tpu.vector_store %arg10[%c680, %c0_47], %96 {strides = array<i32>} : memref<1380x420xbf16, #tpu.memory_space<vmem>>, vector<20x420xbf16>,
    %98 = vector.extract_strided_slice %27 {offsets = [0, 35], sizes = [20, 420], strides = [1, 1]} : vector<20x488xbf16> to vector<20x420xbf16>
    %c700 = arith.constant 700 : index
    %c0_48 = arith.constant 0 : index
    %99 = vector.load %arg10[%c700, %c0_48] : memref<1380x420xbf16, #tpu.memory_space<vmem>>, vector<20x420xbf16>
    tpu.vector_store %arg10[%c700, %c0_48], %98 {strides = array<i32>} : memref<1380x420xbf16, #tpu.memory_space<vmem>>, vector<20x420xbf16>,
    %100 = vector.extract_strided_slice %27 {offsets = [0, 36], sizes = [20, 420], strides = [1, 1]} : vector<20x488xbf16> to vector<20x420xbf16>
    %c720 = arith.constant 720 : index
    %c0_49 = arith.constant 0 : index
    %101 = vector.load %arg10[%c720, %c0_49] : memref<1380x420xbf16, #tpu.memory_space<vmem>>, vector<20x420xbf16>
    tpu.vector_store %arg10[%c720, %c0_49], %100 {strides = array<i32>} : memref<1380x420xbf16, #tpu.memory_space<vmem>>, vector<20x420xbf16>,
    %102 = vector.extract_strided_slice %27 {offsets = [0, 37], sizes = [20, 420], strides = [1, 1]} : vector<20x488xbf16> to vector<20x420xbf16>
    %c740 = arith.constant 740 : index
    %c0_50 = arith.constant 0 : index
    %103 = vector.load %arg10[%c740, %c0_50] : memref<1380x420xbf16, #tpu.memory_space<vmem>>, vector<20x420xbf16>
    tpu.vector_store %arg10[%c740, %c0_50], %102 {strides = array<i32>} : memref<1380x420xbf16, #tpu.memory_space<vmem>>, vector<20x420xbf16>,
    %104 = vector.extract_strided_slice %27 {offsets = [0, 38], sizes = [20, 420], strides = [1, 1]} : vector<20x488xbf16> to vector<20x420xbf16>
    %c760 = arith.constant 760 : index
    %c0_51 = arith.constant 0 : index
    %105 = vector.load %arg10[%c760, %c0_51] : memref<1380x420xbf16, #tpu.memory_space<vmem>>, vector<20x420xbf16>
    tpu.vector_store %arg10[%c760, %c0_51], %104 {strides = array<i32>} : memref<1380x420xbf16, #tpu.memory_space<vmem>>, vector<20x420xbf16>,
    %106 = vector.extract_strided_slice %27 {offsets = [0, 39], sizes = [20, 420], strides = [1, 1]} : vector<20x488xbf16> to vector<20x420xbf16>
    %c780 = arith.constant 780 : index
    %c0_52 = arith.constant 0 : index
    %107 = vector.load %arg10[%c780, %c0_52] : memref<1380x420xbf16, #tpu.memory_space<vmem>>, vector<20x420xbf16>
    tpu.vector_store %arg10[%c780, %c0_52], %106 {strides = array<i32>} : memref<1380x420xbf16, #tpu.memory_space<vmem>>, vector<20x420xbf16>,
    %108 = vector.extract_strided_slice %27 {offsets = [0, 40], sizes = [20, 420], strides = [1, 1]} : vector<20x488xbf16> to vector<20x420xbf16>
    %c800 = arith.constant 800 : index
    %c0_53 = arith.constant 0 : index
    %109 = vector.load %arg10[%c800, %c0_53] : memref<1380x420xbf16, #tpu.memory_space<vmem>>, vector<20x420xbf16>
    tpu.vector_store %arg10[%c800, %c0_53], %108 {strides = array<i32>} : memref<1380x420xbf16, #tpu.memory_space<vmem>>, vector<20x420xbf16>,
    %110 = vector.extract_strided_slice %27 {offsets = [0, 41], sizes = [20, 420], strides = [1, 1]} : vector<20x488xbf16> to vector<20x420xbf16>
    %c820 = arith.constant 820 : index
    %c0_54 = arith.constant 0 : index
    %111 = vector.load %arg10[%c820, %c0_54] : memref<1380x420xbf16, #tpu.memory_space<vmem>>, vector<20x420xbf16>
    tpu.vector_store %arg10[%c820, %c0_54], %110 {strides = array<i32>} : memref<1380x420xbf16, #tpu.memory_space<vmem>>, vector<20x420xbf16>,
    %112 = vector.extract_strided_slice %27 {offsets = [0, 42], sizes = [20, 420], strides = [1, 1]} : vector<20x488xbf16> to vector<20x420xbf16>
    %c840 = arith.constant 840 : index
    %c0_55 = arith.constant 0 : index
    %113 = vector.load %arg10[%c840, %c0_55] : memref<1380x420xbf16, #tpu.memory_space<vmem>>, vector<20x420xbf16>
    tpu.vector_store %arg10[%c840, %c0_55], %112 {strides = array<i32>} : memref<1380x420xbf16, #tpu.memory_space<vmem>>, vector<20x420xbf16>,
    %114 = vector.extract_strided_slice %27 {offsets = [0, 43], sizes = [20, 420], strides = [1, 1]} : vector<20x488xbf16> to vector<20x420xbf16>
    %c860 = arith.constant 860 : index
    %c0_56 = arith.constant 0 : index
    %115 = vector.load %arg10[%c860, %c0_56] : memref<1380x420xbf16, #tpu.memory_space<vmem>>, vector<20x420xbf16>
    tpu.vector_store %arg10[%c860, %c0_56], %114 {strides = array<i32>} : memref<1380x420xbf16, #tpu.memory_space<vmem>>, vector<20x420xbf16>,
    %116 = vector.extract_strided_slice %27 {offsets = [0, 44], sizes = [20, 420], strides = [1, 1]} : vector<20x488xbf16> to vector<20x420xbf16>
    %c880 = arith.constant 880 : index
    %c0_57 = arith.constant 0 : index
    %117 = vector.load %arg10[%c880, %c0_57] : memref<1380x420xbf16, #tpu.memory_space<vmem>>, vector<20x420xbf16>
    tpu.vector_store %arg10[%c880, %c0_57], %116 {strides = array<i32>} : memref<1380x420xbf16, #tpu.memory_space<vmem>>, vector<20x420xbf16>,
    %118 = vector.extract_strided_slice %27 {offsets = [0, 45], sizes = [20, 420], strides = [1, 1]} : vector<20x488xbf16> to vector<20x420xbf16>
    %c900 = arith.constant 900 : index
    %c0_58 = arith.constant 0 : index
    %119 = vector.load %arg10[%c900, %c0_58] : memref<1380x420xbf16, #tpu.memory_space<vmem>>, vector<20x420xbf16>
    tpu.vector_store %arg10[%c900, %c0_58], %118 {strides = array<i32>} : memref<1380x420xbf16, #tpu.memory_space<vmem>>, vector<20x420xbf16>,
    %120 = vector.extract_strided_slice %27 {offsets = [0, 46], sizes = [20, 420], strides = [1, 1]} : vector<20x488xbf16> to vector<20x420xbf16>
    %c920 = arith.constant 920 : index
    %c0_59 = arith.constant 0 : index
    %121 = vector.load %arg10[%c920, %c0_59] : memref<1380x420xbf16, #tpu.memory_space<vmem>>, vector<20x420xbf16>
    tpu.vector_store %arg10[%c920, %c0_59], %120 {strides = array<i32>} : memref<1380x420xbf16, #tpu.memory_space<vmem>>, vector<20x420xbf16>,
    %122 = vector.extract_strided_slice %27 {offsets = [0, 47], sizes = [20, 420], strides = [1, 1]} : vector<20x488xbf16> to vector<20x420xbf16>
    %c940 = arith.constant 940 : index
    %c0_60 = arith.constant 0 : index
    %123 = vector.load %arg10[%c940, %c0_60] : memref<1380x420xbf16, #tpu.memory_space<vmem>>, vector<20x420xbf16>
    tpu.vector_store %arg10[%c940, %c0_60], %122 {strides = array<i32>} : memref<1380x420xbf16, #tpu.memory_space<vmem>>, vector<20x420xbf16>,
    %124 = vector.extract_strided_slice %27 {offsets = [0, 48], sizes = [20, 420], strides = [1, 1]} : vector<20x488xbf16> to vector<20x420xbf16>
    %c960 = arith.constant 960 : index
    %c0_61 = arith.constant 0 : index
    %125 = vector.load %arg10[%c960, %c0_61] : memref<1380x420xbf16, #tpu.memory_space<vmem>>, vector<20x420xbf16>
    tpu.vector_store %arg10[%c960, %c0_61], %124 {strides = array<i32>} : memref<1380x420xbf16, #tpu.memory_space<vmem>>, vector<20x420xbf16>,
    %126 = vector.extract_strided_slice %27 {offsets = [0, 49], sizes = [20, 420], strides = [1, 1]} : vector<20x488xbf16> to vector<20x420xbf16>
    %c980 = arith.constant 980 : index
    %c0_62 = arith.constant 0 : index
    %127 = vector.load %arg10[%c980, %c0_62] : memref<1380x420xbf16, #tpu.memory_space<vmem>>, vector<20x420xbf16>
    tpu.vector_store %arg10[%c980, %c0_62], %126 {strides = array<i32>} : memref<1380x420xbf16, #tpu.memory_space<vmem>>, vector<20x420xbf16>,
    %128 = vector.extract_strided_slice %27 {offsets = [0, 50], sizes = [20, 420], strides = [1, 1]} : vector<20x488xbf16> to vector<20x420xbf16>
    %c1000 = arith.constant 1000 : index
    %c0_63 = arith.constant 0 : index
    %129 = vector.load %arg10[%c1000, %c0_63] : memref<1380x420xbf16, #tpu.memory_space<vmem>>, vector<20x420xbf16>
    tpu.vector_store %arg10[%c1000, %c0_63], %128 {strides = array<i32>} : memref<1380x420xbf16, #tpu.memory_space<vmem>>, vector<20x420xbf16>,
    %130 = vector.extract_strided_slice %27 {offsets = [0, 51], sizes = [20, 420], strides = [1, 1]} : vector<20x488xbf16> to vector<20x420xbf16>
    %c1020 = arith.constant 1020 : index
    %c0_64 = arith.constant 0 : index
    %131 = vector.load %arg10[%c1020, %c0_64] : memref<1380x420xbf16, #tpu.memory_space<vmem>>, vector<20x420xbf16>
    tpu.vector_store %arg10[%c1020, %c0_64], %130 {strides = array<i32>} : memref<1380x420xbf16, #tpu.memory_space<vmem>>, vector<20x420xbf16>,
    %132 = vector.extract_strided_slice %27 {offsets = [0, 52], sizes = [20, 420], strides = [1, 1]} : vector<20x488xbf16> to vector<20x420xbf16>
    %c1040 = arith.constant 1040 : index
    %c0_65 = arith.constant 0 : index
    %133 = vector.load %arg10[%c1040, %c0_65] : memref<1380x420xbf16, #tpu.memory_space<vmem>>, vector<20x420xbf16>
    tpu.vector_store %arg10[%c1040, %c0_65], %132 {strides = array<i32>} : memref<1380x420xbf16, #tpu.memory_space<vmem>>, vector<20x420xbf16>,
    %134 = vector.extract_strided_slice %27 {offsets = [0, 53], sizes = [20, 420], strides = [1, 1]} : vector<20x488xbf16> to vector<20x420xbf16>
    %c1060 = arith.constant 1060 : index
    %c0_66 = arith.constant 0 : index
    %135 = vector.load %arg10[%c1060, %c0_66] : memref<1380x420xbf16, #tpu.memory_space<vmem>>, vector<20x420xbf16>
    tpu.vector_store %arg10[%c1060, %c0_66], %134 {strides = array<i32>} : memref<1380x420xbf16, #tpu.memory_space<vmem>>, vector<20x420xbf16>,
    %136 = vector.extract_strided_slice %27 {offsets = [0, 54], sizes = [20, 420], strides = [1, 1]} : vector<20x488xbf16> to vector<20x420xbf16>
    %c1080 = arith.constant 1080 : index
    %c0_67 = arith.constant 0 : index
    %137 = vector.load %arg10[%c1080, %c0_67] : memref<1380x420xbf16, #tpu.memory_space<vmem>>, vector<20x420xbf16>
    tpu.vector_store %arg10[%c1080, %c0_67], %136 {strides = array<i32>} : memref<1380x420xbf16, #tpu.memory_space<vmem>>, vector<20x420xbf16>,
    %138 = vector.extract_strided_slice %27 {offsets = [0, 55], sizes = [20, 420], strides = [1, 1]} : vector<20x488xbf16> to vector<20x420xbf16>
    %c1100 = arith.constant 1100 : index
    %c0_68 = arith.constant 0 : index
    %139 = vector.load %arg10[%c1100, %c0_68] : memref<1380x420xbf16, #tpu.memory_space<vmem>>, vector<20x420xbf16>
    tpu.vector_store %arg10[%c1100, %c0_68], %138 {strides = array<i32>} : memref<1380x420xbf16, #tpu.memory_space<vmem>>, vector<20x420xbf16>,
    %140 = vector.extract_strided_slice %27 {offsets = [0, 56], sizes = [20, 420], strides = [1, 1]} : vector<20x488xbf16> to vector<20x420xbf16>
    %c1120 = arith.constant 1120 : index
    %c0_69 = arith.constant 0 : index
    %141 = vector.load %arg10[%c1120, %c0_69] : memref<1380x420xbf16, #tpu.memory_space<vmem>>, vector<20x420xbf16>
    tpu.vector_store %arg10[%c1120, %c0_69], %140 {strides = array<i32>} : memref<1380x420xbf16, #tpu.memory_space<vmem>>, vector<20x420xbf16>,
    %142 = vector.extract_strided_slice %27 {offsets = [0, 57], sizes = [20, 420], strides = [1, 1]} : vector<20x488xbf16> to vector<20x420xbf16>
    %c1140 = arith.constant 1140 : index
    %c0_70 = arith.constant 0 : index
    %143 = vector.load %arg10[%c1140, %c0_70] : memref<1380x420xbf16, #tpu.memory_space<vmem>>, vector<20x420xbf16>
    tpu.vector_store %arg10[%c1140, %c0_70], %142 {strides = array<i32>} : memref<1380x420xbf16, #tpu.memory_space<vmem>>, vector<20x420xbf16>,
    %144 = vector.extract_strided_slice %27 {offsets = [0, 58], sizes = [20, 420], strides = [1, 1]} : vector<20x488xbf16> to vector<20x420xbf16>
    %c1160 = arith.constant 1160 : index
    %c0_71 = arith.constant 0 : index
    %145 = vector.load %arg10[%c1160, %c0_71] : memref<1380x420xbf16, #tpu.memory_space<vmem>>, vector<20x420xbf16>
    tpu.vector_store %arg10[%c1160, %c0_71], %144 {strides = array<i32>} : memref<1380x420xbf16, #tpu.memory_space<vmem>>, vector<20x420xbf16>,
    %146 = vector.extract_strided_slice %27 {offsets = [0, 59], sizes = [20, 420], strides = [1, 1]} : vector<20x488xbf16> to vector<20x420xbf16>
    %c1180 = arith.constant 1180 : index
    %c0_72 = arith.constant 0 : index
    %147 = vector.load %arg10[%c1180, %c0_72] : memref<1380x420xbf16, #tpu.memory_space<vmem>>, vector<20x420xbf16>
    tpu.vector_store %arg10[%c1180, %c0_72], %146 {strides = array<i32>} : memref<1380x420xbf16, #tpu.memory_space<vmem>>, vector<20x420xbf16>,
    %148 = vector.extract_strided_slice %27 {offsets = [0, 60], sizes = [20, 420], strides = [1, 1]} : vector<20x488xbf16> to vector<20x420xbf16>
    %c1200 = arith.constant 1200 : index
    %c0_73 = arith.constant 0 : index
    %149 = vector.load %arg10[%c1200, %c0_73] : memref<1380x420xbf16, #tpu.memory_space<vmem>>, vector<20x420xbf16>
    tpu.vector_store %arg10[%c1200, %c0_73], %148 {strides = array<i32>} : memref<1380x420xbf16, #tpu.memory_space<vmem>>, vector<20x420xbf16>,
    %150 = vector.extract_strided_slice %27 {offsets = [0, 61], sizes = [20, 420], strides = [1, 1]} : vector<20x488xbf16> to vector<20x420xbf16>
    %c1220 = arith.constant 1220 : index
    %c0_74 = arith.constant 0 : index
    %151 = vector.load %arg10[%c1220, %c0_74] : memref<1380x420xbf16, #tpu.memory_space<vmem>>, vector<20x420xbf16>
    tpu.vector_store %arg10[%c1220, %c0_74], %150 {strides = array<i32>} : memref<1380x420xbf16, #tpu.memory_space<vmem>>, vector<20x420xbf16>,
    %152 = vector.extract_strided_slice %27 {offsets = [0, 62], sizes = [20, 420], strides = [1, 1]} : vector<20x488xbf16> to vector<20x420xbf16>
    %c1240 = arith.constant 1240 : index
    %c0_75 = arith.constant 0 : index
    %153 = vector.load %arg10[%c1240, %c0_75] : memref<1380x420xbf16, #tpu.memory_space<vmem>>, vector<20x420xbf16>
    tpu.vector_store %arg10[%c1240, %c0_75], %152 {strides = array<i32>} : memref<1380x420xbf16, #tpu.memory_space<vmem>>, vector<20x420xbf16>,
    %154 = vector.extract_strided_slice %27 {offsets = [0, 63], sizes = [20, 420], strides = [1, 1]} : vector<20x488xbf16> to vector<20x420xbf16>
    %c1260 = arith.constant 1260 : index
    %c0_76 = arith.constant 0 : index
    %155 = vector.load %arg10[%c1260, %c0_76] : memref<1380x420xbf16, #tpu.memory_space<vmem>>, vector<20x420xbf16>
    tpu.vector_store %arg10[%c1260, %c0_76], %154 {strides = array<i32>} : memref<1380x420xbf16, #tpu.memory_space<vmem>>, vector<20x420xbf16>,
    %156 = vector.extract_strided_slice %27 {offsets = [0, 64], sizes = [20, 420], strides = [1, 1]} : vector<20x488xbf16> to vector<20x420xbf16>
    %c1280 = arith.constant 1280 : index
    %c0_77 = arith.constant 0 : index
    %157 = vector.load %arg10[%c1280, %c0_77] : memref<1380x420xbf16, #tpu.memory_space<vmem>>, vector<20x420xbf16>
    tpu.vector_store %arg10[%c1280, %c0_77], %156 {strides = array<i32>} : memref<1380x420xbf16, #tpu.memory_space<vmem>>, vector<20x420xbf16>,
    %158 = vector.extract_strided_slice %27 {offsets = [0, 65], sizes = [20, 420], strides = [1, 1]} : vector<20x488xbf16> to vector<20x420xbf16>
    %c1300 = arith.constant 1300 : index
    %c0_78 = arith.constant 0 : index
    %159 = vector.load %arg10[%c1300, %c0_78] : memref<1380x420xbf16, #tpu.memory_space<vmem>>, vector<20x420xbf16>
    tpu.vector_store %arg10[%c1300, %c0_78], %158 {strides = array<i32>} : memref<1380x420xbf16, #tpu.memory_space<vmem>>, vector<20x420xbf16>,
    %160 = vector.extract_strided_slice %27 {offsets = [0, 66], sizes = [20, 420], strides = [1, 1]} : vector<20x488xbf16> to vector<20x420xbf16>
    %c1320 = arith.constant 1320 : index
    %c0_79 = arith.constant 0 : index
    %161 = vector.load %arg10[%c1320, %c0_79] : memref<1380x420xbf16, #tpu.memory_space<vmem>>, vector<20x420xbf16>
    tpu.vector_store %arg10[%c1320, %c0_79], %160 {strides = array<i32>} : memref<1380x420xbf16, #tpu.memory_space<vmem>>, vector<20x420xbf16>,
    %162 = vector.extract_strided_slice %27 {offsets = [0, 67], sizes = [20, 420], strides = [1, 1]} : vector<20x488xbf16> to vector<20x420xbf16>
    %c1340 = arith.constant 1340 : index
    %c0_80 = arith.constant 0 : index
    %163 = vector.load %arg10[%c1340, %c0_80] : memref<1380x420xbf16, #tpu.memory_space<vmem>>, vector<20x420xbf16>
    tpu.vector_store %arg10[%c1340, %c0_80], %162 {strides = array<i32>} : memref<1380x420xbf16, #tpu.memory_space<vmem>>, vector<20x420xbf16>,
    %164 = vector.extract_strided_slice %27 {offsets = [0, 68], sizes = [20, 420], strides = [1, 1]} : vector<20x488xbf16> to vector<20x420xbf16>
    %c1360 = arith.constant 1360 : index
    %c0_81 = arith.constant 0 : index
    %165 = vector.load %arg10[%c1360, %c0_81] : memref<1380x420xbf16, #tpu.memory_space<vmem>>, vector<20x420xbf16>
    tpu.vector_store %arg10[%c1360, %c0_81], %164 {strides = array<i32>} : memref<1380x420xbf16, #tpu.memory_space<vmem>>, vector<20x420xbf16>,
    %c0_82 = arith.constant 0 : index
    %c0_83 = arith.constant 0 : index
    %166 = vector.load %arg4[%c0_82, %c0_83] : memref<10x1380xbf16, #tpu.memory_space<vmem>>, vector<10x1380xbf16>
    %c0_84 = arith.constant 0 : index
    %c0_85 = arith.constant 0 : index
    %167 = vector.load %arg10[%c0_84, %c0_85] : memref<1380x420xbf16, #tpu.memory_space<vmem>>, vector<1380x420xbf16>
    %cst_86 = arith.constant dense<0.000000e+00> : vector<10x420xf32>
    %168 = tpu.matmul %166, %167, %cst_86 {dimension_numbers = #tpu.dot_dimension_numbers<[1], [0], [0], [1], [0, 0, 1, 1], [], []>} : vector<10x1380xbf16>, vector<1380x420xbf16>, vector<10x420xf32> -> vector<10x420xf32>
    %c0_87 = arith.constant 0 : index
    %c0_88 = arith.constant 0 : index
    %169 = vector.load %arg5[%c0_87, %c0_88] : memref<10x1xf32, #tpu.memory_space<vmem>>, vector<10x1xf32>
    %170 = vector.broadcast %169 : vector<10x1xf32> to vector<10x420xf32>
    %171 = arith.addf %168, %170 : vector<10x420xf32>
    %172 = arith.mulf %171, %171 : vector<10x420xf32>
    %c0_89 = arith.constant 0 : index
    %c0_90 = arith.constant 0 : index
    %173 = vector.load %arg6[%c0_89, %c0_90] : memref<420x10xf32, #tpu.memory_space<vmem>>, vector<420x10xf32>
    %cst_91 = arith.constant dense<0.000000e+00> : vector<10x10xf32>
    %174 = tpu.matmul %172, %173, %cst_91 {dimension_numbers = #tpu.dot_dimension_numbers<[1], [0], [0], [1], [0, 0, 1, 1], [], []>} : vector<10x420xf32>, vector<420x10xf32>, vector<10x10xf32> -> vector<10x10xf32>
    %cst_92 = arith.constant 9.99999997E-7 : f32
    %175 = vector.broadcast %cst_92 : f32 to vector<10x10xf32>
    %176 = arith.maximumf %174, %175 : vector<10x10xf32>
    %177 = math.log %176 : vector<10x10xf32>
    %c0_93 = arith.constant 0 : index
    %c0_94 = arith.constant 0 : index
    %c0_95 = arith.constant 0 : index
    %178 = vector.load %arg7[%c0_93, %c0_94, %c0_95] : memref<4x10x10xf32, #tpu.memory_space<vmem>>, vector<1x10x10xf32>
    %179 = vector.shape_cast %178 : vector<1x10x10xf32> to vector<10x10xf32>
    %180 = arith.mulf %177, %179 : vector<10x10xf32>
    %cst_96 = arith.constant dense<0.000000e+00> : vector<10xf32>
    %181 = vector.multi_reduction <add>, %180, %cst_96 [1] : vector<10x10xf32> to vector<10xf32>
    %182 = vector.shape_cast %181 : vector<10xf32> to vector<10x1xf32>
    %cst_97 = arith.constant dense<0.000000e+00> : vector<1xf32>
    %183 = vector.multi_reduction <add>, %182, %cst_97 [0] : vector<10x1xf32> to vector<1xf32>
    %184 = vector.shape_cast %183 : vector<1xf32> to vector<1x1xf32>
    %c1 = arith.constant 1 : index
    %c0_98 = arith.constant 0 : index
    %c0_99 = arith.constant 0 : index
    %185 = vector.load %arg7[%c1, %c0_98, %c0_99] : memref<4x10x10xf32, #tpu.memory_space<vmem>>, vector<1x10x10xf32>
    %186 = vector.shape_cast %185 : vector<1x10x10xf32> to vector<10x10xf32>
    %187 = arith.mulf %177, %186 : vector<10x10xf32>
    %cst_100 = arith.constant dense<0.000000e+00> : vector<10xf32>
    %188 = vector.multi_reduction <add>, %187, %cst_100 [1] : vector<10x10xf32> to vector<10xf32>
    %189 = vector.shape_cast %188 : vector<10xf32> to vector<10x1xf32>
    %cst_101 = arith.constant dense<0.000000e+00> : vector<1xf32>
    %190 = vector.multi_reduction <add>, %189, %cst_101 [0] : vector<10x1xf32> to vector<1xf32>
    %191 = vector.shape_cast %190 : vector<1xf32> to vector<1x1xf32>
    %c2 = arith.constant 2 : index
    %c0_102 = arith.constant 0 : index
    %c0_103 = arith.constant 0 : index
    %192 = vector.load %arg7[%c2, %c0_102, %c0_103] : memref<4x10x10xf32, #tpu.memory_space<vmem>>, vector<1x10x10xf32>
    %193 = vector.shape_cast %192 : vector<1x10x10xf32> to vector<10x10xf32>
    %194 = arith.mulf %177, %193 : vector<10x10xf32>
    %cst_104 = arith.constant dense<0.000000e+00> : vector<10xf32>
    %195 = vector.multi_reduction <add>, %194, %cst_104 [1] : vector<10x10xf32> to vector<10xf32>
    %196 = vector.shape_cast %195 : vector<10xf32> to vector<10x1xf32>
    %cst_105 = arith.constant dense<0.000000e+00> : vector<1xf32>
    %197 = vector.multi_reduction <add>, %196, %cst_105 [0] : vector<10x1xf32> to vector<1xf32>
    %198 = vector.shape_cast %197 : vector<1xf32> to vector<1x1xf32>
    %c3 = arith.constant 3 : index
    %c0_106 = arith.constant 0 : index
    %c0_107 = arith.constant 0 : index
    %199 = vector.load %arg7[%c3, %c0_106, %c0_107] : memref<4x10x10xf32, #tpu.memory_space<vmem>>, vector<1x10x10xf32>
    %200 = vector.shape_cast %199 : vector<1x10x10xf32> to vector<10x10xf32>
    %201 = arith.mulf %177, %200 : vector<10x10xf32>
    %cst_108 = arith.constant dense<0.000000e+00> : vector<10xf32>
    %202 = vector.multi_reduction <add>, %201, %cst_108 [1] : vector<10x10xf32> to vector<10xf32>
    %203 = vector.shape_cast %202 : vector<10xf32> to vector<10x1xf32>
    %cst_109 = arith.constant dense<0.000000e+00> : vector<1xf32>
    %204 = vector.multi_reduction <add>, %203, %cst_109 [0] : vector<10x1xf32> to vector<1xf32>
    %205 = vector.shape_cast %204 : vector<1xf32> to vector<1x1xf32>
    %206 = tpu.concatenate %184, %191, %198, %205 in 1 : vector<1x1xf32>, vector<1x1xf32>, vector<1x1xf32>, vector<1x1xf32> -> vector<1x4xf32>
    %c0_110 = arith.constant 0 : index
    %c0_111 = arith.constant 0 : index
    %207 = vector.load %arg8[%c0_110, %c0_111] : memref<1x4xf32, #tpu.memory_space<vmem>>, vector<1x4xf32>
    %208 = arith.addf %206, %207 : vector<1x4xf32>
    %cst_112 = arith.constant dense<0xFF800000> : vector<1xf32>
    %209 = vector.multi_reduction <maximumf>, %208, %cst_112 [1] : vector<1x4xf32> to vector<1xf32>
    %210 = vector.shape_cast %209 : vector<1xf32> to vector<1x1xf32>
    %211 = vector.broadcast %210 : vector<1x1xf32> to vector<1x4xf32>
    %212 = arith.subf %208, %211 : vector<1x4xf32>
    %213 = math.exp %212 : vector<1x4xf32>
    %cst_113 = arith.constant dense<0.000000e+00> : vector<1xf32>
    %214 = vector.multi_reduction <add>, %213, %cst_113 [1] : vector<1x4xf32> to vector<1xf32>
    %215 = vector.shape_cast %214 : vector<1xf32> to vector<1x1xf32>
    %216 = tpu.reciprocal %215 {approx = true} : vector<1x1xf32> -> vector<1x1xf32>
    %217 = vector.broadcast %216 : vector<1x1xf32> to vector<1x4xf32>
    %218 = arith.mulf %213, %217 : vector<1x4xf32>
    %219 = math.log %215 : vector<1x1xf32>
    %220 = vector.broadcast %219 : vector<1x1xf32> to vector<1x4xf32>
    %221 = arith.subf %212, %220 : vector<1x4xf32>
    %222 = tpu.concatenate %221, %218 in 0 : vector<1x4xf32>, vector<1x4xf32> -> vector<2x4xf32>
    %223 = arith.index_cast %c0_i32 : i32 to index
    %c0_114 = arith.constant 0 : index
    %c0_115 = arith.constant 0 : index
    %224 = vector.load %arg9[%223, %c0_114, %c0_115] : memref<1x2x4xf32, #tpu.memory_space<vmem>>, vector<1x2x4xf32>
    %225 = vector.shape_cast %224 : vector<1x2x4xf32> to vector<2x4xf32>
    %226 = vector.shape_cast %222 : vector<2x4xf32> to vector<1x2x4xf32>
    tpu.vector_store %arg9[%223, %c0_114, %c0_115], %226 {strides = array<i32>} : memref<1x2x4xf32, #tpu.memory_space<vmem>>, vector<1x2x4xf32>,
    %c1_i32 = arith.constant 1 : i32
    return
  }
  func.func @transform_0(%arg0: i32) -> (i32, i32, i32) {
    %c0_i32 = arith.constant 0 : i32
    %c0_i32_0 = arith.constant 0 : i32
    %c0_i32_1 = arith.constant 0 : i32
    return %arg0, %c0_i32, %c0_i32_0 : i32, i32, i32
  }
  func.func @transform_1(%arg0: i32) -> (i32, i32) {
    %c0_i32 = arith.constant 0 : i32
    %c0_i32_0 = arith.constant 0 : i32
    %c0_i32_1 = arith.constant 0 : i32
    return %c0_i32, %c0_i32_0 : i32, i32
  }
  func.func @transform_2(%arg0: i32) -> (i32, i32) {
    %c0_i32 = arith.constant 0 : i32
    %c0_i32_0 = arith.constant 0 : i32
    %c0_i32_1 = arith.constant 0 : i32
    return %c0_i32, %c0_i32_0 : i32, i32
  }
  func.func @transform_3(%arg0: i32) -> (i32, i32) {
    %c0_i32 = arith.constant 0 : i32
    %c0_i32_0 = arith.constant 0 : i32
    %c0_i32_1 = arith.constant 0 : i32
    return %c0_i32, %c0_i32_0 : i32, i32
  }
  func.func @transform_4(%arg0: i32) -> (i32, i32) {
    %c0_i32 = arith.constant 0 : i32
    %c0_i32_0 = arith.constant 0 : i32
    %c0_i32_1 = arith.constant 0 : i32
    return %c0_i32, %c0_i32_0 : i32, i32
  }
  func.func @transform_5(%arg0: i32) -> (i32, i32) {
    %c0_i32 = arith.constant 0 : i32
    %c0_i32_0 = arith.constant 0 : i32
    %c0_i32_1 = arith.constant 0 : i32
    return %c0_i32, %c0_i32_0 : i32, i32
  }
  func.func @transform_6(%arg0: i32) -> (i32, i32, i32) {
    %c0_i32 = arith.constant 0 : i32
    %c0_i32_0 = arith.constant 0 : i32
    %c0_i32_1 = arith.constant 0 : i32
    %c0_i32_2 = arith.constant 0 : i32
    return %c0_i32, %c0_i32_0, %c0_i32_1 : i32, i32, i32
  }
  func.func @transform_7(%arg0: i32) -> (i32, i32) {
    %c0_i32 = arith.constant 0 : i32
    %c0_i32_0 = arith.constant 0 : i32
    %c0_i32_1 = arith.constant 0 : i32
    return %c0_i32, %c0_i32_0 : i32, i32
  }
  func.func @transform_8(%arg0: i32) -> (i32, i32, i32) {
    %c0_i32 = arith.constant 0 : i32
    %c0_i32_0 = arith.constant 0 : i32
    %c0_i32_1 = arith.constant 0 : i32
    return %arg0, %c0_i32, %c0_i32_0 : i32, i32, i32
  }
}

</mosaic_0001>

<llo_original>
// kernel: tpu_custom_call.1
$region0: #{tpu_custom_call.1}
  #allocation0 [shape = 'u32[]', space=smem, size = 0x4, offset = 0x4, fixed_abs, tag = 'smem constant byte address 0x4 - core index']
  #allocation1 [shape = 'u32[144,128]{1,0:T(1,128)}', space=vmem, size = 0x12000, scoped, tag = 'internal scratch']
  #allocation2 [shape = 'bf16[1380,420]{1,0:T(8,128)(2,1)}', space=vmem, size = 0x15a000, scoped, tag = 'scratch operand']
  %s0 = inlined_call_operand.vmem [shape: f32[2,20,488], index: 0, kind: input, shape index: {}]
  %s1 = inlined_call_operand.vmem [shape: f32[20,20], index: 1, kind: input, shape index: {}]
  %s2 = inlined_call_operand.vmem [shape: f32[20,20], index: 2, kind: input, shape index: {}]
  %s3 = inlined_call_operand.vmem [shape: bf16[10,1380], index: 3, kind: input, shape index: {}]
  %s4 = inlined_call_operand.vmem [shape: f32[10,1], index: 4, kind: input, shape index: {}]
  %s5 = inlined_call_operand.vmem [shape: f32[420,10], index: 5, kind: input, shape index: {}]
  %s6 = inlined_call_operand.vmem [shape: f32[4,10,10], index: 6, kind: input, shape index: {}]
  %s7 = inlined_call_operand.vmem [shape: f32[1,4], index: 7, kind: input, shape index: {}]
  %s8 = inlined_call_operand.hbm [shape: f32[2,2,4], index: 8, kind: output, shape index: {}]
  %s9 = sld [smem:[#allocation0]]
  $region65: #{tpu_custom_call.1} parent=0
    _
  %s11 = ssub.s32 1, %s9
  %s12 = scalar_select 0, %s11, %s9
  $region1: #{tpu_custom_call.1} parent=0
    #allocation3 [shape = 'u8[2048]{0}', space=vmem, size = 0x800, scoped, tag = 'output window, operand 0']
    #allocation4 [shape = 's32[2]{0}', space=sflag, size = 0x8, scoped, tag = 'scoped memory for tpu_custom_call.1']
    %13 = vsyncpa [#allocation4], 0
    %s14 = scalar_lea.sflag [#allocation4], 1
    %15 = vsyncpa %s14, 0
    loop: start=0, step=1, limit=4
    $region2: #{tpu_custom_call.1} parent=1 // loop_pre_header
      _
    $region3: #{tpu_custom_call.1} parent=1 // loop_header
      %s17 = sphi 0, %s21
      %p18 = scmp.ge.s32.totalorder %s17, 4
      %s27 = sphi 0, %s29
      %s30 = sphi 0, %s27
      %s31 = sphi 0, %s30
      %s47 = sphi 0, %s31
      %s51 = sphi 0, %s51
      %s53 = sphi 0, %s51
      %s54 = sphi 0, %s53
      %s68 = sphi 0, %s54
      %s72 = sphi 0, %s72
      %s74 = sphi 0, %s72
      %s75 = sphi 0, %s74
      %s89 = sphi 0, %s75
      %s93 = sphi 0, %s93
      %s95 = sphi 0, %s93
      %s96 = sphi 0, %s95
      %s110 = sphi 0, %s96
      %s114 = sphi 0, %s114
      %s116 = sphi 0, %s114
      %s117 = sphi 0, %s116
      %s131 = sphi 0, %s117
      %s135 = sphi 0, %s135
      %s137 = sphi 0, %s135
      %s138 = sphi 0, %s137
      %s152 = sphi 0, %s138
      %s156 = sphi 0, %s156
      %s158 = sphi 0, %s156
      %s159 = sphi 0, %s158
      %s173 = sphi 0, %s159
      %s177 = sphi 0, %s177
      %s179 = sphi 0, %s177
      %s180 = sphi 0, %s179
      %s194 = sphi 0, %s180
      %s200 = sphi 0, %s202
      %s203 = sphi 0, %s200
      %s204 = sphi 0, %s203
      %s220 = sphi 0, %s204
    $region4: #{tpu_custom_call.1} parent=1 // loop_header_branch
      %20 = sbr.rel (%p18) target = $region8
    $region5: #{tpu_custom_call.1} parent=1 // loop_body
      %s22 = ssub.s32 %s17, 1
      %s23 = ssub.s32 %s17, 2
      %s24 = sadd.s32 %s17, 1
      %s25 = ssub.s32 %s17, %s24
      %p26 = scmp.eq.s32.totalorder %s25, 0
      %s28 = sadd.s32 %s27, 1
      %s29 = scalar_select %p26, %s27, %s28
      %p32 = pneg %p26
      %p33 = scmp.eq.s32.totalorder %s17, 1
      %p34 = por %p32, %p33
      %p35 = scmp.ne.s32.totalorder %s27, %s30
      %p36 = scmp.eq.s32.totalorder %s17, 0
      %p37 = por %p35, %p36
      %p38 = scmp.ne.s32.totalorder %s27, %s30
      %p39 = scmp.eq.s32.totalorder %s22, 1
      %p40 = por %p38, %p39
      %p41 = scmp.ne.s32.totalorder %s30, %s31
      %p42 = scmp.eq.s32.totalorder %s22, 0
      %p43 = por %p41, %p42
      %p44 = scmp.ne.s32.totalorder %s30, %s31
      %p45 = scmp.eq.s32.totalorder %s23, 1
      %p46 = por %p44, %p45
      %p48 = scmp.ne.s32.totalorder %s31, %s47
      %p49 = scmp.eq.s32.totalorder %s23, 0
      %p50 = por %p48, %p49
      %s52 = sadd.s32 %s51, 1
      %p55 = scmp.eq.s32.totalorder %s17, 1
      %p56 = scmp.ne.s32.totalorder %s51, %s53
      %p57 = scmp.eq.s32.totalorder %s17, 0
      %p58 = por %p56, %p57
      %p59 = scmp.ne.s32.totalorder %s51, %s53
      %p60 = scmp.eq.s32.totalorder %s22, 1
      %p61 = por %p59, %p60
      %p62 = scmp.ne.s32.totalorder %s53, %s54
      %p63 = scmp.eq.s32.totalorder %s22, 0
      %p64 = por %p62, %p63
      %p65 = scmp.ne.s32.totalorder %s53, %s54
      %p66 = scmp.eq.s32.totalorder %s23, 1
      %p67 = por %p65, %p66
      %p69 = scmp.ne.s32.totalorder %s54, %s68
      %p70 = scmp.eq.s32.totalorder %s23, 0
      %p71 = por %p69, %p70
      %s73 = sadd.s32 %s72, 1
      %p76 = scmp.eq.s32.totalorder %s17, 1
      %p77 = scmp.ne.s32.totalorder %s72, %s74
      %p78 = scmp.eq.s32.totalorder %s17, 0
      %p79 = por %p77, %p78
      %p80 = scmp.ne.s32.totalorder %s72, %s74
      %p81 = scmp.eq.s32.totalorder %s22, 1
      %p82 = por %p80, %p81
      %p83 = scmp.ne.s32.totalorder %s74, %s75
      %p84 = scmp.eq.s32.totalorder %s22, 0
      %p85 = por %p83, %p84
      %p86 = scmp.ne.s32.totalorder %s74, %s75
      %p87 = scmp.eq.s32.totalorder %s23, 1
      %p88 = por %p86, %p87
      %p90 = scmp.ne.s32.totalorder %s75, %s89
      %p91 = scmp.eq.s32.totalorder %s23, 0
      %p92 = por %p90, %p91
      %s94 = sadd.s32 %s93, 1
      %p97 = scmp.eq.s32.totalorder %s17, 1
      %p98 = scmp.ne.s32.totalorder %s93, %s95
      %p99 = scmp.eq.s32.totalorder %s17, 0
      %p100 = por %p98, %p99
      %p101 = scmp.ne.s32.totalorder %s93, %s95
      %p102 = scmp.eq.s32.totalorder %s22, 1
      %p103 = por %p101, %p102
      %p104 = scmp.ne.s32.totalorder %s95, %s96
      %p105 = scmp.eq.s32.totalorder %s22, 0
      %p106 = por %p104, %p105
      %p107 = scmp.ne.s32.totalorder %s95, %s96
      %p108 = scmp.eq.s32.totalorder %s23, 1
      %p109 = por %p107, %p108
      %p111 = scmp.ne.s32.totalorder %s96, %s110
      %p112 = scmp.eq.s32.totalorder %s23, 0
      %p113 = por %p111, %p112
      %s115 = sadd.s32 %s114, 1
      %p118 = scmp.eq.s32.totalorder %s17, 1
      %p119 = scmp.ne.s32.totalorder %s114, %s116
      %p120 = scmp.eq.s32.totalorder %s17, 0
      %p121 = por %p119, %p120
      %p122 = scmp.ne.s32.totalorder %s114, %s116
      %p123 = scmp.eq.s32.totalorder %s22, 1
      %p124 = por %p122, %p123
      %p125 = scmp.ne.s32.totalorder %s116, %s117
      %p126 = scmp.eq.s32.totalorder %s22, 0
      %p127 = por %p125, %p126
      %p128 = scmp.ne.s32.totalorder %s116, %s117
      %p129 = scmp.eq.s32.totalorder %s23, 1
      %p130 = por %p128, %p129
      %p132 = scmp.ne.s32.totalorder %s117, %s131
      %p133 = scmp.eq.s32.totalorder %s23, 0
      %p134 = por %p132, %p133
      %s136 = sadd.s32 %s135, 1
      %p139 = scmp.eq.s32.totalorder %s17, 1
      %p140 = scmp.ne.s32.totalorder %s135, %s137
      %p141 = scmp.eq.s32.totalorder %s17, 0
      %p142 = por %p140, %p141
      %p143 = scmp.ne.s32.totalorder %s135, %s137
      %p144 = scmp.eq.s32.totalorder %s22, 1
      %p145 = por %p143, %p144
      %p146 = scmp.ne.s32.totalorder %s137, %s138
      %p147 = scmp.eq.s32.totalorder %s22, 0
      %p148 = por %p146, %p147
      %p149 = scmp.ne.s32.totalorder %s137, %s138
      %p150 = scmp.eq.s32.totalorder %s23, 1
      %p151 = por %p149, %p150
      %p153 = scmp.ne.s32.totalorder %s138, %s152
      %p154 = scmp.eq.s32.totalorder %s23, 0
      %p155 = por %p153, %p154
      %s157 = sadd.s32 %s156, 1
      %p160 = scmp.eq.s32.totalorder %s17, 1
      %p161 = scmp.ne.s32.totalorder %s156, %s158
      %p162 = scmp.eq.s32.totalorder %s17, 0
      %p163 = por %p161, %p162
      %p164 = scmp.ne.s32.totalorder %s156, %s158
      %p165 = scmp.eq.s32.totalorder %s22, 1
      %p166 = por %p164, %p165
      %p167 = scmp.ne.s32.totalorder %s158, %s159
      %p168 = scmp.eq.s32.totalorder %s22, 0
      %p169 = por %p167, %p168
      %p170 = scmp.ne.s32.totalorder %s158, %s159
      %p171 = scmp.eq.s32.totalorder %s23, 1
      %p172 = por %p170, %p171
      %p174 = scmp.ne.s32.totalorder %s159, %s173
      %p175 = scmp.eq.s32.totalorder %s23, 0
      %p176 = por %p174, %p175
      %s178 = sadd.s32 %s177, 1
      %p181 = scmp.eq.s32.totalorder %s17, 1
      %p182 = scmp.ne.s32.totalorder %s177, %s179
      %p183 = scmp.eq.s32.totalorder %s17, 0
      %p184 = por %p182, %p183
      %p185 = scmp.ne.s32.totalorder %s177, %s179
      %p186 = scmp.eq.s32.totalorder %s22, 1
      %p187 = por %p185, %p186
      %p188 = scmp.ne.s32.totalorder %s179, %s180
      %p189 = scmp.eq.s32.totalorder %s22, 0
      %p190 = por %p188, %p189
      %p191 = scmp.ne.s32.totalorder %s179, %s180
      %p192 = scmp.eq.s32.totalorder %s23, 1
      %p193 = por %p191, %p192
      %p195 = scmp.ne.s32.totalorder %s180, %s194
      %p196 = scmp.eq.s32.totalorder %s23, 0
      %p197 = por %p195, %p196
      %s198 = ssub.s32 %s17, %s24
      %p199 = scmp.eq.s32.totalorder %s198, 0
      %s201 = sadd.s32 %s200, 1
      %s202 = scalar_select %p199, %s200, %s201
      %p205 = pneg %p199
      %p206 = scmp.eq.s32.totalorder %s17, 1
      %p207 = por %p205, %p206
      %p208 = scmp.ne.s32.totalorder %s200, %s203
      %p209 = scmp.eq.s32.totalorder %s17, 0
      %p210 = por %p208, %p209
      %p211 = scmp.ne.s32.totalorder %s200, %s203
      %p212 = scmp.eq.s32.totalorder %s22, 1
      %p213 = por %p211, %p212
      %p214 = scmp.ne.s32.totalorder %s203, %s204
      %p215 = scmp.eq.s32.totalorder %s22, 0
      %p216 = por %p214, %p215
      %p217 = scmp.ne.s32.totalorder %s203, %s204
      %p218 = scmp.eq.s32.totalorder %s23, 1
      %p219 = por %p217, %p218
      %p221 = scmp.ne.s32.totalorder %s204, %s220
      %p222 = scmp.eq.s32.totalorder %s23, 0
      %p223 = por %p221, %p222
      %p224 = scmp.le.s32.totalorder 1, %s17
      %p225 = scmp.lt.s32.totalorder %s17, 3
      %p226 = pnand %p224, %p225
      %p227 = pneg %p226
      // Predicated region
      $region9: #{tpu_custom_call.1} parent=5 // pred_check
        _
      $region10: #{tpu_custom_call.1} parent=5 // pred_check_branch
        %229 = sbr.rel (%p226) target = $region12
      $region11: #{tpu_custom_call.1} parent=5 // pred_region
        %s230 = ssub.s32 %s17, 1
        // Predicated region
        $region13: #{tpu_custom_call.1} parent=11 // pred_check
          %p231 = pneg %p64
        $region14: #{tpu_custom_call.1} parent=11 // pred_check_branch
          %233 = sbr.rel (%p231) target = $region16
        $region15: #{tpu_custom_call.1} parent=11 // pred_region
          _
        $region16: #{tpu_custom_call.1} parent=11 // pred_fallthru
          _
        // Predicated region
        $region17: #{tpu_custom_call.1} parent=11 // pred_check
          %p234 = pneg %p85
        $region18: #{tpu_custom_call.1} parent=11 // pred_check_branch
          %236 = sbr.rel (%p234) target = $region20
        $region19: #{tpu_custom_call.1} parent=11 // pred_region
          _
        $region20: #{tpu_custom_call.1} parent=11 // pred_fallthru
          _
        // Predicated region
        $region21: #{tpu_custom_call.1} parent=11 // pred_check
          %p237 = pneg %p106
        $region22: #{tpu_custom_call.1} parent=11 // pred_check_branch
          %239 = sbr.rel (%p237) target = $region24
        $region23: #{tpu_custom_call.1} parent=11 // pred_region
          _
        $region24: #{tpu_custom_call.1} parent=11 // pred_fallthru
          _
        // Predicated region
        $region25: #{tpu_custom_call.1} parent=11 // pred_check
          %p240 = pneg %p127
        $region26: #{tpu_custom_call.1} parent=11 // pred_check_branch
          %242 = sbr.rel (%p240) target = $region28
        $region27: #{tpu_custom_call.1} parent=11 // pred_region
          _
        $region28: #{tpu_custom_call.1} parent=11 // pred_fallthru
          _
        // Predicated region
        $region29: #{tpu_custom_call.1} parent=11 // pred_check
          %p243 = pneg %p148
        $region30: #{tpu_custom_call.1} parent=11 // pred_check_branch
          %245 = sbr.rel (%p243) target = $region32
        $region31: #{tpu_custom_call.1} parent=11 // pred_region
          _
        $region32: #{tpu_custom_call.1} parent=11 // pred_fallthru
          _
        // Predicated region
        $region33: #{tpu_custom_call.1} parent=11 // pred_check
          %p246 = pneg %p169
        $region34: #{tpu_custom_call.1} parent=11 // pred_check_branch
          %248 = sbr.rel (%p246) target = $region36
        $region35: #{tpu_custom_call.1} parent=11 // pred_region
          _
        $region36: #{tpu_custom_call.1} parent=11 // pred_fallthru
          _
        // Predicated region
        $region37: #{tpu_custom_call.1} parent=11 // pred_check
          %p249 = pneg %p190
        $region38: #{tpu_custom_call.1} parent=11 // pred_check_branch
          %251 = sbr.rel (%p249) target = $region40
        $region39: #{tpu_custom_call.1} parent=11 // pred_region
          _
        $region40: #{tpu_custom_call.1} parent=11 // pred_fallthru
          _
      $region12: #{tpu_custom_call.1} parent=5 // pred_fallthru
        _
      %p252 = scmp.lt.s32.totalorder %s17, 2
      // Predicated region
      $region41: #{tpu_custom_call.1} parent=5 // pred_check
        %p253 = pneg %p252
      $region42: #{tpu_custom_call.1} parent=5 // pred_check_branch
        %255 = sbr.rel (%p253) target = $region44
      $region43: #{tpu_custom_call.1} parent=5 // pred_region
        // Predicated region
        $region45: #{tpu_custom_call.1} parent=43 // pred_check
          %p256 = pneg %p37
        $region46: #{tpu_custom_call.1} parent=43 // pred_check_branch
          %258 = sbr.rel (%p256) target = $region48
        $region47: #{tpu_custom_call.1} parent=43 // pred_region
          %p259 = scmp.lt.s32.totalorder %s17, 1
          %s260 = scalar_select %p259, %s17, 1
          %s261 = smul.addr %s260, 12
          %s262 = smul.addr %s261, 8
          %s263 = scalar_lea.vmem %s0, %s262
        $region48: #{tpu_custom_call.1} parent=43 // pred_fallthru
          _
      $region44: #{tpu_custom_call.1} parent=5 // pred_fallthru
        _
      %p264 = scmp.le.s32.totalorder 1, %s17
      %p265 = scmp.lt.s32.totalorder %s17, 3
      %p266 = pnand %p264, %p265
      %p267 = pneg %p266
      // Predicated region
      $region49: #{tpu_custom_call.1} parent=5 // pred_check
        _
      $region50: #{tpu_custom_call.1} parent=5 // pred_check_branch
        %269 = sbr.rel (%p266) target = $region52
      $region51: #{tpu_custom_call.1} parent=5 // pred_region
        %s270 = ssub.s32 %s17, 1
        %p271 = scmp.lt.s32.totalorder %s22, 1
        %s272 = scalar_select %p271, %s22, 1
        %s273 = smul.addr %s272, 12
        %s274 = smul.addr %s273, 8
        %s275 = scalar_lea.vmem %s0, %s274
        %p276 = pneg %p43
        %p277 = pneg %p40
        %p278 = pneg %p64
        %p279 = pneg %p61
        %p280 = pneg %p85
        %p281 = pneg %p82
        %p282 = pneg %p106
        %p283 = pneg %p103
        %p284 = pneg %p127
        %p285 = pneg %p124
        %p286 = pneg %p148
        %p287 = pneg %p145
        %p288 = pneg %p169
        %p289 = pneg %p166
        %p290 = pneg %p190
        %p291 = pneg %p187
        %p292 = pneg %p216
        %p293 = pneg %p213
        %s294 = sand.u32 %s203, 1
        %s295 = scalar_lea.sflag [#allocation4], %s294
        %s296 = sand.u32 %s203, 1
        %s297 = smul.addr %s296, 2
        %s298 = scalar_lea.vmem [#allocation3], %s297
        %p299 = scmp.lt.s32.totalorder %s22, 1
        %s300 = scalar_select %p299, %s22, 1
        %s301 = smul.addr %s300, 12
        %s302 = smul.addr %s301, 8
        %s303 = scalar_lea.vmem %s0, %s302
        %v305 = vld [vmem:[%s303] sm:$0xff]
        %v306 = vld [vmem:[%s303 + $0x8] sm:$0xff]
        %v307 = vld [vmem:[%s303 + $0x10] sm:$0xff]
        %v308 = vld [vmem:[%s303 + $0x18] sm:$0xff]
        %v309 = vld [vmem:[%s303 + $0x20] sm:$0xff]
        %v310 = vld [vmem:[%s303 + $0x28] sm:$0xff]
        %v311 = vld [vmem:[%s303 + $0x30] sm:$0xff]
        %v312 = vld [vmem:[%s303 + $0x38] sm:$0xff]
        %v313 = vld [vmem:[%s303 + $0x40] sm:$0xf]
        %v314 = vld [vmem:[%s303 + $0x48] sm:$0xf]
        %v315 = vld [vmem:[%s303 + $0x50] sm:$0xf]
        %v316 = vld [vmem:[%s303 + $0x58] sm:$0xf]
        %v317 = vadd.f32 %v305, %v306
        %v318 = vadd.f32 %v317, %v307
        %vm319 = vcmask 850944
        %v320 = vsel %vm319, %v308, 0.0
        %v321 = vadd.f32 %v318, %v320
        %322 = vadd.xlane.f32.xlu0 %v321
        %v323 = vpop.xlane.xlu0 %322
        %v324 = vadd.f32 %v309, %v310
        %v325 = vadd.f32 %v324, %v311
        %v326 = vsel %vm319, %v312, 0.0
        %v327 = vadd.f32 %v325, %v326
        %328 = vadd.xlane.f32.xlu0 %v327
        %v329 = vpop.xlane.xlu0 %328
        %vm330 = vcmask 1043456
        %v331 = vsel %vm330, %v313, 0.0
        %v332 = vsel %vm330, %v314, 0.0
        %v333 = vadd.f32 %v331, %v332
        %v334 = vsel %vm330, %v315, 0.0
        %v335 = vadd.f32 %v333, %v334
        %vm336 = vcmask 846848
        %v337 = vsel %vm336, %v316, 0.0
        %v338 = vadd.f32 %v335, %v337
        %339 = vadd.xlane.f32.xlu0 %v338
        %v340 = vpop.xlane.xlu0 %339
        %v341 = vrcp.pop 488.0
        %v342 = vmul.f32 %v323, %v341
        %v343 = vmul.f32 %v329, %v341
        %v344 = vmul.f32 %v340, %v341
        %v345 = vld [vmem:[%s1] sm:$0xff]
        %v346 = vld [vmem:[%s1 + $0x8] sm:$0xff]
        %v347 = vld [vmem:[%s1 + $0x10] sm:$0xf]
        %vm348 = vcmask 162816
        %v350 = vsel %vm348, %v345, 0
        %v353 = vsel %vm348, %v346, 0
        %v356 = vsel %vm348, %v347, 0
        %v359 = vsel %vm330, %v344, 0
        %361 = vmatprep.subr.mxu0 0.0
        %362 = vmatpush1.msra.mxu0 %v342
        %363 = vmatprep.subr.mxu0 0.0
        %364 = vmatpush1.msra.mxu0 %v343
        %365 = vmatprep.subr.mxu0 0.0
        %366 = vmatpush1.msra.mxu0 %v359
        %367 = vmatprep.subr.mxu0 0.0
        %368 = vmatpush1.msra.mxu0 0.0
        %369 = vmatprep.subr.mxu0 0.0
        %370 = vmatpush1.msra.mxu0 0.0
        %371 = vmatprep.subr.mxu0 0.0
        %372 = vmatpush1.msra.mxu0 0.0
        %373 = vmatprep.subr.mxu0 0.0
        %374 = vmatpush1.msra.mxu0 0.0
        %375 = vmatprep.subr.mxu0 0.0
        %376 = vmatpush1.msra.mxu0 0.0
        %377 = vmatprep.subr.mxu0 0.0
        %378 = vmatpush1.msra.mxu0 0.0
        %379 = vmatprep.subr.mxu0 0.0
        %380 = vmatpush1.msra.mxu0 0.0
        %381 = vmatprep.subr.mxu0 0.0
        %382 = vmatpush1.msra.mxu0 0.0
        %383 = vmatprep.subr.mxu0 0.0
        %384 = vmatpush1.msra.mxu0 0.0
        %385 = vmatprep.subr.mxu0 0.0
        %386 = vmatpush1.msra.mxu0 0.0
        %387 = vmatprep.subr.mxu0 0.0
        %388 = vmatpush1.msra.mxu0 0.0
        %389 = vmatprep.subr.mxu0 0.0
        %390 = vmatpush1.msra.mxu0 0.0
        %391 = vmatprep.subr.mxu0 0.0
        %392 = vmatpush1.msra.mxu0 0.0
        %393 = vmatprep.subr.mxu0 0.0
        %394 = vmatpush1.msra.mxu0 0.0
        %395 = vmatprep.subr.mxu0 0.0
        %396 = vmatpush1.msra.mxu0 0.0
        %397 = vmatprep.subr.mxu0 0.0
        %398 = vmatpush1.msra.mxu0 0.0
        %399 = vmatprep.subr.mxu0 0.0
        %400 = vmatpush1.msra.mxu0 0.0
        %401 = vmatprep.subr.mxu0 0.0
        %402 = vmatpush1.msra.mxu0 0.0
        %403 = vmatprep.subr.mxu0 0.0
        %404 = vmatpush1.msra.mxu0 0.0
        %405 = vmatprep.subr.mxu0 0.0
        %406 = vmatpush1.msra.mxu0 0.0
        %407 = vmatprep.subr.mxu0 0.0
        %408 = vmatpush1.msra.mxu0 0.0
        %409 = vmatprep.subr.mxu0 0.0
        %410 = vmatpush1.msra.mxu0 0.0
        %411 = vmatprep.subr.mxu0 0.0
        %412 = vmatpush1.msra.mxu0 0.0
        %413 = vmatprep.subr.mxu0 0.0
        %414 = vmatpush1.msra.mxu0 0.0
        %415 = vmatprep.subr.mxu0 0.0
        %416 = vmatpush1.msra.mxu0 0.0
        %417 = vmatprep.subr.mxu0 0.0
        %418 = vmatpush1.msra.mxu0 0.0
        %419 = vmatprep.subr.mxu0 0.0
        %420 = vmatpush1.msra.mxu0 0.0
        %421 = vmatprep.subr.mxu0 0.0
        %422 = vmatpush1.msra.mxu0 0.0
        %423 = vmatprep.subr.mxu0 0.0
        %424 = vmatpush1.msra.mxu0 0.0
        %425 = vmatprep.mubr.f32.mxu0 0.0
        %426 = vmatmul.mubr.f32.gmra.mrb[0].mxu0 %v350
        %v427 = vpop.f32.mrb[0].mxu0
        %v428 = vadd.f32 0.0, %v427
        %v429 = vpop.f32.mrb[0].mxu0
        %430 = vmatprep.mubr.f32.mxu0 0.0
        %431 = vmatmul.mubr.f32.gmra.mrb[0].mxu0 %v353
        %v432 = vpop.f32.mrb[0].mxu0
        %v433 = vadd.f32 0.0, %v432
        %v434 = vpop.f32.mrb[0].mxu0
        %435 = vmatprep.mubr.f32.mxu0 0.0
        %436 = vmatmul.mubr.f32.gmra.mrb[0].mxu0 %v356
        %v437 = vpop.f32.mrb[0].mxu0
        %v438 = vadd.f32 0.0, %v437
        %v439 = vpop.f32.mrb[0].mxu0
        %440 = vdwg.mxu0
        %442 = vset.pattern.permute.xlu0 0
        %443 = vperm.xlu0 %442, %v428
        %v444 = vpop.permute.xlu0 %443
        %447 = vset.pattern.permute.xlu0 0
        %448 = vperm.xlu0 %447, %v433
        %v449 = vpop.permute.xlu0 %448
        %452 = vset.pattern.permute.xlu0 0
        %453 = vperm.xlu0 %452, %v438
        %v454 = vpop.permute.xlu0 %453
        %v456 = vsub.f32 %v305, %v444
        %v457 = vsub.f32 %v306, %v444
        %v458 = vsub.f32 %v307, %v444
        %v459 = vsub.f32 %v308, %v444
        %v460 = vsub.f32 %v309, %v449
        %v461 = vsub.f32 %v310, %v449
        %v462 = vsub.f32 %v311, %v449
        %v463 = vsub.f32 %v312, %v449
        %v464 = vsub.f32 %v313, %v454
        %v465 = vsub.f32 %v314, %v454
        %v466 = vsub.f32 %v315, %v454
        %v467 = vsub.f32 %v316, %v454
        %v468 = vadd.f32 %v456, %v457
        %v469 = vadd.f32 %v468, %v458
        %v470 = vsel %vm319, %v459, 0.0
        %v471 = vadd.f32 %v469, %v470
        %472 = vadd.xlane.f32.xlu0 %v471
        %v473 = vpop.xlane.xlu0 %472
        %v474 = vadd.f32 %v460, %v461
        %v475 = vadd.f32 %v474, %v462
        %v476 = vsel %vm319, %v463, 0.0
        %v477 = vadd.f32 %v475, %v476
        %478 = vadd.xlane.f32.xlu0 %v477
        %v479 = vpop.xlane.xlu0 %478
        %v480 = vsel %vm330, %v464, 0.0
        %v481 = vsel %vm330, %v465, 0.0
        %v482 = vadd.f32 %v480, %v481
        %v483 = vsel %vm330, %v466, 0.0
        %v484 = vadd.f32 %v482, %v483
        %v485 = vsel %vm336, %v467, 0.0
        %v486 = vadd.f32 %v484, %v485
        %487 = vadd.xlane.f32.xlu0 %v486
        %v488 = vpop.xlane.xlu0 %487
        %v489 = vmul.f32 %v473, %v341
        %v490 = vmul.f32 %v479, %v341
        %v491 = vmul.f32 %v488, %v341
        %v492 = vsub.f32 %v456, %v489
        %v493 = vsub.f32 %v457, %v489
        %v494 = vsub.f32 %v458, %v489
        %v495 = vsub.f32 %v459, %v489
        %v496 = vsub.f32 %v460, %v490
        %v497 = vsub.f32 %v461, %v490
        %v498 = vsub.f32 %v462, %v490
        %v499 = vsub.f32 %v463, %v490
        %v500 = vsub.f32 %v464, %v491
        %v501 = vsub.f32 %v465, %v491
        %v502 = vsub.f32 %v466, %v491
        %v503 = vsub.f32 %v467, %v491
        %v504 = vmul.f32 %v492, %v492
        %v505 = vmul.f32 %v493, %v493
        %v506 = vmul.f32 %v494, %v494
        %v507 = vmul.f32 %v495, %v495
        %v508 = vmul.f32 %v496, %v496
        %v509 = vmul.f32 %v497, %v497
        %v510 = vmul.f32 %v498, %v498
        %v511 = vmul.f32 %v499, %v499
        %v512 = vmul.f32 %v500, %v500
        %v513 = vmul.f32 %v501, %v501
        %v514 = vmul.f32 %v502, %v502
        %v515 = vmul.f32 %v503, %v503
        %v516 = vadd.f32 %v504, %v505
        %v517 = vadd.f32 %v516, %v506
        %v518 = vsel %vm319, %v507, 0.0
        %v519 = vadd.f32 %v517, %v518
        %520 = vadd.xlane.f32.xlu0 %v519
        %v521 = vpop.xlane.xlu0 %520
        %v522 = vadd.f32 %v508, %v509
        %v523 = vadd.f32 %v522, %v510
        %v524 = vsel %vm319, %v511, 0.0
        %v525 = vadd.f32 %v523, %v524
        %526 = vadd.xlane.f32.xlu0 %v525
        %v527 = vpop.xlane.xlu0 %526
        %v528 = vsel %vm330, %v512, 0.0
        %v529 = vsel %vm330, %v513, 0.0
        %v530 = vadd.f32 %v528, %v529
        %v531 = vsel %vm330, %v514, 0.0
        %v532 = vadd.f32 %v530, %v531
        %v533 = vsel %vm336, %v515, 0.0
        %v534 = vadd.f32 %v532, %v533
        %535 = vadd.xlane.f32.xlu0 %v534
        %v536 = vpop.xlane.xlu0 %535
        %v537 = vmul.f32 %v521, 0.0020533882
        %v538 = vmul.f32 %v527, 0.0020533882
        %v539 = vmul.f32 %v536, 0.0020533882
        %v540 = vld [vmem:[%s2] sm:$0xff]
        %v541 = vld [vmem:[%s2 + $0x8] sm:$0xff]
        %v542 = vld [vmem:[%s2 + $0x10] sm:$0xf]
        %v543 = vrsqrt.pop %v537
        %v544 = vmul.f32 %v537, %v543
        %vm545 = vcmp.eq.f32.partialorder %v537, inf
        %v546 = vsel %vm545, %v537, %v544
        %vm547 = vcmp.eq.f32.partialorder %v537, 0.0
        %v548 = vand.u32 %v537, 2147483648
        %v549 = vsel %vm547, %v548, %v546
        %v550 = vrsqrt.pop %v538
        %v551 = vmul.f32 %v538, %v550
        %vm552 = vcmp.eq.f32.partialorder %v538, inf
        %v553 = vsel %vm552, %v538, %v551
        %vm554 = vcmp.eq.f32.partialorder %v538, 0.0
        %v555 = vand.u32 %v538, 2147483648
        %v556 = vsel %vm554, %v555, %v553
        %v557 = vrsqrt.pop %v539
        %v558 = vmul.f32 %v539, %v557
        %vm559 = vcmp.eq.f32.partialorder %v539, inf
        %v560 = vsel %vm559, %v539, %v558
        %vm561 = vcmp.eq.f32.partialorder %v539, 0.0
        %v562 = vand.u32 %v539, 2147483648
        %v563 = vsel %vm561, %v562, %v560
        %v565 = vsel %vm348, %v540, 0
        %v568 = vsel %vm348, %v541, 0
        %v571 = vsel %vm348, %v542, 0
        %v574 = vsel %vm330, %v563, 0
        %576 = vmatprep.subr.mxu0 0.0
        %577 = vmatpush1.msra.mxu0 %v549
        %578 = vmatprep.subr.mxu0 0.0
        %579 = vmatpush1.msra.mxu0 %v556
        %580 = vmatprep.subr.mxu0 0.0
        %581 = vmatpush1.msra.mxu0 %v574
        %582 = vmatprep.subr.mxu0 0.0
        %583 = vmatpush1.msra.mxu0 0.0
        %584 = vmatprep.subr.mxu0 0.0
        %585 = vmatpush1.msra.mxu0 0.0
        %586 = vmatprep.subr.mxu0 0.0
        %587 = vmatpush1.msra.mxu0 0.0
        %588 = vmatprep.subr.mxu0 0.0
        %589 = vmatpush1.msra.mxu0 0.0
        %590 = vmatprep.subr.mxu0 0.0
        %591 = vmatpush1.msra.mxu0 0.0
        %592 = vmatprep.subr.mxu0 0.0
        %593 = vmatpush1.msra.mxu0 0.0
        %594 = vmatprep.subr.mxu0 0.0
        %595 = vmatpush1.msra.mxu0 0.0
        %596 = vmatprep.subr.mxu0 0.0
        %597 = vmatpush1.msra.mxu0 0.0
        %598 = vmatprep.subr.mxu0 0.0
        %599 = vmatpush1.msra.mxu0 0.0
        %600 = vmatprep.subr.mxu0 0.0
        %601 = vmatpush1.msra.mxu0 0.0
        %602 = vmatprep.subr.mxu0 0.0
        %603 = vmatpush1.msra.mxu0 0.0
        %604 = vmatprep.subr.mxu0 0.0
        %605 = vmatpush1.msra.mxu0 0.0
        %606 = vmatprep.subr.mxu0 0.0
        %607 = vmatpush1.msra.mxu0 0.0
        %608 = vmatprep.subr.mxu0 0.0
        %609 = vmatpush1.msra.mxu0 0.0
        %610 = vmatprep.subr.mxu0 0.0
        %611 = vmatpush1.msra.mxu0 0.0
        %612 = vmatprep.subr.mxu0 0.0
        %613 = vmatpush1.msra.mxu0 0.0
        %614 = vmatprep.subr.mxu0 0.0
        %615 = vmatpush1.msra.mxu0 0.0
        %616 = vmatprep.subr.mxu0 0.0
        %617 = vmatpush1.msra.mxu0 0.0
        %618 = vmatprep.subr.mxu0 0.0
        %619 = vmatpush1.msra.mxu0 0.0
        %620 = vmatprep.subr.mxu0 0.0
        %621 = vmatpush1.msra.mxu0 0.0
        %622 = vmatprep.subr.mxu0 0.0
        %623 = vmatpush1.msra.mxu0 0.0
        %624 = vmatprep.subr.mxu0 0.0
        %625 = vmatpush1.msra.mxu0 0.0
        %626 = vmatprep.subr.mxu0 0.0
        %627 = vmatpush1.msra.mxu0 0.0
        %628 = vmatprep.subr.mxu0 0.0
        %629 = vmatpush1.msra.mxu0 0.0
        %630 = vmatprep.subr.mxu0 0.0
        %631 = vmatpush1.msra.mxu0 0.0
        %632 = vmatprep.subr.mxu0 0.0
        %633 = vmatpush1.msra.mxu0 0.0
        %634 = vmatprep.subr.mxu0 0.0
        %635 = vmatpush1.msra.mxu0 0.0
        %636 = vmatprep.subr.mxu0 0.0
        %637 = vmatpush1.msra.mxu0 0.0
        %638 = vmatprep.subr.mxu0 0.0
        %639 = vmatpush1.msra.mxu0 0.0
        %640 = vmatprep.mubr.f32.mxu0 0.0
        %641 = vmatmul.mubr.f32.gmra.mrb[0].mxu0 %v565
        %v642 = vpop.f32.mrb[0].mxu0
        %v643 = vadd.f32 0.0, %v642
        %v644 = vpop.f32.mrb[0].mxu0
        %645 = vmatprep.mubr.f32.mxu0 0.0
        %646 = vmatmul.mubr.f32.gmra.mrb[0].mxu0 %v568
        %v647 = vpop.f32.mrb[0].mxu0
        %v648 = vadd.f32 0.0, %v647
        %v649 = vpop.f32.mrb[0].mxu0
        %650 = vmatprep.mubr.f32.mxu0 0.0
        %651 = vmatmul.mubr.f32.gmra.mrb[0].mxu0 %v571
        %v652 = vpop.f32.mrb[0].mxu0
        %v653 = vadd.f32 0.0, %v652
        %v654 = vpop.f32.mrb[0].mxu0
        %655 = vdwg.mxu0
        %657 = vset.pattern.permute.xlu0 0
        %658 = vperm.xlu0 %657, %v643
        %v659 = vpop.permute.xlu0 %658
        %662 = vset.pattern.permute.xlu0 0
        %663 = vperm.xlu0 %662, %v648
        %v664 = vpop.permute.xlu0 %663
        %667 = vset.pattern.permute.xlu0 0
        %668 = vperm.xlu0 %667, %v653
        %v669 = vpop.permute.xlu0 %668
        %v671 = vmul.f32 %v456, %v659
        %v672 = vmul.f32 %v457, %v659
        %v673 = vmul.f32 %v458, %v659
        %v674 = vmul.f32 %v459, %v659
        %v675 = vmul.f32 %v460, %v664
        %v676 = vmul.f32 %v461, %v664
        %v677 = vmul.f32 %v462, %v664
        %v678 = vmul.f32 %v463, %v664
        %v679 = vmul.f32 %v464, %v669
        %v680 = vmul.f32 %v465, %v669
        %v681 = vmul.f32 %v466, %v669
        %v682 = vmul.f32 %v467, %v669
        %v683 = vpack.c.bf16 %v675, %v671
        %v684 = vpack.c.bf16 %v676, %v672
        %v685 = vpack.c.bf16 %v677, %v673
        %v686 = vpack.c.bf16 %v678, %v674
        %v687 = vpack.c.bf16 %v679, %v679
        %v688 = vpack.c.bf16 %v680, %v680
        %v689 = vpack.c.bf16 %v681, %v681
        %v690 = vpack.c.bf16 %v682, %v682
        %v699 = vunpack.c.l.b16 %v683
        %v700 = vunpack.c.l.b16 %v684
        %v701 = vunpack.c.l.b16 %v685
        %v702 = vunpack.c.l.b16 %v686
        %v703 = vunpack.c.h.b16 %v683
        %v704 = vunpack.c.h.b16 %v684
        %v705 = vunpack.c.h.b16 %v685
        %v706 = vunpack.c.h.b16 %v686
        %v707 = vunpack.c.l.b16 %v687
        %v708 = vunpack.c.l.b16 %v688
        %v709 = vunpack.c.l.b16 %v689
        %v710 = vunpack.c.l.b16 %v690
        %v711 = vpack.c.b16 %v700, %v699
        %v712 = vpack.c.b16 %v702, %v701
        %v713 = vpack.c.b16 %v704, %v703
        %v714 = vpack.c.b16 %v706, %v705
        %v715 = vpack.c.b16 %v708, %v707
        %v716 = vpack.c.b16 %v710, %v709
        %723 = vst [vmem:[#allocation2] sm:$0xff] %v711
        %vm724 = vcmask 293892
        %vm725 = vmor %vm724, %vm330
        %726 = vst.msk [vmem:[#allocation2 + $0x8] sm:$0xff] %vm725, %v712
        %727 = vst [vmem:[#allocation2 + $0x10] sm:$0xff] %v713
        %728 = vst.msk [vmem:[#allocation2 + $0x18] sm:$0xff] %vm725, %v714
        %729 = vst [vmem:[#allocation2 + $0x20] sm:$0x33] %v715
        %vm730 = vcmask 1041408
        %vm731 = vcmask 291844
        %vm732 = vmor %vm731, %vm730
        %733 = vst.msk [vmem:[#allocation2 + $0x28] sm:$0x33] %vm732, %v716
        %vm734 = vcmask 1041408
        %vm735 = vcmask 1045508
        %vm736 = vmor %vm734, %vm735
        %v737 = vrot.slane %v711, 6
        %v738 = vrot.slane %v712, 6
        %v739 = vrot.slane %v737, 4
        %v740 = vrot.slane %v713, 6
        %v741 = vsel %vm736, %v739, %v740
        %v742 = vrot.slane %v738, 4
        %v743 = vrot.slane %v714, 6
        %v744 = vsel %vm736, %v742, %v743
        %v745 = vrot.slane %v740, 4
        %v746 = vrot.slane %v715, 6
        %v747 = vsel %vm736, %v745, %v746
        %v748 = vrot.slane %v743, 4
        %v749 = vrot.slane %v716, 6
        %v750 = vsel %vm736, %v748, %v749
        %751 = vrot.lane.b32.xlu0 %v737, 127
        %v752 = vpop.permute.xlu0 %751
        %753 = vrot.lane.b32.xlu0 %v738, 127
        %v754 = vpop.permute.xlu0 %753
        %755 = vrot.lane.b32.xlu0 %v741, 127
        %v756 = vpop.permute.xlu0 %755
        %757 = vrot.lane.b32.xlu0 %v744, 127
        %v758 = vpop.permute.xlu0 %757
        %759 = vrot.lane.b32.xlu0 %v747, 127
        %v760 = vpop.permute.xlu0 %759
        %761 = vrot.lane.b32.xlu0 %v750, 127
        %v762 = vpop.permute.xlu0 %761
        %v763 = vrot.slane %v752, 4
        %v764 = vrot.slane %v754, 4
        %v765 = vrot.slane %v756, 4
        %v766 = vrot.slane %v758, 4
        %v767 = vrot.slane %v760, 4
        %v768 = vrot.slane %v762, 4
        %vm769 = vcmask 1043456
        %v770 = vsel %vm769, %v763, %v764
        %vm771 = vcmask 1039360
        %v772 = vsel %vm771, %v752, %v770
        %v773 = vsel %vm771, %v754, %v764
        %v774 = vsel %vm769, %v765, %v766
        %v775 = vsel %vm771, %v756, %v774
        %v776 = vsel %vm771, %v758, %v766
        %v777 = vsel %vm769, %v767, %v768
        %v778 = vsel %vm771, %v760, %v777
        %v779 = vsel %vm771, %v762, %v768
        %786 = vst [vmem:[#allocation2 + $0x20] sm:$0xcc] %v772
        %vm787 = vcmask 1043458
        %vm788 = vcmask 293894
        %vm789 = vmor %vm788, %vm787
        %790 = vst.msk [vmem:[#allocation2 + $0x28] sm:$0xcc] %vm789, %v773
        %791 = vst [vmem:[#allocation2 + $0x30] sm:$0xff] %v775
        %792 = vst.msk [vmem:[#allocation2 + $0x38] sm:$0xff] %vm725, %v776
        %793 = vst [vmem:[#allocation2 + $0x40] sm:$0xff] %v778
        %794 = vst.msk [vmem:[#allocation2 + $0x48] sm:$0xff] %vm725, %v779
        %795 = vrot.lane.b32.xlu0 %v711, 126
        %v796 = vpop.permute.xlu0 %795
        %797 = vrot.lane.b32.xlu0 %v712, 126
        %v798 = vpop.permute.xlu0 %797
        %799 = vrot.lane.b32.xlu0 %v713, 126
        %v800 = vpop.permute.xlu0 %799
        %801 = vrot.lane.b32.xlu0 %v714, 126
        %v802 = vpop.permute.xlu0 %801
        %803 = vrot.lane.b32.xlu0 %v715, 126
        %v804 = vpop.permute.xlu0 %803
        %805 = vrot.lane.b32.xlu0 %v716, 126
        %v806 = vpop.permute.xlu0 %805
        %v807 = vrot.slane %v796, 4
        %v808 = vrot.slane %v798, 4
        %v809 = vrot.slane %v800, 4
        %v810 = vrot.slane %v802, 4
        %v811 = vrot.slane %v804, 4
        %v812 = vrot.slane %v806, 4
        %v813 = vsel %vm769, %v807, %v808
        %vm814 = vcmask 1031168
        %v815 = vsel %vm814, %v796, %v813
        %v816 = vsel %vm814, %v798, %v808
        %v817 = vsel %vm769, %v809, %v810
        %v818 = vsel %vm814, %v800, %v817
        %v819 = vsel %vm814, %v802, %v810
        %v820 = vsel %vm769, %v811, %v812
        %v821 = vsel %vm814, %v804, %v820
        %v822 = vsel %vm814, %v806, %v812
        %829 = vst [vmem:[#allocation2 + $0x50] sm:$0xff] %v815
        %830 = vst.msk [vmem:[#allocation2 + $0x58] sm:$0xff] %vm725, %v816
        %831 = vst [vmem:[#allocation2 + $0x60] sm:$0xff] %v818
        %832 = vst.msk [vmem:[#allocation2 + $0x68] sm:$0xff] %vm725, %v819
        %833 = vst [vmem:[#allocation2 + $0x70] sm:$0x33] %v821
        %834 = vst.msk [vmem:[#allocation2 + $0x78] sm:$0x33] %vm732, %v822
        %835 = vrot.lane.b32.xlu0 %v737, 125
        %v836 = vpop.permute.xlu0 %835
        %837 = vrot.lane.b32.xlu0 %v738, 125
        %v838 = vpop.permute.xlu0 %837
        %839 = vrot.lane.b32.xlu0 %v741, 125
        %v840 = vpop.permute.xlu0 %839
        %841 = vrot.lane.b32.xlu0 %v744, 125
        %v842 = vpop.permute.xlu0 %841
        %843 = vrot.lane.b32.xlu0 %v747, 125
        %v844 = vpop.permute.xlu0 %843
        %845 = vrot.lane.b32.xlu0 %v750, 125
        %v846 = vpop.permute.xlu0 %845
        %v847 = vrot.slane %v836, 4
        %v848 = vrot.slane %v838, 4
        %v849 = vrot.slane %v840, 4
        %v850 = vrot.slane %v842, 4
        %v851 = vrot.slane %v844, 4
        %v852 = vrot.slane %v846, 4
        %v853 = vsel %vm769, %v847, %v848
        %vm854 = vcmask 1022976
        %v855 = vsel %vm854, %v836, %v853
        %v856 = vsel %vm854, %v838, %v848
        %v857 = vsel %vm769, %v849, %v850
        %v858 = vsel %vm854, %v840, %v857
        %v859 = vsel %vm854, %v842, %v850
        %v860 = vsel %vm769, %v851, %v852
        %v861 = vsel %vm854, %v844, %v860
        %v862 = vsel %vm854, %v846, %v852
        %869 = vst [vmem:[#allocation2 + $0x70] sm:$0xcc] %v855
        %870 = vst.msk [vmem:[#allocation2 + $0x78] sm:$0xcc] %vm789, %v856
        %871 = vst [vmem:[#allocation2 + $0x80] sm:$0xff] %v858
        %872 = vst.msk [vmem:[#allocation2 + $0x88] sm:$0xff] %vm725, %v859
        %873 = vst [vmem:[#allocation2 + $0x90] sm:$0xff] %v861
        %874 = vst.msk [vmem:[#allocation2 + $0x98] sm:$0xff] %vm725, %v862
        %875 = vrot.lane.b32.xlu0 %v711, 124
        %v876 = vpop.permute.xlu0 %875
        %877 = vrot.lane.b32.xlu0 %v712, 124
        %v878 = vpop.permute.xlu0 %877
        %879 = vrot.lane.b32.xlu0 %v713, 124
        %v880 = vpop.permute.xlu0 %879
        %881 = vrot.lane.b32.xlu0 %v714, 124
        %v882 = vpop.permute.xlu0 %881
        %883 = vrot.lane.b32.xlu0 %v715, 124
        %v884 = vpop.permute.xlu0 %883
        %885 = vrot.lane.b32.xlu0 %v716, 124
        %v886 = vpop.permute.xlu0 %885
        %v887 = vrot.slane %v876, 4
        %v888 = vrot.slane %v878, 4
        %v889 = vrot.slane %v880, 4
        %v890 = vrot.slane %v882, 4
        %v891 = vrot.slane %v884, 4
        %v892 = vrot.slane %v886, 4
        %v893 = vsel %vm769, %v887, %v888
        %vm894 = vcmask 1014784
        %v895 = vsel %vm894, %v876, %v893
        %v896 = vsel %vm894, %v878, %v888
        %v897 = vsel %vm769, %v889, %v890
        %v898 = vsel %vm894, %v880, %v897
        %v899 = vsel %vm894, %v882, %v890
        %v900 = vsel %vm769, %v891, %v892
        %v901 = vsel %vm894, %v884, %v900
        %v902 = vsel %vm894, %v886, %v892
        %909 = vst [vmem:[#allocation2 + $0xa0] sm:$0xff] %v895
        %910 = vst.msk [vmem:[#allocation2 + $0xa8] sm:$0xff] %vm725, %v896
        %911 = vst [vmem:[#allocation2 + $0xb0] sm:$0xff] %v898
        %912 = vst.msk [vmem:[#allocation2 + $0xb8] sm:$0xff] %vm725, %v899
        %913 = vst [vmem:[#allocation2 + $0xc0] sm:$0x33] %v901
        %914 = vst.msk [vmem:[#allocation2 + $0xc8] sm:$0x33] %vm732, %v902
        %915 = vrot.lane.b32.xlu0 %v737, 123
        %v916 = vpop.permute.xlu0 %915
        %917 = vrot.lane.b32.xlu0 %v738, 123
        %v918 = vpop.permute.xlu0 %917
        %919 = vrot.lane.b32.xlu0 %v741, 123
        %v920 = vpop.permute.xlu0 %919
        %921 = vrot.lane.b32.xlu0 %v744, 123
        %v922 = vpop.permute.xlu0 %921
        %923 = vrot.lane.b32.xlu0 %v747, 123
        %v924 = vpop.permute.xlu0 %923
        %925 = vrot.lane.b32.xlu0 %v750, 123
        %v926 = vpop.permute.xlu0 %925
        %v927 = vrot.slane %v916, 4
        %v928 = vrot.slane %v918, 4
        %v929 = vrot.slane %v920, 4
        %v930 = vrot.slane %v922, 4
        %v931 = vrot.slane %v924, 4
        %v932 = vrot.slane %v926, 4
        %v933 = vsel %vm769, %v927, %v928
        %vm934 = vcmask 1006592
        %v935 = vsel %vm934, %v916, %v933
        %v936 = vsel %vm934, %v918, %v928
        %v937 = vsel %vm769, %v929, %v930
        %v938 = vsel %vm934, %v920, %v937
        %v939 = vsel %vm934, %v922, %v930
        %v940 = vsel %vm769, %v931, %v932
        %v941 = vsel %vm934, %v924, %v940
        %v942 = vsel %vm934, %v926, %v932
        %949 = vst [vmem:[#allocation2 + $0xc0] sm:$0xcc] %v935
        %950 = vst.msk [vmem:[#allocation2 + $0xc8] sm:$0xcc] %vm789, %v936
        %951 = vst [vmem:[#allocation2 + $0xd0] sm:$0xff] %v938
        %952 = vst.msk [vmem:[#allocation2 + $0xd8] sm:$0xff] %vm725, %v939
        %953 = vst [vmem:[#allocation2 + $0xe0] sm:$0xff] %v941
        %954 = vst.msk [vmem:[#allocation2 + $0xe8] sm:$0xff] %vm725, %v942
        %955 = vrot.lane.b32.xlu0 %v711, 122
        %v956 = vpop.permute.xlu0 %955
        %957 = vrot.lane.b32.xlu0 %v712, 122
        %v958 = vpop.permute.xlu0 %957
        %959 = vrot.lane.b32.xlu0 %v713, 122
        %v960 = vpop.permute.xlu0 %959
        %961 = vrot.lane.b32.xlu0 %v714, 122
        %v962 = vpop.permute.xlu0 %961
        %963 = vrot.lane.b32.xlu0 %v715, 122
        %v964 = vpop.permute.xlu0 %963
        %965 = vrot.lane.b32.xlu0 %v716, 122
        %v966 = vpop.permute.xlu0 %965
        %v967 = vrot.slane %v956, 4
        %v968 = vrot.slane %v958, 4
        %v969 = vrot.slane %v960, 4
        %v970 = vrot.slane %v962, 4
        %v971 = vrot.slane %v964, 4
        %v972 = vrot.slane %v966, 4
        %v973 = vsel %vm769, %v967, %v968
        %vm974 = vcmask 998400
        %v975 = vsel %vm974, %v956, %v973
        %v976 = vsel %vm974, %v958, %v968
        %v977 = vsel %vm769, %v969, %v970
        %v978 = vsel %vm974, %v960, %v977
        %v979 = vsel %vm974, %v962, %v970
        %v980 = vsel %vm769, %v971, %v972
        %v981 = vsel %vm974, %v964, %v980
        %v982 = vsel %vm974, %v966, %v972
        %989 = vst [vmem:[#allocation2 + $0xf0] sm:$0xff] %v975
        %990 = vst.msk [vmem:[#allocation2 + $0xf8] sm:$0xff] %vm725, %v976
        %991 = vst [vmem:[#allocation2 + $0x100] sm:$0xff] %v978
        %992 = vst.msk [vmem:[#allocation2 + $0x108] sm:$0xff] %vm725, %v979
        %993 = vst [vmem:[#allocation2 + $0x110] sm:$0x33] %v981
        %994 = vst.msk [vmem:[#allocation2 + $0x118] sm:$0x33] %vm732, %v982
        %995 = vrot.lane.b32.xlu0 %v737, 121
        %v996 = vpop.permute.xlu0 %995
        %997 = vrot.lane.b32.xlu0 %v738, 121
        %v998 = vpop.permute.xlu0 %997
        %999 = vrot.lane.b32.xlu0 %v741, 121
        %v1000 = vpop.permute.xlu0 %999
        %1001 = vrot.lane.b32.xlu0 %v744, 121
        %v1002 = vpop.permute.xlu0 %1001
        %1003 = vrot.lane.b32.xlu0 %v747, 121
        %v1004 = vpop.permute.xlu0 %1003
        %1005 = vrot.lane.b32.xlu0 %v750, 121
        %v1006 = vpop.permute.xlu0 %1005
        %v1007 = vrot.slane %v996, 4
        %v1008 = vrot.slane %v998, 4
        %v1009 = vrot.slane %v1000, 4
        %v1010 = vrot.slane %v1002, 4
        %v1011 = vrot.slane %v1004, 4
        %v1012 = vrot.slane %v1006, 4
        %v1013 = vsel %vm769, %v1007, %v1008
        %vm1014 = vcmask 990208
        %v1015 = vsel %vm1014, %v996, %v1013
        %v1016 = vsel %vm1014, %v998, %v1008
        %v1017 = vsel %vm769, %v1009, %v1010
        %v1018 = vsel %vm1014, %v1000, %v1017
        %v1019 = vsel %vm1014, %v1002, %v1010
        %v1020 = vsel %vm769, %v1011, %v1012
        %v1021 = vsel %vm1014, %v1004, %v1020
        %v1022 = vsel %vm1014, %v1006, %v1012
        %1029 = vst [vmem:[#allocation2 + $0x110] sm:$0xcc] %v1015
        %1030 = vst.msk [vmem:[#allocation2 + $0x118] sm:$0xcc] %vm789, %v1016
        %1031 = vst [vmem:[#allocation2 + $0x120] sm:$0xff] %v1018
        %1032 = vst.msk [vmem:[#allocation2 + $0x128] sm:$0xff] %vm725, %v1019
        %1033 = vst [vmem:[#allocation2 + $0x130] sm:$0xff] %v1021
        %1034 = vst.msk [vmem:[#allocation2 + $0x138] sm:$0xff] %vm725, %v1022
        %1035 = vrot.lane.b32.xlu0 %v711, 120
        %v1036 = vpop.permute.xlu0 %1035
        %1037 = vrot.lane.b32.xlu0 %v712, 120
        %v1038 = vpop.permute.xlu0 %1037
        %1039 = vrot.lane.b32.xlu0 %v713, 120
        %v1040 = vpop.permute.xlu0 %1039
        %1041 = vrot.lane.b32.xlu0 %v714, 120
        %v1042 = vpop.permute.xlu0 %1041
        %1043 = vrot.lane.b32.xlu0 %v715, 120
        %v1044 = vpop.permute.xlu0 %1043
        %1045 = vrot.lane.b32.xlu0 %v716, 120
        %v1046 = vpop.permute.xlu0 %1045
        %v1047 = vrot.slane %v1036, 4
        %v1048 = vrot.slane %v1038, 4
        %v1049 = vrot.slane %v1040, 4
        %v1050 = vrot.slane %v1042, 4
        %v1051 = vrot.slane %v1044, 4
        %v1052 = vrot.slane %v1046, 4
        %v1053 = vsel %vm769, %v1047, %v1048
        %vm1054 = vcmask 982016
        %v1055 = vsel %vm1054, %v1036, %v1053
        %v1056 = vsel %vm1054, %v1038, %v1048
        %v1057 = vsel %vm769, %v1049, %v1050
        %v1058 = vsel %vm1054, %v1040, %v1057
        %v1059 = vsel %vm1054, %v1042, %v1050
        %v1060 = vsel %vm769, %v1051, %v1052
        %v1061 = vsel %vm1054, %v1044, %v1060
        %v1062 = vsel %vm1054, %v1046, %v1052
        %1069 = vst [vmem:[#allocation2 + $0x140] sm:$0xff] %v1055
        %1070 = vst.msk [vmem:[#allocation2 + $0x148] sm:$0xff] %vm725, %v1056
        %1071 = vst [vmem:[#allocation2 + $0x150] sm:$0xff] %v1058
        %1072 = vst.msk [vmem:[#allocation2 + $0x158] sm:$0xff] %vm725, %v1059
        %1073 = vst [vmem:[#allocation2 + $0x160] sm:$0x33] %v1061
        %1074 = vst.msk [vmem:[#allocation2 + $0x168] sm:$0x33] %vm732, %v1062
        %1075 = vrot.lane.b32.xlu0 %v737, 119
        %v1076 = vpop.permute.xlu0 %1075
        %1077 = vrot.lane.b32.xlu0 %v738, 119
        %v1078 = vpop.permute.xlu0 %1077
        %1079 = vrot.lane.b32.xlu0 %v741, 119
        %v1080 = vpop.permute.xlu0 %1079
        %1081 = vrot.lane.b32.xlu0 %v744, 119
        %v1082 = vpop.permute.xlu0 %1081
        %1083 = vrot.lane.b32.xlu0 %v747, 119
        %v1084 = vpop.permute.xlu0 %1083
        %1085 = vrot.lane.b32.xlu0 %v750, 119
        %v1086 = vpop.permute.xlu0 %1085
        %v1087 = vrot.slane %v1076, 4
        %v1088 = vrot.slane %v1078, 4
        %v1089 = vrot.slane %v1080, 4
        %v1090 = vrot.slane %v1082, 4
        %v1091 = vrot.slane %v1084, 4
        %v1092 = vrot.slane %v1086, 4
        %v1093 = vsel %vm769, %v1087, %v1088
        %vm1094 = vcmask 973824
        %v1095 = vsel %vm1094, %v1076, %v1093
        %v1096 = vsel %vm1094, %v1078, %v1088
        %v1097 = vsel %vm769, %v1089, %v1090
        %v1098 = vsel %vm1094, %v1080, %v1097
        %v1099 = vsel %vm1094, %v1082, %v1090
        %v1100 = vsel %vm769, %v1091, %v1092
        %v1101 = vsel %vm1094, %v1084, %v1100
        %v1102 = vsel %vm1094, %v1086, %v1092
        %1109 = vst [vmem:[#allocation2 + $0x160] sm:$0xcc] %v1095
        %1110 = vst.msk [vmem:[#allocation2 + $0x168] sm:$0xcc] %vm789, %v1096
        %1111 = vst [vmem:[#allocation2 + $0x170] sm:$0xff] %v1098
        %1112 = vst.msk [vmem:[#allocation2 + $0x178] sm:$0xff] %vm725, %v1099
        %1113 = vst [vmem:[#allocation2 + $0x180] sm:$0xff] %v1101
        %1114 = vst.msk [vmem:[#allocation2 + $0x188] sm:$0xff] %vm725, %v1102
        %1115 = vrot.lane.b32.xlu0 %v711, 118
        %v1116 = vpop.permute.xlu0 %1115
        %1117 = vrot.lane.b32.xlu0 %v712, 118
        %v1118 = vpop.permute.xlu0 %1117
        %1119 = vrot.lane.b32.xlu0 %v713, 118
        %v1120 = vpop.permute.xlu0 %1119
        %1121 = vrot.lane.b32.xlu0 %v714, 118
        %v1122 = vpop.permute.xlu0 %1121
        %1123 = vrot.lane.b32.xlu0 %v715, 118
        %v1124 = vpop.permute.xlu0 %1123
        %1125 = vrot.lane.b32.xlu0 %v716, 118
        %v1126 = vpop.permute.xlu0 %1125
        %v1127 = vrot.slane %v1116, 4
        %v1128 = vrot.slane %v1118, 4
        %v1129 = vrot.slane %v1120, 4
        %v1130 = vrot.slane %v1122, 4
        %v1131 = vrot.slane %v1124, 4
        %v1132 = vrot.slane %v1126, 4
        %v1133 = vsel %vm769, %v1127, %v1128
        %vm1134 = vcmask 965632
        %v1135 = vsel %vm1134, %v1116, %v1133
        %v1136 = vsel %vm1134, %v1118, %v1128
        %v1137 = vsel %vm769, %v1129, %v1130
        %v1138 = vsel %vm1134, %v1120, %v1137
        %v1139 = vsel %vm1134, %v1122, %v1130
        %v1140 = vsel %vm769, %v1131, %v1132
        %v1141 = vsel %vm1134, %v1124, %v1140
        %v1142 = vsel %vm1134, %v1126, %v1132
        %1149 = vst [vmem:[#allocation2 + $0x190] sm:$0xff] %v1135
        %1150 = vst.msk [vmem:[#allocation2 + $0x198] sm:$0xff] %vm725, %v1136
        %1151 = vst [vmem:[#allocation2 + $0x1a0] sm:$0xff] %v1138
        %1152 = vst.msk [vmem:[#allocation2 + $0x1a8] sm:$0xff] %vm725, %v1139
        %1153 = vst [vmem:[#allocation2 + $0x1b0] sm:$0x33] %v1141
        %1154 = vst.msk [vmem:[#allocation2 + $0x1b8] sm:$0x33] %vm732, %v1142
        %1155 = vrot.lane.b32.xlu0 %v737, 117
        %v1156 = vpop.permute.xlu0 %1155
        %1157 = vrot.lane.b32.xlu0 %v738, 117
        %v1158 = vpop.permute.xlu0 %1157
        %1159 = vrot.lane.b32.xlu0 %v741, 117
        %v1160 = vpop.permute.xlu0 %1159
        %1161 = vrot.lane.b32.xlu0 %v744, 117
        %v1162 = vpop.permute.xlu0 %1161
        %1163 = vrot.lane.b32.xlu0 %v747, 117
        %v1164 = vpop.permute.xlu0 %1163
        %1165 = vrot.lane.b32.xlu0 %v750, 117
        %v1166 = vpop.permute.xlu0 %1165
        %v1167 = vrot.slane %v1156, 4
        %v1168 = vrot.slane %v1158, 4
        %v1169 = vrot.slane %v1160, 4
        %v1170 = vrot.slane %v1162, 4
        %v1171 = vrot.slane %v1164, 4
        %v1172 = vrot.slane %v1166, 4
        %v1173 = vsel %vm769, %v1167, %v1168
        %vm1174 = vcmask 957440
        %v1175 = vsel %vm1174, %v1156, %v1173
        %v1176 = vsel %vm1174, %v1158, %v1168
        %v1177 = vsel %vm769, %v1169, %v1170
        %v1178 = vsel %vm1174, %v1160, %v1177
        %v1179 = vsel %vm1174, %v1162, %v1170
        %v1180 = vsel %vm769, %v1171, %v1172
        %v1181 = vsel %vm1174, %v1164, %v1180
        %v1182 = vsel %vm1174, %v1166, %v1172
        %1189 = vst [vmem:[#allocation2 + $0x1b0] sm:$0xcc] %v1175
        %1190 = vst.msk [vmem:[#allocation2 + $0x1b8] sm:$0xcc] %vm789, %v1176
        %1191 = vst [vmem:[#allocation2 + $0x1c0] sm:$0xff] %v1178
        %1192 = vst.msk [vmem:[#allocation2 + $0x1c8] sm:$0xff] %vm725, %v1179
        %1193 = vst [vmem:[#allocation2 + $0x1d0] sm:$0xff] %v1181
        %1194 = vst.msk [vmem:[#allocation2 + $0x1d8] sm:$0xff] %vm725, %v1182
        %1195 = vrot.lane.b32.xlu0 %v711, 116
        %v1196 = vpop.permute.xlu0 %1195
        %1197 = vrot.lane.b32.xlu0 %v712, 116
        %v1198 = vpop.permute.xlu0 %1197
        %1199 = vrot.lane.b32.xlu0 %v713, 116
        %v1200 = vpop.permute.xlu0 %1199
        %1201 = vrot.lane.b32.xlu0 %v714, 116
        %v1202 = vpop.permute.xlu0 %1201
        %1203 = vrot.lane.b32.xlu0 %v715, 116
        %v1204 = vpop.permute.xlu0 %1203
        %1205 = vrot.lane.b32.xlu0 %v716, 116
        %v1206 = vpop.permute.xlu0 %1205
        %v1207 = vrot.slane %v1196, 4
        %v1208 = vrot.slane %v1198, 4
        %v1209 = vrot.slane %v1200, 4
        %v1210 = vrot.slane %v1202, 4
        %v1211 = vrot.slane %v1204, 4
        %v1212 = vrot.slane %v1206, 4
        %v1213 = vsel %vm769, %v1207, %v1208
        %vm1214 = vcmask 949248
        %v1215 = vsel %vm1214, %v1196, %v1213
        %v1216 = vsel %vm1214, %v1198, %v1208
        %v1217 = vsel %vm769, %v1209, %v1210
        %v1218 = vsel %vm1214, %v1200, %v1217
        %v1219 = vsel %vm1214, %v1202, %v1210
        %v1220 = vsel %vm769, %v1211, %v1212
        %v1221 = vsel %vm1214, %v1204, %v1220
        %v1222 = vsel %vm1214, %v1206, %v1212
        %1229 = vst [vmem:[#allocation2 + $0x1e0] sm:$0xff] %v1215
        %1230 = vst.msk [vmem:[#allocation2 + $0x1e8] sm:$0xff] %vm725, %v1216
        %1231 = vst [vmem:[#allocation2 + $0x1f0] sm:$0xff] %v1218
        %1232 = vst.msk [vmem:[#allocation2 + $0x1f8] sm:$0xff] %vm725, %v1219
        %1233 = vst [vmem:[#allocation2 + $0x200] sm:$0x33] %v1221
        %1234 = vst.msk [vmem:[#allocation2 + $0x208] sm:$0x33] %vm732, %v1222
        %1235 = vrot.lane.b32.xlu0 %v737, 115
        %v1236 = vpop.permute.xlu0 %1235
        %1237 = vrot.lane.b32.xlu0 %v738, 115
        %v1238 = vpop.permute.xlu0 %1237
        %1239 = vrot.lane.b32.xlu0 %v741, 115
        %v1240 = vpop.permute.xlu0 %1239
        %1241 = vrot.lane.b32.xlu0 %v744, 115
        %v1242 = vpop.permute.xlu0 %1241
        %1243 = vrot.lane.b32.xlu0 %v747, 115
        %v1244 = vpop.permute.xlu0 %1243
        %1245 = vrot.lane.b32.xlu0 %v750, 115
        %v1246 = vpop.permute.xlu0 %1245
        %v1247 = vrot.slane %v1236, 4
        %v1248 = vrot.slane %v1238, 4
        %v1249 = vrot.slane %v1240, 4
        %v1250 = vrot.slane %v1242, 4
        %v1251 = vrot.slane %v1244, 4
        %v1252 = vrot.slane %v1246, 4
        %v1253 = vsel %vm769, %v1247, %v1248
        %vm1254 = vcmask 941056
        %v1255 = vsel %vm1254, %v1236, %v1253
        %v1256 = vsel %vm1254, %v1238, %v1248
        %v1257 = vsel %vm769, %v1249, %v1250
        %v1258 = vsel %vm1254, %v1240, %v1257
        %v1259 = vsel %vm1254, %v1242, %v1250
        %v1260 = vsel %vm769, %v1251, %v1252
        %v1261 = vsel %vm1254, %v1244, %v1260
        %v1262 = vsel %vm1254, %v1246, %v1252
        %1269 = vst [vmem:[#allocation2 + $0x200] sm:$0xcc] %v1255
        %1270 = vst.msk [vmem:[#allocation2 + $0x208] sm:$0xcc] %vm789, %v1256
        %1271 = vst [vmem:[#allocation2 + $0x210] sm:$0xff] %v1258
        %1272 = vst.msk [vmem:[#allocation2 + $0x218] sm:$0xff] %vm725, %v1259
        %1273 = vst [vmem:[#allocation2 + $0x220] sm:$0xff] %v1261
        %1274 = vst.msk [vmem:[#allocation2 + $0x228] sm:$0xff] %vm725, %v1262
        %1275 = vrot.lane.b32.xlu0 %v711, 114
        %v1276 = vpop.permute.xlu0 %1275
        %1277 = vrot.lane.b32.xlu0 %v712, 114
        %v1278 = vpop.permute.xlu0 %1277
        %1279 = vrot.lane.b32.xlu0 %v713, 114
        %v1280 = vpop.permute.xlu0 %1279
        %1281 = vrot.lane.b32.xlu0 %v714, 114
        %v1282 = vpop.permute.xlu0 %1281
        %1283 = vrot.lane.b32.xlu0 %v715, 114
        %v1284 = vpop.permute.xlu0 %1283
        %1285 = vrot.lane.b32.xlu0 %v716, 114
        %v1286 = vpop.permute.xlu0 %1285
        %v1287 = vrot.slane %v1276, 4
        %v1288 = vrot.slane %v1278, 4
        %v1289 = vrot.slane %v1280, 4
        %v1290 = vrot.slane %v1282, 4
        %v1291 = vrot.slane %v1284, 4
        %v1292 = vrot.slane %v1286, 4
        %v1293 = vsel %vm769, %v1287, %v1288
        %vm1294 = vcmask 932864
        %v1295 = vsel %vm1294, %v1276, %v1293
        %v1296 = vsel %vm1294, %v1278, %v1288
        %v1297 = vsel %vm769, %v1289, %v1290
        %v1298 = vsel %vm1294, %v1280, %v1297
        %v1299 = vsel %vm1294, %v1282, %v1290
        %v1300 = vsel %vm769, %v1291, %v1292
        %v1301 = vsel %vm1294, %v1284, %v1300
        %v1302 = vsel %vm1294, %v1286, %v1292
        %1309 = vst [vmem:[#allocation2 + $0x230] sm:$0xff] %v1295
        %1310 = vst.msk [vmem:[#allocation2 + $0x238] sm:$0xff] %vm725, %v1296
        %1311 = vst [vmem:[#allocation2 + $0x240] sm:$0xff] %v1298
        %1312 = vst.msk [vmem:[#allocation2 + $0x248] sm:$0xff] %vm725, %v1299
        %1313 = vst [vmem:[#allocation2 + $0x250] sm:$0x33] %v1301
        %1314 = vst.msk [vmem:[#allocation2 + $0x258] sm:$0x33] %vm732, %v1302
        %1315 = vrot.lane.b32.xlu0 %v737, 113
        %v1316 = vpop.permute.xlu0 %1315
        %1317 = vrot.lane.b32.xlu0 %v738, 113
        %v1318 = vpop.permute.xlu0 %1317
        %1319 = vrot.lane.b32.xlu0 %v741, 113
        %v1320 = vpop.permute.xlu0 %1319
        %1321 = vrot.lane.b32.xlu0 %v744, 113
        %v1322 = vpop.permute.xlu0 %1321
        %1323 = vrot.lane.b32.xlu0 %v747, 113
        %v1324 = vpop.permute.xlu0 %1323
        %1325 = vrot.lane.b32.xlu0 %v750, 113
        %v1326 = vpop.permute.xlu0 %1325
        %v1327 = vrot.slane %v1316, 4
        %v1328 = vrot.slane %v1318, 4
        %v1329 = vrot.slane %v1320, 4
        %v1330 = vrot.slane %v1322, 4
        %v1331 = vrot.slane %v1324, 4
        %v1332 = vrot.slane %v1326, 4
        %v1333 = vsel %vm769, %v1327, %v1328
        %vm1334 = vcmask 924672
        %v1335 = vsel %vm1334, %v1316, %v1333
        %v1336 = vsel %vm1334, %v1318, %v1328
        %v1337 = vsel %vm769, %v1329, %v1330
        %v1338 = vsel %vm1334, %v1320, %v1337
        %v1339 = vsel %vm1334, %v1322, %v1330
        %v1340 = vsel %vm769, %v1331, %v1332
        %v1341 = vsel %vm1334, %v1324, %v1340
        %v1342 = vsel %vm1334, %v1326, %v1332
        %1349 = vst [vmem:[#allocation2 + $0x250] sm:$0xcc] %v1335
        %1350 = vst.msk [vmem:[#allocation2 + $0x258] sm:$0xcc] %vm789, %v1336
        %1351 = vst [vmem:[#allocation2 + $0x260] sm:$0xff] %v1338
        %1352 = vst.msk [vmem:[#allocation2 + $0x268] sm:$0xff] %vm725, %v1339
        %1353 = vst [vmem:[#allocation2 + $0x270] sm:$0xff] %v1341
        %1354 = vst.msk [vmem:[#allocation2 + $0x278] sm:$0xff] %vm725, %v1342
        %1355 = vrot.lane.b32.xlu0 %v711, 112
        %v1356 = vpop.permute.xlu0 %1355
        %1357 = vrot.lane.b32.xlu0 %v712, 112
        %v1358 = vpop.permute.xlu0 %1357
        %1359 = vrot.lane.b32.xlu0 %v713, 112
        %v1360 = vpop.permute.xlu0 %1359
        %1361 = vrot.lane.b32.xlu0 %v714, 112
        %v1362 = vpop.permute.xlu0 %1361
        %1363 = vrot.lane.b32.xlu0 %v715, 112
        %v1364 = vpop.permute.xlu0 %1363
        %1365 = vrot.lane.b32.xlu0 %v716, 112
        %v1366 = vpop.permute.xlu0 %1365
        %v1367 = vrot.slane %v1356, 4
        %v1368 = vrot.slane %v1358, 4
        %v1369 = vrot.slane %v1360, 4
        %v1370 = vrot.slane %v1362, 4
        %v1371 = vrot.slane %v1364, 4
        %v1372 = vrot.slane %v1366, 4
        %v1373 = vsel %vm769, %v1367, %v1368
        %vm1374 = vcmask 916480
        %v1375 = vsel %vm1374, %v1356, %v1373
        %v1376 = vsel %vm1374, %v1358, %v1368
        %v1377 = vsel %vm769, %v1369, %v1370
        %v1378 = vsel %vm1374, %v1360, %v1377
        %v1379 = vsel %vm1374, %v1362, %v1370
        %v1380 = vsel %vm769, %v1371, %v1372
        %v1381 = vsel %vm1374, %v1364, %v1380
        %v1382 = vsel %vm1374, %v1366, %v1372
        %1389 = vst [vmem:[#allocation2 + $0x280] sm:$0xff] %v1375
        %1390 = vst.msk [vmem:[#allocation2 + $0x288] sm:$0xff] %vm725, %v1376
        %1391 = vst [vmem:[#allocation2 + $0x290] sm:$0xff] %v1378
        %1392 = vst.msk [vmem:[#allocation2 + $0x298] sm:$0xff] %vm725, %v1379
        %1393 = vst [vmem:[#allocation2 + $0x2a0] sm:$0x33] %v1381
        %1394 = vst.msk [vmem:[#allocation2 + $0x2a8] sm:$0x33] %vm732, %v1382
        %1395 = vrot.lane.b32.xlu0 %v737, 111
        %v1396 = vpop.permute.xlu0 %1395
        %1397 = vrot.lane.b32.xlu0 %v738, 111
        %v1398 = vpop.permute.xlu0 %1397
        %1399 = vrot.lane.b32.xlu0 %v741, 111
        %v1400 = vpop.permute.xlu0 %1399
        %1401 = vrot.lane.b32.xlu0 %v744, 111
        %v1402 = vpop.permute.xlu0 %1401
        %1403 = vrot.lane.b32.xlu0 %v747, 111
        %v1404 = vpop.permute.xlu0 %1403
        %1405 = vrot.lane.b32.xlu0 %v750, 111
        %v1406 = vpop.permute.xlu0 %1405
        %v1407 = vrot.slane %v1396, 4
        %v1408 = vrot.slane %v1398, 4
        %v1409 = vrot.slane %v1400, 4
        %v1410 = vrot.slane %v1402, 4
        %v1411 = vrot.slane %v1404, 4
        %v1412 = vrot.slane %v1406, 4
        %v1413 = vsel %vm769, %v1407, %v1408
        %vm1414 = vcmask 908288
        %v1415 = vsel %vm1414, %v1396, %v1413
        %v1416 = vsel %vm1414, %v1398, %v1408
        %v1417 = vsel %vm769, %v1409, %v1410
        %v1418 = vsel %vm1414, %v1400, %v1417
        %v1419 = vsel %vm1414, %v1402, %v1410
        %v1420 = vsel %vm769, %v1411, %v1412
        %v1421 = vsel %vm1414, %v1404, %v1420
        %v1422 = vsel %vm1414, %v1406, %v1412
        %1429 = vst [vmem:[#allocation2 + $0x2a0] sm:$0xcc] %v1415
        %1430 = vst.msk [vmem:[#allocation2 + $0x2a8] sm:$0xcc] %vm789, %v1416
        %1431 = vst [vmem:[#allocation2 + $0x2b0] sm:$0xff] %v1418
        %1432 = vst.msk [vmem:[#allocation2 + $0x2b8] sm:$0xff] %vm725, %v1419
        %1433 = vst [vmem:[#allocation2 + $0x2c0] sm:$0xff] %v1421
        %1434 = vst.msk [vmem:[#allocation2 + $0x2c8] sm:$0xff] %vm725, %v1422
        %1435 = vrot.lane.b32.xlu0 %v711, 110
        %v1436 = vpop.permute.xlu0 %1435
        %1437 = vrot.lane.b32.xlu0 %v712, 110
        %v1438 = vpop.permute.xlu0 %1437
        %1439 = vrot.lane.b32.xlu0 %v713, 110
        %v1440 = vpop.permute.xlu0 %1439
        %1441 = vrot.lane.b32.xlu0 %v714, 110
        %v1442 = vpop.permute.xlu0 %1441
        %1443 = vrot.lane.b32.xlu0 %v715, 110
        %v1444 = vpop.permute.xlu0 %1443
        %1445 = vrot.lane.b32.xlu0 %v716, 110
        %v1446 = vpop.permute.xlu0 %1445
        %v1447 = vrot.slane %v1436, 4
        %v1448 = vrot.slane %v1438, 4
        %v1449 = vrot.slane %v1440, 4
        %v1450 = vrot.slane %v1442, 4
        %v1451 = vrot.slane %v1444, 4
        %v1452 = vrot.slane %v1446, 4
        %v1453 = vsel %vm769, %v1447, %v1448
        %vm1454 = vcmask 900096
        %v1455 = vsel %vm1454, %v1436, %v1453
        %v1456 = vsel %vm1454, %v1438, %v1448
        %v1457 = vsel %vm769, %v1449, %v1450
        %v1458 = vsel %vm1454, %v1440, %v1457
        %v1459 = vsel %vm1454, %v1442, %v1450
        %v1460 = vsel %vm769, %v1451, %v1452
        %v1461 = vsel %vm1454, %v1444, %v1460
        %v1462 = vsel %vm1454, %v1446, %v1452
        %1469 = vst [vmem:[#allocation2 + $0x2d0] sm:$0xff] %v1455
        %1470 = vst.msk [vmem:[#allocation2 + $0x2d8] sm:$0xff] %vm725, %v1456
        %1471 = vst [vmem:[#allocation2 + $0x2e0] sm:$0xff] %v1458
        %1472 = vst.msk [vmem:[#allocation2 + $0x2e8] sm:$0xff] %vm725, %v1459
        %1473 = vst [vmem:[#allocation2 + $0x2f0] sm:$0x33] %v1461
        %1474 = vst.msk [vmem:[#allocation2 + $0x2f8] sm:$0x33] %vm732, %v1462
        %1475 = vrot.lane.b32.xlu0 %v737, 109
        %v1476 = vpop.permute.xlu0 %1475
        %1477 = vrot.lane.b32.xlu0 %v738, 109
        %v1478 = vpop.permute.xlu0 %1477
        %1479 = vrot.lane.b32.xlu0 %v741, 109
        %v1480 = vpop.permute.xlu0 %1479
        %1481 = vrot.lane.b32.xlu0 %v744, 109
        %v1482 = vpop.permute.xlu0 %1481
        %1483 = vrot.lane.b32.xlu0 %v747, 109
        %v1484 = vpop.permute.xlu0 %1483
        %1485 = vrot.lane.b32.xlu0 %v750, 109
        %v1486 = vpop.permute.xlu0 %1485
        %v1487 = vrot.slane %v1476, 4
        %v1488 = vrot.slane %v1478, 4
        %v1489 = vrot.slane %v1480, 4
        %v1490 = vrot.slane %v1482, 4
        %v1491 = vrot.slane %v1484, 4
        %v1492 = vrot.slane %v1486, 4
        %v1493 = vsel %vm769, %v1487, %v1488
        %vm1494 = vcmask 891904
        %v1495 = vsel %vm1494, %v1476, %v1493
        %v1496 = vsel %vm1494, %v1478, %v1488
        %v1497 = vsel %vm769, %v1489, %v1490
        %v1498 = vsel %vm1494, %v1480, %v1497
        %v1499 = vsel %vm1494, %v1482, %v1490
        %v1500 = vsel %vm769, %v1491, %v1492
        %v1501 = vsel %vm1494, %v1484, %v1500
        %v1502 = vsel %vm1494, %v1486, %v1492
        %1509 = vst [vmem:[#allocation2 + $0x2f0] sm:$0xcc] %v1495
        %1510 = vst.msk [vmem:[#allocation2 + $0x2f8] sm:$0xcc] %vm789, %v1496
        %1511 = vst [vmem:[#allocation2 + $0x300] sm:$0xff] %v1498
        %1512 = vst.msk [vmem:[#allocation2 + $0x308] sm:$0xff] %vm725, %v1499
        %1513 = vst [vmem:[#allocation2 + $0x310] sm:$0xff] %v1501
        %1514 = vst.msk [vmem:[#allocation2 + $0x318] sm:$0xff] %vm725, %v1502
        %1515 = vrot.lane.b32.xlu0 %v711, 108
        %v1516 = vpop.permute.xlu0 %1515
        %1517 = vrot.lane.b32.xlu0 %v712, 108
        %v1518 = vpop.permute.xlu0 %1517
        %1519 = vrot.lane.b32.xlu0 %v713, 108
        %v1520 = vpop.permute.xlu0 %1519
        %1521 = vrot.lane.b32.xlu0 %v714, 108
        %v1522 = vpop.permute.xlu0 %1521
        %1523 = vrot.lane.b32.xlu0 %v715, 108
        %v1524 = vpop.permute.xlu0 %1523
        %1525 = vrot.lane.b32.xlu0 %v716, 108
        %v1526 = vpop.permute.xlu0 %1525
        %v1527 = vrot.slane %v1516, 4
        %v1528 = vrot.slane %v1518, 4
        %v1529 = vrot.slane %v1520, 4
        %v1530 = vrot.slane %v1522, 4
        %v1531 = vrot.slane %v1524, 4
        %v1532 = vrot.slane %v1526, 4
        %v1533 = vsel %vm769, %v1527, %v1528
        %vm1534 = vcmask 883712
        %v1535 = vsel %vm1534, %v1516, %v1533
        %v1536 = vsel %vm1534, %v1518, %v1528
        %v1537 = vsel %vm769, %v1529, %v1530
        %v1538 = vsel %vm1534, %v1520, %v1537
        %v1539 = vsel %vm1534, %v1522, %v1530
        %v1540 = vsel %vm769, %v1531, %v1532
        %v1541 = vsel %vm1534, %v1524, %v1540
        %v1542 = vsel %vm1534, %v1526, %v1532
        %1549 = vst [vmem:[#allocation2 + $0x320] sm:$0xff] %v1535
        %1550 = vst.msk [vmem:[#allocation2 + $0x328] sm:$0xff] %vm725, %v1536
        %1551 = vst [vmem:[#allocation2 + $0x330] sm:$0xff] %v1538
        %1552 = vst.msk [vmem:[#allocation2 + $0x338] sm:$0xff] %vm725, %v1539
        %1553 = vst [vmem:[#allocation2 + $0x340] sm:$0x33] %v1541
        %1554 = vst.msk [vmem:[#allocation2 + $0x348] sm:$0x33] %vm732, %v1542
        %1555 = vrot.lane.b32.xlu0 %v737, 107
        %v1556 = vpop.permute.xlu0 %1555
        %1557 = vrot.lane.b32.xlu0 %v738, 107
        %v1558 = vpop.permute.xlu0 %1557
        %1559 = vrot.lane.b32.xlu0 %v741, 107
        %v1560 = vpop.permute.xlu0 %1559
        %1561 = vrot.lane.b32.xlu0 %v744, 107
        %v1562 = vpop.permute.xlu0 %1561
        %1563 = vrot.lane.b32.xlu0 %v747, 107
        %v1564 = vpop.permute.xlu0 %1563
        %1565 = vrot.lane.b32.xlu0 %v750, 107
        %v1566 = vpop.permute.xlu0 %1565
        %v1567 = vrot.slane %v1556, 4
        %v1568 = vrot.slane %v1558, 4
        %v1569 = vrot.slane %v1560, 4
        %v1570 = vrot.slane %v1562, 4
        %v1571 = vrot.slane %v1564, 4
        %v1572 = vrot.slane %v1566, 4
        %v1573 = vsel %vm769, %v1567, %v1568
        %vm1574 = vcmask 875520
        %v1575 = vsel %vm1574, %v1556, %v1573
        %v1576 = vsel %vm1574, %v1558, %v1568
        %v1577 = vsel %vm769, %v1569, %v1570
        %v1578 = vsel %vm1574, %v1560, %v1577
        %v1579 = vsel %vm1574, %v1562, %v1570
        %v1580 = vsel %vm769, %v1571, %v1572
        %v1581 = vsel %vm1574, %v1564, %v1580
        %v1582 = vsel %vm1574, %v1566, %v1572
        %1589 = vst [vmem:[#allocation2 + $0x340] sm:$0xcc] %v1575
        %1590 = vst.msk [vmem:[#allocation2 + $0x348] sm:$0xcc] %vm789, %v1576
        %1591 = vst [vmem:[#allocation2 + $0x350] sm:$0xff] %v1578
        %1592 = vst.msk [vmem:[#allocation2 + $0x358] sm:$0xff] %vm725, %v1579
        %1593 = vst [vmem:[#allocation2 + $0x360] sm:$0xff] %v1581
        %1594 = vst.msk [vmem:[#allocation2 + $0x368] sm:$0xff] %vm725, %v1582
        %1595 = vrot.lane.b32.xlu0 %v711, 106
        %v1596 = vpop.permute.xlu0 %1595
        %1597 = vrot.lane.b32.xlu0 %v712, 106
        %v1598 = vpop.permute.xlu0 %1597
        %1599 = vrot.lane.b32.xlu0 %v713, 106
        %v1600 = vpop.permute.xlu0 %1599
        %1601 = vrot.lane.b32.xlu0 %v714, 106
        %v1602 = vpop.permute.xlu0 %1601
        %1603 = vrot.lane.b32.xlu0 %v715, 106
        %v1604 = vpop.permute.xlu0 %1603
        %1605 = vrot.lane.b32.xlu0 %v716, 106
        %v1606 = vpop.permute.xlu0 %1605
        %v1607 = vrot.slane %v1596, 4
        %v1608 = vrot.slane %v1598, 4
        %v1609 = vrot.slane %v1600, 4
        %v1610 = vrot.slane %v1602, 4
        %v1611 = vrot.slane %v1604, 4
        %v1612 = vrot.slane %v1606, 4
        %v1613 = vsel %vm769, %v1607, %v1608
        %vm1614 = vcmask 867328
        %v1615 = vsel %vm1614, %v1596, %v1613
        %v1616 = vsel %vm1614, %v1598, %v1608
        %v1617 = vsel %vm769, %v1609, %v1610
        %v1618 = vsel %vm1614, %v1600, %v1617
        %v1619 = vsel %vm1614, %v1602, %v1610
        %v1620 = vsel %vm769, %v1611, %v1612
        %v1621 = vsel %vm1614, %v1604, %v1620
        %v1622 = vsel %vm1614, %v1606, %v1612
        %1629 = vst [vmem:[#allocation2 + $0x370] sm:$0xff] %v1615
        %1630 = vst.msk [vmem:[#allocation2 + $0x378] sm:$0xff] %vm725, %v1616
        %1631 = vst [vmem:[#allocation2 + $0x380] sm:$0xff] %v1618
        %1632 = vst.msk [vmem:[#allocation2 + $0x388] sm:$0xff] %vm725, %v1619
        %1633 = vst [vmem:[#allocation2 + $0x390] sm:$0x33] %v1621
        %1634 = vst.msk [vmem:[#allocation2 + $0x398] sm:$0x33] %vm732, %v1622
        %1635 = vrot.lane.b32.xlu0 %v737, 105
        %v1636 = vpop.permute.xlu0 %1635
        %1637 = vrot.lane.b32.xlu0 %v738, 105
        %v1638 = vpop.permute.xlu0 %1637
        %1639 = vrot.lane.b32.xlu0 %v741, 105
        %v1640 = vpop.permute.xlu0 %1639
        %1641 = vrot.lane.b32.xlu0 %v744, 105
        %v1642 = vpop.permute.xlu0 %1641
        %1643 = vrot.lane.b32.xlu0 %v747, 105
        %v1644 = vpop.permute.xlu0 %1643
        %1645 = vrot.lane.b32.xlu0 %v750, 105
        %v1646 = vpop.permute.xlu0 %1645
        %v1647 = vrot.slane %v1636, 4
        %v1648 = vrot.slane %v1638, 4
        %v1649 = vrot.slane %v1640, 4
        %v1650 = vrot.slane %v1642, 4
        %v1651 = vrot.slane %v1644, 4
        %v1652 = vrot.slane %v1646, 4
        %v1653 = vsel %vm769, %v1647, %v1648
        %vm1654 = vcmask 859136
        %v1655 = vsel %vm1654, %v1636, %v1653
        %v1656 = vsel %vm1654, %v1638, %v1648
        %v1657 = vsel %vm769, %v1649, %v1650
        %v1658 = vsel %vm1654, %v1640, %v1657
        %v1659 = vsel %vm1654, %v1642, %v1650
        %v1660 = vsel %vm769, %v1651, %v1652
        %v1661 = vsel %vm1654, %v1644, %v1660
        %v1662 = vsel %vm1654, %v1646, %v1652
        %1669 = vst [vmem:[#allocation2 + $0x390] sm:$0xcc] %v1655
        %1670 = vst.msk [vmem:[#allocation2 + $0x398] sm:$0xcc] %vm789, %v1656
        %1671 = vst [vmem:[#allocation2 + $0x3a0] sm:$0xff] %v1658
        %1672 = vst.msk [vmem:[#allocation2 + $0x3a8] sm:$0xff] %vm725, %v1659
        %1673 = vst [vmem:[#allocation2 + $0x3b0] sm:$0xff] %v1661
        %1674 = vst.msk [vmem:[#allocation2 + $0x3b8] sm:$0xff] %vm725, %v1662
        %1675 = vrot.lane.b32.xlu0 %v711, 104
        %v1676 = vpop.permute.xlu0 %1675
        %1677 = vrot.lane.b32.xlu0 %v712, 104
        %v1678 = vpop.permute.xlu0 %1677
        %1679 = vrot.lane.b32.xlu0 %v713, 104
        %v1680 = vpop.permute.xlu0 %1679
        %1681 = vrot.lane.b32.xlu0 %v714, 104
        %v1682 = vpop.permute.xlu0 %1681
        %1683 = vrot.lane.b32.xlu0 %v715, 104
        %v1684 = vpop.permute.xlu0 %1683
        %1685 = vrot.lane.b32.xlu0 %v716, 104
        %v1686 = vpop.permute.xlu0 %1685
        %v1687 = vrot.slane %v1676, 4
        %v1688 = vrot.slane %v1678, 4
        %v1689 = vrot.slane %v1680, 4
        %v1690 = vrot.slane %v1682, 4
        %v1691 = vrot.slane %v1684, 4
        %v1692 = vrot.slane %v1686, 4
        %v1693 = vsel %vm769, %v1687, %v1688
        %vm1694 = vcmask 850944
        %v1695 = vsel %vm1694, %v1676, %v1693
        %v1696 = vsel %vm1694, %v1678, %v1688
        %v1697 = vsel %vm769, %v1689, %v1690
        %v1698 = vsel %vm1694, %v1680, %v1697
        %v1699 = vsel %vm1694, %v1682, %v1690
        %v1700 = vsel %vm769, %v1691, %v1692
        %v1701 = vsel %vm1694, %v1684, %v1700
        %v1702 = vsel %vm1694, %v1686, %v1692
        %1709 = vst [vmem:[#allocation2 + $0x3c0] sm:$0xff] %v1695
        %1710 = vst.msk [vmem:[#allocation2 + $0x3c8] sm:$0xff] %vm725, %v1696
        %1711 = vst [vmem:[#allocation2 + $0x3d0] sm:$0xff] %v1698
        %1712 = vst.msk [vmem:[#allocation2 + $0x3d8] sm:$0xff] %vm725, %v1699
        %1713 = vst [vmem:[#allocation2 + $0x3e0] sm:$0x33] %v1701
        %1714 = vst.msk [vmem:[#allocation2 + $0x3e8] sm:$0x33] %vm732, %v1702
        %1715 = vrot.lane.b32.xlu0 %v737, 103
        %v1716 = vpop.permute.xlu0 %1715
        %1717 = vrot.lane.b32.xlu0 %v738, 103
        %v1718 = vpop.permute.xlu0 %1717
        %1719 = vrot.lane.b32.xlu0 %v741, 103
        %v1720 = vpop.permute.xlu0 %1719
        %1721 = vrot.lane.b32.xlu0 %v744, 103
        %v1722 = vpop.permute.xlu0 %1721
        %1723 = vrot.lane.b32.xlu0 %v747, 103
        %v1724 = vpop.permute.xlu0 %1723
        %1725 = vrot.lane.b32.xlu0 %v750, 103
        %v1726 = vpop.permute.xlu0 %1725
        %v1727 = vrot.slane %v1716, 4
        %v1728 = vrot.slane %v1718, 4
        %v1729 = vrot.slane %v1720, 4
        %v1730 = vrot.slane %v1722, 4
        %v1731 = vrot.slane %v1724, 4
        %v1732 = vrot.slane %v1726, 4
        %v1733 = vsel %vm769, %v1727, %v1728
        %vm1734 = vcmask 842752
        %v1735 = vsel %vm1734, %v1716, %v1733
        %v1736 = vsel %vm1734, %v1718, %v1728
        %v1737 = vsel %vm769, %v1729, %v1730
        %v1738 = vsel %vm1734, %v1720, %v1737
        %v1739 = vsel %vm1734, %v1722, %v1730
        %v1740 = vsel %vm769, %v1731, %v1732
        %v1741 = vsel %vm1734, %v1724, %v1740
        %v1742 = vsel %vm1734, %v1726, %v1732
        %1749 = vst [vmem:[#allocation2 + $0x3e0] sm:$0xcc] %v1735
        %1750 = vst.msk [vmem:[#allocation2 + $0x3e8] sm:$0xcc] %vm789, %v1736
        %1751 = vst [vmem:[#allocation2 + $0x3f0] sm:$0xff] %v1738
        %1752 = vst.msk [vmem:[#allocation2 + $0x3f8] sm:$0xff] %vm725, %v1739
        %1753 = vst [vmem:[#allocation2 + $0x400] sm:$0xff] %v1741
        %1754 = vst.msk [vmem:[#allocation2 + $0x408] sm:$0xff] %vm725, %v1742
        %1755 = vrot.lane.b32.xlu0 %v711, 102
        %v1756 = vpop.permute.xlu0 %1755
        %1757 = vrot.lane.b32.xlu0 %v712, 102
        %v1758 = vpop.permute.xlu0 %1757
        %1759 = vrot.lane.b32.xlu0 %v713, 102
        %v1760 = vpop.permute.xlu0 %1759
        %1761 = vrot.lane.b32.xlu0 %v714, 102
        %v1762 = vpop.permute.xlu0 %1761
        %1763 = vrot.lane.b32.xlu0 %v715, 102
        %v1764 = vpop.permute.xlu0 %1763
        %1765 = vrot.lane.b32.xlu0 %v716, 102
        %v1766 = vpop.permute.xlu0 %1765
        %v1767 = vrot.slane %v1756, 4
        %v1768 = vrot.slane %v1758, 4
        %v1769 = vrot.slane %v1760, 4
        %v1770 = vrot.slane %v1762, 4
        %v1771 = vrot.slane %v1764, 4
        %v1772 = vrot.slane %v1766, 4
        %v1773 = vsel %vm769, %v1767, %v1768
        %vm1774 = vcmask 834560
        %v1775 = vsel %vm1774, %v1756, %v1773
        %v1776 = vsel %vm1774, %v1758, %v1768
        %v1777 = vsel %vm769, %v1769, %v1770
        %v1778 = vsel %vm1774, %v1760, %v1777
        %v1779 = vsel %vm1774, %v1762, %v1770
        %v1780 = vsel %vm769, %v1771, %v1772
        %v1781 = vsel %vm1774, %v1764, %v1780
        %v1782 = vsel %vm1774, %v1766, %v1772
        %1789 = vst [vmem:[#allocation2 + $0x410] sm:$0xff] %v1775
        %1790 = vst.msk [vmem:[#allocation2 + $0x418] sm:$0xff] %vm725, %v1776
        %1791 = vst [vmem:[#allocation2 + $0x420] sm:$0xff] %v1778
        %1792 = vst.msk [vmem:[#allocation2 + $0x428] sm:$0xff] %vm725, %v1779
        %1793 = vst [vmem:[#allocation2 + $0x430] sm:$0x33] %v1781
        %1794 = vst.msk [vmem:[#allocation2 + $0x438] sm:$0x33] %vm732, %v1782
        %1795 = vrot.lane.b32.xlu0 %v737, 101
        %v1796 = vpop.permute.xlu0 %1795
        %1797 = vrot.lane.b32.xlu0 %v738, 101
        %v1798 = vpop.permute.xlu0 %1797
        %1799 = vrot.lane.b32.xlu0 %v741, 101
        %v1800 = vpop.permute.xlu0 %1799
        %1801 = vrot.lane.b32.xlu0 %v744, 101
        %v1802 = vpop.permute.xlu0 %1801
        %1803 = vrot.lane.b32.xlu0 %v747, 101
        %v1804 = vpop.permute.xlu0 %1803
        %1805 = vrot.lane.b32.xlu0 %v750, 101
        %v1806 = vpop.permute.xlu0 %1805
        %v1807 = vrot.slane %v1796, 4
        %v1808 = vrot.slane %v1798, 4
        %v1809 = vrot.slane %v1800, 4
        %v1810 = vrot.slane %v1802, 4
        %v1811 = vrot.slane %v1804, 4
        %v1812 = vrot.slane %v1806, 4
        %v1813 = vsel %vm769, %v1807, %v1808
        %vm1814 = vcmask 826368
        %v1815 = vsel %vm1814, %v1796, %v1813
        %v1816 = vsel %vm1814, %v1798, %v1808
        %v1817 = vsel %vm769, %v1809, %v1810
        %v1818 = vsel %vm1814, %v1800, %v1817
        %v1819 = vsel %vm1814, %v1802, %v1810
        %v1820 = vsel %vm769, %v1811, %v1812
        %v1821 = vsel %vm1814, %v1804, %v1820
        %v1822 = vsel %vm1814, %v1806, %v1812
        %1829 = vst [vmem:[#allocation2 + $0x430] sm:$0xcc] %v1815
        %1830 = vst.msk [vmem:[#allocation2 + $0x438] sm:$0xcc] %vm789, %v1816
        %1831 = vst [vmem:[#allocation2 + $0x440] sm:$0xff] %v1818
        %1832 = vst.msk [vmem:[#allocation2 + $0x448] sm:$0xff] %vm725, %v1819
        %1833 = vst [vmem:[#allocation2 + $0x450] sm:$0xff] %v1821
        %1834 = vst.msk [vmem:[#allocation2 + $0x458] sm:$0xff] %vm725, %v1822
        %1835 = vrot.lane.b32.xlu0 %v711, 100
        %v1836 = vpop.permute.xlu0 %1835
        %1837 = vrot.lane.b32.xlu0 %v712, 100
        %v1838 = vpop.permute.xlu0 %1837
        %1839 = vrot.lane.b32.xlu0 %v713, 100
        %v1840 = vpop.permute.xlu0 %1839
        %1841 = vrot.lane.b32.xlu0 %v714, 100
        %v1842 = vpop.permute.xlu0 %1841
        %1843 = vrot.lane.b32.xlu0 %v715, 100
        %v1844 = vpop.permute.xlu0 %1843
        %1845 = vrot.lane.b32.xlu0 %v716, 100
        %v1846 = vpop.permute.xlu0 %1845
        %v1847 = vrot.slane %v1836, 4
        %v1848 = vrot.slane %v1838, 4
        %v1849 = vrot.slane %v1840, 4
        %v1850 = vrot.slane %v1842, 4
        %v1851 = vrot.slane %v1844, 4
        %v1852 = vrot.slane %v1846, 4
        %v1853 = vsel %vm769, %v1847, %v1848
        %vm1854 = vcmask 818176
        %v1855 = vsel %vm1854, %v1836, %v1853
        %v1856 = vsel %vm1854, %v1838, %v1848
        %v1857 = vsel %vm769, %v1849, %v1850
        %v1858 = vsel %vm1854, %v1840, %v1857
        %v1859 = vsel %vm1854, %v1842, %v1850
        %v1860 = vsel %vm769, %v1851, %v1852
        %v1861 = vsel %vm1854, %v1844, %v1860
        %v1862 = vsel %vm1854, %v1846, %v1852
        %1869 = vst [vmem:[#allocation2 + $0x460] sm:$0xff] %v1855
        %1870 = vst.msk [vmem:[#allocation2 + $0x468] sm:$0xff] %vm725, %v1856
        %1871 = vst [vmem:[#allocation2 + $0x470] sm:$0xff] %v1858
        %1872 = vst.msk [vmem:[#allocation2 + $0x478] sm:$0xff] %vm725, %v1859
        %1873 = vst [vmem:[#allocation2 + $0x480] sm:$0x33] %v1861
        %1874 = vst.msk [vmem:[#allocation2 + $0x488] sm:$0x33] %vm732, %v1862
        %1875 = vrot.lane.b32.xlu0 %v737, 99
        %v1876 = vpop.permute.xlu0 %1875
        %1877 = vrot.lane.b32.xlu0 %v738, 99
        %v1878 = vpop.permute.xlu0 %1877
        %1879 = vrot.lane.b32.xlu0 %v741, 99
        %v1880 = vpop.permute.xlu0 %1879
        %1881 = vrot.lane.b32.xlu0 %v744, 99
        %v1882 = vpop.permute.xlu0 %1881
        %1883 = vrot.lane.b32.xlu0 %v747, 99
        %v1884 = vpop.permute.xlu0 %1883
        %1885 = vrot.lane.b32.xlu0 %v750, 99
        %v1886 = vpop.permute.xlu0 %1885
        %v1887 = vrot.slane %v1876, 4
        %v1888 = vrot.slane %v1878, 4
        %v1889 = vrot.slane %v1880, 4
        %v1890 = vrot.slane %v1882, 4
        %v1891 = vrot.slane %v1884, 4
        %v1892 = vrot.slane %v1886, 4
        %v1893 = vsel %vm769, %v1887, %v1888
        %vm1894 = vcmask 809984
        %v1895 = vsel %vm1894, %v1876, %v1893
        %v1896 = vsel %vm1894, %v1878, %v1888
        %v1897 = vsel %vm769, %v1889, %v1890
        %v1898 = vsel %vm1894, %v1880, %v1897
        %v1899 = vsel %vm1894, %v1882, %v1890
        %v1900 = vsel %vm769, %v1891, %v1892
        %v1901 = vsel %vm1894, %v1884, %v1900
        %v1902 = vsel %vm1894, %v1886, %v1892
        %1909 = vst [vmem:[#allocation2 + $0x480] sm:$0xcc] %v1895
        %1910 = vst.msk [vmem:[#allocation2 + $0x488] sm:$0xcc] %vm789, %v1896
        %1911 = vst [vmem:[#allocation2 + $0x490] sm:$0xff] %v1898
        %1912 = vst.msk [vmem:[#allocation2 + $0x498] sm:$0xff] %vm725, %v1899
        %1913 = vst [vmem:[#allocation2 + $0x4a0] sm:$0xff] %v1901
        %1914 = vst.msk [vmem:[#allocation2 + $0x4a8] sm:$0xff] %vm725, %v1902
        %1915 = vrot.lane.b32.xlu0 %v711, 98
        %v1916 = vpop.permute.xlu0 %1915
        %1917 = vrot.lane.b32.xlu0 %v712, 98
        %v1918 = vpop.permute.xlu0 %1917
        %1919 = vrot.lane.b32.xlu0 %v713, 98
        %v1920 = vpop.permute.xlu0 %1919
        %1921 = vrot.lane.b32.xlu0 %v714, 98
        %v1922 = vpop.permute.xlu0 %1921
        %1923 = vrot.lane.b32.xlu0 %v715, 98
        %v1924 = vpop.permute.xlu0 %1923
        %1925 = vrot.lane.b32.xlu0 %v716, 98
        %v1926 = vpop.permute.xlu0 %1925
        %v1927 = vrot.slane %v1916, 4
        %v1928 = vrot.slane %v1918, 4
        %v1929 = vrot.slane %v1920, 4
        %v1930 = vrot.slane %v1922, 4
        %v1931 = vrot.slane %v1924, 4
        %v1932 = vrot.slane %v1926, 4
        %v1933 = vsel %vm769, %v1927, %v1928
        %vm1934 = vcmask 801792
        %v1935 = vsel %vm1934, %v1916, %v1933
        %v1936 = vsel %vm1934, %v1918, %v1928
        %v1937 = vsel %vm769, %v1929, %v1930
        %v1938 = vsel %vm1934, %v1920, %v1937
        %v1939 = vsel %vm1934, %v1922, %v1930
        %v1940 = vsel %vm769, %v1931, %v1932
        %v1941 = vsel %vm1934, %v1924, %v1940
        %v1942 = vsel %vm1934, %v1926, %v1932
        %1949 = vst [vmem:[#allocation2 + $0x4b0] sm:$0xff] %v1935
        %1950 = vst.msk [vmem:[#allocation2 + $0x4b8] sm:$0xff] %vm725, %v1936
        %1951 = vst [vmem:[#allocation2 + $0x4c0] sm:$0xff] %v1938
        %1952 = vst.msk [vmem:[#allocation2 + $0x4c8] sm:$0xff] %vm725, %v1939
        %1953 = vst [vmem:[#allocation2 + $0x4d0] sm:$0x33] %v1941
        %1954 = vst.msk [vmem:[#allocation2 + $0x4d8] sm:$0x33] %vm732, %v1942
        %1955 = vrot.lane.b32.xlu0 %v737, 97
        %v1956 = vpop.permute.xlu0 %1955
        %1957 = vrot.lane.b32.xlu0 %v738, 97
        %v1958 = vpop.permute.xlu0 %1957
        %1959 = vrot.lane.b32.xlu0 %v741, 97
        %v1960 = vpop.permute.xlu0 %1959
        %1961 = vrot.lane.b32.xlu0 %v744, 97
        %v1962 = vpop.permute.xlu0 %1961
        %1963 = vrot.lane.b32.xlu0 %v747, 97
        %v1964 = vpop.permute.xlu0 %1963
        %1965 = vrot.lane.b32.xlu0 %v750, 97
        %v1966 = vpop.permute.xlu0 %1965
        %v1967 = vrot.slane %v1956, 4
        %v1968 = vrot.slane %v1958, 4
        %v1969 = vrot.slane %v1960, 4
        %v1970 = vrot.slane %v1962, 4
        %v1971 = vrot.slane %v1964, 4
        %v1972 = vrot.slane %v1966, 4
        %v1973 = vsel %vm769, %v1967, %v1968
        %vm1974 = vcmask 793600
        %v1975 = vsel %vm1974, %v1956, %v1973
        %v1976 = vsel %vm1974, %v1958, %v1968
        %v1977 = vsel %vm769, %v1969, %v1970
        %v1978 = vsel %vm1974, %v1960, %v1977
        %v1979 = vsel %vm1974, %v1962, %v1970
        %v1980 = vsel %vm769, %v1971, %v1972
        %v1981 = vsel %vm1974, %v1964, %v1980
        %v1982 = vsel %vm1974, %v1966, %v1972
        %1989 = vst [vmem:[#allocation2 + $0x4d0] sm:$0xcc] %v1975
        %1990 = vst.msk [vmem:[#allocation2 + $0x4d8] sm:$0xcc] %vm789, %v1976
        %1991 = vst [vmem:[#allocation2 + $0x4e0] sm:$0xff] %v1978
        %1992 = vst.msk [vmem:[#allocation2 + $0x4e8] sm:$0xff] %vm725, %v1979
        %1993 = vst [vmem:[#allocation2 + $0x4f0] sm:$0xff] %v1981
        %1994 = vst.msk [vmem:[#allocation2 + $0x4f8] sm:$0xff] %vm725, %v1982
        %1995 = vrot.lane.b32.xlu0 %v711, 96
        %v1996 = vpop.permute.xlu0 %1995
        %1997 = vrot.lane.b32.xlu0 %v712, 96
        %v1998 = vpop.permute.xlu0 %1997
        %1999 = vrot.lane.b32.xlu0 %v713, 96
        %v2000 = vpop.permute.xlu0 %1999
        %2001 = vrot.lane.b32.xlu0 %v714, 96
        %v2002 = vpop.permute.xlu0 %2001
        %2003 = vrot.lane.b32.xlu0 %v715, 96
        %v2004 = vpop.permute.xlu0 %2003
        %2005 = vrot.lane.b32.xlu0 %v716, 96
        %v2006 = vpop.permute.xlu0 %2005
        %v2007 = vrot.slane %v1996, 4
        %v2008 = vrot.slane %v1998, 4
        %v2009 = vrot.slane %v2000, 4
        %v2010 = vrot.slane %v2002, 4
        %v2011 = vrot.slane %v2004, 4
        %v2012 = vrot.slane %v2006, 4
        %v2013 = vsel %vm769, %v2007, %v2008
        %vm2014 = vcmask 785408
        %v2015 = vsel %vm2014, %v1996, %v2013
        %v2016 = vsel %vm2014, %v1998, %v2008
        %v2017 = vsel %vm769, %v2009, %v2010
        %v2018 = vsel %vm2014, %v2000, %v2017
        %v2019 = vsel %vm2014, %v2002, %v2010
        %v2020 = vsel %vm769, %v2011, %v2012
        %v2021 = vsel %vm2014, %v2004, %v2020
        %v2022 = vsel %vm2014, %v2006, %v2012
        %2029 = vst [vmem:[#allocation2 + $0x500] sm:$0xff] %v2015
        %2030 = vst.msk [vmem:[#allocation2 + $0x508] sm:$0xff] %vm725, %v2016
        %2031 = vst [vmem:[#allocation2 + $0x510] sm:$0xff] %v2018
        %2032 = vst.msk [vmem:[#allocation2 + $0x518] sm:$0xff] %vm725, %v2019
        %2033 = vst [vmem:[#allocation2 + $0x520] sm:$0x33] %v2021
        %2034 = vst.msk [vmem:[#allocation2 + $0x528] sm:$0x33] %vm732, %v2022
        %2035 = vrot.lane.b32.xlu0 %v737, 95
        %v2036 = vpop.permute.xlu0 %2035
        %2037 = vrot.lane.b32.xlu0 %v738, 95
        %v2038 = vpop.permute.xlu0 %2037
        %2039 = vrot.lane.b32.xlu0 %v741, 95
        %v2040 = vpop.permute.xlu0 %2039
        %2041 = vrot.lane.b32.xlu0 %v744, 95
        %v2042 = vpop.permute.xlu0 %2041
        %2043 = vrot.lane.b32.xlu0 %v747, 95
        %v2044 = vpop.permute.xlu0 %2043
        %2045 = vrot.lane.b32.xlu0 %v750, 95
        %v2046 = vpop.permute.xlu0 %2045
        %v2047 = vrot.slane %v2036, 4
        %v2048 = vrot.slane %v2038, 4
        %v2049 = vrot.slane %v2040, 4
        %v2050 = vrot.slane %v2042, 4
        %v2051 = vrot.slane %v2044, 4
        %v2052 = vrot.slane %v2046, 4
        %v2053 = vsel %vm769, %v2047, %v2048
        %vm2054 = vcmask 777216
        %v2055 = vsel %vm2054, %v2036, %v2053
        %v2056 = vsel %vm2054, %v2038, %v2048
        %v2057 = vsel %vm769, %v2049, %v2050
        %v2058 = vsel %vm2054, %v2040, %v2057
        %v2059 = vsel %vm2054, %v2042, %v2050
        %v2060 = vsel %vm769, %v2051, %v2052
        %v2061 = vsel %vm2054, %v2044, %v2060
        %v2062 = vsel %vm2054, %v2046, %v2052
        %2069 = vst [vmem:[#allocation2 + $0x520] sm:$0xcc] %v2055
        %2070 = vst.msk [vmem:[#allocation2 + $0x528] sm:$0xcc] %vm789, %v2056
        %2071 = vst [vmem:[#allocation2 + $0x530] sm:$0xff] %v2058
        %2072 = vst.msk [vmem:[#allocation2 + $0x538] sm:$0xff] %vm725, %v2059
        %2073 = vst [vmem:[#allocation2 + $0x540] sm:$0xff] %v2061
        %2074 = vst.msk [vmem:[#allocation2 + $0x548] sm:$0xff] %vm725, %v2062
        %2075 = vrot.lane.b32.xlu0 %v711, 94
        %v2076 = vpop.permute.xlu0 %2075
        %2077 = vrot.lane.b32.xlu0 %v712, 94
        %v2078 = vpop.permute.xlu0 %2077
        %2079 = vrot.lane.b32.xlu0 %v713, 94
        %v2080 = vpop.permute.xlu0 %2079
        %2081 = vrot.lane.b32.xlu0 %v714, 94
        %v2082 = vpop.permute.xlu0 %2081
        %2083 = vrot.lane.b32.xlu0 %v715, 94
        %v2084 = vpop.permute.xlu0 %2083
        %2085 = vrot.lane.b32.xlu0 %v716, 94
        %v2086 = vpop.permute.xlu0 %2085
        %v2087 = vrot.slane %v2076, 4
        %v2088 = vrot.slane %v2078, 4
        %v2089 = vrot.slane %v2080, 4
        %v2090 = vrot.slane %v2082, 4
        %v2091 = vrot.slane %v2084, 4
        %v2092 = vrot.slane %v2086, 4
        %v2093 = vsel %vm769, %v2087, %v2088
        %vm2094 = vcmask 769024
        %v2095 = vsel %vm2094, %v2076, %v2093
        %v2096 = vsel %vm2094, %v2078, %v2088
        %v2097 = vsel %vm769, %v2089, %v2090
        %v2098 = vsel %vm2094, %v2080, %v2097
        %v2099 = vsel %vm2094, %v2082, %v2090
        %v2100 = vsel %vm769, %v2091, %v2092
        %v2101 = vsel %vm2094, %v2084, %v2100
        %v2102 = vsel %vm2094, %v2086, %v2092
        %2109 = vst [vmem:[#allocation2 + $0x550] sm:$0xff] %v2095
        %2110 = vst.msk [vmem:[#allocation2 + $0x558] sm:$0xff] %vm725, %v2096
        %2111 = vst [vmem:[#allocation2 + $0x560] sm:$0xff] %v2098
        %2112 = vst.msk [vmem:[#allocation2 + $0x568] sm:$0xff] %vm725, %v2099
        %2113 = vst [vmem:[#allocation2 + $0x570] sm:$0x33] %v2101
        %2114 = vst.msk [vmem:[#allocation2 + $0x578] sm:$0x33] %vm732, %v2102
        %2115 = vrot.lane.b32.xlu0 %v737, 93
        %v2116 = vpop.permute.xlu0 %2115
        %2117 = vrot.lane.b32.xlu0 %v738, 93
        %v2118 = vpop.permute.xlu0 %2117
        %2119 = vrot.lane.b32.xlu0 %v741, 93
        %v2120 = vpop.permute.xlu0 %2119
        %2121 = vrot.lane.b32.xlu0 %v744, 93
        %v2122 = vpop.permute.xlu0 %2121
        %2123 = vrot.lane.b32.xlu0 %v747, 93
        %v2124 = vpop.permute.xlu0 %2123
        %2125 = vrot.lane.b32.xlu0 %v750, 93
        %v2126 = vpop.permute.xlu0 %2125
        %v2127 = vrot.slane %v2116, 4
        %v2128 = vrot.slane %v2118, 4
        %v2129 = vrot.slane %v2120, 4
        %v2130 = vrot.slane %v2122, 4
        %v2131 = vrot.slane %v2124, 4
        %v2132 = vrot.slane %v2126, 4
        %v2133 = vsel %vm769, %v2127, %v2128
        %vm2134 = vcmask 760832
        %v2135 = vsel %vm2134, %v2116, %v2133
        %v2136 = vsel %vm2134, %v2118, %v2128
        %v2137 = vsel %vm769, %v2129, %v2130
        %v2138 = vsel %vm2134, %v2120, %v2137
        %v2139 = vsel %vm2134, %v2122, %v2130
        %v2140 = vsel %vm769, %v2131, %v2132
        %v2141 = vsel %vm2134, %v2124, %v2140
        %v2142 = vsel %vm2134, %v2126, %v2132
        %2149 = vst [vmem:[#allocation2 + $0x570] sm:$0xcc] %v2135
        %2150 = vst.msk [vmem:[#allocation2 + $0x578] sm:$0xcc] %vm789, %v2136
        %2151 = vst [vmem:[#allocation2 + $0x580] sm:$0xff] %v2138
        %2152 = vst.msk [vmem:[#allocation2 + $0x588] sm:$0xff] %vm725, %v2139
        %2153 = vst [vmem:[#allocation2 + $0x590] sm:$0xff] %v2141
        %2154 = vst.msk [vmem:[#allocation2 + $0x598] sm:$0xff] %vm725, %v2142
        %2155 = vrot.lane.b32.xlu0 %v711, 92
        %v2156 = vpop.permute.xlu0 %2155
        %2157 = vrot.lane.b32.xlu0 %v712, 92
        %v2158 = vpop.permute.xlu0 %2157
        %2159 = vrot.lane.b32.xlu0 %v713, 92
        %v2160 = vpop.permute.xlu0 %2159
        %2161 = vrot.lane.b32.xlu0 %v714, 92
        %v2162 = vpop.permute.xlu0 %2161
        %2163 = vrot.lane.b32.xlu0 %v715, 92
        %v2164 = vpop.permute.xlu0 %2163
        %2165 = vrot.lane.b32.xlu0 %v716, 92
        %v2166 = vpop.permute.xlu0 %2165
        %v2167 = vrot.slane %v2156, 4
        %v2168 = vrot.slane %v2158, 4
        %v2169 = vrot.slane %v2160, 4
        %v2170 = vrot.slane %v2162, 4
        %v2171 = vrot.slane %v2164, 4
        %v2172 = vrot.slane %v2166, 4
        %v2173 = vsel %vm769, %v2167, %v2168
        %vm2174 = vcmask 752640
        %v2175 = vsel %vm2174, %v2156, %v2173
        %v2176 = vsel %vm2174, %v2158, %v2168
        %v2177 = vsel %vm769, %v2169, %v2170
        %v2178 = vsel %vm2174, %v2160, %v2177
        %v2179 = vsel %vm2174, %v2162, %v2170
        %v2180 = vsel %vm769, %v2171, %v2172
        %v2181 = vsel %vm2174, %v2164, %v2180
        %v2182 = vsel %vm2174, %v2166, %v2172
        %2189 = vst [vmem:[#allocation2 + $0x5a0] sm:$0xff] %v2175
        %2190 = vst.msk [vmem:[#allocation2 + $0x5a8] sm:$0xff] %vm725, %v2176
        %2191 = vst [vmem:[#allocation2 + $0x5b0] sm:$0xff] %v2178
        %2192 = vst.msk [vmem:[#allocation2 + $0x5b8] sm:$0xff] %vm725, %v2179
        %2193 = vst [vmem:[#allocation2 + $0x5c0] sm:$0x33] %v2181
        %2194 = vst.msk [vmem:[#allocation2 + $0x5c8] sm:$0x33] %vm732, %v2182
        %2195 = vrot.lane.b32.xlu0 %v737, 91
        %v2196 = vpop.permute.xlu0 %2195
        %2197 = vrot.lane.b32.xlu0 %v738, 91
        %v2198 = vpop.permute.xlu0 %2197
        %2199 = vrot.lane.b32.xlu0 %v741, 91
        %v2200 = vpop.permute.xlu0 %2199
        %2201 = vrot.lane.b32.xlu0 %v744, 91
        %v2202 = vpop.permute.xlu0 %2201
        %2203 = vrot.lane.b32.xlu0 %v747, 91
        %v2204 = vpop.permute.xlu0 %2203
        %2205 = vrot.lane.b32.xlu0 %v750, 91
        %v2206 = vpop.permute.xlu0 %2205
        %v2207 = vrot.slane %v2196, 4
        %v2208 = vrot.slane %v2198, 4
        %v2209 = vrot.slane %v2200, 4
        %v2210 = vrot.slane %v2202, 4
        %v2211 = vrot.slane %v2204, 4
        %v2212 = vrot.slane %v2206, 4
        %v2213 = vsel %vm769, %v2207, %v2208
        %vm2214 = vcmask 744448
        %v2215 = vsel %vm2214, %v2196, %v2213
        %v2216 = vsel %vm2214, %v2198, %v2208
        %v2217 = vsel %vm769, %v2209, %v2210
        %v2218 = vsel %vm2214, %v2200, %v2217
        %v2219 = vsel %vm2214, %v2202, %v2210
        %v2220 = vsel %vm769, %v2211, %v2212
        %v2221 = vsel %vm2214, %v2204, %v2220
        %v2222 = vsel %vm2214, %v2206, %v2212
        %2229 = vst [vmem:[#allocation2 + $0x5c0] sm:$0xcc] %v2215
        %2230 = vst.msk [vmem:[#allocation2 + $0x5c8] sm:$0xcc] %vm789, %v2216
        %2231 = vst [vmem:[#allocation2 + $0x5d0] sm:$0xff] %v2218
        %2232 = vst.msk [vmem:[#allocation2 + $0x5d8] sm:$0xff] %vm725, %v2219
        %2233 = vst [vmem:[#allocation2 + $0x5e0] sm:$0xff] %v2221
        %2234 = vst.msk [vmem:[#allocation2 + $0x5e8] sm:$0xff] %vm725, %v2222
        %2235 = vrot.lane.b32.xlu0 %v711, 90
        %v2236 = vpop.permute.xlu0 %2235
        %2237 = vrot.lane.b32.xlu0 %v712, 90
        %v2238 = vpop.permute.xlu0 %2237
        %2239 = vrot.lane.b32.xlu0 %v713, 90
        %v2240 = vpop.permute.xlu0 %2239
        %2241 = vrot.lane.b32.xlu0 %v714, 90
        %v2242 = vpop.permute.xlu0 %2241
        %2243 = vrot.lane.b32.xlu0 %v715, 90
        %v2244 = vpop.permute.xlu0 %2243
        %2245 = vrot.lane.b32.xlu0 %v716, 90
        %v2246 = vpop.permute.xlu0 %2245
        %v2247 = vrot.slane %v2236, 4
        %v2248 = vrot.slane %v2238, 4
        %v2249 = vrot.slane %v2240, 4
        %v2250 = vrot.slane %v2242, 4
        %v2251 = vrot.slane %v2244, 4
        %v2252 = vrot.slane %v2246, 4
        %v2253 = vsel %vm769, %v2247, %v2248
        %vm2254 = vcmask 736256
        %v2255 = vsel %vm2254, %v2236, %v2253
        %v2256 = vsel %vm2254, %v2238, %v2248
        %v2257 = vsel %vm769, %v2249, %v2250
        %v2258 = vsel %vm2254, %v2240, %v2257
        %v2259 = vsel %vm2254, %v2242, %v2250
        %v2260 = vsel %vm769, %v2251, %v2252
        %v2261 = vsel %vm2254, %v2244, %v2260
        %v2262 = vsel %vm2254, %v2246, %v2252
        %2269 = vst [vmem:[#allocation2 + $0x5f0] sm:$0xff] %v2255
        %2270 = vst.msk [vmem:[#allocation2 + $0x5f8] sm:$0xff] %vm725, %v2256
        %2271 = vst [vmem:[#allocation2 + $0x600] sm:$0xff] %v2258
        %2272 = vst.msk [vmem:[#allocation2 + $0x608] sm:$0xff] %vm725, %v2259
        %2273 = vst [vmem:[#allocation2 + $0x610] sm:$0x33] %v2261
        %2274 = vst.msk [vmem:[#allocation2 + $0x618] sm:$0x33] %vm732, %v2262
        %2275 = vrot.lane.b32.xlu0 %v737, 89
        %v2276 = vpop.permute.xlu0 %2275
        %2277 = vrot.lane.b32.xlu0 %v738, 89
        %v2278 = vpop.permute.xlu0 %2277
        %2279 = vrot.lane.b32.xlu0 %v741, 89
        %v2280 = vpop.permute.xlu0 %2279
        %2281 = vrot.lane.b32.xlu0 %v744, 89
        %v2282 = vpop.permute.xlu0 %2281
        %2283 = vrot.lane.b32.xlu0 %v747, 89
        %v2284 = vpop.permute.xlu0 %2283
        %2285 = vrot.lane.b32.xlu0 %v750, 89
        %v2286 = vpop.permute.xlu0 %2285
        %v2287 = vrot.slane %v2276, 4
        %v2288 = vrot.slane %v2278, 4
        %v2289 = vrot.slane %v2280, 4
        %v2290 = vrot.slane %v2282, 4
        %v2291 = vrot.slane %v2284, 4
        %v2292 = vrot.slane %v2286, 4
        %v2293 = vsel %vm769, %v2287, %v2288
        %vm2294 = vcmask 728064
        %v2295 = vsel %vm2294, %v2276, %v2293
        %v2296 = vsel %vm2294, %v2278, %v2288
        %v2297 = vsel %vm769, %v2289, %v2290
        %v2298 = vsel %vm2294, %v2280, %v2297
        %v2299 = vsel %vm2294, %v2282, %v2290
        %v2300 = vsel %vm769, %v2291, %v2292
        %v2301 = vsel %vm2294, %v2284, %v2300
        %v2302 = vsel %vm2294, %v2286, %v2292
        %2309 = vst [vmem:[#allocation2 + $0x610] sm:$0xcc] %v2295
        %2310 = vst.msk [vmem:[#allocation2 + $0x618] sm:$0xcc] %vm789, %v2296
        %2311 = vst [vmem:[#allocation2 + $0x620] sm:$0xff] %v2298
        %2312 = vst.msk [vmem:[#allocation2 + $0x628] sm:$0xff] %vm725, %v2299
        %2313 = vst [vmem:[#allocation2 + $0x630] sm:$0xff] %v2301
        %2314 = vst.msk [vmem:[#allocation2 + $0x638] sm:$0xff] %vm725, %v2302
        %2315 = vrot.lane.b32.xlu0 %v711, 88
        %v2316 = vpop.permute.xlu0 %2315
        %2317 = vrot.lane.b32.xlu0 %v712, 88
        %v2318 = vpop.permute.xlu0 %2317
        %2319 = vrot.lane.b32.xlu0 %v713, 88
        %v2320 = vpop.permute.xlu0 %2319
        %2321 = vrot.lane.b32.xlu0 %v714, 88
        %v2322 = vpop.permute.xlu0 %2321
        %2323 = vrot.lane.b32.xlu0 %v715, 88
        %v2324 = vpop.permute.xlu0 %2323
        %2325 = vrot.lane.b32.xlu0 %v716, 88
        %v2326 = vpop.permute.xlu0 %2325
        %v2327 = vrot.slane %v2316, 4
        %v2328 = vrot.slane %v2318, 4
        %v2329 = vrot.slane %v2320, 4
        %v2330 = vrot.slane %v2322, 4
        %v2331 = vrot.slane %v2324, 4
        %v2332 = vrot.slane %v2326, 4
        %v2333 = vsel %vm769, %v2327, %v2328
        %vm2334 = vcmask 719872
        %v2335 = vsel %vm2334, %v2316, %v2333
        %v2336 = vsel %vm2334, %v2318, %v2328
        %v2337 = vsel %vm769, %v2329, %v2330
        %v2338 = vsel %vm2334, %v2320, %v2337
        %v2339 = vsel %vm2334, %v2322, %v2330
        %v2340 = vsel %vm769, %v2331, %v2332
        %v2341 = vsel %vm2334, %v2324, %v2340
        %v2342 = vsel %vm2334, %v2326, %v2332
        %2349 = vst [vmem:[#allocation2 + $0x640] sm:$0xff] %v2335
        %2350 = vst.msk [vmem:[#allocation2 + $0x648] sm:$0xff] %vm725, %v2336
        %2351 = vst [vmem:[#allocation2 + $0x650] sm:$0xff] %v2338
        %2352 = vst.msk [vmem:[#allocation2 + $0x658] sm:$0xff] %vm725, %v2339
        %2353 = vst [vmem:[#allocation2 + $0x660] sm:$0x33] %v2341
        %2354 = vst.msk [vmem:[#allocation2 + $0x668] sm:$0x33] %vm732, %v2342
        %2355 = vrot.lane.b32.xlu0 %v737, 87
        %v2356 = vpop.permute.xlu0 %2355
        %2357 = vrot.lane.b32.xlu0 %v738, 87
        %v2358 = vpop.permute.xlu0 %2357
        %2359 = vrot.lane.b32.xlu0 %v741, 87
        %v2360 = vpop.permute.xlu0 %2359
        %2361 = vrot.lane.b32.xlu0 %v744, 87
        %v2362 = vpop.permute.xlu0 %2361
        %2363 = vrot.lane.b32.xlu0 %v747, 87
        %v2364 = vpop.permute.xlu0 %2363
        %2365 = vrot.lane.b32.xlu0 %v750, 87
        %v2366 = vpop.permute.xlu0 %2365
        %v2367 = vrot.slane %v2356, 4
        %v2368 = vrot.slane %v2358, 4
        %v2369 = vrot.slane %v2360, 4
        %v2370 = vrot.slane %v2362, 4
        %v2371 = vrot.slane %v2364, 4
        %v2372 = vrot.slane %v2366, 4
        %v2373 = vsel %vm769, %v2367, %v2368
        %vm2374 = vcmask 711680
        %v2375 = vsel %vm2374, %v2356, %v2373
        %v2376 = vsel %vm2374, %v2358, %v2368
        %v2377 = vsel %vm769, %v2369, %v2370
        %v2378 = vsel %vm2374, %v2360, %v2377
        %v2379 = vsel %vm2374, %v2362, %v2370
        %v2380 = vsel %vm769, %v2371, %v2372
        %v2381 = vsel %vm2374, %v2364, %v2380
        %v2382 = vsel %vm2374, %v2366, %v2372
        %2389 = vst [vmem:[#allocation2 + $0x660] sm:$0xcc] %v2375
        %2390 = vst.msk [vmem:[#allocation2 + $0x668] sm:$0xcc] %vm789, %v2376
        %2391 = vst [vmem:[#allocation2 + $0x670] sm:$0xff] %v2378
        %2392 = vst.msk [vmem:[#allocation2 + $0x678] sm:$0xff] %vm725, %v2379
        %2393 = vst [vmem:[#allocation2 + $0x680] sm:$0xff] %v2381
        %2394 = vst.msk [vmem:[#allocation2 + $0x688] sm:$0xff] %vm725, %v2382
        %2395 = vrot.lane.b32.xlu0 %v711, 86
        %v2396 = vpop.permute.xlu0 %2395
        %2397 = vrot.lane.b32.xlu0 %v712, 86
        %v2398 = vpop.permute.xlu0 %2397
        %2399 = vrot.lane.b32.xlu0 %v713, 86
        %v2400 = vpop.permute.xlu0 %2399
        %2401 = vrot.lane.b32.xlu0 %v714, 86
        %v2402 = vpop.permute.xlu0 %2401
        %2403 = vrot.lane.b32.xlu0 %v715, 86
        %v2404 = vpop.permute.xlu0 %2403
        %2405 = vrot.lane.b32.xlu0 %v716, 86
        %v2406 = vpop.permute.xlu0 %2405
        %v2407 = vrot.slane %v2396, 4
        %v2408 = vrot.slane %v2398, 4
        %v2409 = vrot.slane %v2400, 4
        %v2410 = vrot.slane %v2402, 4
        %v2411 = vrot.slane %v2404, 4
        %v2412 = vrot.slane %v2406, 4
        %v2413 = vsel %vm769, %v2407, %v2408
        %vm2414 = vcmask 703488
        %v2415 = vsel %vm2414, %v2396, %v2413
        %v2416 = vsel %vm2414, %v2398, %v2408
        %v2417 = vsel %vm769, %v2409, %v2410
        %v2418 = vsel %vm2414, %v2400, %v2417
        %v2419 = vsel %vm2414, %v2402, %v2410
        %v2420 = vsel %vm769, %v2411, %v2412
        %v2421 = vsel %vm2414, %v2404, %v2420
        %v2422 = vsel %vm2414, %v2406, %v2412
        %2429 = vst [vmem:[#allocation2 + $0x690] sm:$0xff] %v2415
        %2430 = vst.msk [vmem:[#allocation2 + $0x698] sm:$0xff] %vm725, %v2416
        %2431 = vst [vmem:[#allocation2 + $0x6a0] sm:$0xff] %v2418
        %2432 = vst.msk [vmem:[#allocation2 + $0x6a8] sm:$0xff] %vm725, %v2419
        %2433 = vst [vmem:[#allocation2 + $0x6b0] sm:$0x33] %v2421
        %2434 = vst.msk [vmem:[#allocation2 + $0x6b8] sm:$0x33] %vm732, %v2422
        %2435 = vrot.lane.b32.xlu0 %v737, 85
        %v2436 = vpop.permute.xlu0 %2435
        %2437 = vrot.lane.b32.xlu0 %v738, 85
        %v2438 = vpop.permute.xlu0 %2437
        %2439 = vrot.lane.b32.xlu0 %v741, 85
        %v2440 = vpop.permute.xlu0 %2439
        %2441 = vrot.lane.b32.xlu0 %v744, 85
        %v2442 = vpop.permute.xlu0 %2441
        %2443 = vrot.lane.b32.xlu0 %v747, 85
        %v2444 = vpop.permute.xlu0 %2443
        %2445 = vrot.lane.b32.xlu0 %v750, 85
        %v2446 = vpop.permute.xlu0 %2445
        %v2447 = vrot.slane %v2436, 4
        %v2448 = vrot.slane %v2438, 4
        %v2449 = vrot.slane %v2440, 4
        %v2450 = vrot.slane %v2442, 4
        %v2451 = vrot.slane %v2444, 4
        %v2452 = vrot.slane %v2446, 4
        %v2453 = vsel %vm769, %v2447, %v2448
        %vm2454 = vcmask 695296
        %v2455 = vsel %vm2454, %v2436, %v2453
        %v2456 = vsel %vm2454, %v2438, %v2448
        %v2457 = vsel %vm769, %v2449, %v2450
        %v2458 = vsel %vm2454, %v2440, %v2457
        %v2459 = vsel %vm2454, %v2442, %v2450
        %v2460 = vsel %vm769, %v2451, %v2452
        %v2461 = vsel %vm2454, %v2444, %v2460
        %v2462 = vsel %vm2454, %v2446, %v2452
        %2469 = vst [vmem:[#allocation2 + $0x6b0] sm:$0xcc] %v2455
        %2470 = vst.msk [vmem:[#allocation2 + $0x6b8] sm:$0xcc] %vm789, %v2456
        %2471 = vst [vmem:[#allocation2 + $0x6c0] sm:$0xff] %v2458
        %2472 = vst.msk [vmem:[#allocation2 + $0x6c8] sm:$0xff] %vm725, %v2459
        %2473 = vst [vmem:[#allocation2 + $0x6d0] sm:$0xff] %v2461
        %2474 = vst.msk [vmem:[#allocation2 + $0x6d8] sm:$0xff] %vm725, %v2462
        %2475 = vrot.lane.b32.xlu0 %v711, 84
        %v2476 = vpop.permute.xlu0 %2475
        %2477 = vrot.lane.b32.xlu0 %v712, 84
        %v2478 = vpop.permute.xlu0 %2477
        %2479 = vrot.lane.b32.xlu0 %v713, 84
        %v2480 = vpop.permute.xlu0 %2479
        %2481 = vrot.lane.b32.xlu0 %v714, 84
        %v2482 = vpop.permute.xlu0 %2481
        %2483 = vrot.lane.b32.xlu0 %v715, 84
        %v2484 = vpop.permute.xlu0 %2483
        %2485 = vrot.lane.b32.xlu0 %v716, 84
        %v2486 = vpop.permute.xlu0 %2485
        %v2487 = vrot.slane %v2476, 4
        %v2488 = vrot.slane %v2478, 4
        %v2489 = vrot.slane %v2480, 4
        %v2490 = vrot.slane %v2482, 4
        %v2491 = vrot.slane %v2484, 4
        %v2492 = vrot.slane %v2486, 4
        %v2493 = vsel %vm769, %v2487, %v2488
        %vm2494 = vcmask 687104
        %v2495 = vsel %vm2494, %v2476, %v2493
        %v2496 = vsel %vm2494, %v2478, %v2488
        %v2497 = vsel %vm769, %v2489, %v2490
        %v2498 = vsel %vm2494, %v2480, %v2497
        %v2499 = vsel %vm2494, %v2482, %v2490
        %v2500 = vsel %vm769, %v2491, %v2492
        %v2501 = vsel %vm2494, %v2484, %v2500
        %v2502 = vsel %vm2494, %v2486, %v2492
        %2509 = vst [vmem:[#allocation2 + $0x6e0] sm:$0xff] %v2495
        %2510 = vst.msk [vmem:[#allocation2 + $0x6e8] sm:$0xff] %vm725, %v2496
        %2511 = vst [vmem:[#allocation2 + $0x6f0] sm:$0xff] %v2498
        %2512 = vst.msk [vmem:[#allocation2 + $0x6f8] sm:$0xff] %vm725, %v2499
        %2513 = vst [vmem:[#allocation2 + $0x700] sm:$0x33] %v2501
        %2514 = vst.msk [vmem:[#allocation2 + $0x708] sm:$0x33] %vm732, %v2502
        %2515 = vrot.lane.b32.xlu0 %v737, 83
        %v2516 = vpop.permute.xlu0 %2515
        %2517 = vrot.lane.b32.xlu0 %v738, 83
        %v2518 = vpop.permute.xlu0 %2517
        %2519 = vrot.lane.b32.xlu0 %v741, 83
        %v2520 = vpop.permute.xlu0 %2519
        %2521 = vrot.lane.b32.xlu0 %v744, 83
        %v2522 = vpop.permute.xlu0 %2521
        %2523 = vrot.lane.b32.xlu0 %v747, 83
        %v2524 = vpop.permute.xlu0 %2523
        %2525 = vrot.lane.b32.xlu0 %v750, 83
        %v2526 = vpop.permute.xlu0 %2525
        %v2527 = vrot.slane %v2516, 4
        %v2528 = vrot.slane %v2518, 4
        %v2529 = vrot.slane %v2520, 4
        %v2530 = vrot.slane %v2522, 4
        %v2531 = vrot.slane %v2524, 4
        %v2532 = vrot.slane %v2526, 4
        %v2533 = vsel %vm769, %v2527, %v2528
        %vm2534 = vcmask 678912
        %v2535 = vsel %vm2534, %v2516, %v2533
        %v2536 = vsel %vm2534, %v2518, %v2528
        %v2537 = vsel %vm769, %v2529, %v2530
        %v2538 = vsel %vm2534, %v2520, %v2537
        %v2539 = vsel %vm2534, %v2522, %v2530
        %v2540 = vsel %vm769, %v2531, %v2532
        %v2541 = vsel %vm2534, %v2524, %v2540
        %v2542 = vsel %vm2534, %v2526, %v2532
        %2549 = vst [vmem:[#allocation2 + $0x700] sm:$0xcc] %v2535
        %2550 = vst.msk [vmem:[#allocation2 + $0x708] sm:$0xcc] %vm789, %v2536
        %2551 = vst [vmem:[#allocation2 + $0x710] sm:$0xff] %v2538
        %2552 = vst.msk [vmem:[#allocation2 + $0x718] sm:$0xff] %vm725, %v2539
        %2553 = vst [vmem:[#allocation2 + $0x720] sm:$0xff] %v2541
        %2554 = vst.msk [vmem:[#allocation2 + $0x728] sm:$0xff] %vm725, %v2542
        %2555 = vrot.lane.b32.xlu0 %v711, 82
        %v2556 = vpop.permute.xlu0 %2555
        %2557 = vrot.lane.b32.xlu0 %v712, 82
        %v2558 = vpop.permute.xlu0 %2557
        %2559 = vrot.lane.b32.xlu0 %v713, 82
        %v2560 = vpop.permute.xlu0 %2559
        %2561 = vrot.lane.b32.xlu0 %v714, 82
        %v2562 = vpop.permute.xlu0 %2561
        %2563 = vrot.lane.b32.xlu0 %v715, 82
        %v2564 = vpop.permute.xlu0 %2563
        %2565 = vrot.lane.b32.xlu0 %v716, 82
        %v2566 = vpop.permute.xlu0 %2565
        %v2567 = vrot.slane %v2556, 4
        %v2568 = vrot.slane %v2558, 4
        %v2569 = vrot.slane %v2560, 4
        %v2570 = vrot.slane %v2562, 4
        %v2571 = vrot.slane %v2564, 4
        %v2572 = vrot.slane %v2566, 4
        %v2573 = vsel %vm769, %v2567, %v2568
        %vm2574 = vcmask 670720
        %v2575 = vsel %vm2574, %v2556, %v2573
        %v2576 = vsel %vm2574, %v2558, %v2568
        %v2577 = vsel %vm769, %v2569, %v2570
        %v2578 = vsel %vm2574, %v2560, %v2577
        %v2579 = vsel %vm2574, %v2562, %v2570
        %v2580 = vsel %vm769, %v2571, %v2572
        %v2581 = vsel %vm2574, %v2564, %v2580
        %v2582 = vsel %vm2574, %v2566, %v2572
        %2589 = vst [vmem:[#allocation2 + $0x730] sm:$0xff] %v2575
        %2590 = vst.msk [vmem:[#allocation2 + $0x738] sm:$0xff] %vm725, %v2576
        %2591 = vst [vmem:[#allocation2 + $0x740] sm:$0xff] %v2578
        %2592 = vst.msk [vmem:[#allocation2 + $0x748] sm:$0xff] %vm725, %v2579
        %2593 = vst [vmem:[#allocation2 + $0x750] sm:$0x33] %v2581
        %2594 = vst.msk [vmem:[#allocation2 + $0x758] sm:$0x33] %vm732, %v2582
        %2595 = vrot.lane.b32.xlu0 %v737, 81
        %v2596 = vpop.permute.xlu0 %2595
        %2597 = vrot.lane.b32.xlu0 %v738, 81
        %v2598 = vpop.permute.xlu0 %2597
        %2599 = vrot.lane.b32.xlu0 %v741, 81
        %v2600 = vpop.permute.xlu0 %2599
        %2601 = vrot.lane.b32.xlu0 %v744, 81
        %v2602 = vpop.permute.xlu0 %2601
        %2603 = vrot.lane.b32.xlu0 %v747, 81
        %v2604 = vpop.permute.xlu0 %2603
        %2605 = vrot.lane.b32.xlu0 %v750, 81
        %v2606 = vpop.permute.xlu0 %2605
        %v2607 = vrot.slane %v2596, 4
        %v2608 = vrot.slane %v2598, 4
        %v2609 = vrot.slane %v2600, 4
        %v2610 = vrot.slane %v2602, 4
        %v2611 = vrot.slane %v2604, 4
        %v2612 = vrot.slane %v2606, 4
        %v2613 = vsel %vm769, %v2607, %v2608
        %vm2614 = vcmask 662528
        %v2615 = vsel %vm2614, %v2596, %v2613
        %v2616 = vsel %vm2614, %v2598, %v2608
        %v2617 = vsel %vm769, %v2609, %v2610
        %v2618 = vsel %vm2614, %v2600, %v2617
        %v2619 = vsel %vm2614, %v2602, %v2610
        %v2620 = vsel %vm769, %v2611, %v2612
        %v2621 = vsel %vm2614, %v2604, %v2620
        %v2622 = vsel %vm2614, %v2606, %v2612
        %2629 = vst [vmem:[#allocation2 + $0x750] sm:$0xcc] %v2615
        %2630 = vst.msk [vmem:[#allocation2 + $0x758] sm:$0xcc] %vm789, %v2616
        %2631 = vst [vmem:[#allocation2 + $0x760] sm:$0xff] %v2618
        %2632 = vst.msk [vmem:[#allocation2 + $0x768] sm:$0xff] %vm725, %v2619
        %2633 = vst [vmem:[#allocation2 + $0x770] sm:$0xff] %v2621
        %2634 = vst.msk [vmem:[#allocation2 + $0x778] sm:$0xff] %vm725, %v2622
        %2635 = vrot.lane.b32.xlu0 %v711, 80
        %v2636 = vpop.permute.xlu0 %2635
        %2637 = vrot.lane.b32.xlu0 %v712, 80
        %v2638 = vpop.permute.xlu0 %2637
        %2639 = vrot.lane.b32.xlu0 %v713, 80
        %v2640 = vpop.permute.xlu0 %2639
        %2641 = vrot.lane.b32.xlu0 %v714, 80
        %v2642 = vpop.permute.xlu0 %2641
        %2643 = vrot.lane.b32.xlu0 %v715, 80
        %v2644 = vpop.permute.xlu0 %2643
        %2645 = vrot.lane.b32.xlu0 %v716, 80
        %v2646 = vpop.permute.xlu0 %2645
        %v2647 = vrot.slane %v2636, 4
        %v2648 = vrot.slane %v2638, 4
        %v2649 = vrot.slane %v2640, 4
        %v2650 = vrot.slane %v2642, 4
        %v2651 = vrot.slane %v2644, 4
        %v2652 = vrot.slane %v2646, 4
        %v2653 = vsel %vm769, %v2647, %v2648
        %vm2654 = vcmask 654336
        %v2655 = vsel %vm2654, %v2636, %v2653
        %v2656 = vsel %vm2654, %v2638, %v2648
        %v2657 = vsel %vm769, %v2649, %v2650
        %v2658 = vsel %vm2654, %v2640, %v2657
        %v2659 = vsel %vm2654, %v2642, %v2650
        %v2660 = vsel %vm769, %v2651, %v2652
        %v2661 = vsel %vm2654, %v2644, %v2660
        %v2662 = vsel %vm2654, %v2646, %v2652
        %2669 = vst [vmem:[#allocation2 + $0x780] sm:$0xff] %v2655
        %2670 = vst.msk [vmem:[#allocation2 + $0x788] sm:$0xff] %vm725, %v2656
        %2671 = vst [vmem:[#allocation2 + $0x790] sm:$0xff] %v2658
        %2672 = vst.msk [vmem:[#allocation2 + $0x798] sm:$0xff] %vm725, %v2659
        %2673 = vst [vmem:[#allocation2 + $0x7a0] sm:$0x33] %v2661
        %2674 = vst.msk [vmem:[#allocation2 + $0x7a8] sm:$0x33] %vm732, %v2662
        %2675 = vrot.lane.b32.xlu0 %v737, 79
        %v2676 = vpop.permute.xlu0 %2675
        %2677 = vrot.lane.b32.xlu0 %v738, 79
        %v2678 = vpop.permute.xlu0 %2677
        %2679 = vrot.lane.b32.xlu0 %v741, 79
        %v2680 = vpop.permute.xlu0 %2679
        %2681 = vrot.lane.b32.xlu0 %v744, 79
        %v2682 = vpop.permute.xlu0 %2681
        %2683 = vrot.lane.b32.xlu0 %v747, 79
        %v2684 = vpop.permute.xlu0 %2683
        %2685 = vrot.lane.b32.xlu0 %v750, 79
        %v2686 = vpop.permute.xlu0 %2685
        %v2687 = vrot.slane %v2676, 4
        %v2688 = vrot.slane %v2678, 4
        %v2689 = vrot.slane %v2680, 4
        %v2690 = vrot.slane %v2682, 4
        %v2691 = vrot.slane %v2684, 4
        %v2692 = vrot.slane %v2686, 4
        %v2693 = vsel %vm769, %v2687, %v2688
        %vm2694 = vcmask 646144
        %v2695 = vsel %vm2694, %v2676, %v2693
        %v2696 = vsel %vm2694, %v2678, %v2688
        %v2697 = vsel %vm769, %v2689, %v2690
        %v2698 = vsel %vm2694, %v2680, %v2697
        %v2699 = vsel %vm2694, %v2682, %v2690
        %v2700 = vsel %vm769, %v2691, %v2692
        %v2701 = vsel %vm2694, %v2684, %v2700
        %v2702 = vsel %vm2694, %v2686, %v2692
        %2709 = vst [vmem:[#allocation2 + $0x7a0] sm:$0xcc] %v2695
        %2710 = vst.msk [vmem:[#allocation2 + $0x7a8] sm:$0xcc] %vm789, %v2696
        %2711 = vst [vmem:[#allocation2 + $0x7b0] sm:$0xff] %v2698
        %2712 = vst.msk [vmem:[#allocation2 + $0x7b8] sm:$0xff] %vm725, %v2699
        %2713 = vst [vmem:[#allocation2 + $0x7c0] sm:$0xff] %v2701
        %2714 = vst.msk [vmem:[#allocation2 + $0x7c8] sm:$0xff] %vm725, %v2702
        %2715 = vrot.lane.b32.xlu0 %v711, 78
        %v2716 = vpop.permute.xlu0 %2715
        %2717 = vrot.lane.b32.xlu0 %v712, 78
        %v2718 = vpop.permute.xlu0 %2717
        %2719 = vrot.lane.b32.xlu0 %v713, 78
        %v2720 = vpop.permute.xlu0 %2719
        %2721 = vrot.lane.b32.xlu0 %v714, 78
        %v2722 = vpop.permute.xlu0 %2721
        %2723 = vrot.lane.b32.xlu0 %v715, 78
        %v2724 = vpop.permute.xlu0 %2723
        %2725 = vrot.lane.b32.xlu0 %v716, 78
        %v2726 = vpop.permute.xlu0 %2725
        %v2727 = vrot.slane %v2716, 4
        %v2728 = vrot.slane %v2718, 4
        %v2729 = vrot.slane %v2720, 4
        %v2730 = vrot.slane %v2722, 4
        %v2731 = vrot.slane %v2724, 4
        %v2732 = vrot.slane %v2726, 4
        %v2733 = vsel %vm769, %v2727, %v2728
        %vm2734 = vcmask 637952
        %v2735 = vsel %vm2734, %v2716, %v2733
        %v2736 = vsel %vm2734, %v2718, %v2728
        %v2737 = vsel %vm769, %v2729, %v2730
        %v2738 = vsel %vm2734, %v2720, %v2737
        %v2739 = vsel %vm2734, %v2722, %v2730
        %v2740 = vsel %vm769, %v2731, %v2732
        %v2741 = vsel %vm2734, %v2724, %v2740
        %v2742 = vsel %vm2734, %v2726, %v2732
        %2749 = vst [vmem:[#allocation2 + $0x7d0] sm:$0xff] %v2735
        %2750 = vst.msk [vmem:[#allocation2 + $0x7d8] sm:$0xff] %vm725, %v2736
        %2751 = vst [vmem:[#allocation2 + $0x7e0] sm:$0xff] %v2738
        %2752 = vst.msk [vmem:[#allocation2 + $0x7e8] sm:$0xff] %vm725, %v2739
        %2753 = vst [vmem:[#allocation2 + $0x7f0] sm:$0x33] %v2741
        %2754 = vst.msk [vmem:[#allocation2 + $0x7f8] sm:$0x33] %vm732, %v2742
        %2755 = vrot.lane.b32.xlu0 %v737, 77
        %v2756 = vpop.permute.xlu0 %2755
        %2757 = vrot.lane.b32.xlu0 %v738, 77
        %v2758 = vpop.permute.xlu0 %2757
        %2759 = vrot.lane.b32.xlu0 %v741, 77
        %v2760 = vpop.permute.xlu0 %2759
        %2761 = vrot.lane.b32.xlu0 %v744, 77
        %v2762 = vpop.permute.xlu0 %2761
        %2763 = vrot.lane.b32.xlu0 %v747, 77
        %v2764 = vpop.permute.xlu0 %2763
        %2765 = vrot.lane.b32.xlu0 %v750, 77
        %v2766 = vpop.permute.xlu0 %2765
        %v2767 = vrot.slane %v2756, 4
        %v2768 = vrot.slane %v2758, 4
        %v2769 = vrot.slane %v2760, 4
        %v2770 = vrot.slane %v2762, 4
        %v2771 = vrot.slane %v2764, 4
        %v2772 = vrot.slane %v2766, 4
        %v2773 = vsel %vm769, %v2767, %v2768
        %vm2774 = vcmask 629760
        %v2775 = vsel %vm2774, %v2756, %v2773
        %v2776 = vsel %vm2774, %v2758, %v2768
        %v2777 = vsel %vm769, %v2769, %v2770
        %v2778 = vsel %vm2774, %v2760, %v2777
        %v2779 = vsel %vm2774, %v2762, %v2770
        %v2780 = vsel %vm769, %v2771, %v2772
        %v2781 = vsel %vm2774, %v2764, %v2780
        %v2782 = vsel %vm2774, %v2766, %v2772
        %2789 = vst [vmem:[#allocation2 + $0x7f0] sm:$0xcc] %v2775
        %2790 = vst.msk [vmem:[#allocation2 + $0x7f8] sm:$0xcc] %vm789, %v2776
        %2791 = vst [vmem:[#allocation2 + $0x800] sm:$0xff] %v2778
        %2792 = vst.msk [vmem:[#allocation2 + $0x808] sm:$0xff] %vm725, %v2779
        %2793 = vst [vmem:[#allocation2 + $0x810] sm:$0xff] %v2781
        %2794 = vst.msk [vmem:[#allocation2 + $0x818] sm:$0xff] %vm725, %v2782
        %2795 = vrot.lane.b32.xlu0 %v711, 76
        %v2796 = vpop.permute.xlu0 %2795
        %2797 = vrot.lane.b32.xlu0 %v712, 76
        %v2798 = vpop.permute.xlu0 %2797
        %2799 = vrot.lane.b32.xlu0 %v713, 76
        %v2800 = vpop.permute.xlu0 %2799
        %2801 = vrot.lane.b32.xlu0 %v714, 76
        %v2802 = vpop.permute.xlu0 %2801
        %2803 = vrot.lane.b32.xlu0 %v715, 76
        %v2804 = vpop.permute.xlu0 %2803
        %2805 = vrot.lane.b32.xlu0 %v716, 76
        %v2806 = vpop.permute.xlu0 %2805
        %v2807 = vrot.slane %v2796, 4
        %v2808 = vrot.slane %v2798, 4
        %v2809 = vrot.slane %v2800, 4
        %v2810 = vrot.slane %v2802, 4
        %v2811 = vrot.slane %v2804, 4
        %v2812 = vrot.slane %v2806, 4
        %v2813 = vsel %vm769, %v2807, %v2808
        %vm2814 = vcmask 621568
        %v2815 = vsel %vm2814, %v2796, %v2813
        %v2816 = vsel %vm2814, %v2798, %v2808
        %v2817 = vsel %vm769, %v2809, %v2810
        %v2818 = vsel %vm2814, %v2800, %v2817
        %v2819 = vsel %vm2814, %v2802, %v2810
        %v2820 = vsel %vm769, %v2811, %v2812
        %v2821 = vsel %vm2814, %v2804, %v2820
        %v2822 = vsel %vm2814, %v2806, %v2812
        %2829 = vst [vmem:[#allocation2 + $0x820] sm:$0xff] %v2815
        %2830 = vst.msk [vmem:[#allocation2 + $0x828] sm:$0xff] %vm725, %v2816
        %2831 = vst [vmem:[#allocation2 + $0x830] sm:$0xff] %v2818
        %2832 = vst.msk [vmem:[#allocation2 + $0x838] sm:$0xff] %vm725, %v2819
        %2833 = vst [vmem:[#allocation2 + $0x840] sm:$0x33] %v2821
        %2834 = vst.msk [vmem:[#allocation2 + $0x848] sm:$0x33] %vm732, %v2822
        %2835 = vrot.lane.b32.xlu0 %v737, 75
        %v2836 = vpop.permute.xlu0 %2835
        %2837 = vrot.lane.b32.xlu0 %v738, 75
        %v2838 = vpop.permute.xlu0 %2837
        %2839 = vrot.lane.b32.xlu0 %v741, 75
        %v2840 = vpop.permute.xlu0 %2839
        %2841 = vrot.lane.b32.xlu0 %v744, 75
        %v2842 = vpop.permute.xlu0 %2841
        %2843 = vrot.lane.b32.xlu0 %v747, 75
        %v2844 = vpop.permute.xlu0 %2843
        %2845 = vrot.lane.b32.xlu0 %v750, 75
        %v2846 = vpop.permute.xlu0 %2845
        %v2847 = vrot.slane %v2836, 4
        %v2848 = vrot.slane %v2838, 4
        %v2849 = vrot.slane %v2840, 4
        %v2850 = vrot.slane %v2842, 4
        %v2851 = vrot.slane %v2844, 4
        %v2852 = vrot.slane %v2846, 4
        %v2853 = vsel %vm769, %v2847, %v2848
        %vm2854 = vcmask 613376
        %v2855 = vsel %vm2854, %v2836, %v2853
        %v2856 = vsel %vm2854, %v2838, %v2848
        %v2857 = vsel %vm769, %v2849, %v2850
        %v2858 = vsel %vm2854, %v2840, %v2857
        %v2859 = vsel %vm2854, %v2842, %v2850
        %v2860 = vsel %vm769, %v2851, %v2852
        %v2861 = vsel %vm2854, %v2844, %v2860
        %v2862 = vsel %vm2854, %v2846, %v2852
        %2869 = vst [vmem:[#allocation2 + $0x840] sm:$0xcc] %v2855
        %2870 = vst.msk [vmem:[#allocation2 + $0x848] sm:$0xcc] %vm789, %v2856
        %2871 = vst [vmem:[#allocation2 + $0x850] sm:$0xff] %v2858
        %2872 = vst.msk [vmem:[#allocation2 + $0x858] sm:$0xff] %vm725, %v2859
        %2873 = vst [vmem:[#allocation2 + $0x860] sm:$0xff] %v2861
        %2874 = vst.msk [vmem:[#allocation2 + $0x868] sm:$0xff] %vm725, %v2862
        %2875 = vrot.lane.b32.xlu0 %v711, 74
        %v2876 = vpop.permute.xlu0 %2875
        %2877 = vrot.lane.b32.xlu0 %v712, 74
        %v2878 = vpop.permute.xlu0 %2877
        %2879 = vrot.lane.b32.xlu0 %v713, 74
        %v2880 = vpop.permute.xlu0 %2879
        %2881 = vrot.lane.b32.xlu0 %v714, 74
        %v2882 = vpop.permute.xlu0 %2881
        %2883 = vrot.lane.b32.xlu0 %v715, 74
        %v2884 = vpop.permute.xlu0 %2883
        %2885 = vrot.lane.b32.xlu0 %v716, 74
        %v2886 = vpop.permute.xlu0 %2885
        %v2887 = vrot.slane %v2876, 4
        %v2888 = vrot.slane %v2878, 4
        %v2889 = vrot.slane %v2880, 4
        %v2890 = vrot.slane %v2882, 4
        %v2891 = vrot.slane %v2884, 4
        %v2892 = vrot.slane %v2886, 4
        %v2893 = vsel %vm769, %v2887, %v2888
        %vm2894 = vcmask 605184
        %v2895 = vsel %vm2894, %v2876, %v2893
        %v2896 = vsel %vm2894, %v2878, %v2888
        %v2897 = vsel %vm769, %v2889, %v2890
        %v2898 = vsel %vm2894, %v2880, %v2897
        %v2899 = vsel %vm2894, %v2882, %v2890
        %v2900 = vsel %vm769, %v2891, %v2892
        %v2901 = vsel %vm2894, %v2884, %v2900
        %v2902 = vsel %vm2894, %v2886, %v2892
        %2909 = vst [vmem:[#allocation2 + $0x870] sm:$0xff] %v2895
        %2910 = vst.msk [vmem:[#allocation2 + $0x878] sm:$0xff] %vm725, %v2896
        %2911 = vst [vmem:[#allocation2 + $0x880] sm:$0xff] %v2898
        %2912 = vst.msk [vmem:[#allocation2 + $0x888] sm:$0xff] %vm725, %v2899
        %2913 = vst [vmem:[#allocation2 + $0x890] sm:$0x33] %v2901
        %2914 = vst.msk [vmem:[#allocation2 + $0x898] sm:$0x33] %vm732, %v2902
        %2915 = vrot.lane.b32.xlu0 %v737, 73
        %v2916 = vpop.permute.xlu0 %2915
        %2917 = vrot.lane.b32.xlu0 %v738, 73
        %v2918 = vpop.permute.xlu0 %2917
        %2919 = vrot.lane.b32.xlu0 %v741, 73
        %v2920 = vpop.permute.xlu0 %2919
        %2921 = vrot.lane.b32.xlu0 %v744, 73
        %v2922 = vpop.permute.xlu0 %2921
        %2923 = vrot.lane.b32.xlu0 %v747, 73
        %v2924 = vpop.permute.xlu0 %2923
        %2925 = vrot.lane.b32.xlu0 %v750, 73
        %v2926 = vpop.permute.xlu0 %2925
        %v2927 = vrot.slane %v2916, 4
        %v2928 = vrot.slane %v2918, 4
        %v2929 = vrot.slane %v2920, 4
        %v2930 = vrot.slane %v2922, 4
        %v2931 = vrot.slane %v2924, 4
        %v2932 = vrot.slane %v2926, 4
        %v2933 = vsel %vm769, %v2927, %v2928
        %vm2934 = vcmask 596992
        %v2935 = vsel %vm2934, %v2916, %v2933
        %v2936 = vsel %vm2934, %v2918, %v2928
        %v2937 = vsel %vm769, %v2929, %v2930
        %v2938 = vsel %vm2934, %v2920, %v2937
        %v2939 = vsel %vm2934, %v2922, %v2930
        %v2940 = vsel %vm769, %v2931, %v2932
        %v2941 = vsel %vm2934, %v2924, %v2940
        %v2942 = vsel %vm2934, %v2926, %v2932
        %2949 = vst [vmem:[#allocation2 + $0x890] sm:$0xcc] %v2935
        %2950 = vst.msk [vmem:[#allocation2 + $0x898] sm:$0xcc] %vm789, %v2936
        %2951 = vst [vmem:[#allocation2 + $0x8a0] sm:$0xff] %v2938
        %2952 = vst.msk [vmem:[#allocation2 + $0x8a8] sm:$0xff] %vm725, %v2939
        %2953 = vst [vmem:[#allocation2 + $0x8b0] sm:$0xff] %v2941
        %2954 = vst.msk [vmem:[#allocation2 + $0x8b8] sm:$0xff] %vm725, %v2942
        %2955 = vrot.lane.b32.xlu0 %v711, 72
        %v2956 = vpop.permute.xlu0 %2955
        %2957 = vrot.lane.b32.xlu0 %v712, 72
        %v2958 = vpop.permute.xlu0 %2957
        %2959 = vrot.lane.b32.xlu0 %v713, 72
        %v2960 = vpop.permute.xlu0 %2959
        %2961 = vrot.lane.b32.xlu0 %v714, 72
        %v2962 = vpop.permute.xlu0 %2961
        %2963 = vrot.lane.b32.xlu0 %v715, 72
        %v2964 = vpop.permute.xlu0 %2963
        %2965 = vrot.lane.b32.xlu0 %v716, 72
        %v2966 = vpop.permute.xlu0 %2965
        %v2967 = vrot.slane %v2956, 4
        %v2968 = vrot.slane %v2958, 4
        %v2969 = vrot.slane %v2960, 4
        %v2970 = vrot.slane %v2962, 4
        %v2971 = vrot.slane %v2964, 4
        %v2972 = vrot.slane %v2966, 4
        %v2973 = vsel %vm769, %v2967, %v2968
        %vm2974 = vcmask 588800
        %v2975 = vsel %vm2974, %v2956, %v2973
        %v2976 = vsel %vm2974, %v2958, %v2968
        %v2977 = vsel %vm769, %v2969, %v2970
        %v2978 = vsel %vm2974, %v2960, %v2977
        %v2979 = vsel %vm2974, %v2962, %v2970
        %v2980 = vsel %vm769, %v2971, %v2972
        %v2981 = vsel %vm2974, %v2964, %v2980
        %v2982 = vsel %vm2974, %v2966, %v2972
        %2989 = vst [vmem:[#allocation2 + $0x8c0] sm:$0xff] %v2975
        %2990 = vst.msk [vmem:[#allocation2 + $0x8c8] sm:$0xff] %vm725, %v2976
        %2991 = vst [vmem:[#allocation2 + $0x8d0] sm:$0xff] %v2978
        %2992 = vst.msk [vmem:[#allocation2 + $0x8d8] sm:$0xff] %vm725, %v2979
        %2993 = vst [vmem:[#allocation2 + $0x8e0] sm:$0x33] %v2981
        %2994 = vst.msk [vmem:[#allocation2 + $0x8e8] sm:$0x33] %vm732, %v2982
        %2995 = vrot.lane.b32.xlu0 %v737, 71
        %v2996 = vpop.permute.xlu0 %2995
        %2997 = vrot.lane.b32.xlu0 %v738, 71
        %v2998 = vpop.permute.xlu0 %2997
        %2999 = vrot.lane.b32.xlu0 %v741, 71
        %v3000 = vpop.permute.xlu0 %2999
        %3001 = vrot.lane.b32.xlu0 %v744, 71
        %v3002 = vpop.permute.xlu0 %3001
        %3003 = vrot.lane.b32.xlu0 %v747, 71
        %v3004 = vpop.permute.xlu0 %3003
        %3005 = vrot.lane.b32.xlu0 %v750, 71
        %v3006 = vpop.permute.xlu0 %3005
        %v3007 = vrot.slane %v2996, 4
        %v3008 = vrot.slane %v2998, 4
        %v3009 = vrot.slane %v3000, 4
        %v3010 = vrot.slane %v3002, 4
        %v3011 = vrot.slane %v3004, 4
        %v3012 = vrot.slane %v3006, 4
        %v3013 = vsel %vm769, %v3007, %v3008
        %vm3014 = vcmask 580608
        %v3015 = vsel %vm3014, %v2996, %v3013
        %v3016 = vsel %vm3014, %v2998, %v3008
        %v3017 = vsel %vm769, %v3009, %v3010
        %v3018 = vsel %vm3014, %v3000, %v3017
        %v3019 = vsel %vm3014, %v3002, %v3010
        %v3020 = vsel %vm769, %v3011, %v3012
        %v3021 = vsel %vm3014, %v3004, %v3020
        %v3022 = vsel %vm3014, %v3006, %v3012
        %3029 = vst [vmem:[#allocation2 + $0x8e0] sm:$0xcc] %v3015
        %3030 = vst.msk [vmem:[#allocation2 + $0x8e8] sm:$0xcc] %vm789, %v3016
        %3031 = vst [vmem:[#allocation2 + $0x8f0] sm:$0xff] %v3018
        %3032 = vst.msk [vmem:[#allocation2 + $0x8f8] sm:$0xff] %vm725, %v3019
        %3033 = vst [vmem:[#allocation2 + $0x900] sm:$0xff] %v3021
        %3034 = vst.msk [vmem:[#allocation2 + $0x908] sm:$0xff] %vm725, %v3022
        %3035 = vrot.lane.b32.xlu0 %v711, 70
        %v3036 = vpop.permute.xlu0 %3035
        %3037 = vrot.lane.b32.xlu0 %v712, 70
        %v3038 = vpop.permute.xlu0 %3037
        %3039 = vrot.lane.b32.xlu0 %v713, 70
        %v3040 = vpop.permute.xlu0 %3039
        %3041 = vrot.lane.b32.xlu0 %v714, 70
        %v3042 = vpop.permute.xlu0 %3041
        %3043 = vrot.lane.b32.xlu0 %v715, 70
        %v3044 = vpop.permute.xlu0 %3043
        %3045 = vrot.lane.b32.xlu0 %v716, 70
        %v3046 = vpop.permute.xlu0 %3045
        %v3047 = vrot.slane %v3036, 4
        %v3048 = vrot.slane %v3038, 4
        %v3049 = vrot.slane %v3040, 4
        %v3050 = vrot.slane %v3042, 4
        %v3051 = vrot.slane %v3044, 4
        %v3052 = vrot.slane %v3046, 4
        %v3053 = vsel %vm769, %v3047, %v3048
        %vm3054 = vcmask 572416
        %v3055 = vsel %vm3054, %v3036, %v3053
        %v3056 = vsel %vm3054, %v3038, %v3048
        %v3057 = vsel %vm769, %v3049, %v3050
        %v3058 = vsel %vm3054, %v3040, %v3057
        %v3059 = vsel %vm3054, %v3042, %v3050
        %v3060 = vsel %vm769, %v3051, %v3052
        %v3061 = vsel %vm3054, %v3044, %v3060
        %v3062 = vsel %vm3054, %v3046, %v3052
        %3069 = vst [vmem:[#allocation2 + $0x910] sm:$0xff] %v3055
        %3070 = vst.msk [vmem:[#allocation2 + $0x918] sm:$0xff] %vm725, %v3056
        %3071 = vst [vmem:[#allocation2 + $0x920] sm:$0xff] %v3058
        %3072 = vst.msk [vmem:[#allocation2 + $0x928] sm:$0xff] %vm725, %v3059
        %3073 = vst [vmem:[#allocation2 + $0x930] sm:$0x33] %v3061
        %3074 = vst.msk [vmem:[#allocation2 + $0x938] sm:$0x33] %vm732, %v3062
        %3075 = vrot.lane.b32.xlu0 %v737, 69
        %v3076 = vpop.permute.xlu0 %3075
        %3077 = vrot.lane.b32.xlu0 %v738, 69
        %v3078 = vpop.permute.xlu0 %3077
        %3079 = vrot.lane.b32.xlu0 %v741, 69
        %v3080 = vpop.permute.xlu0 %3079
        %3081 = vrot.lane.b32.xlu0 %v744, 69
        %v3082 = vpop.permute.xlu0 %3081
        %3083 = vrot.lane.b32.xlu0 %v747, 69
        %v3084 = vpop.permute.xlu0 %3083
        %3085 = vrot.lane.b32.xlu0 %v750, 69
        %v3086 = vpop.permute.xlu0 %3085
        %v3087 = vrot.slane %v3076, 4
        %v3088 = vrot.slane %v3078, 4
        %v3089 = vrot.slane %v3080, 4
        %v3090 = vrot.slane %v3082, 4
        %v3091 = vrot.slane %v3084, 4
        %v3092 = vrot.slane %v3086, 4
        %v3093 = vsel %vm769, %v3087, %v3088
        %vm3094 = vcmask 564224
        %v3095 = vsel %vm3094, %v3076, %v3093
        %v3096 = vsel %vm3094, %v3078, %v3088
        %v3097 = vsel %vm769, %v3089, %v3090
        %v3098 = vsel %vm3094, %v3080, %v3097
        %v3099 = vsel %vm3094, %v3082, %v3090
        %v3100 = vsel %vm769, %v3091, %v3092
        %v3101 = vsel %vm3094, %v3084, %v3100
        %v3102 = vsel %vm3094, %v3086, %v3092
        %3109 = vst [vmem:[#allocation2 + $0x930] sm:$0xcc] %v3095
        %3110 = vst.msk [vmem:[#allocation2 + $0x938] sm:$0xcc] %vm789, %v3096
        %3111 = vst [vmem:[#allocation2 + $0x940] sm:$0xff] %v3098
        %3112 = vst.msk [vmem:[#allocation2 + $0x948] sm:$0xff] %vm725, %v3099
        %3113 = vst [vmem:[#allocation2 + $0x950] sm:$0xff] %v3101
        %3114 = vst.msk [vmem:[#allocation2 + $0x958] sm:$0xff] %vm725, %v3102
        %3115 = vrot.lane.b32.xlu0 %v711, 68
        %v3116 = vpop.permute.xlu0 %3115
        %3117 = vrot.lane.b32.xlu0 %v712, 68
        %v3118 = vpop.permute.xlu0 %3117
        %3119 = vrot.lane.b32.xlu0 %v713, 68
        %v3120 = vpop.permute.xlu0 %3119
        %3121 = vrot.lane.b32.xlu0 %v714, 68
        %v3122 = vpop.permute.xlu0 %3121
        %3123 = vrot.lane.b32.xlu0 %v715, 68
        %v3124 = vpop.permute.xlu0 %3123
        %3125 = vrot.lane.b32.xlu0 %v716, 68
        %v3126 = vpop.permute.xlu0 %3125
        %v3127 = vrot.slane %v3116, 4
        %v3128 = vrot.slane %v3118, 4
        %v3129 = vrot.slane %v3120, 4
        %v3130 = vrot.slane %v3122, 4
        %v3131 = vrot.slane %v3124, 4
        %v3132 = vrot.slane %v3126, 4
        %v3133 = vsel %vm769, %v3127, %v3128
        %vm3134 = vcmask 556032
        %v3135 = vsel %vm3134, %v3116, %v3133
        %v3136 = vsel %vm3134, %v3118, %v3128
        %v3137 = vsel %vm769, %v3129, %v3130
        %v3138 = vsel %vm3134, %v3120, %v3137
        %v3139 = vsel %vm3134, %v3122, %v3130
        %v3140 = vsel %vm769, %v3131, %v3132
        %v3141 = vsel %vm3134, %v3124, %v3140
        %v3142 = vsel %vm3134, %v3126, %v3132
        %3149 = vst [vmem:[#allocation2 + $0x960] sm:$0xff] %v3135
        %3150 = vst.msk [vmem:[#allocation2 + $0x968] sm:$0xff] %vm725, %v3136
        %3151 = vst [vmem:[#allocation2 + $0x970] sm:$0xff] %v3138
        %3152 = vst.msk [vmem:[#allocation2 + $0x978] sm:$0xff] %vm725, %v3139
        %3153 = vst [vmem:[#allocation2 + $0x980] sm:$0x33] %v3141
        %3154 = vst.msk [vmem:[#allocation2 + $0x988] sm:$0x33] %vm732, %v3142
        %3155 = vrot.lane.b32.xlu0 %v737, 67
        %v3156 = vpop.permute.xlu0 %3155
        %3157 = vrot.lane.b32.xlu0 %v738, 67
        %v3158 = vpop.permute.xlu0 %3157
        %3159 = vrot.lane.b32.xlu0 %v741, 67
        %v3160 = vpop.permute.xlu0 %3159
        %3161 = vrot.lane.b32.xlu0 %v744, 67
        %v3162 = vpop.permute.xlu0 %3161
        %3163 = vrot.lane.b32.xlu0 %v747, 67
        %v3164 = vpop.permute.xlu0 %3163
        %3165 = vrot.lane.b32.xlu0 %v750, 67
        %v3166 = vpop.permute.xlu0 %3165
        %v3167 = vrot.slane %v3156, 4
        %v3168 = vrot.slane %v3158, 4
        %v3169 = vrot.slane %v3160, 4
        %v3170 = vrot.slane %v3162, 4
        %v3171 = vrot.slane %v3164, 4
        %v3172 = vrot.slane %v3166, 4
        %v3173 = vsel %vm769, %v3167, %v3168
        %vm3174 = vcmask 547840
        %v3175 = vsel %vm3174, %v3156, %v3173
        %v3176 = vsel %vm3174, %v3158, %v3168
        %v3177 = vsel %vm769, %v3169, %v3170
        %v3178 = vsel %vm3174, %v3160, %v3177
        %v3179 = vsel %vm3174, %v3162, %v3170
        %v3180 = vsel %vm769, %v3171, %v3172
        %v3181 = vsel %vm3174, %v3164, %v3180
        %v3182 = vsel %vm3174, %v3166, %v3172
        %3189 = vst [vmem:[#allocation2 + $0x980] sm:$0xcc] %v3175
        %3190 = vst.msk [vmem:[#allocation2 + $0x988] sm:$0xcc] %vm789, %v3176
        %3191 = vst [vmem:[#allocation2 + $0x990] sm:$0xff] %v3178
        %3192 = vst.msk [vmem:[#allocation2 + $0x998] sm:$0xff] %vm725, %v3179
        %3193 = vst [vmem:[#allocation2 + $0x9a0] sm:$0xff] %v3181
        %3194 = vst.msk [vmem:[#allocation2 + $0x9a8] sm:$0xff] %vm725, %v3182
        %3195 = vrot.lane.b32.xlu0 %v711, 66
        %v3196 = vpop.permute.xlu0 %3195
        %3197 = vrot.lane.b32.xlu0 %v712, 66
        %v3198 = vpop.permute.xlu0 %3197
        %3199 = vrot.lane.b32.xlu0 %v713, 66
        %v3200 = vpop.permute.xlu0 %3199
        %3201 = vrot.lane.b32.xlu0 %v714, 66
        %v3202 = vpop.permute.xlu0 %3201
        %3203 = vrot.lane.b32.xlu0 %v715, 66
        %v3204 = vpop.permute.xlu0 %3203
        %3205 = vrot.lane.b32.xlu0 %v716, 66
        %v3206 = vpop.permute.xlu0 %3205
        %v3207 = vrot.slane %v3196, 4
        %v3208 = vrot.slane %v3198, 4
        %v3209 = vrot.slane %v3200, 4
        %v3210 = vrot.slane %v3202, 4
        %v3211 = vrot.slane %v3204, 4
        %v3212 = vrot.slane %v3206, 4
        %v3213 = vsel %vm769, %v3207, %v3208
        %vm3214 = vcmask 539648
        %v3215 = vsel %vm3214, %v3196, %v3213
        %v3216 = vsel %vm3214, %v3198, %v3208
        %v3217 = vsel %vm769, %v3209, %v3210
        %v3218 = vsel %vm3214, %v3200, %v3217
        %v3219 = vsel %vm3214, %v3202, %v3210
        %v3220 = vsel %vm769, %v3211, %v3212
        %v3221 = vsel %vm3214, %v3204, %v3220
        %v3222 = vsel %vm3214, %v3206, %v3212
        %3229 = vst [vmem:[#allocation2 + $0x9b0] sm:$0xff] %v3215
        %3230 = vst.msk [vmem:[#allocation2 + $0x9b8] sm:$0xff] %vm725, %v3216
        %3231 = vst [vmem:[#allocation2 + $0x9c0] sm:$0xff] %v3218
        %3232 = vst.msk [vmem:[#allocation2 + $0x9c8] sm:$0xff] %vm725, %v3219
        %3233 = vst [vmem:[#allocation2 + $0x9d0] sm:$0x33] %v3221
        %3234 = vst.msk [vmem:[#allocation2 + $0x9d8] sm:$0x33] %vm732, %v3222
        %3235 = vrot.lane.b32.xlu0 %v737, 65
        %v3236 = vpop.permute.xlu0 %3235
        %3237 = vrot.lane.b32.xlu0 %v738, 65
        %v3238 = vpop.permute.xlu0 %3237
        %3239 = vrot.lane.b32.xlu0 %v741, 65
        %v3240 = vpop.permute.xlu0 %3239
        %3241 = vrot.lane.b32.xlu0 %v744, 65
        %v3242 = vpop.permute.xlu0 %3241
        %3243 = vrot.lane.b32.xlu0 %v747, 65
        %v3244 = vpop.permute.xlu0 %3243
        %3245 = vrot.lane.b32.xlu0 %v750, 65
        %v3246 = vpop.permute.xlu0 %3245
        %v3247 = vrot.slane %v3236, 4
        %v3248 = vrot.slane %v3238, 4
        %v3249 = vrot.slane %v3240, 4
        %v3250 = vrot.slane %v3242, 4
        %v3251 = vrot.slane %v3244, 4
        %v3252 = vrot.slane %v3246, 4
        %v3253 = vsel %vm769, %v3247, %v3248
        %vm3254 = vcmask 531456
        %v3255 = vsel %vm3254, %v3236, %v3253
        %v3256 = vsel %vm3254, %v3238, %v3248
        %v3257 = vsel %vm769, %v3249, %v3250
        %v3258 = vsel %vm3254, %v3240, %v3257
        %v3259 = vsel %vm3254, %v3242, %v3250
        %v3260 = vsel %vm769, %v3251, %v3252
        %v3261 = vsel %vm3254, %v3244, %v3260
        %v3262 = vsel %vm3254, %v3246, %v3252
        %3269 = vst [vmem:[#allocation2 + $0x9d0] sm:$0xcc] %v3255
        %3270 = vst.msk [vmem:[#allocation2 + $0x9d8] sm:$0xcc] %vm789, %v3256
        %3271 = vst [vmem:[#allocation2 + $0x9e0] sm:$0xff] %v3258
        %3272 = vst.msk [vmem:[#allocation2 + $0x9e8] sm:$0xff] %vm725, %v3259
        %3273 = vst [vmem:[#allocation2 + $0x9f0] sm:$0xff] %v3261
        %3274 = vst.msk [vmem:[#allocation2 + $0x9f8] sm:$0xff] %vm725, %v3262
        %3275 = vrot.lane.b32.xlu0 %v711, 64
        %v3276 = vpop.permute.xlu0 %3275
        %3277 = vrot.lane.b32.xlu0 %v712, 64
        %v3278 = vpop.permute.xlu0 %3277
        %3279 = vrot.lane.b32.xlu0 %v713, 64
        %v3280 = vpop.permute.xlu0 %3279
        %3281 = vrot.lane.b32.xlu0 %v714, 64
        %v3282 = vpop.permute.xlu0 %3281
        %3283 = vrot.lane.b32.xlu0 %v715, 64
        %v3284 = vpop.permute.xlu0 %3283
        %3285 = vrot.lane.b32.xlu0 %v716, 64
        %v3286 = vpop.permute.xlu0 %3285
        %v3287 = vrot.slane %v3276, 4
        %v3288 = vrot.slane %v3278, 4
        %v3289 = vrot.slane %v3280, 4
        %v3290 = vrot.slane %v3282, 4
        %v3291 = vrot.slane %v3284, 4
        %v3292 = vrot.slane %v3286, 4
        %v3293 = vsel %vm769, %v3287, %v3288
        %vm3294 = vcmask 523264
        %v3295 = vsel %vm3294, %v3276, %v3293
        %v3296 = vsel %vm3294, %v3278, %v3288
        %v3297 = vsel %vm769, %v3289, %v3290
        %v3298 = vsel %vm3294, %v3280, %v3297
        %v3299 = vsel %vm3294, %v3282, %v3290
        %v3300 = vsel %vm769, %v3291, %v3292
        %v3301 = vsel %vm3294, %v3284, %v3300
        %v3302 = vsel %vm3294, %v3286, %v3292
        %3309 = vst [vmem:[#allocation2 + $0xa00] sm:$0xff] %v3295
        %3310 = vst.msk [vmem:[#allocation2 + $0xa08] sm:$0xff] %vm725, %v3296
        %3311 = vst [vmem:[#allocation2 + $0xa10] sm:$0xff] %v3298
        %3312 = vst.msk [vmem:[#allocation2 + $0xa18] sm:$0xff] %vm725, %v3299
        %3313 = vst [vmem:[#allocation2 + $0xa20] sm:$0x33] %v3301
        %3314 = vst.msk [vmem:[#allocation2 + $0xa28] sm:$0x33] %vm732, %v3302
        %3315 = vrot.lane.b32.xlu0 %v737, 63
        %v3316 = vpop.permute.xlu0 %3315
        %3317 = vrot.lane.b32.xlu0 %v738, 63
        %v3318 = vpop.permute.xlu0 %3317
        %3319 = vrot.lane.b32.xlu0 %v741, 63
        %v3320 = vpop.permute.xlu0 %3319
        %3321 = vrot.lane.b32.xlu0 %v744, 63
        %v3322 = vpop.permute.xlu0 %3321
        %3323 = vrot.lane.b32.xlu0 %v747, 63
        %v3324 = vpop.permute.xlu0 %3323
        %3325 = vrot.lane.b32.xlu0 %v750, 63
        %v3326 = vpop.permute.xlu0 %3325
        %v3327 = vrot.slane %v3316, 4
        %v3328 = vrot.slane %v3318, 4
        %v3329 = vrot.slane %v3320, 4
        %v3330 = vrot.slane %v3322, 4
        %v3331 = vrot.slane %v3324, 4
        %v3332 = vrot.slane %v3326, 4
        %v3333 = vsel %vm769, %v3327, %v3328
        %vm3334 = vcmask 515072
        %v3335 = vsel %vm3334, %v3316, %v3333
        %v3336 = vsel %vm3334, %v3318, %v3328
        %v3337 = vsel %vm769, %v3329, %v3330
        %v3338 = vsel %vm3334, %v3320, %v3337
        %v3339 = vsel %vm3334, %v3322, %v3330
        %v3340 = vsel %vm769, %v3331, %v3332
        %v3341 = vsel %vm3334, %v3324, %v3340
        %v3342 = vsel %vm3334, %v3326, %v3332
        %3349 = vst [vmem:[#allocation2 + $0xa20] sm:$0xcc] %v3335
        %3350 = vst.msk [vmem:[#allocation2 + $0xa28] sm:$0xcc] %vm789, %v3336
        %3351 = vst [vmem:[#allocation2 + $0xa30] sm:$0xff] %v3338
        %3352 = vst.msk [vmem:[#allocation2 + $0xa38] sm:$0xff] %vm725, %v3339
        %3353 = vst [vmem:[#allocation2 + $0xa40] sm:$0xff] %v3341
        %3354 = vst.msk [vmem:[#allocation2 + $0xa48] sm:$0xff] %vm725, %v3342
        %3355 = vrot.lane.b32.xlu0 %v711, 62
        %v3356 = vpop.permute.xlu0 %3355
        %3357 = vrot.lane.b32.xlu0 %v712, 62
        %v3358 = vpop.permute.xlu0 %3357
        %3359 = vrot.lane.b32.xlu0 %v713, 62
        %v3360 = vpop.permute.xlu0 %3359
        %3361 = vrot.lane.b32.xlu0 %v714, 62
        %v3362 = vpop.permute.xlu0 %3361
        %3363 = vrot.lane.b32.xlu0 %v715, 62
        %v3364 = vpop.permute.xlu0 %3363
        %3365 = vrot.lane.b32.xlu0 %v716, 62
        %v3366 = vpop.permute.xlu0 %3365
        %v3367 = vrot.slane %v3356, 4
        %v3368 = vrot.slane %v3358, 4
        %v3369 = vrot.slane %v3360, 4
        %v3370 = vrot.slane %v3362, 4
        %v3371 = vrot.slane %v3364, 4
        %v3372 = vrot.slane %v3366, 4
        %v3373 = vsel %vm769, %v3367, %v3368
        %vm3374 = vcmask 506880
        %v3375 = vsel %vm3374, %v3356, %v3373
        %v3376 = vsel %vm3374, %v3358, %v3368
        %v3377 = vsel %vm769, %v3369, %v3370
        %v3378 = vsel %vm3374, %v3360, %v3377
        %v3379 = vsel %vm3374, %v3362, %v3370
        %v3380 = vsel %vm769, %v3371, %v3372
        %v3381 = vsel %vm3374, %v3364, %v3380
        %v3382 = vsel %vm3374, %v3366, %v3372
        %3389 = vst [vmem:[#allocation2 + $0xa50] sm:$0xff] %v3375
        %3390 = vst.msk [vmem:[#allocation2 + $0xa58] sm:$0xff] %vm725, %v3376
        %3391 = vst [vmem:[#allocation2 + $0xa60] sm:$0xff] %v3378
        %3392 = vst.msk [vmem:[#allocation2 + $0xa68] sm:$0xff] %vm725, %v3379
        %3393 = vst [vmem:[#allocation2 + $0xa70] sm:$0x33] %v3381
        %3394 = vst.msk [vmem:[#allocation2 + $0xa78] sm:$0x33] %vm732, %v3382
        %3395 = vrot.lane.b32.xlu0 %v737, 61
        %v3396 = vpop.permute.xlu0 %3395
        %3397 = vrot.lane.b32.xlu0 %v738, 61
        %v3398 = vpop.permute.xlu0 %3397
        %3399 = vrot.lane.b32.xlu0 %v741, 61
        %v3400 = vpop.permute.xlu0 %3399
        %3401 = vrot.lane.b32.xlu0 %v744, 61
        %v3402 = vpop.permute.xlu0 %3401
        %3403 = vrot.lane.b32.xlu0 %v747, 61
        %v3404 = vpop.permute.xlu0 %3403
        %3405 = vrot.lane.b32.xlu0 %v750, 61
        %v3406 = vpop.permute.xlu0 %3405
        %v3407 = vrot.slane %v3396, 4
        %v3408 = vrot.slane %v3398, 4
        %v3409 = vrot.slane %v3400, 4
        %v3410 = vrot.slane %v3402, 4
        %v3411 = vrot.slane %v3404, 4
        %v3412 = vrot.slane %v3406, 4
        %v3413 = vsel %vm769, %v3407, %v3408
        %vm3414 = vcmask 498688
        %v3415 = vsel %vm3414, %v3396, %v3413
        %v3416 = vsel %vm3414, %v3398, %v3408
        %v3417 = vsel %vm769, %v3409, %v3410
        %v3418 = vsel %vm3414, %v3400, %v3417
        %v3419 = vsel %vm3414, %v3402, %v3410
        %v3420 = vsel %vm769, %v3411, %v3412
        %v3421 = vsel %vm3414, %v3404, %v3420
        %v3422 = vsel %vm3414, %v3406, %v3412
        %3429 = vst [vmem:[#allocation2 + $0xa70] sm:$0xcc] %v3415
        %3430 = vst.msk [vmem:[#allocation2 + $0xa78] sm:$0xcc] %vm789, %v3416
        %3431 = vst [vmem:[#allocation2 + $0xa80] sm:$0xff] %v3418
        %3432 = vst.msk [vmem:[#allocation2 + $0xa88] sm:$0xff] %vm725, %v3419
        %3433 = vst [vmem:[#allocation2 + $0xa90] sm:$0xff] %v3421
        %3434 = vst.msk [vmem:[#allocation2 + $0xa98] sm:$0xff] %vm725, %v3422
        %3435 = vrot.lane.b32.xlu0 %v711, 60
        %v3436 = vpop.permute.xlu0 %3435
        %3437 = vrot.lane.b32.xlu0 %v712, 60
        %v3438 = vpop.permute.xlu0 %3437
        %3439 = vrot.lane.b32.xlu0 %v713, 60
        %v3440 = vpop.permute.xlu0 %3439
        %3441 = vrot.lane.b32.xlu0 %v714, 60
        %v3442 = vpop.permute.xlu0 %3441
        %3443 = vrot.lane.b32.xlu0 %v715, 60
        %v3444 = vpop.permute.xlu0 %3443
        %3445 = vrot.lane.b32.xlu0 %v716, 60
        %v3446 = vpop.permute.xlu0 %3445
        %v3447 = vrot.slane %v3436, 4
        %v3448 = vrot.slane %v3438, 4
        %v3449 = vrot.slane %v3440, 4
        %v3450 = vrot.slane %v3442, 4
        %v3451 = vrot.slane %v3444, 4
        %v3452 = vrot.slane %v3446, 4
        %v3453 = vsel %vm769, %v3447, %v3448
        %vm3454 = vcmask 490496
        %v3455 = vsel %vm3454, %v3436, %v3453
        %v3456 = vsel %vm3454, %v3438, %v3448
        %v3457 = vsel %vm769, %v3449, %v3450
        %v3458 = vsel %vm3454, %v3440, %v3457
        %v3459 = vsel %vm3454, %v3442, %v3450
        %v3460 = vsel %vm769, %v3451, %v3452
        %v3461 = vsel %vm3454, %v3444, %v3460
        %v3462 = vsel %vm3454, %v3446, %v3452
        %3469 = vst [vmem:[#allocation2 + $0xaa0] sm:$0xff] %v3455
        %3470 = vst.msk [vmem:[#allocation2 + $0xaa8] sm:$0xff] %vm725, %v3456
        %3471 = vst [vmem:[#allocation2 + $0xab0] sm:$0xff] %v3458
        %3472 = vst.msk [vmem:[#allocation2 + $0xab8] sm:$0xff] %vm725, %v3459
        %3473 = vst [vmem:[#allocation2 + $0xac0] sm:$0x33] %v3461
        %3474 = vst.msk [vmem:[#allocation2 + $0xac8] sm:$0x33] %vm732, %v3462
        %v3475 = vld [vmem:[%s3] sm:$0xff]
        %v3476 = vld [vmem:[%s3 + $0x8] sm:$0xff]
        %v3477 = vld [vmem:[%s3 + $0x10] sm:$0xff]
        %v3478 = vld [vmem:[%s3 + $0x18] sm:$0xff]
        %v3479 = vld [vmem:[%s3 + $0x20] sm:$0xff]
        %v3480 = vld [vmem:[%s3 + $0x28] sm:$0xf]
        %v3481 = vld [vmem:[%s3 + $0x2c] sm:$0x11]
        %v3482 = vld [vmem:[%s3 + $0x34] sm:$0x11]
        %v3483 = vld [vmem:[%s3 + $0x3c] sm:$0x11]
        %v3484 = vld [vmem:[%s3 + $0x44] sm:$0x11]
        %v3485 = vld [vmem:[%s3 + $0x4c] sm:$0x11]
        %v3486 = vld [vmem:[%s3 + $0x54] sm:$0x1]
        %v3487 = vld [vmem:[#allocation2] sm:$0xff]
        %v3488 = vld [vmem:[#allocation2 + $0x8] sm:$0xff]
        %v3489 = vld [vmem:[#allocation2 + $0x10] sm:$0xff]
        %v3490 = vld [vmem:[#allocation2 + $0x18] sm:$0xff]
        %v3491 = vld [vmem:[#allocation2 + $0x20] sm:$0xff]
        %v3492 = vld [vmem:[#allocation2 + $0x28] sm:$0xff]
        %v3493 = vld [vmem:[#allocation2 + $0x30] sm:$0xff]
        %v3494 = vld [vmem:[#allocation2 + $0x38] sm:$0xff]
        %v3495 = vld [vmem:[#allocation2 + $0x40] sm:$0xff]
        %v3496 = vld [vmem:[#allocation2 + $0x48] sm:$0xff]
        %v3497 = vld [vmem:[#allocation2 + $0x50] sm:$0xff]
        %v3498 = vld [vmem:[#allocation2 + $0x58] sm:$0xff]
        %v3499 = vld [vmem:[#allocation2 + $0x60] sm:$0xff]
        %v3500 = vld [vmem:[#allocation2 + $0x68] sm:$0xff]
        %v3501 = vld [vmem:[#allocation2 + $0x70] sm:$0xff]
        %v3502 = vld [vmem:[#allocation2 + $0x78] sm:$0xff]
        %v3503 = vld [vmem:[#allocation2 + $0x80] sm:$0xff]
        %v3504 = vld [vmem:[#allocation2 + $0x88] sm:$0xff]
        %v3505 = vld [vmem:[#allocation2 + $0x90] sm:$0xff]
        %v3506 = vld [vmem:[#allocation2 + $0x98] sm:$0xff]
        %v3507 = vld [vmem:[#allocation2 + $0xa0] sm:$0xff]
        %v3508 = vld [vmem:[#allocation2 + $0xa8] sm:$0xff]
        %v3509 = vld [vmem:[#allocation2 + $0xb0] sm:$0xff]
        %v3510 = vld [vmem:[#allocation2 + $0xb8] sm:$0xff]
        %v3511 = vld [vmem:[#allocation2 + $0xc0] sm:$0xff]
        %v3512 = vld [vmem:[#allocation2 + $0xc8] sm:$0xff]
        %v3513 = vld [vmem:[#allocation2 + $0xd0] sm:$0xff]
        %v3514 = vld [vmem:[#allocation2 + $0xd8] sm:$0xff]
        %v3515 = vld [vmem:[#allocation2 + $0xe0] sm:$0xff]
        %v3516 = vld [vmem:[#allocation2 + $0xe8] sm:$0xff]
        %v3517 = vld [vmem:[#allocation2 + $0xf0] sm:$0xff]
        %v3518 = vld [vmem:[#allocation2 + $0xf8] sm:$0xff]
        %v3519 = vld [vmem:[#allocation2 + $0x100] sm:$0xff]
        %v3520 = vld [vmem:[#allocation2 + $0x108] sm:$0xff]
        %v3521 = vld [vmem:[#allocation2 + $0x110] sm:$0xff]
        %v3522 = vld [vmem:[#allocation2 + $0x118] sm:$0xff]
        %v3523 = vld [vmem:[#allocation2 + $0x120] sm:$0xff]
        %v3524 = vld [vmem:[#allocation2 + $0x128] sm:$0xff]
        %v3525 = vld [vmem:[#allocation2 + $0x130] sm:$0xff]
        %v3526 = vld [vmem:[#allocation2 + $0x138] sm:$0xff]
        %v3527 = vld [vmem:[#allocation2 + $0x140] sm:$0xff]
        %v3528 = vld [vmem:[#allocation2 + $0x148] sm:$0xff]
        %v3529 = vld [vmem:[#allocation2 + $0x150] sm:$0xff]
        %v3530 = vld [vmem:[#allocation2 + $0x158] sm:$0xff]
        %v3531 = vld [vmem:[#allocation2 + $0x160] sm:$0xff]
        %v3532 = vld [vmem:[#allocation2 + $0x168] sm:$0xff]
        %v3533 = vld [vmem:[#allocation2 + $0x170] sm:$0xff]
        %v3534 = vld [vmem:[#allocation2 + $0x178] sm:$0xff]
        %v3535 = vld [vmem:[#allocation2 + $0x180] sm:$0xff]
        %v3536 = vld [vmem:[#allocation2 + $0x188] sm:$0xff]
        %v3537 = vld [vmem:[#allocation2 + $0x190] sm:$0xff]
        %v3538 = vld [vmem:[#allocation2 + $0x198] sm:$0xff]
        %v3539 = vld [vmem:[#allocation2 + $0x1a0] sm:$0xff]
        %v3540 = vld [vmem:[#allocation2 + $0x1a8] sm:$0xff]
        %v3541 = vld [vmem:[#allocation2 + $0x1b0] sm:$0xff]
        %v3542 = vld [vmem:[#allocation2 + $0x1b8] sm:$0xff]
        %v3543 = vld [vmem:[#allocation2 + $0x1c0] sm:$0xff]
        %v3544 = vld [vmem:[#allocation2 + $0x1c8] sm:$0xff]
        %v3545 = vld [vmem:[#allocation2 + $0x1d0] sm:$0xff]
        %v3546 = vld [vmem:[#allocation2 + $0x1d8] sm:$0xff]
        %v3547 = vld [vmem:[#allocation2 + $0x1e0] sm:$0xff]
        %v3548 = vld [vmem:[#allocation2 + $0x1e8] sm:$0xff]
        %v3549 = vld [vmem:[#allocation2 + $0x1f0] sm:$0xff]
        %v3550 = vld [vmem:[#allocation2 + $0x1f8] sm:$0xff]
        %v3551 = vld [vmem:[#allocation2 + $0x200] sm:$0xff]
        %v3552 = vld [vmem:[#allocation2 + $0x208] sm:$0xff]
        %v3553 = vld [vmem:[#allocation2 + $0x210] sm:$0xff]
        %v3554 = vld [vmem:[#allocation2 + $0x218] sm:$0xff]
        %v3555 = vld [vmem:[#allocation2 + $0x220] sm:$0xff]
        %v3556 = vld [vmem:[#allocation2 + $0x228] sm:$0xff]
        %v3557 = vld [vmem:[#allocation2 + $0x230] sm:$0xff]
        %v3558 = vld [vmem:[#allocation2 + $0x238] sm:$0xff]
        %v3559 = vld [vmem:[#allocation2 + $0x240] sm:$0xff]
        %v3560 = vld [vmem:[#allocation2 + $0x248] sm:$0xff]
        %v3561 = vld [vmem:[#allocation2 + $0x250] sm:$0xff]
        %v3562 = vld [vmem:[#allocation2 + $0x258] sm:$0xff]
        %v3563 = vld [vmem:[#allocation2 + $0x260] sm:$0xff]
        %v3564 = vld [vmem:[#allocation2 + $0x268] sm:$0xff]
        %v3565 = vld [vmem:[#allocation2 + $0x270] sm:$0xff]
        %v3566 = vld [vmem:[#allocation2 + $0x278] sm:$0xff]
        %v3567 = vld [vmem:[#allocation2 + $0x280] sm:$0xff]
        %v3568 = vld [vmem:[#allocation2 + $0x288] sm:$0xff]
        %v3569 = vld [vmem:[#allocation2 + $0x290] sm:$0xff]
        %v3570 = vld [vmem:[#allocation2 + $0x298] sm:$0xff]
        %v3571 = vld [vmem:[#allocation2 + $0x2a0] sm:$0xff]
        %v3572 = vld [vmem:[#allocation2 + $0x2a8] sm:$0xff]
        %v3573 = vld [vmem:[#allocation2 + $0x2b0] sm:$0xff]
        %v3574 = vld [vmem:[#allocation2 + $0x2b8] sm:$0xff]
        %v3575 = vld [vmem:[#allocation2 + $0x2c0] sm:$0xff]
        %v3576 = vld [vmem:[#allocation2 + $0x2c8] sm:$0xff]
        %v3577 = vld [vmem:[#allocation2 + $0x2d0] sm:$0xff]
        %v3578 = vld [vmem:[#allocation2 + $0x2d8] sm:$0xff]
        %v3579 = vld [vmem:[#allocation2 + $0x2e0] sm:$0xff]
        %v3580 = vld [vmem:[#allocation2 + $0x2e8] sm:$0xff]
        %v3581 = vld [vmem:[#allocation2 + $0x2f0] sm:$0xff]
        %v3582 = vld [vmem:[#allocation2 + $0x2f8] sm:$0xff]
        %v3583 = vld [vmem:[#allocation2 + $0x300] sm:$0xff]
        %v3584 = vld [vmem:[#allocation2 + $0x308] sm:$0xff]
        %v3585 = vld [vmem:[#allocation2 + $0x310] sm:$0xff]
        %v3586 = vld [vmem:[#allocation2 + $0x318] sm:$0xff]
        %v3587 = vld [vmem:[#allocation2 + $0x320] sm:$0xff]
        %v3588 = vld [vmem:[#allocation2 + $0x328] sm:$0xff]
        %v3589 = vld [vmem:[#allocation2 + $0x330] sm:$0xff]
        %v3590 = vld [vmem:[#allocation2 + $0x338] sm:$0xff]
        %v3591 = vld [vmem:[#allocation2 + $0x340] sm:$0xff]
        %v3592 = vld [vmem:[#allocation2 + $0x348] sm:$0xff]
        %v3593 = vld [vmem:[#allocation2 + $0x350] sm:$0xff]
        %v3594 = vld [vmem:[#allocation2 + $0x358] sm:$0xff]
        %v3595 = vld [vmem:[#allocation2 + $0x360] sm:$0xff]
        %v3596 = vld [vmem:[#allocation2 + $0x368] sm:$0xff]
        %v3597 = vld [vmem:[#allocation2 + $0x370] sm:$0xff]
        %v3598 = vld [vmem:[#allocation2 + $0x378] sm:$0xff]
        %v3599 = vld [vmem:[#allocation2 + $0x380] sm:$0xff]
        %v3600 = vld [vmem:[#allocation2 + $0x388] sm:$0xff]
        %v3601 = vld [vmem:[#allocation2 + $0x390] sm:$0xff]
        %v3602 = vld [vmem:[#allocation2 + $0x398] sm:$0xff]
        %v3603 = vld [vmem:[#allocation2 + $0x3a0] sm:$0xff]
        %v3604 = vld [vmem:[#allocation2 + $0x3a8] sm:$0xff]
        %v3605 = vld [vmem:[#allocation2 + $0x3b0] sm:$0xff]
        %v3606 = vld [vmem:[#allocation2 + $0x3b8] sm:$0xff]
        %v3607 = vld [vmem:[#allocation2 + $0x3c0] sm:$0xff]
        %v3608 = vld [vmem:[#allocation2 + $0x3c8] sm:$0xff]
        %v3609 = vld [vmem:[#allocation2 + $0x3d0] sm:$0xff]
        %v3610 = vld [vmem:[#allocation2 + $0x3d8] sm:$0xff]
        %v3611 = vld [vmem:[#allocation2 + $0x3e0] sm:$0xff]
        %v3612 = vld [vmem:[#allocation2 + $0x3e8] sm:$0xff]
        %v3613 = vld [vmem:[#allocation2 + $0x3f0] sm:$0xff]
        %v3614 = vld [vmem:[#allocation2 + $0x3f8] sm:$0xff]
        %v3615 = vld [vmem:[#allocation2 + $0x400] sm:$0xff]
        %v3616 = vld [vmem:[#allocation2 + $0x408] sm:$0xff]
        %v3617 = vld [vmem:[#allocation2 + $0x410] sm:$0xff]
        %v3618 = vld [vmem:[#allocation2 + $0x418] sm:$0xff]
        %v3619 = vld [vmem:[#allocation2 + $0x420] sm:$0xff]
        %v3620 = vld [vmem:[#allocation2 + $0x428] sm:$0xff]
        %v3621 = vld [vmem:[#allocation2 + $0x430] sm:$0xff]
        %v3622 = vld [vmem:[#allocation2 + $0x438] sm:$0xff]
        %v3623 = vld [vmem:[#allocation2 + $0x440] sm:$0xff]
        %v3624 = vld [vmem:[#allocation2 + $0x448] sm:$0xff]
        %v3625 = vld [vmem:[#allocation2 + $0x450] sm:$0xff]
        %v3626 = vld [vmem:[#allocation2 + $0x458] sm:$0xff]
        %v3627 = vld [vmem:[#allocation2 + $0x460] sm:$0xff]
        %v3628 = vld [vmem:[#allocation2 + $0x468] sm:$0xff]
        %v3629 = vld [vmem:[#allocation2 + $0x470] sm:$0xff]
        %v3630 = vld [vmem:[#allocation2 + $0x478] sm:$0xff]
        %v3631 = vld [vmem:[#allocation2 + $0x480] sm:$0xff]
        %v3632 = vld [vmem:[#allocation2 + $0x488] sm:$0xff]
        %v3633 = vld [vmem:[#allocation2 + $0x490] sm:$0xff]
        %v3634 = vld [vmem:[#allocation2 + $0x498] sm:$0xff]
        %v3635 = vld [vmem:[#allocation2 + $0x4a0] sm:$0xff]
        %v3636 = vld [vmem:[#allocation2 + $0x4a8] sm:$0xff]
        %v3637 = vld [vmem:[#allocation2 + $0x4b0] sm:$0xff]
        %v3638 = vld [vmem:[#allocation2 + $0x4b8] sm:$0xff]
        %v3639 = vld [vmem:[#allocation2 + $0x4c0] sm:$0xff]
        %v3640 = vld [vmem:[#allocation2 + $0x4c8] sm:$0xff]
        %v3641 = vld [vmem:[#allocation2 + $0x4d0] sm:$0xff]
        %v3642 = vld [vmem:[#allocation2 + $0x4d8] sm:$0xff]
        %v3643 = vld [vmem:[#allocation2 + $0x4e0] sm:$0xff]
        %v3644 = vld [vmem:[#allocation2 + $0x4e8] sm:$0xff]
        %v3645 = vld [vmem:[#allocation2 + $0x4f0] sm:$0xff]
        %v3646 = vld [vmem:[#allocation2 + $0x4f8] sm:$0xff]
        %v3647 = vld [vmem:[#allocation2 + $0x500] sm:$0xff]
        %v3648 = vld [vmem:[#allocation2 + $0x508] sm:$0xff]
        %v3649 = vld [vmem:[#allocation2 + $0x510] sm:$0xff]
        %v3650 = vld [vmem:[#allocation2 + $0x518] sm:$0xff]
        %v3651 = vld [vmem:[#allocation2 + $0x520] sm:$0xff]
        %v3652 = vld [vmem:[#allocation2 + $0x528] sm:$0xff]
        %v3653 = vld [vmem:[#allocation2 + $0x530] sm:$0xff]
        %v3654 = vld [vmem:[#allocation2 + $0x538] sm:$0xff]
        %v3655 = vld [vmem:[#allocation2 + $0x540] sm:$0xff]
        %v3656 = vld [vmem:[#allocation2 + $0x548] sm:$0xff]
        %v3657 = vld [vmem:[#allocation2 + $0x550] sm:$0xff]
        %v3658 = vld [vmem:[#allocation2 + $0x558] sm:$0xff]
        %v3659 = vld [vmem:[#allocation2 + $0x560] sm:$0xff]
        %v3660 = vld [vmem:[#allocation2 + $0x568] sm:$0xff]
        %v3661 = vld [vmem:[#allocation2 + $0x570] sm:$0xff]
        %v3662 = vld [vmem:[#allocation2 + $0x578] sm:$0xff]
        %v3663 = vld [vmem:[#allocation2 + $0x580] sm:$0xff]
        %v3664 = vld [vmem:[#allocation2 + $0x588] sm:$0xff]
        %v3665 = vld [vmem:[#allocation2 + $0x590] sm:$0xff]
        %v3666 = vld [vmem:[#allocation2 + $0x598] sm:$0xff]
        %v3667 = vld [vmem:[#allocation2 + $0x5a0] sm:$0xff]
        %v3668 = vld [vmem:[#allocation2 + $0x5a8] sm:$0xff]
        %v3669 = vld [vmem:[#allocation2 + $0x5b0] sm:$0xff]
        %v3670 = vld [vmem:[#allocation2 + $0x5b8] sm:$0xff]
        %v3671 = vld [vmem:[#allocation2 + $0x5c0] sm:$0xff]
        %v3672 = vld [vmem:[#allocation2 + $0x5c8] sm:$0xff]
        %v3673 = vld [vmem:[#allocation2 + $0x5d0] sm:$0xff]
        %v3674 = vld [vmem:[#allocation2 + $0x5d8] sm:$0xff]
        %v3675 = vld [vmem:[#allocation2 + $0x5e0] sm:$0xff]
        %v3676 = vld [vmem:[#allocation2 + $0x5e8] sm:$0xff]
        %v3677 = vld [vmem:[#allocation2 + $0x5f0] sm:$0xff]
        %v3678 = vld [vmem:[#allocation2 + $0x5f8] sm:$0xff]
        %v3679 = vld [vmem:[#allocation2 + $0x600] sm:$0xff]
        %v3680 = vld [vmem:[#allocation2 + $0x608] sm:$0xff]
        %v3681 = vld [vmem:[#allocation2 + $0x610] sm:$0xff]
        %v3682 = vld [vmem:[#allocation2 + $0x618] sm:$0xff]
        %v3683 = vld [vmem:[#allocation2 + $0x620] sm:$0xff]
        %v3684 = vld [vmem:[#allocation2 + $0x628] sm:$0xff]
        %v3685 = vld [vmem:[#allocation2 + $0x630] sm:$0xff]
        %v3686 = vld [vmem:[#allocation2 + $0x638] sm:$0xff]
        %v3687 = vld [vmem:[#allocation2 + $0x640] sm:$0xff]
        %v3688 = vld [vmem:[#allocation2 + $0x648] sm:$0xff]
        %v3689 = vld [vmem:[#allocation2 + $0x650] sm:$0xff]
        %v3690 = vld [vmem:[#allocation2 + $0x658] sm:$0xff]
        %v3691 = vld [vmem:[#allocation2 + $0x660] sm:$0xff]
        %v3692 = vld [vmem:[#allocation2 + $0x668] sm:$0xff]
        %v3693 = vld [vmem:[#allocation2 + $0x670] sm:$0xff]
        %v3694 = vld [vmem:[#allocation2 + $0x678] sm:$0xff]
        %v3695 = vld [vmem:[#allocation2 + $0x680] sm:$0xff]
        %v3696 = vld [vmem:[#allocation2 + $0x688] sm:$0xff]
        %v3697 = vld [vmem:[#allocation2 + $0x690] sm:$0xff]
        %v3698 = vld [vmem:[#allocation2 + $0x698] sm:$0xff]
        %v3699 = vld [vmem:[#allocation2 + $0x6a0] sm:$0xff]
        %v3700 = vld [vmem:[#allocation2 + $0x6a8] sm:$0xff]
        %v3701 = vld [vmem:[#allocation2 + $0x6b0] sm:$0xff]
        %v3702 = vld [vmem:[#allocation2 + $0x6b8] sm:$0xff]
        %v3703 = vld [vmem:[#allocation2 + $0x6c0] sm:$0xff]
        %v3704 = vld [vmem:[#allocation2 + $0x6c8] sm:$0xff]
        %v3705 = vld [vmem:[#allocation2 + $0x6d0] sm:$0xff]
        %v3706 = vld [vmem:[#allocation2 + $0x6d8] sm:$0xff]
        %v3707 = vld [vmem:[#allocation2 + $0x6e0] sm:$0xff]
        %v3708 = vld [vmem:[#allocation2 + $0x6e8] sm:$0xff]
        %v3709 = vld [vmem:[#allocation2 + $0x6f0] sm:$0xff]
        %v3710 = vld [vmem:[#allocation2 + $0x6f8] sm:$0xff]
        %v3711 = vld [vmem:[#allocation2 + $0x700] sm:$0xff]
        %v3712 = vld [vmem:[#allocation2 + $0x708] sm:$0xff]
        %v3713 = vld [vmem:[#allocation2 + $0x710] sm:$0xff]
        %v3714 = vld [vmem:[#allocation2 + $0x718] sm:$0xff]
        %v3715 = vld [vmem:[#allocation2 + $0x720] sm:$0xff]
        %v3716 = vld [vmem:[#allocation2 + $0x728] sm:$0xff]
        %v3717 = vld [vmem:[#allocation2 + $0x730] sm:$0xff]
        %v3718 = vld [vmem:[#allocation2 + $0x738] sm:$0xff]
        %v3719 = vld [vmem:[#allocation2 + $0x740] sm:$0xff]
        %v3720 = vld [vmem:[#allocation2 + $0x748] sm:$0xff]
        %v3721 = vld [vmem:[#allocation2 + $0x750] sm:$0xff]
        %v3722 = vld [vmem:[#allocation2 + $0x758] sm:$0xff]
        %v3723 = vld [vmem:[#allocation2 + $0x760] sm:$0xff]
        %v3724 = vld [vmem:[#allocation2 + $0x768] sm:$0xff]
        %v3725 = vld [vmem:[#allocation2 + $0x770] sm:$0xff]
        %v3726 = vld [vmem:[#allocation2 + $0x778] sm:$0xff]
        %v3727 = vld [vmem:[#allocation2 + $0x780] sm:$0xff]
        %v3728 = vld [vmem:[#allocation2 + $0x788] sm:$0xff]
        %v3729 = vld [vmem:[#allocation2 + $0x790] sm:$0xff]
        %v3730 = vld [vmem:[#allocation2 + $0x798] sm:$0xff]
        %v3731 = vld [vmem:[#allocation2 + $0x7a0] sm:$0xff]
        %v3732 = vld [vmem:[#allocation2 + $0x7a8] sm:$0xff]
        %v3733 = vld [vmem:[#allocation2 + $0x7b0] sm:$0xff]
        %v3734 = vld [vmem:[#allocation2 + $0x7b8] sm:$0xff]
        %v3735 = vld [vmem:[#allocation2 + $0x7c0] sm:$0xff]
        %v3736 = vld [vmem:[#allocation2 + $0x7c8] sm:$0xff]
        %v3737 = vld [vmem:[#allocation2 + $0x7d0] sm:$0xff]
        %v3738 = vld [vmem:[#allocation2 + $0x7d8] sm:$0xff]
        %v3739 = vld [vmem:[#allocation2 + $0x7e0] sm:$0xff]
        %v3740 = vld [vmem:[#allocation2 + $0x7e8] sm:$0xff]
        %v3741 = vld [vmem:[#allocation2 + $0x7f0] sm:$0xff]
        %v3742 = vld [vmem:[#allocation2 + $0x7f8] sm:$0xff]
        %v3743 = vld [vmem:[#allocation2 + $0x800] sm:$0xff]
        %v3744 = vld [vmem:[#allocation2 + $0x808] sm:$0xff]
        %v3745 = vld [vmem:[#allocation2 + $0x810] sm:$0xff]
        %v3746 = vld [vmem:[#allocation2 + $0x818] sm:$0xff]
        %v3747 = vld [vmem:[#allocation2 + $0x820] sm:$0xff]
        %v3748 = vld [vmem:[#allocation2 + $0x828] sm:$0xff]
        %v3749 = vld [vmem:[#allocation2 + $0x830] sm:$0xff]
        %v3750 = vld [vmem:[#allocation2 + $0x838] sm:$0xff]
        %v3751 = vld [vmem:[#allocation2 + $0x840] sm:$0xff]
        %v3752 = vld [vmem:[#allocation2 + $0x848] sm:$0xff]
        %v3753 = vld [vmem:[#allocation2 + $0x850] sm:$0xff]
        %v3754 = vld [vmem:[#allocation2 + $0x858] sm:$0xff]
        %v3755 = vld [vmem:[#allocation2 + $0x860] sm:$0xff]
        %v3756 = vld [vmem:[#allocation2 + $0x868] sm:$0xff]
        %v3757 = vld [vmem:[#allocation2 + $0x870] sm:$0xff]
        %v3758 = vld [vmem:[#allocation2 + $0x878] sm:$0xff]
        %v3759 = vld [vmem:[#allocation2 + $0x880] sm:$0xff]
        %v3760 = vld [vmem:[#allocation2 + $0x888] sm:$0xff]
        %v3761 = vld [vmem:[#allocation2 + $0x890] sm:$0xff]
        %v3762 = vld [vmem:[#allocation2 + $0x898] sm:$0xff]
        %v3763 = vld [vmem:[#allocation2 + $0x8a0] sm:$0xff]
        %v3764 = vld [vmem:[#allocation2 + $0x8a8] sm:$0xff]
        %v3765 = vld [vmem:[#allocation2 + $0x8b0] sm:$0xff]
        %v3766 = vld [vmem:[#allocation2 + $0x8b8] sm:$0xff]
        %v3767 = vld [vmem:[#allocation2 + $0x8c0] sm:$0xff]
        %v3768 = vld [vmem:[#allocation2 + $0x8c8] sm:$0xff]
        %v3769 = vld [vmem:[#allocation2 + $0x8d0] sm:$0xff]
        %v3770 = vld [vmem:[#allocation2 + $0x8d8] sm:$0xff]
        %v3771 = vld [vmem:[#allocation2 + $0x8e0] sm:$0xff]
        %v3772 = vld [vmem:[#allocation2 + $0x8e8] sm:$0xff]
        %v3773 = vld [vmem:[#allocation2 + $0x8f0] sm:$0xff]
        %v3774 = vld [vmem:[#allocation2 + $0x8f8] sm:$0xff]
        %v3775 = vld [vmem:[#allocation2 + $0x900] sm:$0xff]
        %v3776 = vld [vmem:[#allocation2 + $0x908] sm:$0xff]
        %v3777 = vld [vmem:[#allocation2 + $0x910] sm:$0xff]
        %v3778 = vld [vmem:[#allocation2 + $0x918] sm:$0xff]
        %v3779 = vld [vmem:[#allocation2 + $0x920] sm:$0xff]
        %v3780 = vld [vmem:[#allocation2 + $0x928] sm:$0xff]
        %v3781 = vld [vmem:[#allocation2 + $0x930] sm:$0xff]
        %v3782 = vld [vmem:[#allocation2 + $0x938] sm:$0xff]
        %v3783 = vld [vmem:[#allocation2 + $0x940] sm:$0xff]
        %v3784 = vld [vmem:[#allocation2 + $0x948] sm:$0xff]
        %v3785 = vld [vmem:[#allocation2 + $0x950] sm:$0xff]
        %v3786 = vld [vmem:[#allocation2 + $0x958] sm:$0xff]
        %v3787 = vld [vmem:[#allocation2 + $0x960] sm:$0xff]
        %v3788 = vld [vmem:[#allocation2 + $0x968] sm:$0xff]
        %v3789 = vld [vmem:[#allocation2 + $0x970] sm:$0xff]
        %v3790 = vld [vmem:[#allocation2 + $0x978] sm:$0xff]
        %v3791 = vld [vmem:[#allocation2 + $0x980] sm:$0xff]
        %v3792 = vld [vmem:[#allocation2 + $0x988] sm:$0xff]
        %v3793 = vld [vmem:[#allocation2 + $0x990] sm:$0xff]
        %v3794 = vld [vmem:[#allocation2 + $0x998] sm:$0xff]
        %v3795 = vld [vmem:[#allocation2 + $0x9a0] sm:$0xff]
        %v3796 = vld [vmem:[#allocation2 + $0x9a8] sm:$0xff]
        %v3797 = vld [vmem:[#allocation2 + $0x9b0] sm:$0xff]
        %v3798 = vld [vmem:[#allocation2 + $0x9b8] sm:$0xff]
        %v3799 = vld [vmem:[#allocation2 + $0x9c0] sm:$0xff]
        %v3800 = vld [vmem:[#allocation2 + $0x9c8] sm:$0xff]
        %v3801 = vld [vmem:[#allocation2 + $0x9d0] sm:$0xff]
        %v3802 = vld [vmem:[#allocation2 + $0x9d8] sm:$0xff]
        %v3803 = vld [vmem:[#allocation2 + $0x9e0] sm:$0xff]
        %v3804 = vld [vmem:[#allocation2 + $0x9e8] sm:$0xff]
        %v3805 = vld [vmem:[#allocation2 + $0x9f0] sm:$0xff]
        %v3806 = vld [vmem:[#allocation2 + $0x9f8] sm:$0xff]
        %v3807 = vld [vmem:[#allocation2 + $0xa00] sm:$0xff]
        %v3808 = vld [vmem:[#allocation2 + $0xa08] sm:$0xff]
        %v3809 = vld [vmem:[#allocation2 + $0xa10] sm:$0xff]
        %v3810 = vld [vmem:[#allocation2 + $0xa18] sm:$0xff]
        %v3811 = vld [vmem:[#allocation2 + $0xa20] sm:$0xff]
        %v3812 = vld [vmem:[#allocation2 + $0xa28] sm:$0xff]
        %v3813 = vld [vmem:[#allocation2 + $0xa30] sm:$0xff]
        %v3814 = vld [vmem:[#allocation2 + $0xa38] sm:$0xff]
        %v3815 = vld [vmem:[#allocation2 + $0xa40] sm:$0xff]
        %v3816 = vld [vmem:[#allocation2 + $0xa48] sm:$0xff]
        %v3817 = vld [vmem:[#allocation2 + $0xa50] sm:$0xff]
        %v3818 = vld [vmem:[#allocation2 + $0xa58] sm:$0xff]
        %v3819 = vld [vmem:[#allocation2 + $0xa60] sm:$0xff]
        %v3820 = vld [vmem:[#allocation2 + $0xa68] sm:$0xff]
        %v3821 = vld [vmem:[#allocation2 + $0xa70] sm:$0xff]
        %v3822 = vld [vmem:[#allocation2 + $0xa78] sm:$0xff]
        %v3823 = vld [vmem:[#allocation2 + $0xa80] sm:$0xff]
        %v3824 = vld [vmem:[#allocation2 + $0xa88] sm:$0xff]
        %v3825 = vld [vmem:[#allocation2 + $0xa90] sm:$0xff]
        %v3826 = vld [vmem:[#allocation2 + $0xa98] sm:$0xff]
        %v3827 = vld [vmem:[#allocation2 + $0xaa0] sm:$0xff]
        %v3828 = vld [vmem:[#allocation2 + $0xaa8] sm:$0xff]
        %v3829 = vld [vmem:[#allocation2 + $0xab0] sm:$0xff]
        %v3830 = vld [vmem:[#allocation2 + $0xab8] sm:$0xff]
        %v3831 = vld [vmem:[#allocation2 + $0xac0] sm:$0x33]
        %v3832 = vld [vmem:[#allocation2 + $0xac8] sm:$0x33]
        %v3833 = vld [vmem:[%s4] sm:$0xff]
        %v3834 = vld [vmem:[%s4 + $0x8] sm:$0x3]
        %3836 = vset.pattern.permute.xlu0 0
        %3837 = vperm.xlu0 %3836, %v3833
        %v3838 = vpop.permute.xlu0 %3837
        %3841 = vset.pattern.permute.xlu0 0
        %3842 = vperm.xlu0 %3841, %v3834
        %v3843 = vpop.permute.xlu0 %3842
        %v3857 = vunpack.c.l.b16 %v3475
        %v3858 = vunpack.c.h.b16 %v3475
        %v3859 = vunpack.c.l.b16 %v3476
        %v3860 = vunpack.c.h.b16 %v3476
        %v3861 = vunpack.c.l.b16 %v3477
        %v3862 = vunpack.c.h.b16 %v3477
        %v3863 = vunpack.c.l.b16 %v3478
        %v3864 = vunpack.c.h.b16 %v3478
        %v3865 = vunpack.c.l.b16 %v3479
        %v3866 = vunpack.c.h.b16 %v3479
        %v3867 = vunpack.c.l.b16 %v3480
        %v3868 = vunpack.c.l.b16 %v3481
        %v3869 = vunpack.c.h.b16 %v3481
        %v3870 = vunpack.c.l.b16 %v3482
        %v3871 = vunpack.c.h.b16 %v3482
        %v3872 = vunpack.c.l.b16 %v3483
        %v3873 = vunpack.c.h.b16 %v3483
        %v3874 = vunpack.c.l.b16 %v3484
        %v3875 = vunpack.c.h.b16 %v3484
        %v3876 = vunpack.c.l.b16 %v3485
        %v3877 = vunpack.c.h.b16 %v3485
        %v3878 = vunpack.c.l.b16 %v3486
        %v3879 = vpack.c.b16 %v3868, %v3857
        %v3880 = vpack.c.b16 %v3869, %v3858
        %v3881 = vpack.c.b16 %v3870, %v3859
        %v3882 = vpack.c.b16 %v3871, %v3860
        %v3883 = vpack.c.b16 %v3872, %v3861
        %v3884 = vpack.c.b16 %v3873, %v3862
        %v3885 = vpack.c.b16 %v3874, %v3863
        %v3886 = vpack.c.b16 %v3875, %v3864
        %v3887 = vpack.c.b16 %v3876, %v3865
        %v3888 = vpack.c.b16 %v3877, %v3866
        %v3889 = vpack.c.b16 %v3878, %v3867
        %v4246 = vunpack.c.l.b16 %v3487
        %v4247 = vunpack.c.h.b16 %v3487
        %v4248 = vunpack.c.l.b16 %v3488
        %v4249 = vunpack.c.h.b16 %v3488
        %v4250 = vunpack.c.l.b16 %v3489
        %v4251 = vunpack.c.h.b16 %v3489
        %v4252 = vunpack.c.l.b16 %v3490
        %v4253 = vunpack.c.h.b16 %v3490
        %v4254 = vunpack.c.l.b16 %v3491
        %v4255 = vunpack.c.h.b16 %v3491
        %v4256 = vunpack.c.l.b16 %v3492
        %v4257 = vunpack.c.h.b16 %v3492
        %v4258 = vunpack.c.l.b16 %v3493
        %v4259 = vunpack.c.h.b16 %v3493
        %v4260 = vunpack.c.l.b16 %v3494
        %v4261 = vunpack.c.h.b16 %v3494
        %v4262 = vunpack.c.l.b16 %v3495
        %v4263 = vunpack.c.h.b16 %v3495
        %v4264 = vunpack.c.l.b16 %v3496
        %v4265 = vunpack.c.h.b16 %v3496
        %v4266 = vunpack.c.l.b16 %v3497
        %v4267 = vunpack.c.h.b16 %v3497
        %v4268 = vunpack.c.l.b16 %v3498
        %v4269 = vunpack.c.h.b16 %v3498
        %v4270 = vunpack.c.l.b16 %v3499
        %v4271 = vunpack.c.h.b16 %v3499
        %v4272 = vunpack.c.l.b16 %v3500
        %v4273 = vunpack.c.h.b16 %v3500
        %v4274 = vunpack.c.l.b16 %v3501
        %v4275 = vunpack.c.h.b16 %v3501
        %v4276 = vunpack.c.l.b16 %v3502
        %v4277 = vunpack.c.h.b16 %v3502
        %v4278 = vunpack.c.l.b16 %v3503
        %v4279 = vunpack.c.h.b16 %v3503
        %v4280 = vunpack.c.l.b16 %v3504
        %v4281 = vunpack.c.h.b16 %v3504
        %v4282 = vunpack.c.l.b16 %v3505
        %v4283 = vunpack.c.h.b16 %v3505
        %v4284 = vunpack.c.l.b16 %v3506
        %v4285 = vunpack.c.h.b16 %v3506
        %v4286 = vunpack.c.l.b16 %v3507
        %v4287 = vunpack.c.h.b16 %v3507
        %v4288 = vunpack.c.l.b16 %v3508
        %v4289 = vunpack.c.h.b16 %v3508
        %v4290 = vunpack.c.l.b16 %v3509
        %v4291 = vunpack.c.h.b16 %v3509
        %v4292 = vunpack.c.l.b16 %v3510
        %v4293 = vunpack.c.h.b16 %v3510
        %v4294 = vunpack.c.l.b16 %v3511
        %v4295 = vunpack.c.h.b16 %v3511
        %v4296 = vunpack.c.l.b16 %v3512
        %v4297 = vunpack.c.h.b16 %v3512
        %v4298 = vunpack.c.l.b16 %v3513
        %v4299 = vunpack.c.h.b16 %v3513
        %v4300 = vunpack.c.l.b16 %v3514
        %v4301 = vunpack.c.h.b16 %v3514
        %v4302 = vunpack.c.l.b16 %v3515
        %v4303 = vunpack.c.h.b16 %v3515
        %v4304 = vunpack.c.l.b16 %v3516
        %v4305 = vunpack.c.h.b16 %v3516
        %v4306 = vunpack.c.l.b16 %v3517
        %v4307 = vunpack.c.h.b16 %v3517
        %v4308 = vunpack.c.l.b16 %v3518
        %v4309 = vunpack.c.h.b16 %v3518
        %v4310 = vunpack.c.l.b16 %v3519
        %v4311 = vunpack.c.h.b16 %v3519
        %v4312 = vunpack.c.l.b16 %v3520
        %v4313 = vunpack.c.h.b16 %v3520
        %v4314 = vunpack.c.l.b16 %v3521
        %v4315 = vunpack.c.h.b16 %v3521
        %v4316 = vunpack.c.l.b16 %v3522
        %v4317 = vunpack.c.h.b16 %v3522
        %v4318 = vunpack.c.l.b16 %v3523
        %v4319 = vunpack.c.h.b16 %v3523
        %v4320 = vunpack.c.l.b16 %v3524
        %v4321 = vunpack.c.h.b16 %v3524
        %v4322 = vunpack.c.l.b16 %v3525
        %v4323 = vunpack.c.h.b16 %v3525
        %v4324 = vunpack.c.l.b16 %v3526
        %v4325 = vunpack.c.h.b16 %v3526
        %v4326 = vunpack.c.l.b16 %v3527
        %v4327 = vunpack.c.h.b16 %v3527
        %v4328 = vunpack.c.l.b16 %v3528
        %v4329 = vunpack.c.h.b16 %v3528
        %v4330 = vunpack.c.l.b16 %v3529
        %v4331 = vunpack.c.h.b16 %v3529
        %v4332 = vunpack.c.l.b16 %v3530
        %v4333 = vunpack.c.h.b16 %v3530
        %v4334 = vunpack.c.l.b16 %v3531
        %v4335 = vunpack.c.h.b16 %v3531
        %v4336 = vunpack.c.l.b16 %v3532
        %v4337 = vunpack.c.h.b16 %v3532
        %v4338 = vunpack.c.l.b16 %v3533
        %v4339 = vunpack.c.h.b16 %v3533
        %v4340 = vunpack.c.l.b16 %v3534
        %v4341 = vunpack.c.h.b16 %v3534
        %v4342 = vunpack.c.l.b16 %v3535
        %v4343 = vunpack.c.h.b16 %v3535
        %v4344 = vunpack.c.l.b16 %v3536
        %v4345 = vunpack.c.h.b16 %v3536
        %v4346 = vunpack.c.l.b16 %v3537
        %v4347 = vunpack.c.h.b16 %v3537
        %v4348 = vunpack.c.l.b16 %v3538
        %v4349 = vunpack.c.h.b16 %v3538
        %v4350 = vunpack.c.l.b16 %v3539
        %v4351 = vunpack.c.h.b16 %v3539
        %v4352 = vunpack.c.l.b16 %v3540
        %v4353 = vunpack.c.h.b16 %v3540
        %v4354 = vunpack.c.l.b16 %v3541
        %v4355 = vunpack.c.h.b16 %v3541
        %v4356 = vunpack.c.l.b16 %v3542
        %v4357 = vunpack.c.h.b16 %v3542
        %v4358 = vunpack.c.l.b16 %v3543
        %v4359 = vunpack.c.h.b16 %v3543
        %v4360 = vunpack.c.l.b16 %v3544
        %v4361 = vunpack.c.h.b16 %v3544
        %v4362 = vunpack.c.l.b16 %v3545
        %v4363 = vunpack.c.h.b16 %v3545
        %v4364 = vunpack.c.l.b16 %v3546
        %v4365 = vunpack.c.h.b16 %v3546
        %v4366 = vunpack.c.l.b16 %v3547
        %v4367 = vunpack.c.h.b16 %v3547
        %v4368 = vunpack.c.l.b16 %v3548
        %v4369 = vunpack.c.h.b16 %v3548
        %v4370 = vunpack.c.l.b16 %v3549
        %v4371 = vunpack.c.h.b16 %v3549
        %v4372 = vunpack.c.l.b16 %v3550
        %v4373 = vunpack.c.h.b16 %v3550
        %v4374 = vunpack.c.l.b16 %v3551
        %v4375 = vunpack.c.h.b16 %v3551
        %v4376 = vunpack.c.l.b16 %v3552
        %v4377 = vunpack.c.h.b16 %v3552
        %v4378 = vunpack.c.l.b16 %v3553
        %v4379 = vunpack.c.h.b16 %v3553
        %v4380 = vunpack.c.l.b16 %v3554
        %v4381 = vunpack.c.h.b16 %v3554
        %v4382 = vunpack.c.l.b16 %v3555
        %v4383 = vunpack.c.h.b16 %v3555
        %v4384 = vunpack.c.l.b16 %v3556
        %v4385 = vunpack.c.h.b16 %v3556
        %v4386 = vunpack.c.l.b16 %v3557
        %v4387 = vunpack.c.h.b16 %v3557
        %v4388 = vunpack.c.l.b16 %v3558
        %v4389 = vunpack.c.h.b16 %v3558
        %v4390 = vunpack.c.l.b16 %v3559
        %v4391 = vunpack.c.h.b16 %v3559
        %v4392 = vunpack.c.l.b16 %v3560
        %v4393 = vunpack.c.h.b16 %v3560
        %v4394 = vunpack.c.l.b16 %v3561
        %v4395 = vunpack.c.h.b16 %v3561
        %v4396 = vunpack.c.l.b16 %v3562
        %v4397 = vunpack.c.h.b16 %v3562
        %v4398 = vunpack.c.l.b16 %v3563
        %v4399 = vunpack.c.h.b16 %v3563
        %v4400 = vunpack.c.l.b16 %v3564
        %v4401 = vunpack.c.h.b16 %v3564
        %v4402 = vunpack.c.l.b16 %v3565
        %v4403 = vunpack.c.h.b16 %v3565
        %v4404 = vunpack.c.l.b16 %v3566
        %v4405 = vunpack.c.h.b16 %v3566
        %v4406 = vunpack.c.l.b16 %v3567
        %v4407 = vunpack.c.h.b16 %v3567
        %v4408 = vunpack.c.l.b16 %v3568
        %v4409 = vunpack.c.h.b16 %v3568
        %v4410 = vunpack.c.l.b16 %v3569
        %v4411 = vunpack.c.h.b16 %v3569
        %v4412 = vunpack.c.l.b16 %v3570
        %v4413 = vunpack.c.h.b16 %v3570
        %v4414 = vunpack.c.l.b16 %v3571
        %v4415 = vunpack.c.h.b16 %v3571
        %v4416 = vunpack.c.l.b16 %v3572
        %v4417 = vunpack.c.h.b16 %v3572
        %v4418 = vunpack.c.l.b16 %v3573
        %v4419 = vunpack.c.h.b16 %v3573
        %v4420 = vunpack.c.l.b16 %v3574
        %v4421 = vunpack.c.h.b16 %v3574
        %v4422 = vunpack.c.l.b16 %v3575
        %v4423 = vunpack.c.h.b16 %v3575
        %v4424 = vunpack.c.l.b16 %v3576
        %v4425 = vunpack.c.h.b16 %v3576
        %v4426 = vunpack.c.l.b16 %v3577
        %v4427 = vunpack.c.h.b16 %v3577
        %v4428 = vunpack.c.l.b16 %v3578
        %v4429 = vunpack.c.h.b16 %v3578
        %v4430 = vunpack.c.l.b16 %v3579
        %v4431 = vunpack.c.h.b16 %v3579
        %v4432 = vunpack.c.l.b16 %v3580
        %v4433 = vunpack.c.h.b16 %v3580
        %v4434 = vunpack.c.l.b16 %v3581
        %v4435 = vunpack.c.h.b16 %v3581
        %v4436 = vunpack.c.l.b16 %v3582
        %v4437 = vunpack.c.h.b16 %v3582
        %v4438 = vunpack.c.l.b16 %v3583
        %v4439 = vunpack.c.h.b16 %v3583
        %v4440 = vunpack.c.l.b16 %v3584
        %v4441 = vunpack.c.h.b16 %v3584
        %v4442 = vunpack.c.l.b16 %v3585
        %v4443 = vunpack.c.h.b16 %v3585
        %v4444 = vunpack.c.l.b16 %v3586
        %v4445 = vunpack.c.h.b16 %v3586
        %v4446 = vunpack.c.l.b16 %v3587
        %v4447 = vunpack.c.h.b16 %v3587
        %v4448 = vunpack.c.l.b16 %v3588
        %v4449 = vunpack.c.h.b16 %v3588
        %v4450 = vunpack.c.l.b16 %v3589
        %v4451 = vunpack.c.h.b16 %v3589
        %v4452 = vunpack.c.l.b16 %v3590
        %v4453 = vunpack.c.h.b16 %v3590
        %v4454 = vunpack.c.l.b16 %v3591
        %v4455 = vunpack.c.h.b16 %v3591
        %v4456 = vunpack.c.l.b16 %v3592
        %v4457 = vunpack.c.h.b16 %v3592
        %v4458 = vunpack.c.l.b16 %v3593
        %v4459 = vunpack.c.h.b16 %v3593
        %v4460 = vunpack.c.l.b16 %v3594
        %v4461 = vunpack.c.h.b16 %v3594
        %v4462 = vunpack.c.l.b16 %v3595
        %v4463 = vunpack.c.h.b16 %v3595
        %v4464 = vunpack.c.l.b16 %v3596
        %v4465 = vunpack.c.h.b16 %v3596
        %v4466 = vunpack.c.l.b16 %v3597
        %v4467 = vunpack.c.h.b16 %v3597
        %v4468 = vunpack.c.l.b16 %v3598
        %v4469 = vunpack.c.h.b16 %v3598
        %v4470 = vunpack.c.l.b16 %v3599
        %v4471 = vunpack.c.h.b16 %v3599
        %v4472 = vunpack.c.l.b16 %v3600
        %v4473 = vunpack.c.h.b16 %v3600
        %v4474 = vunpack.c.l.b16 %v3601
        %v4475 = vunpack.c.h.b16 %v3601
        %v4476 = vunpack.c.l.b16 %v3602
        %v4477 = vunpack.c.h.b16 %v3602
        %v4478 = vunpack.c.l.b16 %v3603
        %v4479 = vunpack.c.h.b16 %v3603
        %v4480 = vunpack.c.l.b16 %v3604
        %v4481 = vunpack.c.h.b16 %v3604
        %v4482 = vunpack.c.l.b16 %v3605
        %v4483 = vunpack.c.h.b16 %v3605
        %v4484 = vunpack.c.l.b16 %v3606
        %v4485 = vunpack.c.h.b16 %v3606
        %v4486 = vunpack.c.l.b16 %v3607
        %v4487 = vunpack.c.h.b16 %v3607
        %v4488 = vunpack.c.l.b16 %v3608
        %v4489 = vunpack.c.h.b16 %v3608
        %v4490 = vunpack.c.l.b16 %v3609
        %v4491 = vunpack.c.h.b16 %v3609
        %v4492 = vunpack.c.l.b16 %v3610
        %v4493 = vunpack.c.h.b16 %v3610
        %v4494 = vunpack.c.l.b16 %v3611
        %v4495 = vunpack.c.h.b16 %v3611
        %v4496 = vunpack.c.l.b16 %v3612
        %v4497 = vunpack.c.h.b16 %v3612
        %v4498 = vunpack.c.l.b16 %v3613
        %v4499 = vunpack.c.h.b16 %v3613
        %v4500 = vunpack.c.l.b16 %v3614
        %v4501 = vunpack.c.h.b16 %v3614
        %v4502 = vunpack.c.l.b16 %v3615
        %v4503 = vunpack.c.h.b16 %v3615
        %v4504 = vunpack.c.l.b16 %v3616
        %v4505 = vunpack.c.h.b16 %v3616
        %v4506 = vunpack.c.l.b16 %v3617
        %v4507 = vunpack.c.h.b16 %v3617
        %v4508 = vunpack.c.l.b16 %v3618
        %v4509 = vunpack.c.h.b16 %v3618
        %v4510 = vunpack.c.l.b16 %v3619
        %v4511 = vunpack.c.h.b16 %v3619
        %v4512 = vunpack.c.l.b16 %v3620
        %v4513 = vunpack.c.h.b16 %v3620
        %v4514 = vunpack.c.l.b16 %v3621
        %v4515 = vunpack.c.h.b16 %v3621
        %v4516 = vunpack.c.l.b16 %v3622
        %v4517 = vunpack.c.h.b16 %v3622
        %v4518 = vunpack.c.l.b16 %v3623
        %v4519 = vunpack.c.h.b16 %v3623
        %v4520 = vunpack.c.l.b16 %v3624
        %v4521 = vunpack.c.h.b16 %v3624
        %v4522 = vunpack.c.l.b16 %v3625
        %v4523 = vunpack.c.h.b16 %v3625
        %v4524 = vunpack.c.l.b16 %v3626
        %v4525 = vunpack.c.h.b16 %v3626
        %v4526 = vunpack.c.l.b16 %v3627
        %v4527 = vunpack.c.h.b16 %v3627
        %v4528 = vunpack.c.l.b16 %v3628
        %v4529 = vunpack.c.h.b16 %v3628
        %v4530 = vunpack.c.l.b16 %v3629
        %v4531 = vunpack.c.h.b16 %v3629
        %v4532 = vunpack.c.l.b16 %v3630
        %v4533 = vunpack.c.h.b16 %v3630
        %v4534 = vunpack.c.l.b16 %v3631
        %v4535 = vunpack.c.h.b16 %v3631
        %v4536 = vunpack.c.l.b16 %v3632
        %v4537 = vunpack.c.h.b16 %v3632
        %v4538 = vunpack.c.l.b16 %v3633
        %v4539 = vunpack.c.h.b16 %v3633
        %v4540 = vunpack.c.l.b16 %v3634
        %v4541 = vunpack.c.h.b16 %v3634
        %v4542 = vunpack.c.l.b16 %v3635
        %v4543 = vunpack.c.h.b16 %v3635
        %v4544 = vunpack.c.l.b16 %v3636
        %v4545 = vunpack.c.h.b16 %v3636
        %v4546 = vunpack.c.l.b16 %v3637
        %v4547 = vunpack.c.h.b16 %v3637
        %v4548 = vunpack.c.l.b16 %v3638
        %v4549 = vunpack.c.h.b16 %v3638
        %v4550 = vunpack.c.l.b16 %v3639
        %v4551 = vunpack.c.h.b16 %v3639
        %v4552 = vunpack.c.l.b16 %v3640
        %v4553 = vunpack.c.h.b16 %v3640
        %v4554 = vunpack.c.l.b16 %v3641
        %v4555 = vunpack.c.h.b16 %v3641
        %v4556 = vunpack.c.l.b16 %v3642
        %v4557 = vunpack.c.h.b16 %v3642
        %v4558 = vunpack.c.l.b16 %v3643
        %v4559 = vunpack.c.h.b16 %v3643
        %v4560 = vunpack.c.l.b16 %v3644
        %v4561 = vunpack.c.h.b16 %v3644
        %v4562 = vunpack.c.l.b16 %v3645
        %v4563 = vunpack.c.h.b16 %v3645
        %v4564 = vunpack.c.l.b16 %v3646
        %v4565 = vunpack.c.h.b16 %v3646
        %v4566 = vunpack.c.l.b16 %v3647
        %v4567 = vunpack.c.h.b16 %v3647
        %v4568 = vunpack.c.l.b16 %v3648
        %v4569 = vunpack.c.h.b16 %v3648
        %v4570 = vunpack.c.l.b16 %v3649
        %v4571 = vunpack.c.h.b16 %v3649
        %v4572 = vunpack.c.l.b16 %v3650
        %v4573 = vunpack.c.h.b16 %v3650
        %v4574 = vunpack.c.l.b16 %v3651
        %v4575 = vunpack.c.h.b16 %v3651
        %v4576 = vunpack.c.l.b16 %v3652
        %v4577 = vunpack.c.h.b16 %v3652
        %v4578 = vunpack.c.l.b16 %v3653
        %v4579 = vunpack.c.h.b16 %v3653
        %v4580 = vunpack.c.l.b16 %v3654
        %v4581 = vunpack.c.h.b16 %v3654
        %v4582 = vunpack.c.l.b16 %v3655
        %v4583 = vunpack.c.h.b16 %v3655
        %v4584 = vunpack.c.l.b16 %v3656
        %v4585 = vunpack.c.h.b16 %v3656
        %v4586 = vunpack.c.l.b16 %v3657
        %v4587 = vunpack.c.h.b16 %v3657
        %v4588 = vunpack.c.l.b16 %v3658
        %v4589 = vunpack.c.h.b16 %v3658
        %v4590 = vunpack.c.l.b16 %v3659
        %v4591 = vunpack.c.h.b16 %v3659
        %v4592 = vunpack.c.l.b16 %v3660
        %v4593 = vunpack.c.h.b16 %v3660
        %v4594 = vunpack.c.l.b16 %v3661
        %v4595 = vunpack.c.h.b16 %v3661
        %v4596 = vunpack.c.l.b16 %v3662
        %v4597 = vunpack.c.h.b16 %v3662
        %v4598 = vunpack.c.l.b16 %v3663
        %v4599 = vunpack.c.h.b16 %v3663
        %v4600 = vunpack.c.l.b16 %v3664
        %v4601 = vunpack.c.h.b16 %v3664
        %v4602 = vunpack.c.l.b16 %v3665
        %v4603 = vunpack.c.h.b16 %v3665
        %v4604 = vunpack.c.l.b16 %v3666
        %v4605 = vunpack.c.h.b16 %v3666
        %v4606 = vunpack.c.l.b16 %v3667
        %v4607 = vunpack.c.h.b16 %v3667
        %v4608 = vunpack.c.l.b16 %v3668
        %v4609 = vunpack.c.h.b16 %v3668
        %v4610 = vunpack.c.l.b16 %v3669
        %v4611 = vunpack.c.h.b16 %v3669
        %v4612 = vunpack.c.l.b16 %v3670
        %v4613 = vunpack.c.h.b16 %v3670
        %v4614 = vunpack.c.l.b16 %v3671
        %v4615 = vunpack.c.h.b16 %v3671
        %v4616 = vunpack.c.l.b16 %v3672
        %v4617 = vunpack.c.h.b16 %v3672
        %v4618 = vunpack.c.l.b16 %v3673
        %v4619 = vunpack.c.h.b16 %v3673
        %v4620 = vunpack.c.l.b16 %v3674
        %v4621 = vunpack.c.h.b16 %v3674
        %v4622 = vunpack.c.l.b16 %v3675
        %v4623 = vunpack.c.h.b16 %v3675
        %v4624 = vunpack.c.l.b16 %v3676
        %v4625 = vunpack.c.h.b16 %v3676
        %v4626 = vunpack.c.l.b16 %v3677
        %v4627 = vunpack.c.h.b16 %v3677
        %v4628 = vunpack.c.l.b16 %v3678
        %v4629 = vunpack.c.h.b16 %v3678
        %v4630 = vunpack.c.l.b16 %v3679
        %v4631 = vunpack.c.h.b16 %v3679
        %v4632 = vunpack.c.l.b16 %v3680
        %v4633 = vunpack.c.h.b16 %v3680
        %v4634 = vunpack.c.l.b16 %v3681
        %v4635 = vunpack.c.h.b16 %v3681
        %v4636 = vunpack.c.l.b16 %v3682
        %v4637 = vunpack.c.h.b16 %v3682
        %v4638 = vunpack.c.l.b16 %v3683
        %v4639 = vunpack.c.h.b16 %v3683
        %v4640 = vunpack.c.l.b16 %v3684
        %v4641 = vunpack.c.h.b16 %v3684
        %v4642 = vunpack.c.l.b16 %v3685
        %v4643 = vunpack.c.h.b16 %v3685
        %v4644 = vunpack.c.l.b16 %v3686
        %v4645 = vunpack.c.h.b16 %v3686
        %v4646 = vunpack.c.l.b16 %v3687
        %v4647 = vunpack.c.h.b16 %v3687
        %v4648 = vunpack.c.l.b16 %v3688
        %v4649 = vunpack.c.h.b16 %v3688
        %v4650 = vunpack.c.l.b16 %v3689
        %v4651 = vunpack.c.h.b16 %v3689
        %v4652 = vunpack.c.l.b16 %v3690
        %v4653 = vunpack.c.h.b16 %v3690
        %v4654 = vunpack.c.l.b16 %v3691
        %v4655 = vunpack.c.h.b16 %v3691
        %v4656 = vunpack.c.l.b16 %v3692
        %v4657 = vunpack.c.h.b16 %v3692
        %v4658 = vunpack.c.l.b16 %v3693
        %v4659 = vunpack.c.h.b16 %v3693
        %v4660 = vunpack.c.l.b16 %v3694
        %v4661 = vunpack.c.h.b16 %v3694
        %v4662 = vunpack.c.l.b16 %v3695
        %v4663 = vunpack.c.h.b16 %v3695
        %v4664 = vunpack.c.l.b16 %v3696
        %v4665 = vunpack.c.h.b16 %v3696
        %v4666 = vunpack.c.l.b16 %v3697
        %v4667 = vunpack.c.h.b16 %v3697
        %v4668 = vunpack.c.l.b16 %v3698
        %v4669 = vunpack.c.h.b16 %v3698
        %v4670 = vunpack.c.l.b16 %v3699
        %v4671 = vunpack.c.h.b16 %v3699
        %v4672 = vunpack.c.l.b16 %v3700
        %v4673 = vunpack.c.h.b16 %v3700
        %v4674 = vunpack.c.l.b16 %v3701
        %v4675 = vunpack.c.h.b16 %v3701
        %v4676 = vunpack.c.l.b16 %v3702
        %v4677 = vunpack.c.h.b16 %v3702
        %v4678 = vunpack.c.l.b16 %v3703
        %v4679 = vunpack.c.h.b16 %v3703
        %v4680 = vunpack.c.l.b16 %v3704
        %v4681 = vunpack.c.h.b16 %v3704
        %v4682 = vunpack.c.l.b16 %v3705
        %v4683 = vunpack.c.h.b16 %v3705
        %v4684 = vunpack.c.l.b16 %v3706
        %v4685 = vunpack.c.h.b16 %v3706
        %v4686 = vunpack.c.l.b16 %v3707
        %v4687 = vunpack.c.h.b16 %v3707
        %v4688 = vunpack.c.l.b16 %v3708
        %v4689 = vunpack.c.h.b16 %v3708
        %v4690 = vunpack.c.l.b16 %v3709
        %v4691 = vunpack.c.h.b16 %v3709
        %v4692 = vunpack.c.l.b16 %v3710
        %v4693 = vunpack.c.h.b16 %v3710
        %v4694 = vunpack.c.l.b16 %v3711
        %v4695 = vunpack.c.h.b16 %v3711
        %v4696 = vunpack.c.l.b16 %v3712
        %v4697 = vunpack.c.h.b16 %v3712
        %v4698 = vunpack.c.l.b16 %v3713
        %v4699 = vunpack.c.h.b16 %v3713
        %v4700 = vunpack.c.l.b16 %v3714
        %v4701 = vunpack.c.h.b16 %v3714
        %v4702 = vunpack.c.l.b16 %v3715
        %v4703 = vunpack.c.h.b16 %v3715
        %v4704 = vunpack.c.l.b16 %v3716
        %v4705 = vunpack.c.h.b16 %v3716
        %v4706 = vunpack.c.l.b16 %v3717
        %v4707 = vunpack.c.h.b16 %v3717
        %v4708 = vunpack.c.l.b16 %v3718
        %v4709 = vunpack.c.h.b16 %v3718
        %v4710 = vunpack.c.l.b16 %v3719
        %v4711 = vunpack.c.h.b16 %v3719
        %v4712 = vunpack.c.l.b16 %v3720
        %v4713 = vunpack.c.h.b16 %v3720
        %v4714 = vunpack.c.l.b16 %v3721
        %v4715 = vunpack.c.h.b16 %v3721
        %v4716 = vunpack.c.l.b16 %v3722
        %v4717 = vunpack.c.h.b16 %v3722
        %v4718 = vunpack.c.l.b16 %v3723
        %v4719 = vunpack.c.h.b16 %v3723
        %v4720 = vunpack.c.l.b16 %v3724
        %v4721 = vunpack.c.h.b16 %v3724
        %v4722 = vunpack.c.l.b16 %v3725
        %v4723 = vunpack.c.h.b16 %v3725
        %v4724 = vunpack.c.l.b16 %v3726
        %v4725 = vunpack.c.h.b16 %v3726
        %v4726 = vunpack.c.l.b16 %v3727
        %v4727 = vunpack.c.h.b16 %v3727
        %v4728 = vunpack.c.l.b16 %v3728
        %v4729 = vunpack.c.h.b16 %v3728
        %v4730 = vunpack.c.l.b16 %v3729
        %v4731 = vunpack.c.h.b16 %v3729
        %v4732 = vunpack.c.l.b16 %v3730
        %v4733 = vunpack.c.h.b16 %v3730
        %v4734 = vunpack.c.l.b16 %v3731
        %v4735 = vunpack.c.h.b16 %v3731
        %v4736 = vunpack.c.l.b16 %v3732
        %v4737 = vunpack.c.h.b16 %v3732
        %v4738 = vunpack.c.l.b16 %v3733
        %v4739 = vunpack.c.h.b16 %v3733
        %v4740 = vunpack.c.l.b16 %v3734
        %v4741 = vunpack.c.h.b16 %v3734
        %v4742 = vunpack.c.l.b16 %v3735
        %v4743 = vunpack.c.h.b16 %v3735
        %v4744 = vunpack.c.l.b16 %v3736
        %v4745 = vunpack.c.h.b16 %v3736
        %v4746 = vunpack.c.l.b16 %v3737
        %v4747 = vunpack.c.h.b16 %v3737
        %v4748 = vunpack.c.l.b16 %v3738
        %v4749 = vunpack.c.h.b16 %v3738
        %v4750 = vunpack.c.l.b16 %v3739
        %v4751 = vunpack.c.h.b16 %v3739
        %v4752 = vunpack.c.l.b16 %v3740
        %v4753 = vunpack.c.h.b16 %v3740
        %v4754 = vunpack.c.l.b16 %v3741
        %v4755 = vunpack.c.h.b16 %v3741
        %v4756 = vunpack.c.l.b16 %v3742
        %v4757 = vunpack.c.h.b16 %v3742
        %v4758 = vunpack.c.l.b16 %v3743
        %v4759 = vunpack.c.h.b16 %v3743
        %v4760 = vunpack.c.l.b16 %v3744
        %v4761 = vunpack.c.h.b16 %v3744
        %v4762 = vunpack.c.l.b16 %v3745
        %v4763 = vunpack.c.h.b16 %v3745
        %v4764 = vunpack.c.l.b16 %v3746
        %v4765 = vunpack.c.h.b16 %v3746
        %v4766 = vunpack.c.l.b16 %v3747
        %v4767 = vunpack.c.h.b16 %v3747
        %v4768 = vunpack.c.l.b16 %v3748
        %v4769 = vunpack.c.h.b16 %v3748
        %v4770 = vunpack.c.l.b16 %v3749
        %v4771 = vunpack.c.h.b16 %v3749
        %v4772 = vunpack.c.l.b16 %v3750
        %v4773 = vunpack.c.h.b16 %v3750
        %v4774 = vunpack.c.l.b16 %v3751
        %v4775 = vunpack.c.h.b16 %v3751
        %v4776 = vunpack.c.l.b16 %v3752
        %v4777 = vunpack.c.h.b16 %v3752
        %v4778 = vunpack.c.l.b16 %v3753
        %v4779 = vunpack.c.h.b16 %v3753
        %v4780 = vunpack.c.l.b16 %v3754
        %v4781 = vunpack.c.h.b16 %v3754
        %v4782 = vunpack.c.l.b16 %v3755
        %v4783 = vunpack.c.h.b16 %v3755
        %v4784 = vunpack.c.l.b16 %v3756
        %v4785 = vunpack.c.h.b16 %v3756
        %v4786 = vunpack.c.l.b16 %v3757
        %v4787 = vunpack.c.h.b16 %v3757
        %v4788 = vunpack.c.l.b16 %v3758
        %v4789 = vunpack.c.h.b16 %v3758
        %v4790 = vunpack.c.l.b16 %v3759
        %v4791 = vunpack.c.h.b16 %v3759
        %v4792 = vunpack.c.l.b16 %v3760
        %v4793 = vunpack.c.h.b16 %v3760
        %v4794 = vunpack.c.l.b16 %v3761
        %v4795 = vunpack.c.h.b16 %v3761
        %v4796 = vunpack.c.l.b16 %v3762
        %v4797 = vunpack.c.h.b16 %v3762
        %v4798 = vunpack.c.l.b16 %v3763
        %v4799 = vunpack.c.h.b16 %v3763
        %v4800 = vunpack.c.l.b16 %v3764
        %v4801 = vunpack.c.h.b16 %v3764
        %v4802 = vunpack.c.l.b16 %v3765
        %v4803 = vunpack.c.h.b16 %v3765
        %v4804 = vunpack.c.l.b16 %v3766
        %v4805 = vunpack.c.h.b16 %v3766
        %v4806 = vunpack.c.l.b16 %v3767
        %v4807 = vunpack.c.h.b16 %v3767
        %v4808 = vunpack.c.l.b16 %v3768
        %v4809 = vunpack.c.h.b16 %v3768
        %v4810 = vunpack.c.l.b16 %v3769
        %v4811 = vunpack.c.h.b16 %v3769
        %v4812 = vunpack.c.l.b16 %v3770
        %v4813 = vunpack.c.h.b16 %v3770
        %v4814 = vunpack.c.l.b16 %v3771
        %v4815 = vunpack.c.h.b16 %v3771
        %v4816 = vunpack.c.l.b16 %v3772
        %v4817 = vunpack.c.h.b16 %v3772
        %v4818 = vunpack.c.l.b16 %v3773
        %v4819 = vunpack.c.h.b16 %v3773
        %v4820 = vunpack.c.l.b16 %v3774
        %v4821 = vunpack.c.h.b16 %v3774
        %v4822 = vunpack.c.l.b16 %v3775
        %v4823 = vunpack.c.h.b16 %v3775
        %v4824 = vunpack.c.l.b16 %v3776
        %v4825 = vunpack.c.h.b16 %v3776
        %v4826 = vunpack.c.l.b16 %v3777
        %v4827 = vunpack.c.h.b16 %v3777
        %v4828 = vunpack.c.l.b16 %v3778
        %v4829 = vunpack.c.h.b16 %v3778
        %v4830 = vunpack.c.l.b16 %v3779
        %v4831 = vunpack.c.h.b16 %v3779
        %v4832 = vunpack.c.l.b16 %v3780
        %v4833 = vunpack.c.h.b16 %v3780
        %v4834 = vunpack.c.l.b16 %v3781
        %v4835 = vunpack.c.h.b16 %v3781
        %v4836 = vunpack.c.l.b16 %v3782
        %v4837 = vunpack.c.h.b16 %v3782
        %v4838 = vunpack.c.l.b16 %v3783
        %v4839 = vunpack.c.h.b16 %v3783
        %v4840 = vunpack.c.l.b16 %v3784
        %v4841 = vunpack.c.h.b16 %v3784
        %v4842 = vunpack.c.l.b16 %v3785
        %v4843 = vunpack.c.h.b16 %v3785
        %v4844 = vunpack.c.l.b16 %v3786
        %v4845 = vunpack.c.h.b16 %v3786
        %v4846 = vunpack.c.l.b16 %v3787
        %v4847 = vunpack.c.h.b16 %v3787
        %v4848 = vunpack.c.l.b16 %v3788
        %v4849 = vunpack.c.h.b16 %v3788
        %v4850 = vunpack.c.l.b16 %v3789
        %v4851 = vunpack.c.h.b16 %v3789
        %v4852 = vunpack.c.l.b16 %v3790
        %v4853 = vunpack.c.h.b16 %v3790
        %v4854 = vunpack.c.l.b16 %v3791
        %v4855 = vunpack.c.h.b16 %v3791
        %v4856 = vunpack.c.l.b16 %v3792
        %v4857 = vunpack.c.h.b16 %v3792
        %v4858 = vunpack.c.l.b16 %v3793
        %v4859 = vunpack.c.h.b16 %v3793
        %v4860 = vunpack.c.l.b16 %v3794
        %v4861 = vunpack.c.h.b16 %v3794
        %v4862 = vunpack.c.l.b16 %v3795
        %v4863 = vunpack.c.h.b16 %v3795
        %v4864 = vunpack.c.l.b16 %v3796
        %v4865 = vunpack.c.h.b16 %v3796
        %v4866 = vunpack.c.l.b16 %v3797
        %v4867 = vunpack.c.h.b16 %v3797
        %v4868 = vunpack.c.l.b16 %v3798
        %v4869 = vunpack.c.h.b16 %v3798
        %v4870 = vunpack.c.l.b16 %v3799
        %v4871 = vunpack.c.h.b16 %v3799
        %v4872 = vunpack.c.l.b16 %v3800
        %v4873 = vunpack.c.h.b16 %v3800
        %v4874 = vunpack.c.l.b16 %v3801
        %v4875 = vunpack.c.h.b16 %v3801
        %v4876 = vunpack.c.l.b16 %v3802
        %v4877 = vunpack.c.h.b16 %v3802
        %v4878 = vunpack.c.l.b16 %v3803
        %v4879 = vunpack.c.h.b16 %v3803
        %v4880 = vunpack.c.l.b16 %v3804
        %v4881 = vunpack.c.h.b16 %v3804
        %v4882 = vunpack.c.l.b16 %v3805
        %v4883 = vunpack.c.h.b16 %v3805
        %v4884 = vunpack.c.l.b16 %v3806
        %v4885 = vunpack.c.h.b16 %v3806
        %v4886 = vunpack.c.l.b16 %v3807
        %v4887 = vunpack.c.h.b16 %v3807
        %v4888 = vunpack.c.l.b16 %v3808
        %v4889 = vunpack.c.h.b16 %v3808
        %v4890 = vunpack.c.l.b16 %v3809
        %v4891 = vunpack.c.h.b16 %v3809
        %v4892 = vunpack.c.l.b16 %v3810
        %v4893 = vunpack.c.h.b16 %v3810
        %v4894 = vunpack.c.l.b16 %v3811
        %v4895 = vunpack.c.h.b16 %v3811
        %v4896 = vunpack.c.l.b16 %v3812
        %v4897 = vunpack.c.h.b16 %v3812
        %v4898 = vunpack.c.l.b16 %v3813
        %v4899 = vunpack.c.h.b16 %v3813
        %v4900 = vunpack.c.l.b16 %v3814
        %v4901 = vunpack.c.h.b16 %v3814
        %v4902 = vunpack.c.l.b16 %v3815
        %v4903 = vunpack.c.h.b16 %v3815
        %v4904 = vunpack.c.l.b16 %v3816
        %v4905 = vunpack.c.h.b16 %v3816
        %v4906 = vunpack.c.l.b16 %v3817
        %v4907 = vunpack.c.h.b16 %v3817
        %v4908 = vunpack.c.l.b16 %v3818
        %v4909 = vunpack.c.h.b16 %v3818
        %v4910 = vunpack.c.l.b16 %v3819
        %v4911 = vunpack.c.h.b16 %v3819
        %v4912 = vunpack.c.l.b16 %v3820
        %v4913 = vunpack.c.h.b16 %v3820
        %v4914 = vunpack.c.l.b16 %v3821
        %v4915 = vunpack.c.h.b16 %v3821
        %v4916 = vunpack.c.l.b16 %v3822
        %v4917 = vunpack.c.h.b16 %v3822
        %v4918 = vunpack.c.l.b16 %v3823
        %v4919 = vunpack.c.h.b16 %v3823
        %v4920 = vunpack.c.l.b16 %v3824
        %v4921 = vunpack.c.h.b16 %v3824
        %v4922 = vunpack.c.l.b16 %v3825
        %v4923 = vunpack.c.h.b16 %v3825
        %v4924 = vunpack.c.l.b16 %v3826
        %v4925 = vunpack.c.h.b16 %v3826
        %v4926 = vunpack.c.l.b16 %v3827
        %v4927 = vunpack.c.h.b16 %v3827
        %v4928 = vunpack.c.l.b16 %v3828
        %v4929 = vunpack.c.h.b16 %v3828
        %v4930 = vunpack.c.l.b16 %v3829
        %v4931 = vunpack.c.h.b16 %v3829
        %v4932 = vunpack.c.l.b16 %v3830
        %v4933 = vunpack.c.h.b16 %v3830
        %v4934 = vunpack.c.l.b16 %v3831
        %v4935 = vunpack.c.h.b16 %v3831
        %v4936 = vunpack.c.l.b16 %v3832
        %v4937 = vunpack.c.h.b16 %v3832
        %v4938 = vpack.c.b16 %v4250, %v4246
        %v4939 = vpack.c.b16 %v4251, %v4247
        %v4940 = vpack.c.b16 %v4252, %v4248
        %v4941 = vpack.c.b16 %v4253, %v4249
        %v4942 = vpack.c.b16 %v4258, %v4254
        %v4943 = vpack.c.b16 %v4259, %v4255
        %v4944 = vpack.c.b16 %v4260, %v4256
        %v4945 = vpack.c.b16 %v4261, %v4257
        %v4946 = vpack.c.b16 %v4266, %v4262
        %v4947 = vpack.c.b16 %v4267, %v4263
        %v4948 = vpack.c.b16 %v4268, %v4264
        %v4949 = vpack.c.b16 %v4269, %v4265
        %v4950 = vpack.c.b16 %v4274, %v4270
        %v4951 = vpack.c.b16 %v4275, %v4271
        %v4952 = vpack.c.b16 %v4276, %v4272
        %v4953 = vpack.c.b16 %v4277, %v4273
        %v4954 = vpack.c.b16 %v4282, %v4278
        %v4955 = vpack.c.b16 %v4283, %v4279
        %v4956 = vpack.c.b16 %v4284, %v4280
        %v4957 = vpack.c.b16 %v4285, %v4281
        %v4958 = vpack.c.b16 %v4290, %v4286
        %v4959 = vpack.c.b16 %v4291, %v4287
        %v4960 = vpack.c.b16 %v4292, %v4288
        %v4961 = vpack.c.b16 %v4293, %v4289
        %v4962 = vpack.c.b16 %v4298, %v4294
        %v4963 = vpack.c.b16 %v4299, %v4295
        %v4964 = vpack.c.b16 %v4300, %v4296
        %v4965 = vpack.c.b16 %v4301, %v4297
        %v4966 = vpack.c.b16 %v4306, %v4302
        %v4967 = vpack.c.b16 %v4307, %v4303
        %v4968 = vpack.c.b16 %v4308, %v4304
        %v4969 = vpack.c.b16 %v4309, %v4305
        %v4970 = vpack.c.b16 %v4314, %v4310
        %v4971 = vpack.c.b16 %v4315, %v4311
        %v4972 = vpack.c.b16 %v4316, %v4312
        %v4973 = vpack.c.b16 %v4317, %v4313
        %v4974 = vpack.c.b16 %v4322, %v4318
        %v4975 = vpack.c.b16 %v4323, %v4319
        %v4976 = vpack.c.b16 %v4324, %v4320
        %v4977 = vpack.c.b16 %v4325, %v4321
        %v4978 = vpack.c.b16 %v4330, %v4326
        %v4979 = vpack.c.b16 %v4331, %v4327
        %v4980 = vpack.c.b16 %v4332, %v4328
        %v4981 = vpack.c.b16 %v4333, %v4329
        %v4982 = vpack.c.b16 %v4338, %v4334
        %v4983 = vpack.c.b16 %v4339, %v4335
        %v4984 = vpack.c.b16 %v4340, %v4336
        %v4985 = vpack.c.b16 %v4341, %v4337
        %v4986 = vpack.c.b16 %v4346, %v4342
        %v4987 = vpack.c.b16 %v4347, %v4343
        %v4988 = vpack.c.b16 %v4348, %v4344
        %v4989 = vpack.c.b16 %v4349, %v4345
        %v4990 = vpack.c.b16 %v4354, %v4350
        %v4991 = vpack.c.b16 %v4355, %v4351
        %v4992 = vpack.c.b16 %v4356, %v4352
        %v4993 = vpack.c.b16 %v4357, %v4353
        %v4994 = vpack.c.b16 %v4362, %v4358
        %v4995 = vpack.c.b16 %v4363, %v4359
        %v4996 = vpack.c.b16 %v4364, %v4360
        %v4997 = vpack.c.b16 %v4365, %v4361
        %v4998 = vpack.c.b16 %v4370, %v4366
        %v4999 = vpack.c.b16 %v4371, %v4367
        %v5000 = vpack.c.b16 %v4372, %v4368
        %v5001 = vpack.c.b16 %v4373, %v4369
        %v5002 = vpack.c.b16 %v4378, %v4374
        %v5003 = vpack.c.b16 %v4379, %v4375
        %v5004 = vpack.c.b16 %v4380, %v4376
        %v5005 = vpack.c.b16 %v4381, %v4377
        %v5006 = vpack.c.b16 %v4386, %v4382
        %v5007 = vpack.c.b16 %v4387, %v4383
        %v5008 = vpack.c.b16 %v4388, %v4384
        %v5009 = vpack.c.b16 %v4389, %v4385
        %v5010 = vpack.c.b16 %v4394, %v4390
        %v5011 = vpack.c.b16 %v4395, %v4391
        %v5012 = vpack.c.b16 %v4396, %v4392
        %v5013 = vpack.c.b16 %v4397, %v4393
        %v5014 = vpack.c.b16 %v4402, %v4398
        %v5015 = vpack.c.b16 %v4403, %v4399
        %v5016 = vpack.c.b16 %v4404, %v4400
        %v5017 = vpack.c.b16 %v4405, %v4401
        %v5018 = vpack.c.b16 %v4410, %v4406
        %v5019 = vpack.c.b16 %v4411, %v4407
        %v5020 = vpack.c.b16 %v4412, %v4408
        %v5021 = vpack.c.b16 %v4413, %v4409
        %v5022 = vpack.c.b16 %v4418, %v4414
        %v5023 = vpack.c.b16 %v4419, %v4415
        %v5024 = vpack.c.b16 %v4420, %v4416
        %v5025 = vpack.c.b16 %v4421, %v4417
        %v5026 = vpack.c.b16 %v4426, %v4422
        %v5027 = vpack.c.b16 %v4427, %v4423
        %v5028 = vpack.c.b16 %v4428, %v4424
        %v5029 = vpack.c.b16 %v4429, %v4425
        %v5030 = vpack.c.b16 %v4434, %v4430
        %v5031 = vpack.c.b16 %v4435, %v4431
        %v5032 = vpack.c.b16 %v4436, %v4432
        %v5033 = vpack.c.b16 %v4437, %v4433
        %v5034 = vpack.c.b16 %v4442, %v4438
        %v5035 = vpack.c.b16 %v4443, %v4439
        %v5036 = vpack.c.b16 %v4444, %v4440
        %v5037 = vpack.c.b16 %v4445, %v4441
        %v5038 = vpack.c.b16 %v4450, %v4446
        %v5039 = vpack.c.b16 %v4451, %v4447
        %v5040 = vpack.c.b16 %v4452, %v4448
        %v5041 = vpack.c.b16 %v4453, %v4449
        %v5042 = vpack.c.b16 %v4458, %v4454
        %v5043 = vpack.c.b16 %v4459, %v4455
        %v5044 = vpack.c.b16 %v4460, %v4456
        %v5045 = vpack.c.b16 %v4461, %v4457
        %v5046 = vpack.c.b16 %v4466, %v4462
        %v5047 = vpack.c.b16 %v4467, %v4463
        %v5048 = vpack.c.b16 %v4468, %v4464
        %v5049 = vpack.c.b16 %v4469, %v4465
        %v5050 = vpack.c.b16 %v4474, %v4470
        %v5051 = vpack.c.b16 %v4475, %v4471
        %v5052 = vpack.c.b16 %v4476, %v4472
        %v5053 = vpack.c.b16 %v4477, %v4473
        %v5054 = vpack.c.b16 %v4482, %v4478
        %v5055 = vpack.c.b16 %v4483, %v4479
        %v5056 = vpack.c.b16 %v4484, %v4480
        %v5057 = vpack.c.b16 %v4485, %v4481
        %v5058 = vpack.c.b16 %v4490, %v4486
        %v5059 = vpack.c.b16 %v4491, %v4487
        %v5060 = vpack.c.b16 %v4492, %v4488
        %v5061 = vpack.c.b16 %v4493, %v4489
        %v5062 = vpack.c.b16 %v4498, %v4494
        %v5063 = vpack.c.b16 %v4499, %v4495
        %v5064 = vpack.c.b16 %v4500, %v4496
        %v5065 = vpack.c.b16 %v4501, %v4497
        %v5066 = vpack.c.b16 %v4506, %v4502
        %v5067 = vpack.c.b16 %v4507, %v4503
        %v5068 = vpack.c.b16 %v4508, %v4504
        %v5069 = vpack.c.b16 %v4509, %v4505
        %v5070 = vpack.c.b16 %v4514, %v4510
        %v5071 = vpack.c.b16 %v4515, %v4511
        %v5072 = vpack.c.b16 %v4516, %v4512
        %v5073 = vpack.c.b16 %v4517, %v4513
        %v5074 = vpack.c.b16 %v4522, %v4518
        %v5075 = vpack.c.b16 %v4523, %v4519
        %v5076 = vpack.c.b16 %v4524, %v4520
        %v5077 = vpack.c.b16 %v4525, %v4521
        %v5078 = vpack.c.b16 %v4530, %v4526
        %v5079 = vpack.c.b16 %v4531, %v4527
        %v5080 = vpack.c.b16 %v4532, %v4528
        %v5081 = vpack.c.b16 %v4533, %v4529
        %v5082 = vpack.c.b16 %v4538, %v4534
        %v5083 = vpack.c.b16 %v4539, %v4535
        %v5084 = vpack.c.b16 %v4540, %v4536
        %v5085 = vpack.c.b16 %v4541, %v4537
        %v5086 = vpack.c.b16 %v4546, %v4542
        %v5087 = vpack.c.b16 %v4547, %v4543
        %v5088 = vpack.c.b16 %v4548, %v4544
        %v5089 = vpack.c.b16 %v4549, %v4545
        %v5090 = vpack.c.b16 %v4554, %v4550
        %v5091 = vpack.c.b16 %v4555, %v4551
        %v5092 = vpack.c.b16 %v4556, %v4552
        %v5093 = vpack.c.b16 %v4557, %v4553
        %v5094 = vpack.c.b16 %v4562, %v4558
        %v5095 = vpack.c.b16 %v4563, %v4559
        %v5096 = vpack.c.b16 %v4564, %v4560
        %v5097 = vpack.c.b16 %v4565, %v4561
        %v5098 = vpack.c.b16 %v4570, %v4566
        %v5099 = vpack.c.b16 %v4571, %v4567
        %v5100 = vpack.c.b16 %v4572, %v4568
        %v5101 = vpack.c.b16 %v4573, %v4569
        %v5102 = vpack.c.b16 %v4578, %v4574
        %v5103 = vpack.c.b16 %v4579, %v4575
        %v5104 = vpack.c.b16 %v4580, %v4576
        %v5105 = vpack.c.b16 %v4581, %v4577
        %v5106 = vpack.c.b16 %v4586, %v4582
        %v5107 = vpack.c.b16 %v4587, %v4583
        %v5108 = vpack.c.b16 %v4588, %v4584
        %v5109 = vpack.c.b16 %v4589, %v4585
        %v5110 = vpack.c.b16 %v4594, %v4590
        %v5111 = vpack.c.b16 %v4595, %v4591
        %v5112 = vpack.c.b16 %v4596, %v4592
        %v5113 = vpack.c.b16 %v4597, %v4593
        %v5114 = vpack.c.b16 %v4602, %v4598
        %v5115 = vpack.c.b16 %v4603, %v4599
        %v5116 = vpack.c.b16 %v4604, %v4600
        %v5117 = vpack.c.b16 %v4605, %v4601
        %v5118 = vpack.c.b16 %v4610, %v4606
        %v5119 = vpack.c.b16 %v4611, %v4607
        %v5120 = vpack.c.b16 %v4612, %v4608
        %v5121 = vpack.c.b16 %v4613, %v4609
        %v5122 = vpack.c.b16 %v4618, %v4614
        %v5123 = vpack.c.b16 %v4619, %v4615
        %v5124 = vpack.c.b16 %v4620, %v4616
        %v5125 = vpack.c.b16 %v4621, %v4617
        %v5126 = vpack.c.b16 %v4626, %v4622
        %v5127 = vpack.c.b16 %v4627, %v4623
        %v5128 = vpack.c.b16 %v4628, %v4624
        %v5129 = vpack.c.b16 %v4629, %v4625
        %v5130 = vpack.c.b16 %v4634, %v4630
        %v5131 = vpack.c.b16 %v4635, %v4631
        %v5132 = vpack.c.b16 %v4636, %v4632
        %v5133 = vpack.c.b16 %v4637, %v4633
        %v5134 = vpack.c.b16 %v4642, %v4638
        %v5135 = vpack.c.b16 %v4643, %v4639
        %v5136 = vpack.c.b16 %v4644, %v4640
        %v5137 = vpack.c.b16 %v4645, %v4641
        %v5138 = vpack.c.b16 %v4650, %v4646
        %v5139 = vpack.c.b16 %v4651, %v4647
        %v5140 = vpack.c.b16 %v4652, %v4648
        %v5141 = vpack.c.b16 %v4653, %v4649
        %v5142 = vpack.c.b16 %v4658, %v4654
        %v5143 = vpack.c.b16 %v4659, %v4655
        %v5144 = vpack.c.b16 %v4660, %v4656
        %v5145 = vpack.c.b16 %v4661, %v4657
        %v5146 = vpack.c.b16 %v4666, %v4662
        %v5147 = vpack.c.b16 %v4667, %v4663
        %v5148 = vpack.c.b16 %v4668, %v4664
        %v5149 = vpack.c.b16 %v4669, %v4665
        %v5150 = vpack.c.b16 %v4674, %v4670
        %v5151 = vpack.c.b16 %v4675, %v4671
        %v5152 = vpack.c.b16 %v4676, %v4672
        %v5153 = vpack.c.b16 %v4677, %v4673
        %v5154 = vpack.c.b16 %v4682, %v4678
        %v5155 = vpack.c.b16 %v4683, %v4679
        %v5156 = vpack.c.b16 %v4684, %v4680
        %v5157 = vpack.c.b16 %v4685, %v4681
        %v5158 = vpack.c.b16 %v4690, %v4686
        %v5159 = vpack.c.b16 %v4691, %v4687
        %v5160 = vpack.c.b16 %v4692, %v4688
        %v5161 = vpack.c.b16 %v4693, %v4689
        %v5162 = vpack.c.b16 %v4698, %v4694
        %v5163 = vpack.c.b16 %v4699, %v4695
        %v5164 = vpack.c.b16 %v4700, %v4696
        %v5165 = vpack.c.b16 %v4701, %v4697
        %v5166 = vpack.c.b16 %v4706, %v4702
        %v5167 = vpack.c.b16 %v4707, %v4703
        %v5168 = vpack.c.b16 %v4708, %v4704
        %v5169 = vpack.c.b16 %v4709, %v4705
        %v5170 = vpack.c.b16 %v4714, %v4710
        %v5171 = vpack.c.b16 %v4715, %v4711
        %v5172 = vpack.c.b16 %v4716, %v4712
        %v5173 = vpack.c.b16 %v4717, %v4713
        %v5174 = vpack.c.b16 %v4722, %v4718
        %v5175 = vpack.c.b16 %v4723, %v4719
        %v5176 = vpack.c.b16 %v4724, %v4720
        %v5177 = vpack.c.b16 %v4725, %v4721
        %v5178 = vpack.c.b16 %v4730, %v4726
        %v5179 = vpack.c.b16 %v4731, %v4727
        %v5180 = vpack.c.b16 %v4732, %v4728
        %v5181 = vpack.c.b16 %v4733, %v4729
        %v5182 = vpack.c.b16 %v4738, %v4734
        %v5183 = vpack.c.b16 %v4739, %v4735
        %v5184 = vpack.c.b16 %v4740, %v4736
        %v5185 = vpack.c.b16 %v4741, %v4737
        %v5186 = vpack.c.b16 %v4746, %v4742
        %v5187 = vpack.c.b16 %v4747, %v4743
        %v5188 = vpack.c.b16 %v4748, %v4744
        %v5189 = vpack.c.b16 %v4749, %v4745
        %v5190 = vpack.c.b16 %v4754, %v4750
        %v5191 = vpack.c.b16 %v4755, %v4751
        %v5192 = vpack.c.b16 %v4756, %v4752
        %v5193 = vpack.c.b16 %v4757, %v4753
        %v5194 = vpack.c.b16 %v4762, %v4758
        %v5195 = vpack.c.b16 %v4763, %v4759
        %v5196 = vpack.c.b16 %v4764, %v4760
        %v5197 = vpack.c.b16 %v4765, %v4761
        %v5198 = vpack.c.b16 %v4770, %v4766
        %v5199 = vpack.c.b16 %v4771, %v4767
        %v5200 = vpack.c.b16 %v4772, %v4768
        %v5201 = vpack.c.b16 %v4773, %v4769
        %v5202 = vpack.c.b16 %v4778, %v4774
        %v5203 = vpack.c.b16 %v4779, %v4775
        %v5204 = vpack.c.b16 %v4780, %v4776
        %v5205 = vpack.c.b16 %v4781, %v4777
        %v5206 = vpack.c.b16 %v4786, %v4782
        %v5207 = vpack.c.b16 %v4787, %v4783
        %v5208 = vpack.c.b16 %v4788, %v4784
        %v5209 = vpack.c.b16 %v4789, %v4785
        %v5210 = vpack.c.b16 %v4794, %v4790
        %v5211 = vpack.c.b16 %v4795, %v4791
        %v5212 = vpack.c.b16 %v4796, %v4792
        %v5213 = vpack.c.b16 %v4797, %v4793
        %v5214 = vpack.c.b16 %v4802, %v4798
        %v5215 = vpack.c.b16 %v4803, %v4799
        %v5216 = vpack.c.b16 %v4804, %v4800
        %v5217 = vpack.c.b16 %v4805, %v4801
        %v5218 = vpack.c.b16 %v4810, %v4806
        %v5219 = vpack.c.b16 %v4811, %v4807
        %v5220 = vpack.c.b16 %v4812, %v4808
        %v5221 = vpack.c.b16 %v4813, %v4809
        %v5222 = vpack.c.b16 %v4818, %v4814
        %v5223 = vpack.c.b16 %v4819, %v4815
        %v5224 = vpack.c.b16 %v4820, %v4816
        %v5225 = vpack.c.b16 %v4821, %v4817
        %v5226 = vpack.c.b16 %v4826, %v4822
        %v5227 = vpack.c.b16 %v4827, %v4823
        %v5228 = vpack.c.b16 %v4828, %v4824
        %v5229 = vpack.c.b16 %v4829, %v4825
        %v5230 = vpack.c.b16 %v4834, %v4830
        %v5231 = vpack.c.b16 %v4835, %v4831
        %v5232 = vpack.c.b16 %v4836, %v4832
        %v5233 = vpack.c.b16 %v4837, %v4833
        %v5234 = vpack.c.b16 %v4842, %v4838
        %v5235 = vpack.c.b16 %v4843, %v4839
        %v5236 = vpack.c.b16 %v4844, %v4840
        %v5237 = vpack.c.b16 %v4845, %v4841
        %v5238 = vpack.c.b16 %v4850, %v4846
        %v5239 = vpack.c.b16 %v4851, %v4847
        %v5240 = vpack.c.b16 %v4852, %v4848
        %v5241 = vpack.c.b16 %v4853, %v4849
        %v5242 = vpack.c.b16 %v4858, %v4854
        %v5243 = vpack.c.b16 %v4859, %v4855
        %v5244 = vpack.c.b16 %v4860, %v4856
        %v5245 = vpack.c.b16 %v4861, %v4857
        %v5246 = vpack.c.b16 %v4866, %v4862
        %v5247 = vpack.c.b16 %v4867, %v4863
        %v5248 = vpack.c.b16 %v4868, %v4864
        %v5249 = vpack.c.b16 %v4869, %v4865
        %v5250 = vpack.c.b16 %v4874, %v4870
        %v5251 = vpack.c.b16 %v4875, %v4871
        %v5252 = vpack.c.b16 %v4876, %v4872
        %v5253 = vpack.c.b16 %v4877, %v4873
        %v5254 = vpack.c.b16 %v4882, %v4878
        %v5255 = vpack.c.b16 %v4883, %v4879
        %v5256 = vpack.c.b16 %v4884, %v4880
        %v5257 = vpack.c.b16 %v4885, %v4881
        %v5258 = vpack.c.b16 %v4890, %v4886
        %v5259 = vpack.c.b16 %v4891, %v4887
        %v5260 = vpack.c.b16 %v4892, %v4888
        %v5261 = vpack.c.b16 %v4893, %v4889
        %v5262 = vpack.c.b16 %v4898, %v4894
        %v5263 = vpack.c.b16 %v4899, %v4895
        %v5264 = vpack.c.b16 %v4900, %v4896
        %v5265 = vpack.c.b16 %v4901, %v4897
        %v5266 = vpack.c.b16 %v4906, %v4902
        %v5267 = vpack.c.b16 %v4907, %v4903
        %v5268 = vpack.c.b16 %v4908, %v4904
        %v5269 = vpack.c.b16 %v4909, %v4905
        %v5270 = vpack.c.b16 %v4914, %v4910
        %v5271 = vpack.c.b16 %v4915, %v4911
        %v5272 = vpack.c.b16 %v4916, %v4912
        %v5273 = vpack.c.b16 %v4917, %v4913
        %v5274 = vpack.c.b16 %v4922, %v4918
        %v5275 = vpack.c.b16 %v4923, %v4919
        %v5276 = vpack.c.b16 %v4924, %v4920
        %v5277 = vpack.c.b16 %v4925, %v4921
        %v5278 = vpack.c.b16 %v4930, %v4926
        %v5279 = vpack.c.b16 %v4931, %v4927
        %v5280 = vpack.c.b16 %v4932, %v4928
        %v5281 = vpack.c.b16 %v4933, %v4929
        %v5282 = vpack.c.b16 %v4934, %v4934
        %v5283 = vpack.c.b16 %v4935, %v4935
        %v5284 = vpack.c.b16 %v4936, %v4936
        %v5285 = vpack.c.b16 %v4937, %v4937
        %vm5630 = vcmask 818176
        %v5632 = vsel %vm5630, %v3889, 0
        %v5635 = vsel %vm730, %v5282, 0
        %v5638 = vsel %vm730, %v5283, 0
        %v5641 = vsel %vm730, %v5284, 0
        %v5644 = vsel %vm730, %v5285, 0
        %5646 = vmatprep.subr.bf16.mxu0 %v4939
        %5647 = vmatpush1.bf16.msra.mxu0 %v4938
        %5648 = vmatprep.subr.bf16.mxu0 %v4943
        %5649 = vmatpush1.bf16.msra.mxu0 %v4942
        %5650 = vmatprep.subr.bf16.mxu0 %v4947
        %5651 = vmatpush1.bf16.msra.mxu0 %v4946
        %5652 = vmatprep.subr.bf16.mxu0 %v4951
        %5653 = vmatpush1.bf16.msra.mxu0 %v4950
        %5654 = vmatprep.subr.bf16.mxu0 %v4955
        %5655 = vmatpush1.bf16.msra.mxu0 %v4954
        %5656 = vmatprep.subr.bf16.mxu0 %v4959
        %5657 = vmatpush1.bf16.msra.mxu0 %v4958
        %5658 = vmatprep.subr.bf16.mxu0 %v4963
        %5659 = vmatpush1.bf16.msra.mxu0 %v4962
        %5660 = vmatprep.subr.bf16.mxu0 %v4967
        %5661 = vmatpush1.bf16.msra.mxu0 %v4966
        %5662 = vmatprep.subr.bf16.mxu0 %v4971
        %5663 = vmatpush1.bf16.msra.mxu0 %v4970
        %5664 = vmatprep.subr.bf16.mxu0 %v4975
        %5665 = vmatpush1.bf16.msra.mxu0 %v4974
        %5666 = vmatprep.subr.bf16.mxu0 %v4979
        %5667 = vmatpush1.bf16.msra.mxu0 %v4978
        %5668 = vmatprep.subr.bf16.mxu0 %v4983
        %5669 = vmatpush1.bf16.msra.mxu0 %v4982
        %5670 = vmatprep.subr.bf16.mxu0 %v4987
        %5671 = vmatpush1.bf16.msra.mxu0 %v4986
        %5672 = vmatprep.subr.bf16.mxu0 %v4991
        %5673 = vmatpush1.bf16.msra.mxu0 %v4990
        %5674 = vmatprep.subr.bf16.mxu0 %v4995
        %5675 = vmatpush1.bf16.msra.mxu0 %v4994
        %5676 = vmatprep.subr.bf16.mxu0 %v4999
        %5677 = vmatpush1.bf16.msra.mxu0 %v4998
        %5678 = vmatprep.mubr.bf16.mxu0 %v3880
        %5679 = vmatmul.mubr.bf16.gmra.mrb[0].mxu0 %v3879
        %v5680 = vpop.f32.mrb[0].mxu0
        %v5681 = vadd.f32 %v3838, %v5680
        %v5682 = vpop.f32.mrb[0].mxu0
        %v5683 = vadd.f32 %v3838, %v5682
        %v5684 = vpop.f32.mrb[0].mxu0
        %v5685 = vadd.f32 %v3843, %v5684
        %v5686 = vpop.f32.mrb[0].mxu0
        %v5687 = vadd.f32 %v3843, %v5686
        %5688 = vdwg.mxu0
        %5689 = vmatprep.subr.bf16.mxu0 %v5003
        %5690 = vmatpush1.bf16.msra.mxu0 %v5002
        %5691 = vmatprep.subr.bf16.mxu0 %v5007
        %5692 = vmatpush1.bf16.msra.mxu0 %v5006
        %5693 = vmatprep.subr.bf16.mxu0 %v5011
        %5694 = vmatpush1.bf16.msra.mxu0 %v5010
        %5695 = vmatprep.subr.bf16.mxu0 %v5015
        %5696 = vmatpush1.bf16.msra.mxu0 %v5014
        %5697 = vmatprep.subr.bf16.mxu0 %v5019
        %5698 = vmatpush1.bf16.msra.mxu0 %v5018
        %5699 = vmatprep.subr.bf16.mxu0 %v5023
        %5700 = vmatpush1.bf16.msra.mxu0 %v5022
        %5701 = vmatprep.subr.bf16.mxu0 %v5027
        %5702 = vmatpush1.bf16.msra.mxu0 %v5026
        %5703 = vmatprep.subr.bf16.mxu0 %v5031
        %5704 = vmatpush1.bf16.msra.mxu0 %v5030
        %5705 = vmatprep.subr.bf16.mxu0 %v5035
        %5706 = vmatpush1.bf16.msra.mxu0 %v5034
        %5707 = vmatprep.subr.bf16.mxu0 %v5039
        %5708 = vmatpush1.bf16.msra.mxu0 %v5038
        %5709 = vmatprep.subr.bf16.mxu0 %v5043
        %5710 = vmatpush1.bf16.msra.mxu0 %v5042
        %5711 = vmatprep.subr.bf16.mxu0 %v5047
        %5712 = vmatpush1.bf16.msra.mxu0 %v5046
        %5713 = vmatprep.subr.bf16.mxu0 %v5051
        %5714 = vmatpush1.bf16.msra.mxu0 %v5050
        %5715 = vmatprep.subr.bf16.mxu0 %v5055
        %5716 = vmatpush1.bf16.msra.mxu0 %v5054
        %5717 = vmatprep.subr.bf16.mxu0 %v5059
        %5718 = vmatpush1.bf16.msra.mxu0 %v5058
        %5719 = vmatprep.subr.bf16.mxu0 %v5063
        %5720 = vmatpush1.bf16.msra.mxu0 %v5062
        %5721 = vmatprep.mubr.bf16.mxu0 %v3882
        %5722 = vmatmul.mubr.bf16.gmra.mrb[0].mxu0 %v3881
        %v5723 = vpop.f32.mrb[0].mxu0
        %v5724 = vadd.f32 %v5681, %v5723
        %v5725 = vpop.f32.mrb[0].mxu0
        %v5726 = vadd.f32 %v5683, %v5725
        %v5727 = vpop.f32.mrb[0].mxu0
        %v5728 = vadd.f32 %v5685, %v5727
        %v5729 = vpop.f32.mrb[0].mxu0
        %v5730 = vadd.f32 %v5687, %v5729
        %5731 = vdwg.mxu0
        %5732 = vmatprep.subr.bf16.mxu0 %v5067
        %5733 = vmatpush1.bf16.msra.mxu0 %v5066
        %5734 = vmatprep.subr.bf16.mxu0 %v5071
        %5735 = vmatpush1.bf16.msra.mxu0 %v5070
        %5736 = vmatprep.subr.bf16.mxu0 %v5075
        %5737 = vmatpush1.bf16.msra.mxu0 %v5074
        %5738 = vmatprep.subr.bf16.mxu0 %v5079
        %5739 = vmatpush1.bf16.msra.mxu0 %v5078
        %5740 = vmatprep.subr.bf16.mxu0 %v5083
        %5741 = vmatpush1.bf16.msra.mxu0 %v5082
        %5742 = vmatprep.subr.bf16.mxu0 %v5087
        %5743 = vmatpush1.bf16.msra.mxu0 %v5086
        %5744 = vmatprep.subr.bf16.mxu0 %v5091
        %5745 = vmatpush1.bf16.msra.mxu0 %v5090
        %5746 = vmatprep.subr.bf16.mxu0 %v5095
        %5747 = vmatpush1.bf16.msra.mxu0 %v5094
        %5748 = vmatprep.subr.bf16.mxu0 %v5099
        %5749 = vmatpush1.bf16.msra.mxu0 %v5098
        %5750 = vmatprep.subr.bf16.mxu0 %v5103
        %5751 = vmatpush1.bf16.msra.mxu0 %v5102
        %5752 = vmatprep.subr.bf16.mxu0 %v5107
        %5753 = vmatpush1.bf16.msra.mxu0 %v5106
        %5754 = vmatprep.subr.bf16.mxu0 %v5111
        %5755 = vmatpush1.bf16.msra.mxu0 %v5110
        %5756 = vmatprep.subr.bf16.mxu0 %v5115
        %5757 = vmatpush1.bf16.msra.mxu0 %v5114
        %5758 = vmatprep.subr.bf16.mxu0 %v5119
        %5759 = vmatpush1.bf16.msra.mxu0 %v5118
        %5760 = vmatprep.subr.bf16.mxu0 %v5123
        %5761 = vmatpush1.bf16.msra.mxu0 %v5122
        %5762 = vmatprep.subr.bf16.mxu0 %v5127
        %5763 = vmatpush1.bf16.msra.mxu0 %v5126
        %5764 = vmatprep.mubr.bf16.mxu0 %v3884
        %5765 = vmatmul.mubr.bf16.gmra.mrb[0].mxu0 %v3883
        %v5766 = vpop.f32.mrb[0].mxu0
        %v5767 = vadd.f32 %v5724, %v5766
        %v5768 = vpop.f32.mrb[0].mxu0
        %v5769 = vadd.f32 %v5726, %v5768
        %v5770 = vpop.f32.mrb[0].mxu0
        %v5771 = vadd.f32 %v5728, %v5770
        %v5772 = vpop.f32.mrb[0].mxu0
        %v5773 = vadd.f32 %v5730, %v5772
        %5774 = vdwg.mxu0
        %5775 = vmatprep.subr.bf16.mxu0 %v5131
        %5776 = vmatpush1.bf16.msra.mxu0 %v5130
        %5777 = vmatprep.subr.bf16.mxu0 %v5135
        %5778 = vmatpush1.bf16.msra.mxu0 %v5134
        %5779 = vmatprep.subr.bf16.mxu0 %v5139
        %5780 = vmatpush1.bf16.msra.mxu0 %v5138
        %5781 = vmatprep.subr.bf16.mxu0 %v5143
        %5782 = vmatpush1.bf16.msra.mxu0 %v5142
        %5783 = vmatprep.subr.bf16.mxu0 %v5147
        %5784 = vmatpush1.bf16.msra.mxu0 %v5146
        %5785 = vmatprep.subr.bf16.mxu0 %v5151
        %5786 = vmatpush1.bf16.msra.mxu0 %v5150
        %5787 = vmatprep.subr.bf16.mxu0 %v5155
        %5788 = vmatpush1.bf16.msra.mxu0 %v5154
        %5789 = vmatprep.subr.bf16.mxu0 %v5159
        %5790 = vmatpush1.bf16.msra.mxu0 %v5158
        %5791 = vmatprep.subr.bf16.mxu0 %v5163
        %5792 = vmatpush1.bf16.msra.mxu0 %v5162
        %5793 = vmatprep.subr.bf16.mxu0 %v5167
        %5794 = vmatpush1.bf16.msra.mxu0 %v5166
        %5795 = vmatprep.subr.bf16.mxu0 %v5171
        %5796 = vmatpush1.bf16.msra.mxu0 %v5170
        %5797 = vmatprep.subr.bf16.mxu0 %v5175
        %5798 = vmatpush1.bf16.msra.mxu0 %v5174
        %5799 = vmatprep.subr.bf16.mxu0 %v5179
        %5800 = vmatpush1.bf16.msra.mxu0 %v5178
        %5801 = vmatprep.subr.bf16.mxu0 %v5183
        %5802 = vmatpush1.bf16.msra.mxu0 %v5182
        %5803 = vmatprep.subr.bf16.mxu0 %v5187
        %5804 = vmatpush1.bf16.msra.mxu0 %v5186
        %5805 = vmatprep.subr.bf16.mxu0 %v5191
        %5806 = vmatpush1.bf16.msra.mxu0 %v5190
        %5807 = vmatprep.mubr.bf16.mxu0 %v3886
        %5808 = vmatmul.mubr.bf16.gmra.mrb[0].mxu0 %v3885
        %v5809 = vpop.f32.mrb[0].mxu0
        %v5810 = vadd.f32 %v5767, %v5809
        %v5811 = vpop.f32.mrb[0].mxu0
        %v5812 = vadd.f32 %v5769, %v5811
        %v5813 = vpop.f32.mrb[0].mxu0
        %v5814 = vadd.f32 %v5771, %v5813
        %v5815 = vpop.f32.mrb[0].mxu0
        %v5816 = vadd.f32 %v5773, %v5815
        %5817 = vdwg.mxu0
        %5818 = vmatprep.subr.bf16.mxu0 %v5195
        %5819 = vmatpush1.bf16.msra.mxu0 %v5194
        %5820 = vmatprep.subr.bf16.mxu0 %v5199
        %5821 = vmatpush1.bf16.msra.mxu0 %v5198
        %5822 = vmatprep.subr.bf16.mxu0 %v5203
        %5823 = vmatpush1.bf16.msra.mxu0 %v5202
        %5824 = vmatprep.subr.bf16.mxu0 %v5207
        %5825 = vmatpush1.bf16.msra.mxu0 %v5206
        %5826 = vmatprep.subr.bf16.mxu0 %v5211
        %5827 = vmatpush1.bf16.msra.mxu0 %v5210
        %5828 = vmatprep.subr.bf16.mxu0 %v5215
        %5829 = vmatpush1.bf16.msra.mxu0 %v5214
        %5830 = vmatprep.subr.bf16.mxu0 %v5219
        %5831 = vmatpush1.bf16.msra.mxu0 %v5218
        %5832 = vmatprep.subr.bf16.mxu0 %v5223
        %5833 = vmatpush1.bf16.msra.mxu0 %v5222
        %5834 = vmatprep.subr.bf16.mxu0 %v5227
        %5835 = vmatpush1.bf16.msra.mxu0 %v5226
        %5836 = vmatprep.subr.bf16.mxu0 %v5231
        %5837 = vmatpush1.bf16.msra.mxu0 %v5230
        %5838 = vmatprep.subr.bf16.mxu0 %v5235
        %5839 = vmatpush1.bf16.msra.mxu0 %v5234
        %5840 = vmatprep.subr.bf16.mxu0 %v5239
        %5841 = vmatpush1.bf16.msra.mxu0 %v5238
        %5842 = vmatprep.subr.bf16.mxu0 %v5243
        %5843 = vmatpush1.bf16.msra.mxu0 %v5242
        %5844 = vmatprep.subr.bf16.mxu0 %v5247
        %5845 = vmatpush1.bf16.msra.mxu0 %v5246
        %5846 = vmatprep.subr.bf16.mxu0 %v5251
        %5847 = vmatpush1.bf16.msra.mxu0 %v5250
        %5848 = vmatprep.subr.bf16.mxu0 %v5255
        %5849 = vmatpush1.bf16.msra.mxu0 %v5254
        %5850 = vmatprep.mubr.bf16.mxu0 %v3888
        %5851 = vmatmul.mubr.bf16.gmra.mrb[0].mxu0 %v3887
        %v5852 = vpop.f32.mrb[0].mxu0
        %v5853 = vadd.f32 %v5810, %v5852
        %v5854 = vpop.f32.mrb[0].mxu0
        %v5855 = vadd.f32 %v5812, %v5854
        %v5856 = vpop.f32.mrb[0].mxu0
        %v5857 = vadd.f32 %v5814, %v5856
        %v5858 = vpop.f32.mrb[0].mxu0
        %v5859 = vadd.f32 %v5816, %v5858
        %5860 = vdwg.mxu0
        %5861 = vmatprep.subr.bf16.mxu0 %v5259
        %5862 = vmatpush1.bf16.msra.mxu0 %v5258
        %5863 = vmatprep.subr.bf16.mxu0 %v5263
        %5864 = vmatpush1.bf16.msra.mxu0 %v5262
        %5865 = vmatprep.subr.bf16.mxu0 %v5267
        %5866 = vmatpush1.bf16.msra.mxu0 %v5266
        %5867 = vmatprep.subr.bf16.mxu0 %v5271
        %5868 = vmatpush1.bf16.msra.mxu0 %v5270
        %5869 = vmatprep.subr.bf16.mxu0 %v5275
        %5870 = vmatpush1.bf16.msra.mxu0 %v5274
        %5871 = vmatprep.subr.bf16.mxu0 %v5279
        %5872 = vmatpush1.bf16.msra.mxu0 %v5278
        %5873 = vmatprep.subr.bf16.mxu0 %v5638
        %5874 = vmatpush1.bf16.msra.mxu0 %v5635
        %5875 = vmatprep.subr.bf16.mxu0 0
        %5876 = vmatpush1.bf16.msra.mxu0 0
        %5877 = vmatprep.subr.bf16.mxu0 0
        %5878 = vmatpush1.bf16.msra.mxu0 0
        %5879 = vmatprep.subr.bf16.mxu0 0
        %5880 = vmatpush1.bf16.msra.mxu0 0
        %5881 = vmatprep.subr.bf16.mxu0 0
        %5882 = vmatpush1.bf16.msra.mxu0 0
        %5883 = vmatprep.subr.bf16.mxu0 0
        %5884 = vmatpush1.bf16.msra.mxu0 0
        %5885 = vmatprep.subr.bf16.mxu0 0
        %5886 = vmatpush1.bf16.msra.mxu0 0
        %5887 = vmatprep.subr.bf16.mxu0 0
        %5888 = vmatpush1.bf16.msra.mxu0 0
        %5889 = vmatprep.subr.bf16.mxu0 0
        %5890 = vmatpush1.bf16.msra.mxu0 0
        %5891 = vmatprep.subr.bf16.mxu0 0
        %5892 = vmatpush1.bf16.msra.mxu0 0
        %5893 = vmatprep.mubr.bf16.mxu0 0
        %5894 = vmatmul.mubr.bf16.gmra.mrb[0].mxu0 %v5632
        %v5895 = vpop.f32.mrb[0].mxu0
        %v5896 = vadd.f32 %v5853, %v5895
        %v5897 = vpop.f32.mrb[0].mxu0
        %v5898 = vadd.f32 %v5855, %v5897
        %v5899 = vpop.f32.mrb[0].mxu0
        %v5900 = vadd.f32 %v5857, %v5899
        %v5901 = vpop.f32.mrb[0].mxu0
        %v5902 = vadd.f32 %v5859, %v5901
        %5903 = vdwg.mxu0
        %5904 = vmatprep.subr.bf16.mxu0 %v4941
        %5905 = vmatpush1.bf16.msra.mxu0 %v4940
        %5906 = vmatprep.subr.bf16.mxu0 %v4945
        %5907 = vmatpush1.bf16.msra.mxu0 %v4944
        %5908 = vmatprep.subr.bf16.mxu0 %v4949
        %5909 = vmatpush1.bf16.msra.mxu0 %v4948
        %5910 = vmatprep.subr.bf16.mxu0 %v4953
        %5911 = vmatpush1.bf16.msra.mxu0 %v4952
        %5912 = vmatprep.subr.bf16.mxu0 %v4957
        %5913 = vmatpush1.bf16.msra.mxu0 %v4956
        %5914 = vmatprep.subr.bf16.mxu0 %v4961
        %5915 = vmatpush1.bf16.msra.mxu0 %v4960
        %5916 = vmatprep.subr.bf16.mxu0 %v4965
        %5917 = vmatpush1.bf16.msra.mxu0 %v4964
        %5918 = vmatprep.subr.bf16.mxu0 %v4969
        %5919 = vmatpush1.bf16.msra.mxu0 %v4968
        %5920 = vmatprep.subr.bf16.mxu0 %v4973
        %5921 = vmatpush1.bf16.msra.mxu0 %v4972
        %5922 = vmatprep.subr.bf16.mxu0 %v4977
        %5923 = vmatpush1.bf16.msra.mxu0 %v4976
        %5924 = vmatprep.subr.bf16.mxu0 %v4981
        %5925 = vmatpush1.bf16.msra.mxu0 %v4980
        %5926 = vmatprep.subr.bf16.mxu0 %v4985
        %5927 = vmatpush1.bf16.msra.mxu0 %v4984
        %5928 = vmatprep.subr.bf16.mxu0 %v4989
        %5929 = vmatpush1.bf16.msra.mxu0 %v4988
        %5930 = vmatprep.subr.bf16.mxu0 %v4993
        %5931 = vmatpush1.bf16.msra.mxu0 %v4992
        %5932 = vmatprep.subr.bf16.mxu0 %v4997
        %5933 = vmatpush1.bf16.msra.mxu0 %v4996
        %5934 = vmatprep.subr.bf16.mxu0 %v5001
        %5935 = vmatpush1.bf16.msra.mxu0 %v5000
        %5936 = vmatprep.mubr.bf16.mxu0 %v3880
        %5937 = vmatmul.mubr.bf16.gmra.mrb[0].mxu0 %v3879
        %v5938 = vpop.f32.mrb[0].mxu0
        %v5939 = vadd.f32 %v3838, %v5938
        %v5940 = vpop.f32.mrb[0].mxu0
        %v5941 = vadd.f32 %v3838, %v5940
        %v5942 = vpop.f32.mrb[0].mxu0
        %v5943 = vadd.f32 %v3843, %v5942
        %v5944 = vpop.f32.mrb[0].mxu0
        %v5945 = vadd.f32 %v3843, %v5944
        %5946 = vdwg.mxu0
        %5947 = vmatprep.subr.bf16.mxu0 %v5005
        %5948 = vmatpush1.bf16.msra.mxu0 %v5004
        %5949 = vmatprep.subr.bf16.mxu0 %v5009
        %5950 = vmatpush1.bf16.msra.mxu0 %v5008
        %5951 = vmatprep.subr.bf16.mxu0 %v5013
        %5952 = vmatpush1.bf16.msra.mxu0 %v5012
        %5953 = vmatprep.subr.bf16.mxu0 %v5017
        %5954 = vmatpush1.bf16.msra.mxu0 %v5016
        %5955 = vmatprep.subr.bf16.mxu0 %v5021
        %5956 = vmatpush1.bf16.msra.mxu0 %v5020
        %5957 = vmatprep.subr.bf16.mxu0 %v5025
        %5958 = vmatpush1.bf16.msra.mxu0 %v5024
        %5959 = vmatprep.subr.bf16.mxu0 %v5029
        %5960 = vmatpush1.bf16.msra.mxu0 %v5028
        %5961 = vmatprep.subr.bf16.mxu0 %v5033
        %5962 = vmatpush1.bf16.msra.mxu0 %v5032
        %5963 = vmatprep.subr.bf16.mxu0 %v5037
        %5964 = vmatpush1.bf16.msra.mxu0 %v5036
        %5965 = vmatprep.subr.bf16.mxu0 %v5041
        %5966 = vmatpush1.bf16.msra.mxu0 %v5040
        %5967 = vmatprep.subr.bf16.mxu0 %v5045
        %5968 = vmatpush1.bf16.msra.mxu0 %v5044
        %5969 = vmatprep.subr.bf16.mxu0 %v5049
        %5970 = vmatpush1.bf16.msra.mxu0 %v5048
        %5971 = vmatprep.subr.bf16.mxu0 %v5053
        %5972 = vmatpush1.bf16.msra.mxu0 %v5052
        %5973 = vmatprep.subr.bf16.mxu0 %v5057
        %5974 = vmatpush1.bf16.msra.mxu0 %v5056
        %5975 = vmatprep.subr.bf16.mxu0 %v5061
        %5976 = vmatpush1.bf16.msra.mxu0 %v5060
        %5977 = vmatprep.subr.bf16.mxu0 %v5065
        %5978 = vmatpush1.bf16.msra.mxu0 %v5064
        %5979 = vmatprep.mubr.bf16.mxu0 %v3882
        %5980 = vmatmul.mubr.bf16.gmra.mrb[0].mxu0 %v3881
        %v5981 = vpop.f32.mrb[0].mxu0
        %v5982 = vadd.f32 %v5939, %v5981
        %v5983 = vpop.f32.mrb[0].mxu0
        %v5984 = vadd.f32 %v5941, %v5983
        %v5985 = vpop.f32.mrb[0].mxu0
        %v5986 = vadd.f32 %v5943, %v5985
        %v5987 = vpop.f32.mrb[0].mxu0
        %v5988 = vadd.f32 %v5945, %v5987
        %5989 = vdwg.mxu0
        %5990 = vmatprep.subr.bf16.mxu0 %v5069
        %5991 = vmatpush1.bf16.msra.mxu0 %v5068
        %5992 = vmatprep.subr.bf16.mxu0 %v5073
        %5993 = vmatpush1.bf16.msra.mxu0 %v5072
        %5994 = vmatprep.subr.bf16.mxu0 %v5077
        %5995 = vmatpush1.bf16.msra.mxu0 %v5076
        %5996 = vmatprep.subr.bf16.mxu0 %v5081
        %5997 = vmatpush1.bf16.msra.mxu0 %v5080
        %5998 = vmatprep.subr.bf16.mxu0 %v5085
        %5999 = vmatpush1.bf16.msra.mxu0 %v5084
        %6000 = vmatprep.subr.bf16.mxu0 %v5089
        %6001 = vmatpush1.bf16.msra.mxu0 %v5088
        %6002 = vmatprep.subr.bf16.mxu0 %v5093
        %6003 = vmatpush1.bf16.msra.mxu0 %v5092
        %6004 = vmatprep.subr.bf16.mxu0 %v5097
        %6005 = vmatpush1.bf16.msra.mxu0 %v5096
        %6006 = vmatprep.subr.bf16.mxu0 %v5101
        %6007 = vmatpush1.bf16.msra.mxu0 %v5100
        %6008 = vmatprep.subr.bf16.mxu0 %v5105
        %6009 = vmatpush1.bf16.msra.mxu0 %v5104
        %6010 = vmatprep.subr.bf16.mxu0 %v5109
        %6011 = vmatpush1.bf16.msra.mxu0 %v5108
        %6012 = vmatprep.subr.bf16.mxu0 %v5113
        %6013 = vmatpush1.bf16.msra.mxu0 %v5112
        %6014 = vmatprep.subr.bf16.mxu0 %v5117
        %6015 = vmatpush1.bf16.msra.mxu0 %v5116
        %6016 = vmatprep.subr.bf16.mxu0 %v5121
        %6017 = vmatpush1.bf16.msra.mxu0 %v5120
        %6018 = vmatprep.subr.bf16.mxu0 %v5125
        %6019 = vmatpush1.bf16.msra.mxu0 %v5124
        %6020 = vmatprep.subr.bf16.mxu0 %v5129
        %6021 = vmatpush1.bf16.msra.mxu0 %v5128
        %6022 = vmatprep.mubr.bf16.mxu0 %v3884
        %6023 = vmatmul.mubr.bf16.gmra.mrb[0].mxu0 %v3883
        %v6024 = vpop.f32.mrb[0].mxu0
        %v6025 = vadd.f32 %v5982, %v6024
        %v6026 = vpop.f32.mrb[0].mxu0
        %v6027 = vadd.f32 %v5984, %v6026
        %v6028 = vpop.f32.mrb[0].mxu0
        %v6029 = vadd.f32 %v5986, %v6028
        %v6030 = vpop.f32.mrb[0].mxu0
        %v6031 = vadd.f32 %v5988, %v6030
        %6032 = vdwg.mxu0
        %6033 = vmatprep.subr.bf16.mxu0 %v5133
        %6034 = vmatpush1.bf16.msra.mxu0 %v5132
        %6035 = vmatprep.subr.bf16.mxu0 %v5137
        %6036 = vmatpush1.bf16.msra.mxu0 %v5136
        %6037 = vmatprep.subr.bf16.mxu0 %v5141
        %6038 = vmatpush1.bf16.msra.mxu0 %v5140
        %6039 = vmatprep.subr.bf16.mxu0 %v5145
        %6040 = vmatpush1.bf16.msra.mxu0 %v5144
        %6041 = vmatprep.subr.bf16.mxu0 %v5149
        %6042 = vmatpush1.bf16.msra.mxu0 %v5148
        %6043 = vmatprep.subr.bf16.mxu0 %v5153
        %6044 = vmatpush1.bf16.msra.mxu0 %v5152
        %6045 = vmatprep.subr.bf16.mxu0 %v5157
        %6046 = vmatpush1.bf16.msra.mxu0 %v5156
        %6047 = vmatprep.subr.bf16.mxu0 %v5161
        %6048 = vmatpush1.bf16.msra.mxu0 %v5160
        %6049 = vmatprep.subr.bf16.mxu0 %v5165
        %6050 = vmatpush1.bf16.msra.mxu0 %v5164
        %6051 = vmatprep.subr.bf16.mxu0 %v5169
        %6052 = vmatpush1.bf16.msra.mxu0 %v5168
        %6053 = vmatprep.subr.bf16.mxu0 %v5173
        %6054 = vmatpush1.bf16.msra.mxu0 %v5172
        %6055 = vmatprep.subr.bf16.mxu0 %v5177
        %6056 = vmatpush1.bf16.msra.mxu0 %v5176
        %6057 = vmatprep.subr.bf16.mxu0 %v5181
        %6058 = vmatpush1.bf16.msra.mxu0 %v5180
        %6059 = vmatprep.subr.bf16.mxu0 %v5185
        %6060 = vmatpush1.bf16.msra.mxu0 %v5184
        %6061 = vmatprep.subr.bf16.mxu0 %v5189
        %6062 = vmatpush1.bf16.msra.mxu0 %v5188
        %6063 = vmatprep.subr.bf16.mxu0 %v5193
        %6064 = vmatpush1.bf16.msra.mxu0 %v5192
        %6065 = vmatprep.mubr.bf16.mxu0 %v3886
        %6066 = vmatmul.mubr.bf16.gmra.mrb[0].mxu0 %v3885
        %v6067 = vpop.f32.mrb[0].mxu0
        %v6068 = vadd.f32 %v6025, %v6067
        %v6069 = vpop.f32.mrb[0].mxu0
        %v6070 = vadd.f32 %v6027, %v6069
        %v6071 = vpop.f32.mrb[0].mxu0
        %v6072 = vadd.f32 %v6029, %v6071
        %v6073 = vpop.f32.mrb[0].mxu0
        %v6074 = vadd.f32 %v6031, %v6073
        %6075 = vdwg.mxu0
        %6076 = vmatprep.subr.bf16.mxu0 %v5197
        %6077 = vmatpush1.bf16.msra.mxu0 %v5196
        %6078 = vmatprep.subr.bf16.mxu0 %v5201
        %6079 = vmatpush1.bf16.msra.mxu0 %v5200
        %6080 = vmatprep.subr.bf16.mxu0 %v5205
        %6081 = vmatpush1.bf16.msra.mxu0 %v5204
        %6082 = vmatprep.subr.bf16.mxu0 %v5209
        %6083 = vmatpush1.bf16.msra.mxu0 %v5208
        %6084 = vmatprep.subr.bf16.mxu0 %v5213
        %6085 = vmatpush1.bf16.msra.mxu0 %v5212
        %6086 = vmatprep.subr.bf16.mxu0 %v5217
        %6087 = vmatpush1.bf16.msra.mxu0 %v5216
        %6088 = vmatprep.subr.bf16.mxu0 %v5221
        %6089 = vmatpush1.bf16.msra.mxu0 %v5220
        %6090 = vmatprep.subr.bf16.mxu0 %v5225
        %6091 = vmatpush1.bf16.msra.mxu0 %v5224
        %6092 = vmatprep.subr.bf16.mxu0 %v5229
        %6093 = vmatpush1.bf16.msra.mxu0 %v5228
        %6094 = vmatprep.subr.bf16.mxu0 %v5233
        %6095 = vmatpush1.bf16.msra.mxu0 %v5232
        %6096 = vmatprep.subr.bf16.mxu0 %v5237
        %6097 = vmatpush1.bf16.msra.mxu0 %v5236
        %6098 = vmatprep.subr.bf16.mxu0 %v5241
        %6099 = vmatpush1.bf16.msra.mxu0 %v5240
        %6100 = vmatprep.subr.bf16.mxu0 %v5245
        %6101 = vmatpush1.bf16.msra.mxu0 %v5244
        %6102 = vmatprep.subr.bf16.mxu0 %v5249
        %6103 = vmatpush1.bf16.msra.mxu0 %v5248
        %6104 = vmatprep.subr.bf16.mxu0 %v5253
        %6105 = vmatpush1.bf16.msra.mxu0 %v5252
        %6106 = vmatprep.subr.bf16.mxu0 %v5257
        %6107 = vmatpush1.bf16.msra.mxu0 %v5256
        %6108 = vmatprep.mubr.bf16.mxu0 %v3888
        %6109 = vmatmul.mubr.bf16.gmra.mrb[0].mxu0 %v3887
        %v6110 = vpop.f32.mrb[0].mxu0
        %v6111 = vadd.f32 %v6068, %v6110
        %v6112 = vpop.f32.mrb[0].mxu0
        %v6113 = vadd.f32 %v6070, %v6112
        %v6114 = vpop.f32.mrb[0].mxu0
        %v6115 = vadd.f32 %v6072, %v6114
        %v6116 = vpop.f32.mrb[0].mxu0
        %v6117 = vadd.f32 %v6074, %v6116
        %6118 = vdwg.mxu0
        %6119 = vmatprep.subr.bf16.mxu0 %v5261
        %6120 = vmatpush1.bf16.msra.mxu0 %v5260
        %6121 = vmatprep.subr.bf16.mxu0 %v5265
        %6122 = vmatpush1.bf16.msra.mxu0 %v5264
        %6123 = vmatprep.subr.bf16.mxu0 %v5269
        %6124 = vmatpush1.bf16.msra.mxu0 %v5268
        %6125 = vmatprep.subr.bf16.mxu0 %v5273
        %6126 = vmatpush1.bf16.msra.mxu0 %v5272
        %6127 = vmatprep.subr.bf16.mxu0 %v5277
        %6128 = vmatpush1.bf16.msra.mxu0 %v5276
        %6129 = vmatprep.subr.bf16.mxu0 %v5281
        %6130 = vmatpush1.bf16.msra.mxu0 %v5280
        %6131 = vmatprep.subr.bf16.mxu0 %v5644
        %6132 = vmatpush1.bf16.msra.mxu0 %v5641
        %6133 = vmatprep.subr.bf16.mxu0 0
        %6134 = vmatpush1.bf16.msra.mxu0 0
        %6135 = vmatprep.subr.bf16.mxu0 0
        %6136 = vmatpush1.bf16.msra.mxu0 0
        %6137 = vmatprep.subr.bf16.mxu0 0
        %6138 = vmatpush1.bf16.msra.mxu0 0
        %6139 = vmatprep.subr.bf16.mxu0 0
        %6140 = vmatpush1.bf16.msra.mxu0 0
        %6141 = vmatprep.subr.bf16.mxu0 0
        %6142 = vmatpush1.bf16.msra.mxu0 0
        %6143 = vmatprep.subr.bf16.mxu0 0
        %6144 = vmatpush1.bf16.msra.mxu0 0
        %6145 = vmatprep.subr.bf16.mxu0 0
        %6146 = vmatpush1.bf16.msra.mxu0 0
        %6147 = vmatprep.subr.bf16.mxu0 0
        %6148 = vmatpush1.bf16.msra.mxu0 0
        %6149 = vmatprep.subr.bf16.mxu0 0
        %6150 = vmatpush1.bf16.msra.mxu0 0
        %6151 = vmatprep.mubr.bf16.mxu0 0
        %6152 = vmatmul.mubr.bf16.gmra.mrb[0].mxu0 %v5632
        %v6153 = vpop.f32.mrb[0].mxu0
        %v6154 = vadd.f32 %v6111, %v6153
        %v6155 = vpop.f32.mrb[0].mxu0
        %v6156 = vadd.f32 %v6113, %v6155
        %v6157 = vpop.f32.mrb[0].mxu0
        %v6158 = vadd.f32 %v6115, %v6157
        %v6159 = vpop.f32.mrb[0].mxu0
        %v6160 = vadd.f32 %v6117, %v6159
        %6161 = vdwg.mxu0
        %v6162 = vmul.f32 %v5896, %v5896
        %v6163 = vmul.f32 %v5898, %v5898
        %v6164 = vmul.f32 %v6154, %v6154
        %v6165 = vmul.f32 %v6156, %v6156
        %v6166 = vmul.f32 %v5900, %v5900
        %v6167 = vmul.f32 %v5902, %v5902
        %v6168 = vmul.f32 %v6158, %v6158
        %v6169 = vmul.f32 %v6160, %v6160
        %v6170 = vld [vmem:[%s5] sm:$0xff]
        %v6171 = vld [vmem:[%s5 + $0x8] sm:$0xff]
        %v6172 = vld [vmem:[%s5 + $0x10] sm:$0xff]
        %v6173 = vld [vmem:[%s5 + $0x18] sm:$0xff]
        %v6174 = vld [vmem:[%s5 + $0x20] sm:$0xff]
        %v6175 = vld [vmem:[%s5 + $0x28] sm:$0xff]
        %v6176 = vld [vmem:[%s5 + $0x30] sm:$0xff]
        %v6177 = vld [vmem:[%s5 + $0x38] sm:$0xff]
        %v6178 = vld [vmem:[%s5 + $0x40] sm:$0xff]
        %v6179 = vld [vmem:[%s5 + $0x48] sm:$0xff]
        %v6180 = vld [vmem:[%s5 + $0x50] sm:$0xff]
        %v6181 = vld [vmem:[%s5 + $0x58] sm:$0xff]
        %v6182 = vld [vmem:[%s5 + $0x60] sm:$0xff]
        %v6183 = vld [vmem:[%s5 + $0x68] sm:$0xff]
        %v6184 = vld [vmem:[%s5 + $0x70] sm:$0xff]
        %v6185 = vld [vmem:[%s5 + $0x78] sm:$0xff]
        %v6186 = vld [vmem:[%s5 + $0x80] sm:$0xff]
        %v6187 = vld [vmem:[%s5 + $0x88] sm:$0xff]
        %v6188 = vld [vmem:[%s5 + $0x90] sm:$0xff]
        %v6189 = vld [vmem:[%s5 + $0x98] sm:$0xff]
        %v6190 = vld [vmem:[%s5 + $0xa0] sm:$0xff]
        %v6191 = vld [vmem:[%s5 + $0xa8] sm:$0xff]
        %v6192 = vld [vmem:[%s5 + $0xb0] sm:$0xff]
        %v6193 = vld [vmem:[%s5 + $0xb8] sm:$0xff]
        %v6194 = vld [vmem:[%s5 + $0xc0] sm:$0xff]
        %v6195 = vld [vmem:[%s5 + $0xc8] sm:$0xff]
        %v6196 = vld [vmem:[%s5 + $0xd0] sm:$0xff]
        %v6197 = vld [vmem:[%s5 + $0xd8] sm:$0xff]
        %v6198 = vld [vmem:[%s5 + $0xe0] sm:$0xff]
        %v6199 = vld [vmem:[%s5 + $0xe8] sm:$0xff]
        %v6200 = vld [vmem:[%s5 + $0xf0] sm:$0xff]
        %v6201 = vld [vmem:[%s5 + $0xf8] sm:$0xff]
        %v6202 = vld [vmem:[%s5 + $0x100] sm:$0xff]
        %v6203 = vld [vmem:[%s5 + $0x108] sm:$0xff]
        %v6204 = vld [vmem:[%s5 + $0x110] sm:$0xff]
        %v6205 = vld [vmem:[%s5 + $0x118] sm:$0xff]
        %v6206 = vld [vmem:[%s5 + $0x120] sm:$0xff]
        %v6207 = vld [vmem:[%s5 + $0x128] sm:$0xff]
        %v6208 = vld [vmem:[%s5 + $0x130] sm:$0xff]
        %v6209 = vld [vmem:[%s5 + $0x138] sm:$0xff]
        %v6210 = vld [vmem:[%s5 + $0x140] sm:$0xff]
        %v6211 = vld [vmem:[%s5 + $0x148] sm:$0xff]
        %v6212 = vld [vmem:[%s5 + $0x150] sm:$0xff]
        %v6213 = vld [vmem:[%s5 + $0x158] sm:$0xff]
        %v6214 = vld [vmem:[%s5 + $0x160] sm:$0xff]
        %v6215 = vld [vmem:[%s5 + $0x168] sm:$0xff]
        %v6216 = vld [vmem:[%s5 + $0x170] sm:$0xff]
        %v6217 = vld [vmem:[%s5 + $0x178] sm:$0xff]
        %v6218 = vld [vmem:[%s5 + $0x180] sm:$0xff]
        %v6219 = vld [vmem:[%s5 + $0x188] sm:$0xff]
        %v6220 = vld [vmem:[%s5 + $0x190] sm:$0xff]
        %v6221 = vld [vmem:[%s5 + $0x198] sm:$0xff]
        %v6222 = vld [vmem:[%s5 + $0x1a0] sm:$0xf]
        %vm6223 = vcmask 293888
        %v6225 = vsel %vm6223, %v6165, 0
        %v6228 = vsel %vm6223, %v6169, 0
        %v6231 = vsel %vm330, %v6222, 0
        %6233 = vmatprep.subr.mxu0 0.0
        %6234 = vmatpush1.msra.mxu0 %v6170
        %6235 = vmatprep.subr.mxu0 0.0
        %6236 = vmatpush1.msra.mxu0 %v6171
        %6237 = vmatprep.subr.mxu0 0.0
        %6238 = vmatpush1.msra.mxu0 %v6172
        %6239 = vmatprep.subr.mxu0 0.0
        %6240 = vmatpush1.msra.mxu0 %v6173
        %6241 = vmatprep.subr.mxu0 0.0
        %6242 = vmatpush1.msra.mxu0 %v6174
        %6243 = vmatprep.subr.mxu0 0.0
        %6244 = vmatpush1.msra.mxu0 %v6175
        %6245 = vmatprep.subr.mxu0 0.0
        %6246 = vmatpush1.msra.mxu0 %v6176
        %6247 = vmatprep.subr.mxu0 0.0
        %6248 = vmatpush1.msra.mxu0 %v6177
        %6249 = vmatprep.subr.mxu0 0.0
        %6250 = vmatpush1.msra.mxu0 %v6178
        %6251 = vmatprep.subr.mxu0 0.0
        %6252 = vmatpush1.msra.mxu0 %v6179
        %6253 = vmatprep.subr.mxu0 0.0
        %6254 = vmatpush1.msra.mxu0 %v6180
        %6255 = vmatprep.subr.mxu0 0.0
        %6256 = vmatpush1.msra.mxu0 %v6181
        %6257 = vmatprep.subr.mxu0 0.0
        %6258 = vmatpush1.msra.mxu0 %v6182
        %6259 = vmatprep.subr.mxu0 0.0
        %6260 = vmatpush1.msra.mxu0 %v6183
        %6261 = vmatprep.subr.mxu0 0.0
        %6262 = vmatpush1.msra.mxu0 %v6184
        %6263 = vmatprep.subr.mxu0 0.0
        %6264 = vmatpush1.msra.mxu0 %v6185
        %6265 = vmatprep.subr.mxu0 0.0
        %6266 = vmatpush1.msra.mxu0 %v6186
        %6267 = vmatprep.subr.mxu0 0.0
        %6268 = vmatpush1.msra.mxu0 %v6187
        %6269 = vmatprep.subr.mxu0 0.0
        %6270 = vmatpush1.msra.mxu0 %v6188
        %6271 = vmatprep.subr.mxu0 0.0
        %6272 = vmatpush1.msra.mxu0 %v6189
        %6273 = vmatprep.subr.mxu0 0.0
        %6274 = vmatpush1.msra.mxu0 %v6190
        %6275 = vmatprep.subr.mxu0 0.0
        %6276 = vmatpush1.msra.mxu0 %v6191
        %6277 = vmatprep.subr.mxu0 0.0
        %6278 = vmatpush1.msra.mxu0 %v6192
        %6279 = vmatprep.subr.mxu0 0.0
        %6280 = vmatpush1.msra.mxu0 %v6193
        %6281 = vmatprep.subr.mxu0 0.0
        %6282 = vmatpush1.msra.mxu0 %v6194
        %6283 = vmatprep.subr.mxu0 0.0
        %6284 = vmatpush1.msra.mxu0 %v6195
        %6285 = vmatprep.subr.mxu0 0.0
        %6286 = vmatpush1.msra.mxu0 %v6196
        %6287 = vmatprep.subr.mxu0 0.0
        %6288 = vmatpush1.msra.mxu0 %v6197
        %6289 = vmatprep.subr.mxu0 0.0
        %6290 = vmatpush1.msra.mxu0 %v6198
        %6291 = vmatprep.subr.mxu0 0.0
        %6292 = vmatpush1.msra.mxu0 %v6199
        %6293 = vmatprep.subr.mxu0 0.0
        %6294 = vmatpush1.msra.mxu0 %v6200
        %6295 = vmatprep.subr.mxu0 0.0
        %6296 = vmatpush1.msra.mxu0 %v6201
        %6297 = vmatprep.mubr.f32.mxu0 %v6163
        %6298 = vmatmul.mubr.f32.gmra.mrb[0].mxu0 %v6162
        %v6299 = vpop.f32.mrb[0].mxu0
        %v6300 = vadd.f32 0.0, %v6299
        %v6301 = vpop.f32.mrb[0].mxu0
        %6302 = vmatprep.mubr.f32.mxu0 %v6167
        %6303 = vmatmul.mubr.f32.gmra.mrb[0].mxu0 %v6166
        %v6304 = vpop.f32.mrb[0].mxu0
        %v6305 = vadd.f32 0.0, %v6304
        %v6306 = vpop.f32.mrb[0].mxu0
        %6307 = vdwg.mxu0
        %6308 = vmatprep.subr.mxu0 0.0
        %6309 = vmatpush1.msra.mxu0 %v6202
        %6310 = vmatprep.subr.mxu0 0.0
        %6311 = vmatpush1.msra.mxu0 %v6203
        %6312 = vmatprep.subr.mxu0 0.0
        %6313 = vmatpush1.msra.mxu0 %v6204
        %6314 = vmatprep.subr.mxu0 0.0
        %6315 = vmatpush1.msra.mxu0 %v6205
        %6316 = vmatprep.subr.mxu0 0.0
        %6317 = vmatpush1.msra.mxu0 %v6206
        %6318 = vmatprep.subr.mxu0 0.0
        %6319 = vmatpush1.msra.mxu0 %v6207
        %6320 = vmatprep.subr.mxu0 0.0
        %6321 = vmatpush1.msra.mxu0 %v6208
        %6322 = vmatprep.subr.mxu0 0.0
        %6323 = vmatpush1.msra.mxu0 %v6209
        %6324 = vmatprep.subr.mxu0 0.0
        %6325 = vmatpush1.msra.mxu0 %v6210
        %6326 = vmatprep.subr.mxu0 0.0
        %6327 = vmatpush1.msra.mxu0 %v6211
        %6328 = vmatprep.subr.mxu0 0.0
        %6329 = vmatpush1.msra.mxu0 %v6212
        %6330 = vmatprep.subr.mxu0 0.0
        %6331 = vmatpush1.msra.mxu0 %v6213
        %6332 = vmatprep.subr.mxu0 0.0
        %6333 = vmatpush1.msra.mxu0 %v6214
        %6334 = vmatprep.subr.mxu0 0.0
        %6335 = vmatpush1.msra.mxu0 %v6215
        %6336 = vmatprep.subr.mxu0 0.0
        %6337 = vmatpush1.msra.mxu0 %v6216
        %6338 = vmatprep.subr.mxu0 0.0
        %6339 = vmatpush1.msra.mxu0 %v6217
        %6340 = vmatprep.subr.mxu0 0.0
        %6341 = vmatpush1.msra.mxu0 %v6218
        %6342 = vmatprep.subr.mxu0 0.0
        %6343 = vmatpush1.msra.mxu0 %v6219
        %6344 = vmatprep.subr.mxu0 0.0
        %6345 = vmatpush1.msra.mxu0 %v6220
        %6346 = vmatprep.subr.mxu0 0.0
        %6347 = vmatpush1.msra.mxu0 %v6221
        %6348 = vmatprep.subr.mxu0 0.0
        %6349 = vmatpush1.msra.mxu0 %v6231
        %6350 = vmatprep.subr.mxu0 0.0
        %6351 = vmatpush1.msra.mxu0 0.0
        %6352 = vmatprep.subr.mxu0 0.0
        %6353 = vmatpush1.msra.mxu0 0.0
        %6354 = vmatprep.subr.mxu0 0.0
        %6355 = vmatpush1.msra.mxu0 0.0
        %6356 = vmatprep.subr.mxu0 0.0
        %6357 = vmatpush1.msra.mxu0 0.0
        %6358 = vmatprep.subr.mxu0 0.0
        %6359 = vmatpush1.msra.mxu0 0.0
        %6360 = vmatprep.subr.mxu0 0.0
        %6361 = vmatpush1.msra.mxu0 0.0
        %6362 = vmatprep.subr.mxu0 0.0
        %6363 = vmatpush1.msra.mxu0 0.0
        %6364 = vmatprep.subr.mxu0 0.0
        %6365 = vmatpush1.msra.mxu0 0.0
        %6366 = vmatprep.subr.mxu0 0.0
        %6367 = vmatpush1.msra.mxu0 0.0
        %6368 = vmatprep.subr.mxu0 0.0
        %6369 = vmatpush1.msra.mxu0 0.0
        %6370 = vmatprep.subr.mxu0 0.0
        %6371 = vmatpush1.msra.mxu0 0.0
        %6372 = vmatprep.mubr.f32.mxu0 %v6225
        %6373 = vmatmul.mubr.f32.gmra.mrb[0].mxu0 %v6164
        %v6374 = vpop.f32.mrb[0].mxu0
        %v6375 = vadd.f32 %v6300, %v6374
        %v6376 = vpop.f32.mrb[0].mxu0
        %6377 = vmatprep.mubr.f32.mxu0 %v6228
        %6378 = vmatmul.mubr.f32.gmra.mrb[0].mxu0 %v6168
        %v6379 = vpop.f32.mrb[0].mxu0
        %v6380 = vadd.f32 %v6305, %v6379
        %v6381 = vpop.f32.mrb[0].mxu0
        %6382 = vdwg.mxu0
        %v6383 = vmax.f32 %v6375, 1e-06
        %v6384 = vmax.f32 %v6380, 1e-06
        %v6385 = vlog2.pop %v6383
        %v6386 = vmul.f32 %v6385, 0.6931472
        %v6387 = vlog2.pop %v6384
        %v6388 = vmul.f32 %v6387, 0.6931472
        %v6389 = vld [vmem:[%s6] sm:$0xff]
        %v6390 = vld [vmem:[%s6 + $0x8] sm:$0x3]
        %v6391 = vmul.f32 %v6386, %v6389
        %v6392 = vmul.f32 %v6388, %v6390
        %vm6393 = vcmask 80896
        %v6394 = vsel %vm6393, %v6391, 0.0
        %6395 = vadd.xlane.f32.xlu0 %v6394
        %v6396 = vpop.xlane.xlu0 %6395
        %vm6397 = vcmask 74752
        %v6398 = vsel %vm6397, %v6392, 0.0
        %6399 = vadd.xlane.f32.xlu0 %v6398
        %v6400 = vpop.xlane.xlu0 %6399
        %v6401 = vsel %vm730, %v6400, 0.0
        %v6402 = vadd.f32 %v6396, %v6401
        %v6403 = vrot.slane %v6402, 4
        %v6404 = vadd.f32 %v6402, %v6403
        %v6405 = vrot.slane %v6404, 2
        %v6406 = vadd.f32 %v6404, %v6405
        %v6407 = vrot.slane %v6406, 1
        %v6408 = vadd.f32 %v6406, %v6407
        %s6409 = scalar_lea.vmem %s6, 16
        %v6410 = vld [vmem:[%s6409] sm:$0xff]
        %v6411 = vld [vmem:[%s6409 + $0x8] sm:$0x3]
        %v6412 = vmul.f32 %v6386, %v6410
        %v6413 = vmul.f32 %v6388, %v6411
        %v6414 = vsel %vm6393, %v6412, 0.0
        %6415 = vadd.xlane.f32.xlu0 %v6414
        %v6416 = vpop.xlane.xlu0 %6415
        %v6417 = vsel %vm6397, %v6413, 0.0
        %6418 = vadd.xlane.f32.xlu0 %v6417
        %v6419 = vpop.xlane.xlu0 %6418
        %v6420 = vsel %vm730, %v6419, 0.0
        %v6421 = vadd.f32 %v6416, %v6420
        %v6422 = vrot.slane %v6421, 4
        %v6423 = vadd.f32 %v6421, %v6422
        %v6424 = vrot.slane %v6423, 2
        %v6425 = vadd.f32 %v6423, %v6424
        %v6426 = vrot.slane %v6425, 1
        %v6427 = vadd.f32 %v6425, %v6426
        %s6428 = scalar_lea.vmem %s6, 32
        %v6429 = vld [vmem:[%s6428] sm:$0xff]
        %v6430 = vld [vmem:[%s6428 + $0x8] sm:$0x3]
        %v6431 = vmul.f32 %v6386, %v6429
        %v6432 = vmul.f32 %v6388, %v6430
        %v6433 = vsel %vm6393, %v6431, 0.0
        %6434 = vadd.xlane.f32.xlu0 %v6433
        %v6435 = vpop.xlane.xlu0 %6434
        %v6436 = vsel %vm6397, %v6432, 0.0
        %6437 = vadd.xlane.f32.xlu0 %v6436
        %v6438 = vpop.xlane.xlu0 %6437
        %v6439 = vsel %vm730, %v6438, 0.0
        %v6440 = vadd.f32 %v6435, %v6439
        %v6441 = vrot.slane %v6440, 4
        %v6442 = vadd.f32 %v6440, %v6441
        %v6443 = vrot.slane %v6442, 2
        %v6444 = vadd.f32 %v6442, %v6443
        %v6445 = vrot.slane %v6444, 1
        %v6446 = vadd.f32 %v6444, %v6445
        %s6447 = scalar_lea.vmem %s6, 48
        %v6448 = vld [vmem:[%s6447] sm:$0xff]
        %v6449 = vld [vmem:[%s6447 + $0x8] sm:$0x3]
        %v6450 = vmul.f32 %v6386, %v6448
        %v6451 = vmul.f32 %v6388, %v6449
        %v6452 = vsel %vm6393, %v6450, 0.0
        %6453 = vadd.xlane.f32.xlu0 %v6452
        %v6454 = vpop.xlane.xlu0 %6453
        %v6455 = vsel %vm6397, %v6451, 0.0
        %6456 = vadd.xlane.f32.xlu0 %v6455
        %v6457 = vpop.xlane.xlu0 %6456
        %v6458 = vsel %vm730, %v6457, 0.0
        %v6459 = vadd.f32 %v6454, %v6458
        %v6460 = vrot.slane %v6459, 4
        %v6461 = vadd.f32 %v6459, %v6460
        %v6462 = vrot.slane %v6461, 2
        %v6463 = vadd.f32 %v6461, %v6462
        %v6464 = vrot.slane %v6463, 1
        %v6465 = vadd.f32 %v6463, %v6464
        %vm6466 = vcmask 7168
        %v6467 = vsel %vm6466, %v6408, %v6427
        %vm6468 = vcmask 15360
        %v6469 = vsel %vm6468, %v6467, %v6446
        %vm6470 = vcmask 23552
        %v6471 = vsel %vm6470, %v6469, %v6465
        %v6472 = vld [vmem:[%s7] sm:$0x1]
        %v6473 = vadd.f32 %v6471, %v6472
        %vm6474 = vcmask 24576
        %v6475 = vsel %vm6474, %v6473, -inf
        %6476 = vmax.xlane.f32.xlu0 %v6475
        %v6477 = vpop.xlane.xlu0 %6476
        %v6478 = vsub.f32 %v6473, %v6477
        %v6479 = vmul.f32 %v6478, 1.442695
        %v6480 = vpow.pop %v6479
        %v6481 = vsel %vm6474, %v6480, 0.0
        %6482 = vadd.xlane.f32.xlu0 %v6481
        %v6483 = vpop.xlane.xlu0 %6482
        %v6484 = vrcp.pop %v6483
        %v6485 = vmul.f32 %v6480, %v6484
        %v6486 = vlog2.pop %v6483
        %v6487 = vmul.f32 %v6486, 0.6931472
        %v6488 = vsub.f32 %v6478, %v6487
        %v6490 = vrot.slane %v6485, 7
        %vm6492 = vcmask 1040384
        %v6493 = vsel %vm6492, %v6488, %v6490
        %vm6494 = vcmask 25600
        %6495 = vst.msk [vmem:[%s298] sm:$0x3] %vm6494, %v6493
        %s6496 = sand.u32 %s203, 1
        %s6497 = scalar_lea.sflag [#allocation4], %s6496
        %s6498 = sand.u32 %s203, 1
        %s6499 = smul.addr %s6498, 2
        %s6500 = scalar_lea.vmem [#allocation3], %s6499
        // Predicated region
        $region53: #{tpu_custom_call.1} parent=51 // pred_check
          %p6501 = pneg %p213
        $region54: #{tpu_custom_call.1} parent=51 // pred_check_branch
          %6503 = sbr.rel (%p6501) target = $region56
        $region55: #{tpu_custom_call.1} parent=51 // pred_region
          %s6505 = ssub.s32 32, 32
          %6506 = vsyncadd %s6497, %s6505
          %s6507 = smul.addr %s22, 32
          %s6508 = scalar_lea.hbm %s8, %s6507
          %s6510 = sshll.u32 %s6500, 4
          %s6511 = int_to_ptr.vmem [resolvable:$true] %s6510
          %6513 = dma.vmem_to_hbm [thread:$0]  %s6511, 32, %s6508, %s6497
        $region56: #{tpu_custom_call.1} parent=51 // pred_fallthru
          _
      $region52: #{tpu_custom_call.1} parent=5 // pred_fallthru
        _
      %p6514 = scmp.le.s32.totalorder 2, %s17
      // Predicated region
      $region57: #{tpu_custom_call.1} parent=5 // pred_check
        %p6515 = pneg %p6514
      $region58: #{tpu_custom_call.1} parent=5 // pred_check_branch
        %6517 = sbr.rel (%p6515) target = $region60
      $region59: #{tpu_custom_call.1} parent=5 // pred_region
        %s6518 = ssub.s32 %s17, 2
        // Predicated region
        $region61: #{tpu_custom_call.1} parent=59 // pred_check
          %p6519 = pneg %p219
        $region62: #{tpu_custom_call.1} parent=59 // pred_check_branch
          %6521 = sbr.rel (%p6519) target = $region64
        $region63: #{tpu_custom_call.1} parent=59 // pred_region
          %s6522 = sand.u32 %s204, 1
          %s6523 = scalar_lea.sflag [#allocation4], %s6522
          %s6524 = sand.u32 %s204, 1
          %s6525 = smul.addr %s6524, 2
          %s6526 = scalar_lea.vmem [#allocation3], %s6525
          %6527 = dma.done %s6523, 32
        $region64: #{tpu_custom_call.1} parent=59 // pred_fallthru
          _
      $region60: #{tpu_custom_call.1} parent=5 // pred_fallthru
        _
    $region6: #{tpu_custom_call.1} parent=1 // loop_footer
      %s21 = sadd.s32 1, %s17
    $region7: #{tpu_custom_call.1} parent=1 // loop_footer_branch
      %16 = sbr.rel target = $region3
    $region8: #{tpu_custom_call.1} parent=1 // loop_exit
      _
    %6528 = vsyncpa [#allocation4], 1
    %s6529 = scalar_lea.sflag [#allocation4], 1
    %6530 = vsyncpa %s6529, 1

</llo_original>
